<compile_context>
chip_gen: v6e
topology: v6e:2x2x1
jax: 0.10.0
libtpu: 0.0.40
codegen_flags: <defaults>
</compile_context>

<pallas_src>
import math
import numpy as np

import jax
import jax.numpy as jnp
from jax import lax
from jax.experimental import pallas as pl
from jax.experimental.pallas import tpu as pltpu


def _round_up(x, m):
    return ((x + m - 1) // m) * m


def _vmem_limit_bytes():
    # generation-aware scoped-VMEM limit (v5e/v6e: 128 MiB physical -> 96 MiB,
    # v7x: 64 MiB physical -> 48 MiB); safe fallback if the query fails.
    try:
        cap = int(getattr(pltpu.get_tpu_info(), "vmem_capacity_bytes", 0)) or (128 << 20)
    except Exception:
        cap = 128 << 20
    return int(min(96 << 20, max(32 << 20, cap * 3 // 4)))


_VMEM_LIMIT = _vmem_limit_bytes()


def _cp(*sem):
    return pltpu.CompilerParams(dimension_semantics=tuple(sem),
                                vmem_limit_bytes=_VMEM_LIMIT)


# ----------------------------------------------------------------------------
# Pallas kernels
# ----------------------------------------------------------------------------

def _matmul_kernel(x_ref, w_ref, o_ref):
    # bf16 operands on the MXU, f32 accumulation.
    o_ref[...] = jnp.dot(x_ref[...].astype(jnp.bfloat16), w_ref[...],
                         preferred_element_type=jnp.float32)


def _dwconv_silu_kernel(xp_ref, w_ref, b_ref, o_ref):
    # Depthwise 3x3x3 conv + SiLU on a halo-padded per-batch block.
    # xp_ref: (D+2p, H+2p, W+2p, C); w_ref: (k^3, 1, C); b_ref: (1, C)
    # o_ref: (D, H, W, C).  The sublane (W) shift is hoisted: k relayouts, not k^3.
    Dd, Hh, Ww, C = o_ref.shape
    k = xp_ref.shape[0] - Dd + 1
    acc = jnp.zeros((Dd, Hh, Ww, C), jnp.float32)
    for kw in range(k):
        xw = xp_ref[:, :, kw:kw + Ww, :]          # one sublane shift per kw
        for kd in range(k):
            for kh in range(k):
                idx = (kd * k + kh) * k + kw
                acc = acc + xw[kd:kd + Dd, kh:kh + Hh, :, :] * w_ref[idx]
    acc = acc + b_ref[...]
    o_ref[...] = acc * jax.nn.sigmoid(acc)        # SiLU


def _defconv_accum_kernel(zp_ref, b_ref, o_ref):
    # Stage 2 of def_conv: shift-and-accumulate of the per-tap channel
    # contractions (stage 1 is one MXU matmul done in `linear`).
    # zp_ref: (Dp, Hp, Wp, width) halo-padded; lane group [tap*Cout, (tap+1)*Cout)
    #         holds tap's contracted output channels.  Pure VPU: no cross-lane
    #         reductions, no im2col.
    Dd, Hh, Ww, Cout = o_ref.shape
    k = zp_ref.shape[0] - Dd + 1
    acc = jnp.zeros((Dd, Hh, Ww, Cout), jnp.float32)
    for kw in range(k):
        zw = zp_ref[:, :, kw:kw + Ww, :]          # hoisted sublane (W) shift
        for kd in range(k):
            for kh in range(k):
                c0 = ((kd * k + kh) * k + kw) * Cout
                acc = acc + zw[kd:kd + Dd, kh:kh + Hh, :, c0:c0 + Cout]
    o_ref[...] = acc + b_ref[...]


def _scan_kernel(u_ref, dt_ref, Bm_ref, Cm_ref, At_ref, D_ref, db_ref, y_ref,
                 x_state, dtsp_scr, dtu_scr):
    # u/dt/y: (CHUNK, Din); Bm/Cm: (CHUNK, N, 1); At: (N, Din); D/db: (1, Din)
    # x_state: packed (N, Din) SSM state carried across L-chunks.
    # NOTE (correctness): the L-chunk axis MUST remain the LAST grid axis and be
    #   marked "arbitrary"; only the batch axis may be "parallel" -- the carried
    #   x_state makes the recurrence strictly serial in L.
    CH, Din = u_ref.shape
    N = x_state.shape[0]
    MICRO = 8                       # CHUNK is padded to a multiple of 8 by the wrapper
    n_blk = CH // MICRO

    @pl.when(pl.program_id(1) == 0)
    def _():
        x_state[...] = jnp.zeros_like(x_state)

    # vectorized (full-sublane) precompute of softplus / dt*u for the whole chunk
    dt_sp = jax.nn.softplus(dt_ref[...] + db_ref[...])       # (CH, Din)
    dtsp_scr[...] = dt_sp
    dtu_scr[...] = dt_sp * u_ref[...]

    At = At_ref[...]                # (N, Din), hoisted out of the loop
    D_row = D_ref[...]              # (1, Din)

    def blk_body(bi, x):
        base = pl.multiple_of(bi * MICRO, MICRO)
        y_rows = []
        for r in range(MICRO):
            t = base + r
            dt_row = dtsp_scr[pl.ds(t, 1), :]                 # (1, Din)
            dA = jnp.exp(dt_row * At)                         # (N, Din) on the fly (EUP)
            dBu = Bm_ref[t] * dtu_scr[pl.ds(t, 1), :]         # (N,1)*(1,Din) -> (N, Din)
            x = dA * x + dBu                                  # packed full-slab update
            y_rows.append(jnp.sum(Cm_ref[t] * x, axis=0, keepdims=True))
        y_blk = jnp.concatenate(y_rows, axis=0)               # (MICRO, Din)
        # fused u*D skip: single lane-dense store per 8-row slab
        y_ref[pl.ds(base, MICRO), :] = y_blk + u_ref[pl.ds(base, MICRO), :] * D_row
        return x

    x_state[...] = lax.fori_loop(0, n_blk, blk_body, x_state[...])


def _ln_proj_kernel(y1_ref, y2_ref, g1_ref, b1_ref, g2_ref, b2_ref,
                    w1_ref, w2_ref, bo_ref, o_ref):
    # Two LayerNorms + out_proj as two accumulating bf16 MXU dots
    # (no lane-concatenated (tm, 2*Din) temporary).
    def ln(y, g, b):
        mu = jnp.mean(y, axis=-1, keepdims=True)
        var = jnp.mean(jnp.square(y - mu), axis=-1, keepdims=True)
        return (y - mu) * lax.rsqrt(var + 1e-5) * g + b

    h1 = ln(y1_ref[...], g1_ref[...], b1_ref[...]).astype(jnp.bfloat16)
    h2 = ln(y2_ref[...], g2_ref[...], b2_ref[...]).astype(jnp.bfloat16)
    acc = jnp.dot(h1, w1_ref[...], preferred_element_type=jnp.float32)
    acc = acc + jnp.dot(h2, w2_ref[...], preferred_element_type=jnp.float32)
    o_ref[...] = acc + bo_ref[...]


# ----------------------------------------------------------------------------
# pallas_call wrappers
# ----------------------------------------------------------------------------

def linear(x, w, tile_m=1024):
    # x: (M, K) f32; w: (K, N) (cast to bf16 for the MXU); output f32.
    M, K = x.shape
    Nc = w.shape[1]
    w = w.astype(jnp.bfloat16)
    tm = min(tile_m, M)                       # tm == M (full) or a multiple of 8
    return pl.pallas_call(
        _matmul_kernel,
        out_shape=jax.ShapeDtypeStruct((M, Nc), jnp.float32),
        grid=(pl.cdiv(M, tm),),
        in_specs=[pl.BlockSpec((tm, K), lambda i: (i, 0)),
                  pl.BlockSpec((K, Nc), lambda i: (0, 0))],
        out_specs=pl.BlockSpec((tm, Nc), lambda i: (i, 0)),
        compiler_params=_cp("parallel"),
    )(x, w)


def dwconv3d_silu(x, w, b):
    # x: (B, D, H, W, C); w: (k, k, k, C); b: (C,) -> (B, D, H, W, C)
    # TODO(synk): replace jnp.pad + whole-volume blocks with halo'd D-slab blocks
    #             (manual DMA) to bound per-step VMEM for large volumes (v7x 64 MiB).
    Bn, Dd, Hh, Ww, C = x.shape
    k = w.shape[0]
    K3 = k ** 3
    p = (k - 1) // 2
    xp = jnp.pad(x, ((0, 0), (p, p), (p, p), (p, p), (0, 0)))
    return pl.pallas_call(
        _dwconv_silu_kernel,
        out_shape=jax.ShapeDtypeStruct((Bn, Dd, Hh, Ww, C), jnp.float32),
        grid=(Bn,),
        in_specs=[pl.BlockSpec((None, Dd + 2 * p, Hh + 2 * p, Ww + 2 * p, C),
                               lambda i: (i, 0, 0, 0, 0)),
                  pl.BlockSpec((K3, 1, C), lambda i: (0, 0, 0)),
                  pl.BlockSpec((1, C), lambda i: (0, 0))],
        out_specs=pl.BlockSpec((None, Dd, Hh, Ww, C), lambda i: (i, 0, 0, 0, 0)),
        compiler_params=_cp("parallel"),
    )(xp, w.reshape(K3, 1, C), b.reshape(1, C))


def def_conv_flow(y_tok, vol_shape, w, b):
    # y_tok: (B*L, Cin); w: (3, 3, 3, Cin, 3); b: (3,) -> (B, D, H, W, 3)
    Bn, Dd, Hh, Ww = vol_shape
    Cin = y_tok.shape[-1]
    k = w.shape[0]
    Cout = w.shape[-1]
    K3 = k ** 3
    p = (k - 1) // 2
    width = _round_up(K3 * Cout, 128)                        # 81 -> 128 (lane dense)

    # stage 1: all taps' channel contractions as ONE lane-dense MXU matmul
    wcat = jnp.transpose(w.reshape(K3, Cin, Cout), (1, 0, 2)).reshape(Cin, K3 * Cout)
    wcat = jnp.pad(wcat, ((0, 0), (0, width - K3 * Cout)))
    z = linear(y_tok, wcat)                                  # (B*L, width)

    # TODO(synk): halo'd D-slab blocks instead of whole padded volume + jnp.pad.
    zp = jnp.pad(z.reshape(Bn, Dd, Hh, Ww, width),
                 ((0, 0), (p, p), (p, p), (p, p), (0, 0)))

    # stage 2: pure-VPU shift-and-accumulate (no cross-lane reductions)
    return pl.pallas_call(
        _defconv_accum_kernel,
        out_shape=jax.ShapeDtypeStruct((Bn, Dd, Hh, Ww, Cout), jnp.float32),
        grid=(Bn,),
        in_specs=[pl.BlockSpec((None, Dd + 2 * p, Hh + 2 * p, Ww + 2 * p, width),
                               lambda i: (i, 0, 0, 0, 0)),
                  pl.BlockSpec((1, Cout), lambda i: (0, 0))],
        out_specs=pl.BlockSpec((None, Dd, Hh, Ww, Cout), lambda i: (i, 0, 0, 0, 0)),
        compiler_params=_cp("parallel"),
    )(zp, b.reshape(1, Cout))


def selective_scan(u, dt, At, Bm, Cm, Dv, db):
    # u, dt: (B, L, Din); At: (N, Din); Bm, Cm: (B, L, N); Dv, db: (Din,)
    Bn, L, Din = u.shape
    N = At.shape[0]
    chunk = min(512, _round_up(L, 8))          # multiple of 8; 512 is a multiple of 128
    Lp = _round_up(L, chunk)
    if Lp != L:                                # pad tail rows (discarded after the scan)
        pad = ((0, 0), (0, Lp - L), (0, 0))
        u, dt, Bm, Cm = (jnp.pad(a, pad) for a in (u, dt, Bm, Cm))
    Bm4 = Bm.reshape(Bn, Lp, N, 1)             # per-step (N, 1) columns via leading index
    Cm4 = Cm.reshape(Bn, Lp, N, 1)

    # correctness: batch axis "parallel", L-chunk axis LAST and "arbitrary" (serial
    # recurrence carried in the x_state scratch) -- do not reorder.
    y = pl.pallas_call(
        _scan_kernel,
        out_shape=jax.ShapeDtypeStruct((Bn, Lp, Din), jnp.float32),
        grid=(Bn, Lp // chunk),
        in_specs=[pl.BlockSpec((None, chunk, Din), lambda b, c: (b, c, 0)),
                  pl.BlockSpec((None, chunk, Din), lambda b, c: (b, c, 0)),
                  pl.BlockSpec((None, chunk, N, 1), lambda b, c: (b, c, 0, 0)),
                  pl.BlockSpec((None, chunk, N, 1), lambda b, c: (b, c, 0, 0)),
                  pl.BlockSpec((N, Din), lambda b, c: (0, 0)),
                  pl.BlockSpec((1, Din), lambda b, c: (0, 0)),
                  pl.BlockSpec((1, Din), lambda b, c: (0, 0))],
        out_specs=pl.BlockSpec((None, chunk, Din), lambda b, c: (b, c, 0)),
        scratch_shapes=[pltpu.VMEM((N, Din), jnp.float32),     # packed state
                        pltpu.VMEM((chunk, Din), jnp.float32),  # softplus(dt)
                        pltpu.VMEM((chunk, Din), jnp.float32)], # dt*u
        compiler_params=_cp("parallel", "arbitrary"),
    )(u, dt, Bm4, Cm4, At, Dv.reshape(1, Din), db.reshape(1, Din))
    return y[:, :L, :] if Lp != L else y


def ln_concat_proj(y1, y2, params, tile_m=1024):
    M, Din = y1.shape
    tm = min(tile_m, M)
    w = params['out_proj_w'].T.astype(jnp.bfloat16)            # (2*Din, Din)
    w1, w2 = w[:Din], w[Din:]
    args = (y1, y2,
            params['ln1_g'].reshape(1, Din), params['ln1_b'].reshape(1, Din),
            params['ln2_g'].reshape(1, Din), params['ln2_b'].reshape(1, Din),
            w1, w2, params['out_proj_b'].reshape(1, Din))
    return pl.pallas_call(
        _ln_proj_kernel,
        out_shape=jax.ShapeDtypeStruct((M, Din), jnp.float32),
        grid=(pl.cdiv(M, tm),),
        in_specs=[pl.BlockSpec((tm, Din), lambda i: (i, 0)),
                  pl.BlockSpec((tm, Din), lambda i: (i, 0)),
                  pl.BlockSpec((1, Din), lambda i: (0, 0)),
                  pl.BlockSpec((1, Din), lambda i: (0, 0)),
                  pl.BlockSpec((1, Din), lambda i: (0, 0)),
                  pl.BlockSpec((1, Din), lambda i: (0, 0)),
                  pl.BlockSpec((Din, Din), lambda i: (0, 0)),
                  pl.BlockSpec((Din, Din), lambda i: (0, 0)),
                  pl.BlockSpec((1, Din), lambda i: (0, 0))],
        out_specs=pl.BlockSpec((tm, Din), lambda i: (i, 0)),
        compiler_params=_cp("parallel"),
    )(*args)


# ----------------------------------------------------------------------------
# Full forward (CrossMambaFusion_3DSSM)
# ----------------------------------------------------------------------------

def forward_pallas(params, x1, x2):
    B, Dd, Hh, Ww, C = x1.shape                    # C = d_model
    d_inner = params['in_proj1_w'].shape[1]
    R = params['dt_proj1_w'].shape[0]
    N = params['A_log1'].shape[1]
    L = Dd * Hh * Ww

    # in_proj (bias=False)
    x1p = linear(x1.reshape(B * L, C), params['in_proj1_w']).reshape(B, Dd, Hh, Ww, d_inner)
    x2p = linear(x2.reshape(B * L, C), params['in_proj2_w']).reshape(B, Dd, Hh, Ww, d_inner)

    # depthwise conv3d + SiLU (halo-block kernel, W-shift hoisted)
    x1c = dwconv3d_silu(x1p, params['conv3d_w'], params['conv3d_b'])
    x2c = dwconv3d_silu(x2p, params['conv3d_w'], params['conv3d_b'])
    u1 = x1c.reshape(B, L, d_inner)
    u2 = x2c.reshape(B, L, d_inner)

    # x_proj with dt_proj folded in (exact by matmul associativity); pad the fused
    # output width to a lane-dense multiple of 128 (pad columns are dropped below).
    xw1 = jnp.concatenate([params['x_proj1_w'][:, :R] @ params['dt_proj1_w'],
                           params['x_proj1_w'][:, R:]], axis=1)      # (di, di + 2N)
    xw2 = jnp.concatenate([params['x_proj2_w'][:, :R] @ params['dt_proj2_w'],
                           params['x_proj2_w'][:, R:]], axis=1)
    wpad = _round_up(d_inner + 2 * N, 128) - (d_inner + 2 * N)
    if wpad:
        xw1 = jnp.pad(xw1, ((0, 0), (0, wpad)))
        xw2 = jnp.pad(xw2, ((0, 0), (0, wpad)))
    x1_dbl = linear(u1.reshape(B * L, d_inner), xw1)
    x2_dbl = linear(u2.reshape(B * L, d_inner), xw2)

    dt1 = x1_dbl[:, :d_inner].reshape(B, L, d_inner)
    B1 = x1_dbl[:, d_inner:d_inner + N].reshape(B, L, N)
    C1 = x1_dbl[:, d_inner + N:d_inner + 2 * N].reshape(B, L, N)
    dt2 = x2_dbl[:, :d_inner].reshape(B, L, d_inner)
    B2 = x2_dbl[:, d_inner:d_inner + N].reshape(B, L, N)
    C2 = x2_dbl[:, d_inner + N:d_inner + 2 * N].reshape(B, L, N)

    A1t = (-jnp.exp(params['A_log1'])).T           # (N, d_inner)
    A2t = (-jnp.exp(params['A_log2'])).T

    # cross: stream-1 input driven by stream-2's (dt, A, B, C)
    y1 = selective_scan(u1, dt2, A2t, B2, C2, params['D1'], params['dt_proj1_b'])
    y2 = selective_scan(u2, dt1, A1t, B1, C1, params['D2'], params['dt_proj2_b'])

    y = ln_concat_proj(y1.reshape(B * L, d_inner), y2.reshape(B * L, d_inner), params)

    # def_conv: d_inner -> 3, k=3, pad=1  (MXU contraction + shift-accumulate)
    flow = def_conv_flow(y, (B, Dd, Hh, Ww),
                         params['def_conv_w'], params['def_conv_b'])  # (B,D,H,W,3)
    return flow.transpose(0, 4, 1, 2, 3)                              # (B,3,D,H,W)


# ----------------------------------------------------------------------------
# Pure-JAX reference (mirrors the PyTorch forward)
# ----------------------------------------------------------------------------

def reference_forward(params, x1, x2):
    B, D, H, W, _ = x1.shape
    d_inner = params['in_proj1_w'].shape[1]
    R = params['dt_proj1_w'].shape[0]
    N = params['A_log1'].shape[1]
    L = D * H * W

    x1p = x1 @ params['in_proj1_w']
    x2p = x2 @ params['in_proj2_w']

    def dwconv(x):
        rhs = params['conv3d_w'][:, :, :, None, :]          # (3,3,3,1,C)
        y = lax.conv_general_dilated(x, rhs, (1, 1, 1), [(1, 1)] * 3,
                                     dimension_numbers=('NDHWC', 'DHWIO', 'NDHWC'),
                                     feature_group_count=d_inner)
        y = y + params['conv3d_b']
        return y * jax.nn.sigmoid(y)

    x1c = dwconv(x1p).reshape(B, L, d_inner)
    x2c = dwconv(x2p).reshape(B, L, d_inner)

    def proj_split(xc, xw, dtw):
        dbl = xc @ xw
        return dbl[..., :R] @ dtw, dbl[..., R:R + N], dbl[..., R + N:]

    dt1, B1, C1 = proj_split(x1c, params['x_proj1_w'], params['dt_proj1_w'])
    dt2, B2, C2 = proj_split(x2c, params['x_proj2_w'], params['dt_proj2_w'])
    A1 = -jnp.exp(params['A_log1'])
    A2 = -jnp.exp(params['A_log2'])

    def scan_ref(u, dt, A, Bm, Cm, Dv, db):
        dt = jax.nn.softplus(dt + db)

        def step(x, inp):
            u_l, dt_l, B_l, C_l = inp
            dA = jnp.exp(dt_l[:, :, None] * A[None])
            dBu = dt_l[:, :, None] * B_l[:, None, :] * u_l[:, :, None]
            x = dA * x + dBu
            return x, jnp.sum(x * C_l[:, None, :], axis=-1)

        x0 = jnp.zeros((u.shape[0], u.shape[2], N), jnp.float32)
        _, ys = lax.scan(step, x0, (u.transpose(1, 0, 2), dt.transpose(1, 0, 2),
                                    Bm.transpose(1, 0, 2), Cm.transpose(1, 0, 2)))
        return ys.transpose(1, 0, 2) + u * Dv

    y1 = scan_ref(x1c, dt2, A2, B2, C2, params['D1'], params['dt_proj1_b'])
    y2 = scan_ref(x2c, dt1, A1, B1, C1, params['D2'], params['dt_proj2_b'])

    def ln(y, g, b):
        mu = jnp.mean(y, -1, keepdims=True)
        var = jnp.mean(jnp.square(y - mu), -1, keepdims=True)
        return (y - mu) * lax.rsqrt(var + 1e-5) * g + b

    y1 = ln(y1, params['ln1_g'], params['ln1_b'])
    y2 = ln(y2, params['ln2_g'], params['ln2_b'])
    y = jnp.concatenate([y1, y2], -1) @ params['out_proj_w'].T + params['out_proj_b']

    y5 = y.reshape(B, D, H, W, d_inner)
    flow = lax.conv_general_dilated(y5, params['def_conv_w'], (1, 1, 1), [(1, 1)] * 3,
                                    dimension_numbers=('NDHWC', 'DHWIO', 'NDHWC'))
    flow = flow + params['def_conv_b']
    return flow.transpose(0, 4, 1, 2, 3)


# ----------------------------------------------------------------------------
# Deterministic parameter init (synthetic; mirrors the module's shapes)
# ----------------------------------------------------------------------------

def init_params(key, d_model, d_state, ssm_ratio, dt_rank, d_conv,
                dt_min=0.001, dt_max=0.1, dt_init_floor=1e-4):
    d_inner = int(ssm_ratio * d_model)
    R, N = dt_rank, d_state
    ks = jax.random.split(key, 16)

    def unif(k, shape, fan_in):
        b = 1.0 / math.sqrt(fan_in)
        return jax.random.uniform(k, shape, jnp.float32, -b, b)

    def dt_bias(k):
        dt = jnp.exp(jax.random.uniform(k, (d_inner,), jnp.float32)
                     * (math.log(dt_max) - math.log(dt_min)) + math.log(dt_min))
        dt = jnp.maximum(dt, dt_init_floor)
        return dt + jnp.log(-jnp.expm1(-dt))

    A_log = jnp.log(jnp.broadcast_to(jnp.arange(1, N + 1, dtype=jnp.float32), (d_inner, N)))

    return {
        'in_proj1_w': unif(ks[0], (d_model, d_inner), d_model),
        'in_proj2_w': unif(ks[1], (d_model, d_inner), d_model),
        'conv3d_w': unif(ks[2], (d_conv, d_conv, d_conv, d_inner), d_conv ** 3),
        'conv3d_b': unif(ks[3], (d_inner,), d_conv ** 3),
        'x_proj1_w': unif(ks[4], (d_inner, R + 2 * N), d_inner),
        'x_proj2_w': unif(ks[5], (d_inner, R + 2 * N), d_inner),
        'dt_proj1_w': jax.random.uniform(ks[6], (R, d_inner), jnp.float32, -R ** -0.5, R ** -0.5),
        'dt_proj2_w': jax.random.uniform(ks[7], (R, d_inner), jnp.float32, -R ** -0.5, R ** -0.5),
        'dt_proj1_b': dt_bias(ks[8]),
        'dt_proj2_b': dt_bias(ks[9]),
        'A_log1': A_log,
        'A_log2': A_log,
        'D1': jnp.ones((d_inner,), jnp.float32),
        'D2': jnp.ones((d_inner,), jnp.float32),
        'ln1_g': jnp.ones((d_inner,), jnp.float32),
        'ln1_b': jnp.zeros((d_inner,), jnp.float32),
        'ln2_g': jnp.ones((d_inner,), jnp.float32),
        'ln2_b': jnp.zeros((d_inner,), jnp.float32),
        'out_proj_w': unif(ks[10], (d_inner, 2 * d_inner), 2 * d_inner),
        'out_proj_b': unif(ks[11], (d_inner,), 2 * d_inner),
        'def_conv_w': 1e-5 * jax.random.normal(ks[12], (d_conv, d_conv, d_conv, d_inner, 3), jnp.float32),
        'def_conv_b': jnp.zeros((3,), jnp.float32),
    }


# ----------------------------------------------------------------------------

if __name__ == "__main__":
    # small, module-consistent shapes
    B, D, H, W = 2, 4, 4, 4
    d_model, d_state, ssm_ratio, dt_rank, d_conv = 8, 4, 2, 2, 3

    key = jax.random.PRNGKey(0)
    k_in1, k_in2, k_par = jax.random.split(key, 3)
    x1 = jax.random.normal(k_in1, (B, D, H, W, d_model), jnp.float32)
    x2 = jax.random.normal(k_in2, (B, D, H, W, d_model), jnp.float32)
    params = init_params(k_par, d_model, d_state, ssm_ratio, dt_rank, d_conv)

    out = jax.jit(forward_pallas)(params, x1, x2)
    out = jax.block_until_ready(out)
    assert out.shape == (B, 3, D, H, W)

    ref = reference_forward(params, x1, x2)
    # bf16 MXU operands (f32 accumulate) vs the f32 reference -> slightly looser atol
    np.testing.assert_allclose(np.asarray(out), np.asarray(ref), rtol=5e-2, atol=2e-5)

    print("KERNEL_OK")
</pallas_src>

<mosaic_0001>
module attributes {stable_mosaic.version = 11 : i64} {
  func.func @_matmul_kernel(%arg0: i32, %arg1: memref<128x8xf32, #tpu.memory_space<vmem>>, %arg2: memref<8x16xbf16, #tpu.memory_space<vmem>>, %arg3: memref<128x16xf32, #tpu.memory_space<vmem>>) attributes {dimension_semantics = [#tpu.dimension_semantics<parallel>], iteration_bounds = array<i64: 1>, scalar_prefetch = 0 : i64, scratch_operands = 0 : i64, tpu.core_type = #tpu.core_type<tc>, window_params = [{transform_indices = @transform_0, window_bounds = array<i64: 128, 8>}, {pipeline_mode = #tpu.pipeline_mode<synchronous>, transform_indices = @transform_1, window_bounds = array<i64: 8, 16>}, {transform_indices = @transform_2, window_bounds = array<i64: 128, 16>}]} {
    %c0 = arith.constant 0 : index
    %c0_0 = arith.constant 0 : index
    %0 = vector.load %arg1[%c0, %c0_0] : memref<128x8xf32, #tpu.memory_space<vmem>>, vector<128x8xf32>
    %1 = arith.truncf %0 : vector<128x8xf32> to vector<128x8xbf16>
    %c0_1 = arith.constant 0 : index
    %c0_2 = arith.constant 0 : index
    %2 = vector.load %arg2[%c0_1, %c0_2] : memref<8x16xbf16, #tpu.memory_space<vmem>>, vector<8x16xbf16>
    %cst = arith.constant dense<0.000000e+00> : vector<128x16xf32>
    %3 = tpu.matmul %1, %2, %cst {dimension_numbers = #tpu.dot_dimension_numbers<[1], [0], [0], [1], [0, 0, 1, 1], [], []>} : vector<128x8xbf16>, vector<8x16xbf16>, vector<128x16xf32> -> vector<128x16xf32>
    %c0_3 = arith.constant 0 : index
    %c0_4 = arith.constant 0 : index
    %4 = vector.load %arg3[%c0_3, %c0_4] : memref<128x16xf32, #tpu.memory_space<vmem>>, vector<128x16xf32>
    tpu.vector_store %arg3[%c0_3, %c0_4], %3 {strides = array<i32>} : memref<128x16xf32, #tpu.memory_space<vmem>>, vector<128x16xf32>,
    return
  }
  func.func @transform_0(%arg0: i32) -> (i32, i32) {
    %c0_i32 = arith.constant 0 : i32
    %c0_i32_0 = arith.constant 0 : i32
    return %arg0, %c0_i32 : i32, i32
  }
  func.func @transform_1(%arg0: i32) -> (i32, i32) {
    %c0_i32 = arith.constant 0 : i32
    %c0_i32_0 = arith.constant 0 : i32
    %c0_i32_1 = arith.constant 0 : i32
    return %c0_i32, %c0_i32_0 : i32, i32
  }
  func.func @transform_2(%arg0: i32) -> (i32, i32) {
    %c0_i32 = arith.constant 0 : i32
    %c0_i32_0 = arith.constant 0 : i32
    return %arg0, %c0_i32 : i32, i32
  }
}

module attributes {stable_mosaic.version = 11 : i64} {
  func.func @_dwconv_silu_kernel(%arg0: i32, %arg1: memref<1x6x6x6x16xf32, #tpu.memory_space<vmem>>, %arg2: memref<27x1x16xf32, #tpu.memory_space<vmem>>, %arg3: memref<1x16xf32, #tpu.memory_space<vmem>>, %arg4: memref<1x4x4x4x16xf32, #tpu.memory_space<vmem>>) attributes {dimension_semantics = [#tpu.dimension_semantics<parallel>], iteration_bounds = array<i64: 2>, scalar_prefetch = 0 : i64, scratch_operands = 0 : i64, tpu.core_type = #tpu.core_type<tc>, window_params = [{transform_indices = @transform_0, window_bounds = array<i64: 1, 6, 6, 6, 16>}, {pipeline_mode = #tpu.pipeline_mode<synchronous>, transform_indices = @transform_1, window_bounds = array<i64: 27, 1, 16>}, {pipeline_mode = #tpu.pipeline_mode<synchronous>, transform_indices = @transform_2, window_bounds = array<i64: 1, 16>}, {transform_indices = @transform_3, window_bounds = array<i64: 1, 4, 4, 4, 16>}]} {
    %cst = arith.constant 0.000000e+00 : f32
    %0 = vector.broadcast %cst : f32 to vector<4x4x4x16xf32>
    %c0 = arith.constant 0 : index
    %c0_0 = arith.constant 0 : index
    %c0_1 = arith.constant 0 : index
    %c0_2 = arith.constant 0 : index
    %c0_3 = arith.constant 0 : index
    %1 = vector.load %arg1[%c0, %c0_0, %c0_1, %c0_2, %c0_3] : memref<1x6x6x6x16xf32, #tpu.memory_space<vmem>>, vector<1x6x6x4x16xf32>
    %2 = vector.shape_cast %1 : vector<1x6x6x4x16xf32> to vector<6x6x4x16xf32>
    %3 = vector.extract_strided_slice %2 {offsets = [0, 0, 0, 0], sizes = [4, 4, 4, 16], strides = [1, 1, 1, 1]} : vector<6x6x4x16xf32> to vector<4x4x4x16xf32>
    %c0_4 = arith.constant 0 : index
    %c0_5 = arith.constant 0 : index
    %c0_6 = arith.constant 0 : index
    %4 = vector.load %arg2[%c0_4, %c0_5, %c0_6] : memref<27x1x16xf32, #tpu.memory_space<vmem>>, vector<1x1x16xf32>
    %5 = vector.shape_cast %4 : vector<1x1x16xf32> to vector<1x16xf32>
    %6 = vector.shape_cast %5 : vector<1x16xf32> to vector<1x1x1x16xf32>
    %7 = vector.broadcast %6 : vector<1x1x1x16xf32> to vector<4x4x4x16xf32>
    %8 = arith.mulf %3, %7 : vector<4x4x4x16xf32>
    %9 = arith.addf %0, %8 : vector<4x4x4x16xf32>
    %10 = vector.extract_strided_slice %2 {offsets = [0, 1, 0, 0], sizes = [4, 4, 4, 16], strides = [1, 1, 1, 1]} : vector<6x6x4x16xf32> to vector<4x4x4x16xf32>
    %c3 = arith.constant 3 : index
    %c0_7 = arith.constant 0 : index
    %c0_8 = arith.constant 0 : index
    %11 = vector.load %arg2[%c3, %c0_7, %c0_8] : memref<27x1x16xf32, #tpu.memory_space<vmem>>, vector<1x1x16xf32>
    %12 = vector.shape_cast %11 : vector<1x1x16xf32> to vector<1x16xf32>
    %13 = vector.shape_cast %12 : vector<1x16xf32> to vector<1x1x1x16xf32>
    %14 = vector.broadcast %13 : vector<1x1x1x16xf32> to vector<4x4x4x16xf32>
    %15 = arith.mulf %10, %14 : vector<4x4x4x16xf32>
    %16 = arith.addf %9, %15 : vector<4x4x4x16xf32>
    %17 = vector.extract_strided_slice %2 {offsets = [0, 2, 0, 0], sizes = [4, 4, 4, 16], strides = [1, 1, 1, 1]} : vector<6x6x4x16xf32> to vector<4x4x4x16xf32>
    %c6 = arith.constant 6 : index
    %c0_9 = arith.constant 0 : index
    %c0_10 = arith.constant 0 : index
    %18 = vector.load %arg2[%c6, %c0_9, %c0_10] : memref<27x1x16xf32, #tpu.memory_space<vmem>>, vector<1x1x16xf32>
    %19 = vector.shape_cast %18 : vector<1x1x16xf32> to vector<1x16xf32>
    %20 = vector.shape_cast %19 : vector<1x16xf32> to vector<1x1x1x16xf32>
    %21 = vector.broadcast %20 : vector<1x1x1x16xf32> to vector<4x4x4x16xf32>
    %22 = arith.mulf %17, %21 : vector<4x4x4x16xf32>
    %23 = arith.addf %16, %22 : vector<4x4x4x16xf32>
    %24 = vector.extract_strided_slice %2 {offsets = [1, 0, 0, 0], sizes = [4, 4, 4, 16], strides = [1, 1, 1, 1]} : vector<6x6x4x16xf32> to vector<4x4x4x16xf32>
    %c9 = arith.constant 9 : index
    %c0_11 = arith.constant 0 : index
    %c0_12 = arith.constant 0 : index
    %25 = vector.load %arg2[%c9, %c0_11, %c0_12] : memref<27x1x16xf32, #tpu.memory_space<vmem>>, vector<1x1x16xf32>
    %26 = vector.shape_cast %25 : vector<1x1x16xf32> to vector<1x16xf32>
    %27 = vector.shape_cast %26 : vector<1x16xf32> to vector<1x1x1x16xf32>
    %28 = vector.broadcast %27 : vector<1x1x1x16xf32> to vector<4x4x4x16xf32>
    %29 = arith.mulf %24, %28 : vector<4x4x4x16xf32>
    %30 = arith.addf %23, %29 : vector<4x4x4x16xf32>
    %31 = vector.extract_strided_slice %2 {offsets = [1, 1, 0, 0], sizes = [4, 4, 4, 16], strides = [1, 1, 1, 1]} : vector<6x6x4x16xf32> to vector<4x4x4x16xf32>
    %c12 = arith.constant 12 : index
    %c0_13 = arith.constant 0 : index
    %c0_14 = arith.constant 0 : index
    %32 = vector.load %arg2[%c12, %c0_13, %c0_14] : memref<27x1x16xf32, #tpu.memory_space<vmem>>, vector<1x1x16xf32>
    %33 = vector.shape_cast %32 : vector<1x1x16xf32> to vector<1x16xf32>
    %34 = vector.shape_cast %33 : vector<1x16xf32> to vector<1x1x1x16xf32>
    %35 = vector.broadcast %34 : vector<1x1x1x16xf32> to vector<4x4x4x16xf32>
    %36 = arith.mulf %31, %35 : vector<4x4x4x16xf32>
    %37 = arith.addf %30, %36 : vector<4x4x4x16xf32>
    %38 = vector.extract_strided_slice %2 {offsets = [1, 2, 0, 0], sizes = [4, 4, 4, 16], strides = [1, 1, 1, 1]} : vector<6x6x4x16xf32> to vector<4x4x4x16xf32>
    %c15 = arith.constant 15 : index
    %c0_15 = arith.constant 0 : index
    %c0_16 = arith.constant 0 : index
    %39 = vector.load %arg2[%c15, %c0_15, %c0_16] : memref<27x1x16xf32, #tpu.memory_space<vmem>>, vector<1x1x16xf32>
    %40 = vector.shape_cast %39 : vector<1x1x16xf32> to vector<1x16xf32>
    %41 = vector.shape_cast %40 : vector<1x16xf32> to vector<1x1x1x16xf32>
    %42 = vector.broadcast %41 : vector<1x1x1x16xf32> to vector<4x4x4x16xf32>
    %43 = arith.mulf %38, %42 : vector<4x4x4x16xf32>
    %44 = arith.addf %37, %43 : vector<4x4x4x16xf32>
    %45 = vector.extract_strided_slice %2 {offsets = [2, 0, 0, 0], sizes = [4, 4, 4, 16], strides = [1, 1, 1, 1]} : vector<6x6x4x16xf32> to vector<4x4x4x16xf32>
    %c18 = arith.constant 18 : index
    %c0_17 = arith.constant 0 : index
    %c0_18 = arith.constant 0 : index
    %46 = vector.load %arg2[%c18, %c0_17, %c0_18] : memref<27x1x16xf32, #tpu.memory_space<vmem>>, vector<1x1x16xf32>
    %47 = vector.shape_cast %46 : vector<1x1x16xf32> to vector<1x16xf32>
    %48 = vector.shape_cast %47 : vector<1x16xf32> to vector<1x1x1x16xf32>
    %49 = vector.broadcast %48 : vector<1x1x1x16xf32> to vector<4x4x4x16xf32>
    %50 = arith.mulf %45, %49 : vector<4x4x4x16xf32>
    %51 = arith.addf %44, %50 : vector<4x4x4x16xf32>
    %52 = vector.extract_strided_slice %2 {offsets = [2, 1, 0, 0], sizes = [4, 4, 4, 16], strides = [1, 1, 1, 1]} : vector<6x6x4x16xf32> to vector<4x4x4x16xf32>
    %c21 = arith.constant 21 : index
    %c0_19 = arith.constant 0 : index
    %c0_20 = arith.constant 0 : index
    %53 = vector.load %arg2[%c21, %c0_19, %c0_20] : memref<27x1x16xf32, #tpu.memory_space<vmem>>, vector<1x1x16xf32>
    %54 = vector.shape_cast %53 : vector<1x1x16xf32> to vector<1x16xf32>
    %55 = vector.shape_cast %54 : vector<1x16xf32> to vector<1x1x1x16xf32>
    %56 = vector.broadcast %55 : vector<1x1x1x16xf32> to vector<4x4x4x16xf32>
    %57 = arith.mulf %52, %56 : vector<4x4x4x16xf32>
    %58 = arith.addf %51, %57 : vector<4x4x4x16xf32>
    %59 = vector.extract_strided_slice %2 {offsets = [2, 2, 0, 0], sizes = [4, 4, 4, 16], strides = [1, 1, 1, 1]} : vector<6x6x4x16xf32> to vector<4x4x4x16xf32>
    %c24 = arith.constant 24 : index
    %c0_21 = arith.constant 0 : index
    %c0_22 = arith.constant 0 : index
    %60 = vector.load %arg2[%c24, %c0_21, %c0_22] : memref<27x1x16xf32, #tpu.memory_space<vmem>>, vector<1x1x16xf32>
    %61 = vector.shape_cast %60 : vector<1x1x16xf32> to vector<1x16xf32>
    %62 = vector.shape_cast %61 : vector<1x16xf32> to vector<1x1x1x16xf32>
    %63 = vector.broadcast %62 : vector<1x1x1x16xf32> to vector<4x4x4x16xf32>
    %64 = arith.mulf %59, %63 : vector<4x4x4x16xf32>
    %65 = arith.addf %58, %64 : vector<4x4x4x16xf32>
    %c0_23 = arith.constant 0 : index
    %c0_24 = arith.constant 0 : index
    %c0_25 = arith.constant 0 : index
    %c1 = arith.constant 1 : index
    %c0_26 = arith.constant 0 : index
    %66 = vector.load %arg1[%c0_23, %c0_24, %c0_25, %c1, %c0_26] : memref<1x6x6x6x16xf32, #tpu.memory_space<vmem>>, vector<1x6x6x4x16xf32>
    %67 = vector.shape_cast %66 : vector<1x6x6x4x16xf32> to vector<6x6x4x16xf32>
    %68 = vector.extract_strided_slice %67 {offsets = [0, 0, 0, 0], sizes = [4, 4, 4, 16], strides = [1, 1, 1, 1]} : vector<6x6x4x16xf32> to vector<4x4x4x16xf32>
    %c1_27 = arith.constant 1 : index
    %c0_28 = arith.constant 0 : index
    %c0_29 = arith.constant 0 : index
    %69 = vector.load %arg2[%c1_27, %c0_28, %c0_29] : memref<27x1x16xf32, #tpu.memory_space<vmem>>, vector<1x1x16xf32>
    %70 = vector.shape_cast %69 : vector<1x1x16xf32> to vector<1x16xf32>
    %71 = vector.shape_cast %70 : vector<1x16xf32> to vector<1x1x1x16xf32>
    %72 = vector.broadcast %71 : vector<1x1x1x16xf32> to vector<4x4x4x16xf32>
    %73 = arith.mulf %68, %72 : vector<4x4x4x16xf32>
    %74 = arith.addf %65, %73 : vector<4x4x4x16xf32>
    %75 = vector.extract_strided_slice %67 {offsets = [0, 1, 0, 0], sizes = [4, 4, 4, 16], strides = [1, 1, 1, 1]} : vector<6x6x4x16xf32> to vector<4x4x4x16xf32>
    %c4 = arith.constant 4 : index
    %c0_30 = arith.constant 0 : index
    %c0_31 = arith.constant 0 : index
    %76 = vector.load %arg2[%c4, %c0_30, %c0_31] : memref<27x1x16xf32, #tpu.memory_space<vmem>>, vector<1x1x16xf32>
    %77 = vector.shape_cast %76 : vector<1x1x16xf32> to vector<1x16xf32>
    %78 = vector.shape_cast %77 : vector<1x16xf32> to vector<1x1x1x16xf32>
    %79 = vector.broadcast %78 : vector<1x1x1x16xf32> to vector<4x4x4x16xf32>
    %80 = arith.mulf %75, %79 : vector<4x4x4x16xf32>
    %81 = arith.addf %74, %80 : vector<4x4x4x16xf32>
    %82 = vector.extract_strided_slice %67 {offsets = [0, 2, 0, 0], sizes = [4, 4, 4, 16], strides = [1, 1, 1, 1]} : vector<6x6x4x16xf32> to vector<4x4x4x16xf32>
    %c7 = arith.constant 7 : index
    %c0_32 = arith.constant 0 : index
    %c0_33 = arith.constant 0 : index
    %83 = vector.load %arg2[%c7, %c0_32, %c0_33] : memref<27x1x16xf32, #tpu.memory_space<vmem>>, vector<1x1x16xf32>
    %84 = vector.shape_cast %83 : vector<1x1x16xf32> to vector<1x16xf32>
    %85 = vector.shape_cast %84 : vector<1x16xf32> to vector<1x1x1x16xf32>
    %86 = vector.broadcast %85 : vector<1x1x1x16xf32> to vector<4x4x4x16xf32>
    %87 = arith.mulf %82, %86 : vector<4x4x4x16xf32>
    %88 = arith.addf %81, %87 : vector<4x4x4x16xf32>
    %89 = vector.extract_strided_slice %67 {offsets = [1, 0, 0, 0], sizes = [4, 4, 4, 16], strides = [1, 1, 1, 1]} : vector<6x6x4x16xf32> to vector<4x4x4x16xf32>
    %c10 = arith.constant 10 : index
    %c0_34 = arith.constant 0 : index
    %c0_35 = arith.constant 0 : index
    %90 = vector.load %arg2[%c10, %c0_34, %c0_35] : memref<27x1x16xf32, #tpu.memory_space<vmem>>, vector<1x1x16xf32>
    %91 = vector.shape_cast %90 : vector<1x1x16xf32> to vector<1x16xf32>
    %92 = vector.shape_cast %91 : vector<1x16xf32> to vector<1x1x1x16xf32>
    %93 = vector.broadcast %92 : vector<1x1x1x16xf32> to vector<4x4x4x16xf32>
    %94 = arith.mulf %89, %93 : vector<4x4x4x16xf32>
    %95 = arith.addf %88, %94 : vector<4x4x4x16xf32>
    %96 = vector.extract_strided_slice %67 {offsets = [1, 1, 0, 0], sizes = [4, 4, 4, 16], strides = [1, 1, 1, 1]} : vector<6x6x4x16xf32> to vector<4x4x4x16xf32>
    %c13 = arith.constant 13 : index
    %c0_36 = arith.constant 0 : index
    %c0_37 = arith.constant 0 : index
    %97 = vector.load %arg2[%c13, %c0_36, %c0_37] : memref<27x1x16xf32, #tpu.memory_space<vmem>>, vector<1x1x16xf32>
    %98 = vector.shape_cast %97 : vector<1x1x16xf32> to vector<1x16xf32>
    %99 = vector.shape_cast %98 : vector<1x16xf32> to vector<1x1x1x16xf32>
    %100 = vector.broadcast %99 : vector<1x1x1x16xf32> to vector<4x4x4x16xf32>
    %101 = arith.mulf %96, %100 : vector<4x4x4x16xf32>
    %102 = arith.addf %95, %101 : vector<4x4x4x16xf32>
    %103 = vector.extract_strided_slice %67 {offsets = [1, 2, 0, 0], sizes = [4, 4, 4, 16], strides = [1, 1, 1, 1]} : vector<6x6x4x16xf32> to vector<4x4x4x16xf32>
    %c16 = arith.constant 16 : index
    %c0_38 = arith.constant 0 : index
    %c0_39 = arith.constant 0 : index
    %104 = vector.load %arg2[%c16, %c0_38, %c0_39] : memref<27x1x16xf32, #tpu.memory_space<vmem>>, vector<1x1x16xf32>
    %105 = vector.shape_cast %104 : vector<1x1x16xf32> to vector<1x16xf32>
    %106 = vector.shape_cast %105 : vector<1x16xf32> to vector<1x1x1x16xf32>
    %107 = vector.broadcast %106 : vector<1x1x1x16xf32> to vector<4x4x4x16xf32>
    %108 = arith.mulf %103, %107 : vector<4x4x4x16xf32>
    %109 = arith.addf %102, %108 : vector<4x4x4x16xf32>
    %110 = vector.extract_strided_slice %67 {offsets = [2, 0, 0, 0], sizes = [4, 4, 4, 16], strides = [1, 1, 1, 1]} : vector<6x6x4x16xf32> to vector<4x4x4x16xf32>
    %c19 = arith.constant 19 : index
    %c0_40 = arith.constant 0 : index
    %c0_41 = arith.constant 0 : index
    %111 = vector.load %arg2[%c19, %c0_40, %c0_41] : memref<27x1x16xf32, #tpu.memory_space<vmem>>, vector<1x1x16xf32>
    %112 = vector.shape_cast %111 : vector<1x1x16xf32> to vector<1x16xf32>
    %113 = vector.shape_cast %112 : vector<1x16xf32> to vector<1x1x1x16xf32>
    %114 = vector.broadcast %113 : vector<1x1x1x16xf32> to vector<4x4x4x16xf32>
    %115 = arith.mulf %110, %114 : vector<4x4x4x16xf32>
    %116 = arith.addf %109, %115 : vector<4x4x4x16xf32>
    %117 = vector.extract_strided_slice %67 {offsets = [2, 1, 0, 0], sizes = [4, 4, 4, 16], strides = [1, 1, 1, 1]} : vector<6x6x4x16xf32> to vector<4x4x4x16xf32>
    %c22 = arith.constant 22 : index
    %c0_42 = arith.constant 0 : index
    %c0_43 = arith.constant 0 : index
    %118 = vector.load %arg2[%c22, %c0_42, %c0_43] : memref<27x1x16xf32, #tpu.memory_space<vmem>>, vector<1x1x16xf32>
    %119 = vector.shape_cast %118 : vector<1x1x16xf32> to vector<1x16xf32>
    %120 = vector.shape_cast %119 : vector<1x16xf32> to vector<1x1x1x16xf32>
    %121 = vector.broadcast %120 : vector<1x1x1x16xf32> to vector<4x4x4x16xf32>
    %122 = arith.mulf %117, %121 : vector<4x4x4x16xf32>
    %123 = arith.addf %116, %122 : vector<4x4x4x16xf32>
    %124 = vector.extract_strided_slice %67 {offsets = [2, 2, 0, 0], sizes = [4, 4, 4, 16], strides = [1, 1, 1, 1]} : vector<6x6x4x16xf32> to vector<4x4x4x16xf32>
    %c25 = arith.constant 25 : index
    %c0_44 = arith.constant 0 : index
    %c0_45 = arith.constant 0 : index
    %125 = vector.load %arg2[%c25, %c0_44, %c0_45] : memref<27x1x16xf32, #tpu.memory_space<vmem>>, vector<1x1x16xf32>
    %126 = vector.shape_cast %125 : vector<1x1x16xf32> to vector<1x16xf32>
    %127 = vector.shape_cast %126 : vector<1x16xf32> to vector<1x1x1x16xf32>
    %128 = vector.broadcast %127 : vector<1x1x1x16xf32> to vector<4x4x4x16xf32>
    %129 = arith.mulf %124, %128 : vector<4x4x4x16xf32>
    %130 = arith.addf %123, %129 : vector<4x4x4x16xf32>
    %c0_46 = arith.constant 0 : index
    %c0_47 = arith.constant 0 : index
    %c0_48 = arith.constant 0 : index
    %c2 = arith.constant 2 : index
    %c0_49 = arith.constant 0 : index
    %131 = vector.load %arg1[%c0_46, %c0_47, %c0_48, %c2, %c0_49] : memref<1x6x6x6x16xf32, #tpu.memory_space<vmem>>, vector<1x6x6x4x16xf32>
    %132 = vector.shape_cast %131 : vector<1x6x6x4x16xf32> to vector<6x6x4x16xf32>
    %133 = vector.extract_strided_slice %132 {offsets = [0, 0, 0, 0], sizes = [4, 4, 4, 16], strides = [1, 1, 1, 1]} : vector<6x6x4x16xf32> to vector<4x4x4x16xf32>
    %c2_50 = arith.constant 2 : index
    %c0_51 = arith.constant 0 : index
    %c0_52 = arith.constant 0 : index
    %134 = vector.load %arg2[%c2_50, %c0_51, %c0_52] : memref<27x1x16xf32, #tpu.memory_space<vmem>>, vector<1x1x16xf32>
    %135 = vector.shape_cast %134 : vector<1x1x16xf32> to vector<1x16xf32>
    %136 = vector.shape_cast %135 : vector<1x16xf32> to vector<1x1x1x16xf32>
    %137 = vector.broadcast %136 : vector<1x1x1x16xf32> to vector<4x4x4x16xf32>
    %138 = arith.mulf %133, %137 : vector<4x4x4x16xf32>
    %139 = arith.addf %130, %138 : vector<4x4x4x16xf32>
    %140 = vector.extract_strided_slice %132 {offsets = [0, 1, 0, 0], sizes = [4, 4, 4, 16], strides = [1, 1, 1, 1]} : vector<6x6x4x16xf32> to vector<4x4x4x16xf32>
    %c5 = arith.constant 5 : index
    %c0_53 = arith.constant 0 : index
    %c0_54 = arith.constant 0 : index
    %141 = vector.load %arg2[%c5, %c0_53, %c0_54] : memref<27x1x16xf32, #tpu.memory_space<vmem>>, vector<1x1x16xf32>
    %142 = vector.shape_cast %141 : vector<1x1x16xf32> to vector<1x16xf32>
    %143 = vector.shape_cast %142 : vector<1x16xf32> to vector<1x1x1x16xf32>
    %144 = vector.broadcast %143 : vector<1x1x1x16xf32> to vector<4x4x4x16xf32>
    %145 = arith.mulf %140, %144 : vector<4x4x4x16xf32>
    %146 = arith.addf %139, %145 : vector<4x4x4x16xf32>
    %147 = vector.extract_strided_slice %132 {offsets = [0, 2, 0, 0], sizes = [4, 4, 4, 16], strides = [1, 1, 1, 1]} : vector<6x6x4x16xf32> to vector<4x4x4x16xf32>
    %c8 = arith.constant 8 : index
    %c0_55 = arith.constant 0 : index
    %c0_56 = arith.constant 0 : index
    %148 = vector.load %arg2[%c8, %c0_55, %c0_56] : memref<27x1x16xf32, #tpu.memory_space<vmem>>, vector<1x1x16xf32>
    %149 = vector.shape_cast %148 : vector<1x1x16xf32> to vector<1x16xf32>
    %150 = vector.shape_cast %149 : vector<1x16xf32> to vector<1x1x1x16xf32>
    %151 = vector.broadcast %150 : vector<1x1x1x16xf32> to vector<4x4x4x16xf32>
    %152 = arith.mulf %147, %151 : vector<4x4x4x16xf32>
    %153 = arith.addf %146, %152 : vector<4x4x4x16xf32>
    %154 = vector.extract_strided_slice %132 {offsets = [1, 0, 0, 0], sizes = [4, 4, 4, 16], strides = [1, 1, 1, 1]} : vector<6x6x4x16xf32> to vector<4x4x4x16xf32>
    %c11 = arith.constant 11 : index
    %c0_57 = arith.constant 0 : index
    %c0_58 = arith.constant 0 : index
    %155 = vector.load %arg2[%c11, %c0_57, %c0_58] : memref<27x1x16xf32, #tpu.memory_space<vmem>>, vector<1x1x16xf32>
    %156 = vector.shape_cast %155 : vector<1x1x16xf32> to vector<1x16xf32>
    %157 = vector.shape_cast %156 : vector<1x16xf32> to vector<1x1x1x16xf32>
    %158 = vector.broadcast %157 : vector<1x1x1x16xf32> to vector<4x4x4x16xf32>
    %159 = arith.mulf %154, %158 : vector<4x4x4x16xf32>
    %160 = arith.addf %153, %159 : vector<4x4x4x16xf32>
    %161 = vector.extract_strided_slice %132 {offsets = [1, 1, 0, 0], sizes = [4, 4, 4, 16], strides = [1, 1, 1, 1]} : vector<6x6x4x16xf32> to vector<4x4x4x16xf32>
    %c14 = arith.constant 14 : index
    %c0_59 = arith.constant 0 : index
    %c0_60 = arith.constant 0 : index
    %162 = vector.load %arg2[%c14, %c0_59, %c0_60] : memref<27x1x16xf32, #tpu.memory_space<vmem>>, vector<1x1x16xf32>
    %163 = vector.shape_cast %162 : vector<1x1x16xf32> to vector<1x16xf32>
    %164 = vector.shape_cast %163 : vector<1x16xf32> to vector<1x1x1x16xf32>
    %165 = vector.broadcast %164 : vector<1x1x1x16xf32> to vector<4x4x4x16xf32>
    %166 = arith.mulf %161, %165 : vector<4x4x4x16xf32>
    %167 = arith.addf %160, %166 : vector<4x4x4x16xf32>
    %168 = vector.extract_strided_slice %132 {offsets = [1, 2, 0, 0], sizes = [4, 4, 4, 16], strides = [1, 1, 1, 1]} : vector<6x6x4x16xf32> to vector<4x4x4x16xf32>
    %c17 = arith.constant 17 : index
    %c0_61 = arith.constant 0 : index
    %c0_62 = arith.constant 0 : index
    %169 = vector.load %arg2[%c17, %c0_61, %c0_62] : memref<27x1x16xf32, #tpu.memory_space<vmem>>, vector<1x1x16xf32>
    %170 = vector.shape_cast %169 : vector<1x1x16xf32> to vector<1x16xf32>
    %171 = vector.shape_cast %170 : vector<1x16xf32> to vector<1x1x1x16xf32>
    %172 = vector.broadcast %171 : vector<1x1x1x16xf32> to vector<4x4x4x16xf32>
    %173 = arith.mulf %168, %172 : vector<4x4x4x16xf32>
    %174 = arith.addf %167, %173 : vector<4x4x4x16xf32>
    %175 = vector.extract_strided_slice %132 {offsets = [2, 0, 0, 0], sizes = [4, 4, 4, 16], strides = [1, 1, 1, 1]} : vector<6x6x4x16xf32> to vector<4x4x4x16xf32>
    %c20 = arith.constant 20 : index
    %c0_63 = arith.constant 0 : index
    %c0_64 = arith.constant 0 : index
    %176 = vector.load %arg2[%c20, %c0_63, %c0_64] : memref<27x1x16xf32, #tpu.memory_space<vmem>>, vector<1x1x16xf32>
    %177 = vector.shape_cast %176 : vector<1x1x16xf32> to vector<1x16xf32>
    %178 = vector.shape_cast %177 : vector<1x16xf32> to vector<1x1x1x16xf32>
    %179 = vector.broadcast %178 : vector<1x1x1x16xf32> to vector<4x4x4x16xf32>
    %180 = arith.mulf %175, %179 : vector<4x4x4x16xf32>
    %181 = arith.addf %174, %180 : vector<4x4x4x16xf32>
    %182 = vector.extract_strided_slice %132 {offsets = [2, 1, 0, 0], sizes = [4, 4, 4, 16], strides = [1, 1, 1, 1]} : vector<6x6x4x16xf32> to vector<4x4x4x16xf32>
    %c23 = arith.constant 23 : index
    %c0_65 = arith.constant 0 : index
    %c0_66 = arith.constant 0 : index
    %183 = vector.load %arg2[%c23, %c0_65, %c0_66] : memref<27x1x16xf32, #tpu.memory_space<vmem>>, vector<1x1x16xf32>
    %184 = vector.shape_cast %183 : vector<1x1x16xf32> to vector<1x16xf32>
    %185 = vector.shape_cast %184 : vector<1x16xf32> to vector<1x1x1x16xf32>
    %186 = vector.broadcast %185 : vector<1x1x1x16xf32> to vector<4x4x4x16xf32>
    %187 = arith.mulf %182, %186 : vector<4x4x4x16xf32>
    %188 = arith.addf %181, %187 : vector<4x4x4x16xf32>
    %189 = vector.extract_strided_slice %132 {offsets = [2, 2, 0, 0], sizes = [4, 4, 4, 16], strides = [1, 1, 1, 1]} : vector<6x6x4x16xf32> to vector<4x4x4x16xf32>
    %c26 = arith.constant 26 : index
    %c0_67 = arith.constant 0 : index
    %c0_68 = arith.constant 0 : index
    %190 = vector.load %arg2[%c26, %c0_67, %c0_68] : memref<27x1x16xf32, #tpu.memory_space<vmem>>, vector<1x1x16xf32>
    %191 = vector.shape_cast %190 : vector<1x1x16xf32> to vector<1x16xf32>
    %192 = vector.shape_cast %191 : vector<1x16xf32> to vector<1x1x1x16xf32>
    %193 = vector.broadcast %192 : vector<1x1x1x16xf32> to vector<4x4x4x16xf32>
    %194 = arith.mulf %189, %193 : vector<4x4x4x16xf32>
    %195 = arith.addf %188, %194 : vector<4x4x4x16xf32>
    %c0_69 = arith.constant 0 : index
    %c0_70 = arith.constant 0 : index
    %196 = vector.load %arg3[%c0_69, %c0_70] : memref<1x16xf32, #tpu.memory_space<vmem>>, vector<1x16xf32>
    %197 = vector.shape_cast %196 : vector<1x16xf32> to vector<1x1x1x16xf32>
    %198 = vector.broadcast %197 : vector<1x1x1x16xf32> to vector<4x4x4x16xf32>
    %199 = arith.addf %195, %198 : vector<4x4x4x16xf32>
    %200 = arith.negf %199 : vector<4x4x4x16xf32>
    %201 = math.exp %200 : vector<4x4x4x16xf32>
    %cst_71 = arith.constant 1.000000e+00 : f32
    %202 = vector.broadcast %cst_71 : f32 to vector<4x4x4x16xf32>
    %203 = arith.addf %202, %201 : vector<4x4x4x16xf32>
    %204 = arith.divf %202, %203 : vector<4x4x4x16xf32>
    %205 = arith.mulf %199, %204 : vector<4x4x4x16xf32>
    %c0_72 = arith.constant 0 : index
    %c0_73 = arith.constant 0 : index
    %c0_74 = arith.constant 0 : index
    %c0_75 = arith.constant 0 : index
    %c0_76 = arith.constant 0 : index
    %206 = vector.load %arg4[%c0_72, %c0_73, %c0_74, %c0_75, %c0_76] : memref<1x4x4x4x16xf32, #tpu.memory_space<vmem>>, vector<1x4x4x4x16xf32>
    %207 = vector.shape_cast %206 : vector<1x4x4x4x16xf32> to vector<4x4x4x16xf32>
    %208 = vector.shape_cast %205 : vector<4x4x4x16xf32> to vector<1x4x4x4x16xf32>
    tpu.vector_store %arg4[%c0_72, %c0_73, %c0_74, %c0_75, %c0_76], %208 {strides = array<i32>} : memref<1x4x4x4x16xf32, #tpu.memory_space<vmem>>, vector<1x4x4x4x16xf32>,
    return
  }
  func.func @transform_0(%arg0: i32) -> (i32, i32, i32, i32, i32) {
    %c0_i32 = arith.constant 0 : i32
    %c0_i32_0 = arith.constant 0 : i32
    %c0_i32_1 = arith.constant 0 : i32
    %c0_i32_2 = arith.constant 0 : i32
    %c0_i32_3 = arith.constant 0 : i32
    return %arg0, %c0_i32, %c0_i32_0, %c0_i32_1, %c0_i32_2 : i32, i32, i32, i32, i32
  }
  func.func @transform_1(%arg0: i32) -> (i32, i32, i32) {
    %c0_i32 = arith.constant 0 : i32
    %c0_i32_0 = arith.constant 0 : i32
    %c0_i32_1 = arith.constant 0 : i32
    %c0_i32_2 = arith.constant 0 : i32
    return %c0_i32, %c0_i32_0, %c0_i32_1 : i32, i32, i32
  }
  func.func @transform_2(%arg0: i32) -> (i32, i32) {
    %c0_i32 = arith.constant 0 : i32
    %c0_i32_0 = arith.constant 0 : i32
    %c0_i32_1 = arith.constant 0 : i32
    return %c0_i32, %c0_i32_0 : i32, i32
  }
  func.func @transform_3(%arg0: i32) -> (i32, i32, i32, i32, i32) {
    %c0_i32 = arith.constant 0 : i32
    %c0_i32_0 = arith.constant 0 : i32
    %c0_i32_1 = arith.constant 0 : i32
    %c0_i32_2 = arith.constant 0 : i32
    %c0_i32_3 = arith.constant 0 : i32
    return %arg0, %c0_i32, %c0_i32_0, %c0_i32_1, %c0_i32_2 : i32, i32, i32, i32, i32
  }
}

module attributes {stable_mosaic.version = 11 : i64} {
  func.func @_matmul_kernel(%arg0: i32, %arg1: memref<128x8xf32, #tpu.memory_space<vmem>>, %arg2: memref<8x16xbf16, #tpu.memory_space<vmem>>, %arg3: memref<128x16xf32, #tpu.memory_space<vmem>>) attributes {dimension_semantics = [#tpu.dimension_semantics<parallel>], iteration_bounds = array<i64: 1>, scalar_prefetch = 0 : i64, scratch_operands = 0 : i64, tpu.core_type = #tpu.core_type<tc>, window_params = [{transform_indices = @transform_0, window_bounds = array<i64: 128, 8>}, {pipeline_mode = #tpu.pipeline_mode<synchronous>, transform_indices = @transform_1, window_bounds = array<i64: 8, 16>}, {transform_indices = @transform_2, window_bounds = array<i64: 128, 16>}]} {
    %c0 = arith.constant 0 : index
    %c0_0 = arith.constant 0 : index
    %0 = vector.load %arg1[%c0, %c0_0] : memref<128x8xf32, #tpu.memory_space<vmem>>, vector<128x8xf32>
    %1 = arith.truncf %0 : vector<128x8xf32> to vector<128x8xbf16>
    %c0_1 = arith.constant 0 : index
    %c0_2 = arith.constant 0 : index
    %2 = vector.load %arg2[%c0_1, %c0_2] : memref<8x16xbf16, #tpu.memory_space<vmem>>, vector<8x16xbf16>
    %cst = arith.constant dense<0.000000e+00> : vector<128x16xf32>
    %3 = tpu.matmul %1, %2, %cst {dimension_numbers = #tpu.dot_dimension_numbers<[1], [0], [0], [1], [0, 0, 1, 1], [], []>} : vector<128x8xbf16>, vector<8x16xbf16>, vector<128x16xf32> -> vector<128x16xf32>
    %c0_3 = arith.constant 0 : index
    %c0_4 = arith.constant 0 : index
    %4 = vector.load %arg3[%c0_3, %c0_4] : memref<128x16xf32, #tpu.memory_space<vmem>>, vector<128x16xf32>
    tpu.vector_store %arg3[%c0_3, %c0_4], %3 {strides = array<i32>} : memref<128x16xf32, #tpu.memory_space<vmem>>, vector<128x16xf32>,
    return
  }
  func.func @transform_0(%arg0: i32) -> (i32, i32) {
    %c0_i32 = arith.constant 0 : i32
    %c0_i32_0 = arith.constant 0 : i32
    return %arg0, %c0_i32 : i32, i32
  }
  func.func @transform_1(%arg0: i32) -> (i32, i32) {
    %c0_i32 = arith.constant 0 : i32
    %c0_i32_0 = arith.constant 0 : i32
    %c0_i32_1 = arith.constant 0 : i32
    return %c0_i32, %c0_i32_0 : i32, i32
  }
  func.func @transform_2(%arg0: i32) -> (i32, i32) {
    %c0_i32 = arith.constant 0 : i32
    %c0_i32_0 = arith.constant 0 : i32
    return %arg0, %c0_i32 : i32, i32
  }
}

module attributes {stable_mosaic.version = 11 : i64} {
  func.func @_matmul_kernel(%arg0: i32, %arg1: memref<128x16xf32, #tpu.memory_space<vmem>>, %arg2: memref<16x128xbf16, #tpu.memory_space<vmem>>, %arg3: memref<128x128xf32, #tpu.memory_space<vmem>>) attributes {dimension_semantics = [#tpu.dimension_semantics<parallel>], iteration_bounds = array<i64: 1>, scalar_prefetch = 0 : i64, scratch_operands = 0 : i64, tpu.core_type = #tpu.core_type<tc>, window_params = [{transform_indices = @transform_0, window_bounds = array<i64: 128, 16>}, {pipeline_mode = #tpu.pipeline_mode<synchronous>, transform_indices = @transform_1, window_bounds = array<i64: 16, 128>}, {transform_indices = @transform_2, window_bounds = array<i64: 128, 128>}]} {
    %c0 = arith.constant 0 : index
    %c0_0 = arith.constant 0 : index
    %0 = vector.load %arg1[%c0, %c0_0] : memref<128x16xf32, #tpu.memory_space<vmem>>, vector<128x16xf32>
    %1 = arith.truncf %0 : vector<128x16xf32> to vector<128x16xbf16>
    %c0_1 = arith.constant 0 : index
    %c0_2 = arith.constant 0 : index
    %2 = vector.load %arg2[%c0_1, %c0_2] : memref<16x128xbf16, #tpu.memory_space<vmem>>, vector<16x128xbf16>
    %cst = arith.constant dense<0.000000e+00> : vector<128x128xf32>
    %3 = tpu.matmul %1, %2, %cst {dimension_numbers = #tpu.dot_dimension_numbers<[1], [0], [0], [1], [0, 0, 1, 1], [], []>} : vector<128x16xbf16>, vector<16x128xbf16>, vector<128x128xf32> -> vector<128x128xf32>
    %c0_3 = arith.constant 0 : index
    %c0_4 = arith.constant 0 : index
    %4 = vector.load %arg3[%c0_3, %c0_4] : memref<128x128xf32, #tpu.memory_space<vmem>>, vector<128x128xf32>
    tpu.vector_store %arg3[%c0_3, %c0_4], %3 {strides = array<i32>} : memref<128x128xf32, #tpu.memory_space<vmem>>, vector<128x128xf32>,
    return
  }
  func.func @transform_0(%arg0: i32) -> (i32, i32) {
    %c0_i32 = arith.constant 0 : i32
    %c0_i32_0 = arith.constant 0 : i32
    return %arg0, %c0_i32 : i32, i32
  }
  func.func @transform_1(%arg0: i32) -> (i32, i32) {
    %c0_i32 = arith.constant 0 : i32
    %c0_i32_0 = arith.constant 0 : i32
    %c0_i32_1 = arith.constant 0 : i32
    return %c0_i32, %c0_i32_0 : i32, i32
  }
  func.func @transform_2(%arg0: i32) -> (i32, i32) {
    %c0_i32 = arith.constant 0 : i32
    %c0_i32_0 = arith.constant 0 : i32
    return %arg0, %c0_i32 : i32, i32
  }
}

module attributes {stable_mosaic.version = 11 : i64} {
  func.func @_scan_kernel(%arg0: i32, %arg1: i32, %arg2: memref<1x64x16xf32, #tpu.memory_space<vmem>>, %arg3: memref<1x64x16xf32, #tpu.memory_space<vmem>>, %arg4: memref<1x64x4x1xf32, #tpu.memory_space<vmem>>, %arg5: memref<1x64x4x1xf32, #tpu.memory_space<vmem>>, %arg6: memref<4x16xf32, #tpu.memory_space<vmem>>, %arg7: memref<1x16xf32, #tpu.memory_space<vmem>>, %arg8: memref<1x16xf32, #tpu.memory_space<vmem>>, %arg9: memref<1x64x16xf32, #tpu.memory_space<vmem>>, %arg10: memref<4x16xf32, #tpu.memory_space<vmem>>, %arg11: memref<64x16xf32, #tpu.memory_space<vmem>>, %arg12: memref<64x16xf32, #tpu.memory_space<vmem>>) attributes {dimension_semantics = [#tpu.dimension_semantics<parallel>, #tpu.dimension_semantics<arbitrary>], iteration_bounds = array<i64: 2, 1>, scalar_prefetch = 0 : i64, scratch_operands = 3 : i64, tpu.core_type = #tpu.core_type<tc>, window_params = [{transform_indices = @transform_0, window_bounds = array<i64: 1, 64, 16>}, {transform_indices = @transform_1, window_bounds = array<i64: 1, 64, 16>}, {transform_indices = @transform_2, window_bounds = array<i64: 1, 64, 4, 1>}, {transform_indices = @transform_3, window_bounds = array<i64: 1, 64, 4, 1>}, {pipeline_mode = #tpu.pipeline_mode<synchronous>, transform_indices = @transform_4, window_bounds = array<i64: 4, 16>}, {pipeline_mode = #tpu.pipeline_mode<synchronous>, transform_indices = @transform_5, window_bounds = array<i64: 1, 16>}, {pipeline_mode = #tpu.pipeline_mode<synchronous>, transform_indices = @transform_6, window_bounds = array<i64: 1, 16>}, {transform_indices = @transform_7, window_bounds = array<i64: 1, 64, 16>}]} {
    %c0_i32 = arith.constant 0 : i32
    %0 = arith.cmpi eq, %arg1, %c0_i32 : i32
    %1 = arith.extui %0 : i1 to i32
    %c0_i32_0 = arith.constant 0 : i32
    %2 = arith.cmpi ne, %1, %c0_i32_0 : i32
    scf.if %2 {
      %cst_23 = arith.constant 0.000000e+00 : f32
      %33 = vector.broadcast %cst_23 : f32 to vector<4x16xf32>
      %c0_24 = arith.constant 0 : index
      %c0_25 = arith.constant 0 : index
      %34 = vector.load %arg10[%c0_24, %c0_25] : memref<4x16xf32, #tpu.memory_space<vmem>>, vector<4x16xf32>
      tpu.vector_store %arg10[%c0_24, %c0_25], %33 {strides = array<i32>} : memref<4x16xf32, #tpu.memory_space<vmem>>, vector<4x16xf32>,
    } else {
    }
    %c0 = arith.constant 0 : index
    %c0_1 = arith.constant 0 : index
    %c0_2 = arith.constant 0 : index
    %3 = vector.load %arg3[%c0, %c0_1, %c0_2] : memref<1x64x16xf32, #tpu.memory_space<vmem>>, vector<1x64x16xf32>
    %4 = vector.shape_cast %3 : vector<1x64x16xf32> to vector<64x16xf32>
    %c0_3 = arith.constant 0 : index
    %c0_4 = arith.constant 0 : index
    %5 = vector.load %arg8[%c0_3, %c0_4] : memref<1x16xf32, #tpu.memory_space<vmem>>, vector<1x16xf32>
    %6 = vector.broadcast %5 : vector<1x16xf32> to vector<64x16xf32>
    %7 = arith.addf %4, %6 : vector<64x16xf32>
    %cst = arith.constant 0.000000e+00 : f32
    %8 = vector.broadcast %cst : f32 to vector<64x16xf32>
    %9 = arith.maximumf %7, %8 : vector<64x16xf32>
    %10 = vector.broadcast %cst : f32 to vector<64x16xf32>
    %11 = arith.subf %7, %10 : vector<64x16xf32>
    %12 = arith.cmpf one, %11, %11 : vector<64x16xf32>
    %13 = vector.broadcast %cst : f32 to vector<64x16xf32>
    %14 = arith.addf %7, %13 : vector<64x16xf32>
    %15 = math.absf %11 : vector<64x16xf32>
    %cst_5 = arith.constant 0.000000e+00 : f32
    %16 = vector.broadcast %cst_5 : f32 to vector<64x16xf32>
    %17 = arith.subf %16, %15 : vector<64x16xf32>
    %18 = math.exp %17 : vector<64x16xf32>
    %19 = math.log1p %18 : vector<64x16xf32>
    %20 = arith.addf %9, %19 : vector<64x16xf32>
    %21 = arith.select %12, %14, %20 : vector<64x16xi1>, vector<64x16xf32>
    %c0_6 = arith.constant 0 : index
    %c0_7 = arith.constant 0 : index
    %22 = vector.load %arg11[%c0_6, %c0_7] : memref<64x16xf32, #tpu.memory_space<vmem>>, vector<64x16xf32>
    tpu.vector_store %arg11[%c0_6, %c0_7], %21 {strides = array<i32>} : memref<64x16xf32, #tpu.memory_space<vmem>>, vector<64x16xf32>,
    %c0_8 = arith.constant 0 : index
    %c0_9 = arith.constant 0 : index
    %c0_10 = arith.constant 0 : index
    %23 = vector.load %arg2[%c0_8, %c0_9, %c0_10] : memref<1x64x16xf32, #tpu.memory_space<vmem>>, vector<1x64x16xf32>
    %24 = vector.shape_cast %23 : vector<1x64x16xf32> to vector<64x16xf32>
    %25 = arith.mulf %21, %24 : vector<64x16xf32>
    %c0_11 = arith.constant 0 : index
    %c0_12 = arith.constant 0 : index
    %26 = vector.load %arg12[%c0_11, %c0_12] : memref<64x16xf32, #tpu.memory_space<vmem>>, vector<64x16xf32>
    tpu.vector_store %arg12[%c0_11, %c0_12], %25 {strides = array<i32>} : memref<64x16xf32, #tpu.memory_space<vmem>>, vector<64x16xf32>,
    %c0_13 = arith.constant 0 : index
    %c0_14 = arith.constant 0 : index
    %27 = vector.load %arg6[%c0_13, %c0_14] : memref<4x16xf32, #tpu.memory_space<vmem>>, vector<4x16xf32>
    %c0_15 = arith.constant 0 : index
    %c0_16 = arith.constant 0 : index
    %28 = vector.load %arg7[%c0_15, %c0_16] : memref<1x16xf32, #tpu.memory_space<vmem>>, vector<1x16xf32>
    %c0_17 = arith.constant 0 : index
    %c0_18 = arith.constant 0 : index
    %29 = vector.load %arg10[%c0_17, %c0_18] : memref<4x16xf32, #tpu.memory_space<vmem>>, vector<4x16xf32>
    %c0_i32_19 = arith.constant 0 : i32
    %c8_i32 = arith.constant 8 : i32
    %30 = arith.addi %c0_i32_19, %c8_i32 : i32
    %c1_i32 = arith.constant 1 : i32
    %31 = scf.for %arg13 = %c0_i32_19 to %30 step %c1_i32 iter_args(%arg14 = %29) -> (vector<4x16xf32>)  : i32 {
      %c8_i32_23 = arith.constant 8 : i32
      %33 = arith.muli %arg13, %c8_i32_23 : i32
      %34 = tpu.assume_multiple %33, 8 : i32
      %c0_i32_24 = arith.constant 0 : i32
      %35 = arith.addi %34, %c0_i32_24 : i32
      %36 = arith.index_cast %35 : i32 to index
      %c0_25 = arith.constant 0 : index
      %37 = vector.load %arg11[%36, %c0_25] : memref<64x16xf32, #tpu.memory_space<vmem>>, vector<1x16xf32>
      %38 = vector.broadcast %37 : vector<1x16xf32> to vector<4x16xf32>
      %39 = arith.mulf %38, %27 : vector<4x16xf32>
      %40 = math.exp %39 : vector<4x16xf32>
      %c0_26 = arith.constant 0 : index
      %41 = arith.index_cast %35 : i32 to index
      %c0_27 = arith.constant 0 : index
      %c0_28 = arith.constant 0 : index
      %42 = vector.load %arg4[%c0_26, %41, %c0_27, %c0_28] : memref<1x64x4x1xf32, #tpu.memory_space<vmem>>, vector<1x1x4x1xf32>
      %43 = vector.shape_cast %42 : vector<1x1x4x1xf32> to vector<4x1xf32>
      %44 = arith.index_cast %35 : i32 to index
      %c0_29 = arith.constant 0 : index
      %45 = vector.load %arg12[%44, %c0_29] : memref<64x16xf32, #tpu.memory_space<vmem>>, vector<1x16xf32>
      %46 = vector.broadcast %43 : vector<4x1xf32> to vector<4x16xf32>
      %47 = vector.broadcast %45 : vector<1x16xf32> to vector<4x16xf32>
      %48 = arith.mulf %46, %47 : vector<4x16xf32>
      %49 = arith.mulf %40, %arg14 : vector<4x16xf32>
      %50 = arith.addf %49, %48 : vector<4x16xf32>
      %c0_30 = arith.constant 0 : index
      %51 = arith.index_cast %35 : i32 to index
      %c0_31 = arith.constant 0 : index
      %c0_32 = arith.constant 0 : index
      %52 = vector.load %arg5[%c0_30, %51, %c0_31, %c0_32] : memref<1x64x4x1xf32, #tpu.memory_space<vmem>>, vector<1x1x4x1xf32>
      %53 = vector.shape_cast %52 : vector<1x1x4x1xf32> to vector<4x1xf32>
      %54 = vector.broadcast %53 : vector<4x1xf32> to vector<4x16xf32>
      %55 = arith.mulf %54, %50 : vector<4x16xf32>
      %cst_33 = arith.constant dense<0.000000e+00> : vector<16xf32>
      %56 = vector.multi_reduction <add>, %55, %cst_33 [0] : vector<4x16xf32> to vector<16xf32>
      %57 = vector.shape_cast %56 : vector<16xf32> to vector<1x16xf32>
      %c1_i32_34 = arith.constant 1 : i32
      %58 = arith.addi %34, %c1_i32_34 : i32
      %59 = arith.index_cast %58 : i32 to index
      %c0_35 = arith.constant 0 : index
      %60 = vector.load %arg11[%59, %c0_35] : memref<64x16xf32, #tpu.memory_space<vmem>>, vector<1x16xf32>
      %61 = vector.broadcast %60 : vector<1x16xf32> to vector<4x16xf32>
      %62 = arith.mulf %61, %27 : vector<4x16xf32>
      %63 = math.exp %62 : vector<4x16xf32>
      %c0_36 = arith.constant 0 : index
      %64 = arith.index_cast %58 : i32 to index
      %c0_37 = arith.constant 0 : index
      %c0_38 = arith.constant 0 : index
      %65 = vector.load %arg4[%c0_36, %64, %c0_37, %c0_38] : memref<1x64x4x1xf32, #tpu.memory_space<vmem>>, vector<1x1x4x1xf32>
      %66 = vector.shape_cast %65 : vector<1x1x4x1xf32> to vector<4x1xf32>
      %67 = arith.index_cast %58 : i32 to index
      %c0_39 = arith.constant 0 : index
      %68 = vector.load %arg12[%67, %c0_39] : memref<64x16xf32, #tpu.memory_space<vmem>>, vector<1x16xf32>
      %69 = vector.broadcast %66 : vector<4x1xf32> to vector<4x16xf32>
      %70 = vector.broadcast %68 : vector<1x16xf32> to vector<4x16xf32>
      %71 = arith.mulf %69, %70 : vector<4x16xf32>
      %72 = arith.mulf %63, %50 : vector<4x16xf32>
      %73 = arith.addf %72, %71 : vector<4x16xf32>
      %c0_40 = arith.constant 0 : index
      %74 = arith.index_cast %58 : i32 to index
      %c0_41 = arith.constant 0 : index
      %c0_42 = arith.constant 0 : index
      %75 = vector.load %arg5[%c0_40, %74, %c0_41, %c0_42] : memref<1x64x4x1xf32, #tpu.memory_space<vmem>>, vector<1x1x4x1xf32>
      %76 = vector.shape_cast %75 : vector<1x1x4x1xf32> to vector<4x1xf32>
      %77 = vector.broadcast %76 : vector<4x1xf32> to vector<4x16xf32>
      %78 = arith.mulf %77, %73 : vector<4x16xf32>
      %cst_43 = arith.constant dense<0.000000e+00> : vector<16xf32>
      %79 = vector.multi_reduction <add>, %78, %cst_43 [0] : vector<4x16xf32> to vector<16xf32>
      %80 = vector.shape_cast %79 : vector<16xf32> to vector<1x16xf32>
      %c2_i32 = arith.constant 2 : i32
      %81 = arith.addi %34, %c2_i32 : i32
      %82 = arith.index_cast %81 : i32 to index
      %c0_44 = arith.constant 0 : index
      %83 = vector.load %arg11[%82, %c0_44] : memref<64x16xf32, #tpu.memory_space<vmem>>, vector<1x16xf32>
      %84 = vector.broadcast %83 : vector<1x16xf32> to vector<4x16xf32>
      %85 = arith.mulf %84, %27 : vector<4x16xf32>
      %86 = math.exp %85 : vector<4x16xf32>
      %c0_45 = arith.constant 0 : index
      %87 = arith.index_cast %81 : i32 to index
      %c0_46 = arith.constant 0 : index
      %c0_47 = arith.constant 0 : index
      %88 = vector.load %arg4[%c0_45, %87, %c0_46, %c0_47] : memref<1x64x4x1xf32, #tpu.memory_space<vmem>>, vector<1x1x4x1xf32>
      %89 = vector.shape_cast %88 : vector<1x1x4x1xf32> to vector<4x1xf32>
      %90 = arith.index_cast %81 : i32 to index
      %c0_48 = arith.constant 0 : index
      %91 = vector.load %arg12[%90, %c0_48] : memref<64x16xf32, #tpu.memory_space<vmem>>, vector<1x16xf32>
      %92 = vector.broadcast %89 : vector<4x1xf32> to vector<4x16xf32>
      %93 = vector.broadcast %91 : vector<1x16xf32> to vector<4x16xf32>
      %94 = arith.mulf %92, %93 : vector<4x16xf32>
      %95 = arith.mulf %86, %73 : vector<4x16xf32>
      %96 = arith.addf %95, %94 : vector<4x16xf32>
      %c0_49 = arith.constant 0 : index
      %97 = arith.index_cast %81 : i32 to index
      %c0_50 = arith.constant 0 : index
      %c0_51 = arith.constant 0 : index
      %98 = vector.load %arg5[%c0_49, %97, %c0_50, %c0_51] : memref<1x64x4x1xf32, #tpu.memory_space<vmem>>, vector<1x1x4x1xf32>
      %99 = vector.shape_cast %98 : vector<1x1x4x1xf32> to vector<4x1xf32>
      %100 = vector.broadcast %99 : vector<4x1xf32> to vector<4x16xf32>
      %101 = arith.mulf %100, %96 : vector<4x16xf32>
      %cst_52 = arith.constant dense<0.000000e+00> : vector<16xf32>
      %102 = vector.multi_reduction <add>, %101, %cst_52 [0] : vector<4x16xf32> to vector<16xf32>
      %103 = vector.shape_cast %102 : vector<16xf32> to vector<1x16xf32>
      %c3_i32 = arith.constant 3 : i32
      %104 = arith.addi %34, %c3_i32 : i32
      %105 = arith.index_cast %104 : i32 to index
      %c0_53 = arith.constant 0 : index
      %106 = vector.load %arg11[%105, %c0_53] : memref<64x16xf32, #tpu.memory_space<vmem>>, vector<1x16xf32>
      %107 = vector.broadcast %106 : vector<1x16xf32> to vector<4x16xf32>
      %108 = arith.mulf %107, %27 : vector<4x16xf32>
      %109 = math.exp %108 : vector<4x16xf32>
      %c0_54 = arith.constant 0 : index
      %110 = arith.index_cast %104 : i32 to index
      %c0_55 = arith.constant 0 : index
      %c0_56 = arith.constant 0 : index
      %111 = vector.load %arg4[%c0_54, %110, %c0_55, %c0_56] : memref<1x64x4x1xf32, #tpu.memory_space<vmem>>, vector<1x1x4x1xf32>
      %112 = vector.shape_cast %111 : vector<1x1x4x1xf32> to vector<4x1xf32>
      %113 = arith.index_cast %104 : i32 to index
      %c0_57 = arith.constant 0 : index
      %114 = vector.load %arg12[%113, %c0_57] : memref<64x16xf32, #tpu.memory_space<vmem>>, vector<1x16xf32>
      %115 = vector.broadcast %112 : vector<4x1xf32> to vector<4x16xf32>
      %116 = vector.broadcast %114 : vector<1x16xf32> to vector<4x16xf32>
      %117 = arith.mulf %115, %116 : vector<4x16xf32>
      %118 = arith.mulf %109, %96 : vector<4x16xf32>
      %119 = arith.addf %118, %117 : vector<4x16xf32>
      %c0_58 = arith.constant 0 : index
      %120 = arith.index_cast %104 : i32 to index
      %c0_59 = arith.constant 0 : index
      %c0_60 = arith.constant 0 : index
      %121 = vector.load %arg5[%c0_58, %120, %c0_59, %c0_60] : memref<1x64x4x1xf32, #tpu.memory_space<vmem>>, vector<1x1x4x1xf32>
      %122 = vector.shape_cast %121 : vector<1x1x4x1xf32> to vector<4x1xf32>
      %123 = vector.broadcast %122 : vector<4x1xf32> to vector<4x16xf32>
      %124 = arith.mulf %123, %119 : vector<4x16xf32>
      %cst_61 = arith.constant dense<0.000000e+00> : vector<16xf32>
      %125 = vector.multi_reduction <add>, %124, %cst_61 [0] : vector<4x16xf32> to vector<16xf32>
      %126 = vector.shape_cast %125 : vector<16xf32> to vector<1x16xf32>
      %c4_i32 = arith.constant 4 : i32
      %127 = arith.addi %34, %c4_i32 : i32
      %128 = arith.index_cast %127 : i32 to index
      %c0_62 = arith.constant 0 : index
      %129 = vector.load %arg11[%128, %c0_62] : memref<64x16xf32, #tpu.memory_space<vmem>>, vector<1x16xf32>
      %130 = vector.broadcast %129 : vector<1x16xf32> to vector<4x16xf32>
      %131 = arith.mulf %130, %27 : vector<4x16xf32>
      %132 = math.exp %131 : vector<4x16xf32>
      %c0_63 = arith.constant 0 : index
      %133 = arith.index_cast %127 : i32 to index
      %c0_64 = arith.constant 0 : index
      %c0_65 = arith.constant 0 : index
      %134 = vector.load %arg4[%c0_63, %133, %c0_64, %c0_65] : memref<1x64x4x1xf32, #tpu.memory_space<vmem>>, vector<1x1x4x1xf32>
      %135 = vector.shape_cast %134 : vector<1x1x4x1xf32> to vector<4x1xf32>
      %136 = arith.index_cast %127 : i32 to index
      %c0_66 = arith.constant 0 : index
      %137 = vector.load %arg12[%136, %c0_66] : memref<64x16xf32, #tpu.memory_space<vmem>>, vector<1x16xf32>
      %138 = vector.broadcast %135 : vector<4x1xf32> to vector<4x16xf32>
      %139 = vector.broadcast %137 : vector<1x16xf32> to vector<4x16xf32>
      %140 = arith.mulf %138, %139 : vector<4x16xf32>
      %141 = arith.mulf %132, %119 : vector<4x16xf32>
      %142 = arith.addf %141, %140 : vector<4x16xf32>
      %c0_67 = arith.constant 0 : index
      %143 = arith.index_cast %127 : i32 to index
      %c0_68 = arith.constant 0 : index
      %c0_69 = arith.constant 0 : index
      %144 = vector.load %arg5[%c0_67, %143, %c0_68, %c0_69] : memref<1x64x4x1xf32, #tpu.memory_space<vmem>>, vector<1x1x4x1xf32>
      %145 = vector.shape_cast %144 : vector<1x1x4x1xf32> to vector<4x1xf32>
      %146 = vector.broadcast %145 : vector<4x1xf32> to vector<4x16xf32>
      %147 = arith.mulf %146, %142 : vector<4x16xf32>
      %cst_70 = arith.constant dense<0.000000e+00> : vector<16xf32>
      %148 = vector.multi_reduction <add>, %147, %cst_70 [0] : vector<4x16xf32> to vector<16xf32>
      %149 = vector.shape_cast %148 : vector<16xf32> to vector<1x16xf32>
      %c5_i32 = arith.constant 5 : i32
      %150 = arith.addi %34, %c5_i32 : i32
      %151 = arith.index_cast %150 : i32 to index
      %c0_71 = arith.constant 0 : index
      %152 = vector.load %arg11[%151, %c0_71] : memref<64x16xf32, #tpu.memory_space<vmem>>, vector<1x16xf32>
      %153 = vector.broadcast %152 : vector<1x16xf32> to vector<4x16xf32>
      %154 = arith.mulf %153, %27 : vector<4x16xf32>
      %155 = math.exp %154 : vector<4x16xf32>
      %c0_72 = arith.constant 0 : index
      %156 = arith.index_cast %150 : i32 to index
      %c0_73 = arith.constant 0 : index
      %c0_74 = arith.constant 0 : index
      %157 = vector.load %arg4[%c0_72, %156, %c0_73, %c0_74] : memref<1x64x4x1xf32, #tpu.memory_space<vmem>>, vector<1x1x4x1xf32>
      %158 = vector.shape_cast %157 : vector<1x1x4x1xf32> to vector<4x1xf32>
      %159 = arith.index_cast %150 : i32 to index
      %c0_75 = arith.constant 0 : index
      %160 = vector.load %arg12[%159, %c0_75] : memref<64x16xf32, #tpu.memory_space<vmem>>, vector<1x16xf32>
      %161 = vector.broadcast %158 : vector<4x1xf32> to vector<4x16xf32>
      %162 = vector.broadcast %160 : vector<1x16xf32> to vector<4x16xf32>
      %163 = arith.mulf %161, %162 : vector<4x16xf32>
      %164 = arith.mulf %155, %142 : vector<4x16xf32>
      %165 = arith.addf %164, %163 : vector<4x16xf32>
      %c0_76 = arith.constant 0 : index
      %166 = arith.index_cast %150 : i32 to index
      %c0_77 = arith.constant 0 : index
      %c0_78 = arith.constant 0 : index
      %167 = vector.load %arg5[%c0_76, %166, %c0_77, %c0_78] : memref<1x64x4x1xf32, #tpu.memory_space<vmem>>, vector<1x1x4x1xf32>
      %168 = vector.shape_cast %167 : vector<1x1x4x1xf32> to vector<4x1xf32>
      %169 = vector.broadcast %168 : vector<4x1xf32> to vector<4x16xf32>
      %170 = arith.mulf %169, %165 : vector<4x16xf32>
      %cst_79 = arith.constant dense<0.000000e+00> : vector<16xf32>
      %171 = vector.multi_reduction <add>, %170, %cst_79 [0] : vector<4x16xf32> to vector<16xf32>
      %172 = vector.shape_cast %171 : vector<16xf32> to vector<1x16xf32>
      %c6_i32 = arith.constant 6 : i32
      %173 = arith.addi %34, %c6_i32 : i32
      %174 = arith.index_cast %173 : i32 to index
      %c0_80 = arith.constant 0 : index
      %175 = vector.load %arg11[%174, %c0_80] : memref<64x16xf32, #tpu.memory_space<vmem>>, vector<1x16xf32>
      %176 = vector.broadcast %175 : vector<1x16xf32> to vector<4x16xf32>
      %177 = arith.mulf %176, %27 : vector<4x16xf32>
      %178 = math.exp %177 : vector<4x16xf32>
      %c0_81 = arith.constant 0 : index
      %179 = arith.index_cast %173 : i32 to index
      %c0_82 = arith.constant 0 : index
      %c0_83 = arith.constant 0 : index
      %180 = vector.load %arg4[%c0_81, %179, %c0_82, %c0_83] : memref<1x64x4x1xf32, #tpu.memory_space<vmem>>, vector<1x1x4x1xf32>
      %181 = vector.shape_cast %180 : vector<1x1x4x1xf32> to vector<4x1xf32>
      %182 = arith.index_cast %173 : i32 to index
      %c0_84 = arith.constant 0 : index
      %183 = vector.load %arg12[%182, %c0_84] : memref<64x16xf32, #tpu.memory_space<vmem>>, vector<1x16xf32>
      %184 = vector.broadcast %181 : vector<4x1xf32> to vector<4x16xf32>
      %185 = vector.broadcast %183 : vector<1x16xf32> to vector<4x16xf32>
      %186 = arith.mulf %184, %185 : vector<4x16xf32>
      %187 = arith.mulf %178, %165 : vector<4x16xf32>
      %188 = arith.addf %187, %186 : vector<4x16xf32>
      %c0_85 = arith.constant 0 : index
      %189 = arith.index_cast %173 : i32 to index
      %c0_86 = arith.constant 0 : index
      %c0_87 = arith.constant 0 : index
      %190 = vector.load %arg5[%c0_85, %189, %c0_86, %c0_87] : memref<1x64x4x1xf32, #tpu.memory_space<vmem>>, vector<1x1x4x1xf32>
      %191 = vector.shape_cast %190 : vector<1x1x4x1xf32> to vector<4x1xf32>
      %192 = vector.broadcast %191 : vector<4x1xf32> to vector<4x16xf32>
      %193 = arith.mulf %192, %188 : vector<4x16xf32>
      %cst_88 = arith.constant dense<0.000000e+00> : vector<16xf32>
      %194 = vector.multi_reduction <add>, %193, %cst_88 [0] : vector<4x16xf32> to vector<16xf32>
      %195 = vector.shape_cast %194 : vector<16xf32> to vector<1x16xf32>
      %c7_i32 = arith.constant 7 : i32
      %196 = arith.addi %34, %c7_i32 : i32
      %197 = arith.index_cast %196 : i32 to index
      %c0_89 = arith.constant 0 : index
      %198 = vector.load %arg11[%197, %c0_89] : memref<64x16xf32, #tpu.memory_space<vmem>>, vector<1x16xf32>
      %199 = vector.broadcast %198 : vector<1x16xf32> to vector<4x16xf32>
      %200 = arith.mulf %199, %27 : vector<4x16xf32>
      %201 = math.exp %200 : vector<4x16xf32>
      %c0_90 = arith.constant 0 : index
      %202 = arith.index_cast %196 : i32 to index
      %c0_91 = arith.constant 0 : index
      %c0_92 = arith.constant 0 : index
      %203 = vector.load %arg4[%c0_90, %202, %c0_91, %c0_92] : memref<1x64x4x1xf32, #tpu.memory_space<vmem>>, vector<1x1x4x1xf32>
      %204 = vector.shape_cast %203 : vector<1x1x4x1xf32> to vector<4x1xf32>
      %205 = arith.index_cast %196 : i32 to index
      %c0_93 = arith.constant 0 : index
      %206 = vector.load %arg12[%205, %c0_93] : memref<64x16xf32, #tpu.memory_space<vmem>>, vector<1x16xf32>
      %207 = vector.broadcast %204 : vector<4x1xf32> to vector<4x16xf32>
      %208 = vector.broadcast %206 : vector<1x16xf32> to vector<4x16xf32>
      %209 = arith.mulf %207, %208 : vector<4x16xf32>
      %210 = arith.mulf %201, %188 : vector<4x16xf32>
      %211 = arith.addf %210, %209 : vector<4x16xf32>
      %c0_94 = arith.constant 0 : index
      %212 = arith.index_cast %196 : i32 to index
      %c0_95 = arith.constant 0 : index
      %c0_96 = arith.constant 0 : index
      %213 = vector.load %arg5[%c0_94, %212, %c0_95, %c0_96] : memref<1x64x4x1xf32, #tpu.memory_space<vmem>>, vector<1x1x4x1xf32>
      %214 = vector.shape_cast %213 : vector<1x1x4x1xf32> to vector<4x1xf32>
      %215 = vector.broadcast %214 : vector<4x1xf32> to vector<4x16xf32>
      %216 = arith.mulf %215, %211 : vector<4x16xf32>
      %cst_97 = arith.constant dense<0.000000e+00> : vector<16xf32>
      %217 = vector.multi_reduction <add>, %216, %cst_97 [0] : vector<4x16xf32> to vector<16xf32>
      %218 = vector.shape_cast %217 : vector<16xf32> to vector<1x16xf32>
      %219 = tpu.concatenate %57, %80, %103, %126, %149, %172, %195, %218 in 0 : vector<1x16xf32>, vector<1x16xf32>, vector<1x16xf32>, vector<1x16xf32>, vector<1x16xf32>, vector<1x16xf32>, vector<1x16xf32>, vector<1x16xf32> -> vector<8x16xf32>
      %c0_98 = arith.constant 0 : index
      %220 = arith.index_cast %34 : i32 to index
      %c0_99 = arith.constant 0 : index
      %221 = vector.load %arg2[%c0_98, %220, %c0_99] : memref<1x64x16xf32, #tpu.memory_space<vmem>>, vector<1x8x16xf32>
      %222 = vector.shape_cast %221 : vector<1x8x16xf32> to vector<8x16xf32>
      %223 = vector.broadcast %28 : vector<1x16xf32> to vector<8x16xf32>
      %224 = arith.mulf %222, %223 : vector<8x16xf32>
      %225 = arith.addf %219, %224 : vector<8x16xf32>
      %c0_100 = arith.constant 0 : index
      %226 = arith.index_cast %34 : i32 to index
      %c0_101 = arith.constant 0 : index
      %227 = vector.load %arg9[%c0_100, %226, %c0_101] : memref<1x64x16xf32, #tpu.memory_space<vmem>>, vector<1x8x16xf32>
      %228 = vector.shape_cast %227 : vector<1x8x16xf32> to vector<8x16xf32>
      %229 = vector.shape_cast %225 : vector<8x16xf32> to vector<1x8x16xf32>
      tpu.vector_store %arg9[%c0_100, %226, %c0_101], %229 {strides = array<i32>} : memref<1x64x16xf32, #tpu.memory_space<vmem>>, vector<1x8x16xf32>,
      scf.yield %211 : vector<4x16xf32>
    }
    %c8_i32_20 = arith.constant 8 : i32
    %c0_21 = arith.constant 0 : index
    %c0_22 = arith.constant 0 : index
    %32 = vector.load %arg10[%c0_21, %c0_22] : memref<4x16xf32, #tpu.memory_space<vmem>>, vector<4x16xf32>
    tpu.vector_store %arg10[%c0_21, %c0_22], %31 {strides = array<i32>} : memref<4x16xf32, #tpu.memory_space<vmem>>, vector<4x16xf32>,
    return
  }
  func.func @transform_0(%arg0: i32, %arg1: i32) -> (i32, i32, i32) {
    %c0_i32 = arith.constant 0 : i32
    %c0_i32_0 = arith.constant 0 : i32
    return %arg0, %arg1, %c0_i32 : i32, i32, i32
  }
  func.func @transform_1(%arg0: i32, %arg1: i32) -> (i32, i32, i32) {
    %c0_i32 = arith.constant 0 : i32
    %c0_i32_0 = arith.constant 0 : i32
    return %arg0, %arg1, %c0_i32 : i32, i32, i32
  }
  func.func @transform_2(%arg0: i32, %arg1: i32) -> (i32, i32, i32, i32) {
    %c0_i32 = arith.constant 0 : i32
    %c0_i32_0 = arith.constant 0 : i32
    %c0_i32_1 = arith.constant 0 : i32
    return %arg0, %arg1, %c0_i32, %c0_i32_0 : i32, i32, i32, i32
  }
  func.func @transform_3(%arg0: i32, %arg1: i32) -> (i32, i32, i32, i32) {
    %c0_i32 = arith.constant 0 : i32
    %c0_i32_0 = arith.constant 0 : i32
    %c0_i32_1 = arith.constant 0 : i32
    return %arg0, %arg1, %c0_i32, %c0_i32_0 : i32, i32, i32, i32
  }
  func.func @transform_4(%arg0: i32, %arg1: i32) -> (i32, i32) {
    %c0_i32 = arith.constant 0 : i32
    %c0_i32_0 = arith.constant 0 : i32
    %c0_i32_1 = arith.constant 0 : i32
    return %c0_i32, %c0_i32_0 : i32, i32
  }
  func.func @transform_5(%arg0: i32, %arg1: i32) -> (i32, i32) {
    %c0_i32 = arith.constant 0 : i32
    %c0_i32_0 = arith.constant 0 : i32
    %c0_i32_1 = arith.constant 0 : i32
    return %c0_i32, %c0_i32_0 : i32, i32
  }
  func.func @transform_6(%arg0: i32, %arg1: i32) -> (i32, i32) {
    %c0_i32 = arith.constant 0 : i32
    %c0_i32_0 = arith.constant 0 : i32
    %c0_i32_1 = arith.constant 0 : i32
    return %c0_i32, %c0_i32_0 : i32, i32
  }
  func.func @transform_7(%arg0: i32, %arg1: i32) -> (i32, i32, i32) {
    %c0_i32 = arith.constant 0 : i32
    %c0_i32_0 = arith.constant 0 : i32
    return %arg0, %arg1, %c0_i32 : i32, i32, i32
  }
}

module attributes {stable_mosaic.version = 11 : i64} {
  func.func @_ln_proj_kernel(%arg0: i32, %arg1: memref<128x16xf32, #tpu.memory_space<vmem>>, %arg2: memref<128x16xf32, #tpu.memory_space<vmem>>, %arg3: memref<1x16xf32, #tpu.memory_space<vmem>>, %arg4: memref<1x16xf32, #tpu.memory_space<vmem>>, %arg5: memref<1x16xf32, #tpu.memory_space<vmem>>, %arg6: memref<1x16xf32, #tpu.memory_space<vmem>>, %arg7: memref<16x16xbf16, #tpu.memory_space<vmem>>, %arg8: memref<16x16xbf16, #tpu.memory_space<vmem>>, %arg9: memref<1x16xf32, #tpu.memory_space<vmem>>, %arg10: memref<128x16xf32, #tpu.memory_space<vmem>>) attributes {dimension_semantics = [#tpu.dimension_semantics<parallel>], iteration_bounds = array<i64: 1>, scalar_prefetch = 0 : i64, scratch_operands = 0 : i64, tpu.core_type = #tpu.core_type<tc>, window_params = [{transform_indices = @transform_0, window_bounds = array<i64: 128, 16>}, {transform_indices = @transform_1, window_bounds = array<i64: 128, 16>}, {pipeline_mode = #tpu.pipeline_mode<synchronous>, transform_indices = @transform_2, window_bounds = array<i64: 1, 16>}, {pipeline_mode = #tpu.pipeline_mode<synchronous>, transform_indices = @transform_3, window_bounds = array<i64: 1, 16>}, {pipeline_mode = #tpu.pipeline_mode<synchronous>, transform_indices = @transform_4, window_bounds = array<i64: 1, 16>}, {pipeline_mode = #tpu.pipeline_mode<synchronous>, transform_indices = @transform_5, window_bounds = array<i64: 1, 16>}, {pipeline_mode = #tpu.pipeline_mode<synchronous>, transform_indices = @transform_6, window_bounds = array<i64: 16, 16>}, {pipeline_mode = #tpu.pipeline_mode<synchronous>, transform_indices = @transform_7, window_bounds = array<i64: 16, 16>}, {pipeline_mode = #tpu.pipeline_mode<synchronous>, transform_indices = @transform_8, window_bounds = array<i64: 1, 16>}, {transform_indices = @transform_9, window_bounds = array<i64: 128, 16>}]} {
    %c0 = arith.constant 0 : index
    %c0_0 = arith.constant 0 : index
    %0 = vector.load %arg1[%c0, %c0_0] : memref<128x16xf32, #tpu.memory_space<vmem>>, vector<128x16xf32>
    %c0_1 = arith.constant 0 : index
    %c0_2 = arith.constant 0 : index
    %1 = vector.load %arg3[%c0_1, %c0_2] : memref<1x16xf32, #tpu.memory_space<vmem>>, vector<1x16xf32>
    %c0_3 = arith.constant 0 : index
    %c0_4 = arith.constant 0 : index
    %2 = vector.load %arg4[%c0_3, %c0_4] : memref<1x16xf32, #tpu.memory_space<vmem>>, vector<1x16xf32>
    %cst = arith.constant dense<0.000000e+00> : vector<128xf32>
    %3 = vector.multi_reduction <add>, %0, %cst [1] : vector<128x16xf32> to vector<128xf32>
    %4 = vector.shape_cast %3 : vector<128xf32> to vector<128x1xf32>
    %cst_5 = arith.constant 1.600000e+01 : f32
    %5 = vector.broadcast %cst_5 : f32 to vector<128x1xf32>
    %6 = arith.divf %4, %5 : vector<128x1xf32>
    %7 = vector.broadcast %6 : vector<128x1xf32> to vector<128x16xf32>
    %8 = arith.subf %0, %7 : vector<128x16xf32>
    %9 = arith.mulf %8, %8 : vector<128x16xf32>
    %cst_6 = arith.constant dense<0.000000e+00> : vector<128xf32>
    %10 = vector.multi_reduction <add>, %9, %cst_6 [1] : vector<128x16xf32> to vector<128xf32>
    %11 = vector.shape_cast %10 : vector<128xf32> to vector<128x1xf32>
    %cst_7 = arith.constant 1.600000e+01 : f32
    %12 = vector.broadcast %cst_7 : f32 to vector<128x1xf32>
    %13 = arith.divf %11, %12 : vector<128x1xf32>
    %14 = vector.broadcast %6 : vector<128x1xf32> to vector<128x16xf32>
    %15 = arith.subf %0, %14 : vector<128x16xf32>
    %cst_8 = arith.constant 9.99999974E-6 : f32
    %16 = vector.broadcast %cst_8 : f32 to vector<128x1xf32>
    %17 = arith.addf %13, %16 : vector<128x1xf32>
    %18 = math.rsqrt %17 : vector<128x1xf32>
    %19 = vector.broadcast %18 : vector<128x1xf32> to vector<128x16xf32>
    %20 = arith.mulf %15, %19 : vector<128x16xf32>
    %21 = vector.broadcast %1 : vector<1x16xf32> to vector<128x16xf32>
    %22 = arith.mulf %20, %21 : vector<128x16xf32>
    %23 = vector.broadcast %2 : vector<1x16xf32> to vector<128x16xf32>
    %24 = arith.addf %22, %23 : vector<128x16xf32>
    %25 = arith.truncf %24 : vector<128x16xf32> to vector<128x16xbf16>
    %c0_9 = arith.constant 0 : index
    %c0_10 = arith.constant 0 : index
    %26 = vector.load %arg2[%c0_9, %c0_10] : memref<128x16xf32, #tpu.memory_space<vmem>>, vector<128x16xf32>
    %c0_11 = arith.constant 0 : index
    %c0_12 = arith.constant 0 : index
    %27 = vector.load %arg5[%c0_11, %c0_12] : memref<1x16xf32, #tpu.memory_space<vmem>>, vector<1x16xf32>
    %c0_13 = arith.constant 0 : index
    %c0_14 = arith.constant 0 : index
    %28 = vector.load %arg6[%c0_13, %c0_14] : memref<1x16xf32, #tpu.memory_space<vmem>>, vector<1x16xf32>
    %cst_15 = arith.constant dense<0.000000e+00> : vector<128xf32>
    %29 = vector.multi_reduction <add>, %26, %cst_15 [1] : vector<128x16xf32> to vector<128xf32>
    %30 = vector.shape_cast %29 : vector<128xf32> to vector<128x1xf32>
    %cst_16 = arith.constant 1.600000e+01 : f32
    %31 = vector.broadcast %cst_16 : f32 to vector<128x1xf32>
    %32 = arith.divf %30, %31 : vector<128x1xf32>
    %33 = vector.broadcast %32 : vector<128x1xf32> to vector<128x16xf32>
    %34 = arith.subf %26, %33 : vector<128x16xf32>
    %35 = arith.mulf %34, %34 : vector<128x16xf32>
    %cst_17 = arith.constant dense<0.000000e+00> : vector<128xf32>
    %36 = vector.multi_reduction <add>, %35, %cst_17 [1] : vector<128x16xf32> to vector<128xf32>
    %37 = vector.shape_cast %36 : vector<128xf32> to vector<128x1xf32>
    %cst_18 = arith.constant 1.600000e+01 : f32
    %38 = vector.broadcast %cst_18 : f32 to vector<128x1xf32>
    %39 = arith.divf %37, %38 : vector<128x1xf32>
    %40 = vector.broadcast %32 : vector<128x1xf32> to vector<128x16xf32>
    %41 = arith.subf %26, %40 : vector<128x16xf32>
    %cst_19 = arith.constant 9.99999974E-6 : f32
    %42 = vector.broadcast %cst_19 : f32 to vector<128x1xf32>
    %43 = arith.addf %39, %42 : vector<128x1xf32>
    %44 = math.rsqrt %43 : vector<128x1xf32>
    %45 = vector.broadcast %44 : vector<128x1xf32> to vector<128x16xf32>
    %46 = arith.mulf %41, %45 : vector<128x16xf32>
    %47 = vector.broadcast %27 : vector<1x16xf32> to vector<128x16xf32>
    %48 = arith.mulf %46, %47 : vector<128x16xf32>
    %49 = vector.broadcast %28 : vector<1x16xf32> to vector<128x16xf32>
    %50 = arith.addf %48, %49 : vector<128x16xf32>
    %51 = arith.truncf %50 : vector<128x16xf32> to vector<128x16xbf16>
    %c0_20 = arith.constant 0 : index
    %c0_21 = arith.constant 0 : index
    %52 = vector.load %arg7[%c0_20, %c0_21] : memref<16x16xbf16, #tpu.memory_space<vmem>>, vector<16x16xbf16>
    %cst_22 = arith.constant dense<0.000000e+00> : vector<128x16xf32>
    %53 = tpu.matmul %25, %52, %cst_22 {dimension_numbers = #tpu.dot_dimension_numbers<[1], [0], [0], [1], [0, 0, 1, 1], [], []>} : vector<128x16xbf16>, vector<16x16xbf16>, vector<128x16xf32> -> vector<128x16xf32>
    %c0_23 = arith.constant 0 : index
    %c0_24 = arith.constant 0 : index
    %54 = vector.load %arg8[%c0_23, %c0_24] : memref<16x16xbf16, #tpu.memory_space<vmem>>, vector<16x16xbf16>
    %cst_25 = arith.constant dense<0.000000e+00> : vector<128x16xf32>
    %55 = tpu.matmul %51, %54, %cst_25 {dimension_numbers = #tpu.dot_dimension_numbers<[1], [0], [0], [1], [0, 0, 1, 1], [], []>} : vector<128x16xbf16>, vector<16x16xbf16>, vector<128x16xf32> -> vector<128x16xf32>
    %56 = arith.addf %53, %55 : vector<128x16xf32>
    %c0_26 = arith.constant 0 : index
    %c0_27 = arith.constant 0 : index
    %57 = vector.load %arg9[%c0_26, %c0_27] : memref<1x16xf32, #tpu.memory_space<vmem>>, vector<1x16xf32>
    %58 = vector.broadcast %57 : vector<1x16xf32> to vector<128x16xf32>
    %59 = arith.addf %56, %58 : vector<128x16xf32>
    %c0_28 = arith.constant 0 : index
    %c0_29 = arith.constant 0 : index
    %60 = vector.load %arg10[%c0_28, %c0_29] : memref<128x16xf32, #tpu.memory_space<vmem>>, vector<128x16xf32>
    tpu.vector_store %arg10[%c0_28, %c0_29], %59 {strides = array<i32>} : memref<128x16xf32, #tpu.memory_space<vmem>>, vector<128x16xf32>,
    return
  }
  func.func @transform_0(%arg0: i32) -> (i32, i32) {
    %c0_i32 = arith.constant 0 : i32
    %c0_i32_0 = arith.constant 0 : i32
    return %arg0, %c0_i32 : i32, i32
  }
  func.func @transform_1(%arg0: i32) -> (i32, i32) {
    %c0_i32 = arith.constant 0 : i32
    %c0_i32_0 = arith.constant 0 : i32
    return %arg0, %c0_i32 : i32, i32
  }
  func.func @transform_2(%arg0: i32) -> (i32, i32) {
    %c0_i32 = arith.constant 0 : i32
    %c0_i32_0 = arith.constant 0 : i32
    %c0_i32_1 = arith.constant 0 : i32
    return %c0_i32, %c0_i32_0 : i32, i32
  }
  func.func @transform_3(%arg0: i32) -> (i32, i32) {
    %c0_i32 = arith.constant 0 : i32
    %c0_i32_0 = arith.constant 0 : i32
    %c0_i32_1 = arith.constant 0 : i32
    return %c0_i32, %c0_i32_0 : i32, i32
  }
  func.func @transform_4(%arg0: i32) -> (i32, i32) {
    %c0_i32 = arith.constant 0 : i32
    %c0_i32_0 = arith.constant 0 : i32
    %c0_i32_1 = arith.constant 0 : i32
    return %c0_i32, %c0_i32_0 : i32, i32
  }
  func.func @transform_5(%arg0: i32) -> (i32, i32) {
    %c0_i32 = arith.constant 0 : i32
    %c0_i32_0 = arith.constant 0 : i32
    %c0_i32_1 = arith.constant 0 : i32
    return %c0_i32, %c0_i32_0 : i32, i32
  }
  func.func @transform_6(%arg0: i32) -> (i32, i32) {
    %c0_i32 = arith.constant 0 : i32
    %c0_i32_0 = arith.constant 0 : i32
    %c0_i32_1 = arith.constant 0 : i32
    return %c0_i32, %c0_i32_0 : i32, i32
  }
  func.func @transform_7(%arg0: i32) -> (i32, i32) {
    %c0_i32 = arith.constant 0 : i32
    %c0_i32_0 = arith.constant 0 : i32
    %c0_i32_1 = arith.constant 0 : i32
    return %c0_i32, %c0_i32_0 : i32, i32
  }
  func.func @transform_8(%arg0: i32) -> (i32, i32) {
    %c0_i32 = arith.constant 0 : i32
    %c0_i32_0 = arith.constant 0 : i32
    %c0_i32_1 = arith.constant 0 : i32
    return %c0_i32, %c0_i32_0 : i32, i32
  }
  func.func @transform_9(%arg0: i32) -> (i32, i32) {
    %c0_i32 = arith.constant 0 : i32
    %c0_i32_0 = arith.constant 0 : i32
    return %arg0, %c0_i32 : i32, i32
  }
}

module attributes {stable_mosaic.version = 11 : i64} {
  func.func @_defconv_accum_kernel(%arg0: i32, %arg1: memref<1x6x6x6x128xf32, #tpu.memory_space<vmem>>, %arg2: memref<1x3xf32, #tpu.memory_space<vmem>>, %arg3: memref<1x4x4x4x3xf32, #tpu.memory_space<vmem>>) attributes {dimension_semantics = [#tpu.dimension_semantics<parallel>], iteration_bounds = array<i64: 2>, scalar_prefetch = 0 : i64, scratch_operands = 0 : i64, tpu.core_type = #tpu.core_type<tc>, window_params = [{transform_indices = @transform_0, window_bounds = array<i64: 1, 6, 6, 6, 128>}, {pipeline_mode = #tpu.pipeline_mode<synchronous>, transform_indices = @transform_1, window_bounds = array<i64: 1, 3>}, {transform_indices = @transform_2, window_bounds = array<i64: 1, 4, 4, 4, 3>}]} {
    %cst = arith.constant 0.000000e+00 : f32
    %0 = vector.broadcast %cst : f32 to vector<4x4x4x3xf32>
    %c0 = arith.constant 0 : index
    %c0_0 = arith.constant 0 : index
    %c0_1 = arith.constant 0 : index
    %c0_2 = arith.constant 0 : index
    %c0_3 = arith.constant 0 : index
    %1 = vector.load %arg1[%c0, %c0_0, %c0_1, %c0_2, %c0_3] : memref<1x6x6x6x128xf32, #tpu.memory_space<vmem>>, vector<1x6x6x4x128xf32>
    %2 = vector.shape_cast %1 : vector<1x6x6x4x128xf32> to vector<6x6x4x128xf32>
    %3 = vector.extract_strided_slice %2 {offsets = [0, 0, 0, 0], sizes = [4, 4, 4, 3], strides = [1, 1, 1, 1]} : vector<6x6x4x128xf32> to vector<4x4x4x3xf32>
    %4 = arith.addf %0, %3 : vector<4x4x4x3xf32>
    %5 = vector.extract_strided_slice %2 {offsets = [0, 1, 0, 9], sizes = [4, 4, 4, 3], strides = [1, 1, 1, 1]} : vector<6x6x4x128xf32> to vector<4x4x4x3xf32>
    %6 = arith.addf %4, %5 : vector<4x4x4x3xf32>
    %7 = vector.extract_strided_slice %2 {offsets = [0, 2, 0, 18], sizes = [4, 4, 4, 3], strides = [1, 1, 1, 1]} : vector<6x6x4x128xf32> to vector<4x4x4x3xf32>
    %8 = arith.addf %6, %7 : vector<4x4x4x3xf32>
    %9 = vector.extract_strided_slice %2 {offsets = [1, 0, 0, 27], sizes = [4, 4, 4, 3], strides = [1, 1, 1, 1]} : vector<6x6x4x128xf32> to vector<4x4x4x3xf32>
    %10 = arith.addf %8, %9 : vector<4x4x4x3xf32>
    %11 = vector.extract_strided_slice %2 {offsets = [1, 1, 0, 36], sizes = [4, 4, 4, 3], strides = [1, 1, 1, 1]} : vector<6x6x4x128xf32> to vector<4x4x4x3xf32>
    %12 = arith.addf %10, %11 : vector<4x4x4x3xf32>
    %13 = vector.extract_strided_slice %2 {offsets = [1, 2, 0, 45], sizes = [4, 4, 4, 3], strides = [1, 1, 1, 1]} : vector<6x6x4x128xf32> to vector<4x4x4x3xf32>
    %14 = arith.addf %12, %13 : vector<4x4x4x3xf32>
    %15 = vector.extract_strided_slice %2 {offsets = [2, 0, 0, 54], sizes = [4, 4, 4, 3], strides = [1, 1, 1, 1]} : vector<6x6x4x128xf32> to vector<4x4x4x3xf32>
    %16 = arith.addf %14, %15 : vector<4x4x4x3xf32>
    %17 = vector.extract_strided_slice %2 {offsets = [2, 1, 0, 63], sizes = [4, 4, 4, 3], strides = [1, 1, 1, 1]} : vector<6x6x4x128xf32> to vector<4x4x4x3xf32>
    %18 = arith.addf %16, %17 : vector<4x4x4x3xf32>
    %19 = vector.extract_strided_slice %2 {offsets = [2, 2, 0, 72], sizes = [4, 4, 4, 3], strides = [1, 1, 1, 1]} : vector<6x6x4x128xf32> to vector<4x4x4x3xf32>
    %20 = arith.addf %18, %19 : vector<4x4x4x3xf32>
    %c0_4 = arith.constant 0 : index
    %c0_5 = arith.constant 0 : index
    %c0_6 = arith.constant 0 : index
    %c1 = arith.constant 1 : index
    %c0_7 = arith.constant 0 : index
    %21 = vector.load %arg1[%c0_4, %c0_5, %c0_6, %c1, %c0_7] : memref<1x6x6x6x128xf32, #tpu.memory_space<vmem>>, vector<1x6x6x4x128xf32>
    %22 = vector.shape_cast %21 : vector<1x6x6x4x128xf32> to vector<6x6x4x128xf32>
    %23 = vector.extract_strided_slice %22 {offsets = [0, 0, 0, 3], sizes = [4, 4, 4, 3], strides = [1, 1, 1, 1]} : vector<6x6x4x128xf32> to vector<4x4x4x3xf32>
    %24 = arith.addf %20, %23 : vector<4x4x4x3xf32>
    %25 = vector.extract_strided_slice %22 {offsets = [0, 1, 0, 12], sizes = [4, 4, 4, 3], strides = [1, 1, 1, 1]} : vector<6x6x4x128xf32> to vector<4x4x4x3xf32>
    %26 = arith.addf %24, %25 : vector<4x4x4x3xf32>
    %27 = vector.extract_strided_slice %22 {offsets = [0, 2, 0, 21], sizes = [4, 4, 4, 3], strides = [1, 1, 1, 1]} : vector<6x6x4x128xf32> to vector<4x4x4x3xf32>
    %28 = arith.addf %26, %27 : vector<4x4x4x3xf32>
    %29 = vector.extract_strided_slice %22 {offsets = [1, 0, 0, 30], sizes = [4, 4, 4, 3], strides = [1, 1, 1, 1]} : vector<6x6x4x128xf32> to vector<4x4x4x3xf32>
    %30 = arith.addf %28, %29 : vector<4x4x4x3xf32>
    %31 = vector.extract_strided_slice %22 {offsets = [1, 1, 0, 39], sizes = [4, 4, 4, 3], strides = [1, 1, 1, 1]} : vector<6x6x4x128xf32> to vector<4x4x4x3xf32>
    %32 = arith.addf %30, %31 : vector<4x4x4x3xf32>
    %33 = vector.extract_strided_slice %22 {offsets = [1, 2, 0, 48], sizes = [4, 4, 4, 3], strides = [1, 1, 1, 1]} : vector<6x6x4x128xf32> to vector<4x4x4x3xf32>
    %34 = arith.addf %32, %33 : vector<4x4x4x3xf32>
    %35 = vector.extract_strided_slice %22 {offsets = [2, 0, 0, 57], sizes = [4, 4, 4, 3], strides = [1, 1, 1, 1]} : vector<6x6x4x128xf32> to vector<4x4x4x3xf32>
    %36 = arith.addf %34, %35 : vector<4x4x4x3xf32>
    %37 = vector.extract_strided_slice %22 {offsets = [2, 1, 0, 66], sizes = [4, 4, 4, 3], strides = [1, 1, 1, 1]} : vector<6x6x4x128xf32> to vector<4x4x4x3xf32>
    %38 = arith.addf %36, %37 : vector<4x4x4x3xf32>
    %39 = vector.extract_strided_slice %22 {offsets = [2, 2, 0, 75], sizes = [4, 4, 4, 3], strides = [1, 1, 1, 1]} : vector<6x6x4x128xf32> to vector<4x4x4x3xf32>
    %40 = arith.addf %38, %39 : vector<4x4x4x3xf32>
    %c0_8 = arith.constant 0 : index
    %c0_9 = arith.constant 0 : index
    %c0_10 = arith.constant 0 : index
    %c2 = arith.constant 2 : index
    %c0_11 = arith.constant 0 : index
    %41 = vector.load %arg1[%c0_8, %c0_9, %c0_10, %c2, %c0_11] : memref<1x6x6x6x128xf32, #tpu.memory_space<vmem>>, vector<1x6x6x4x128xf32>
    %42 = vector.shape_cast %41 : vector<1x6x6x4x128xf32> to vector<6x6x4x128xf32>
    %43 = vector.extract_strided_slice %42 {offsets = [0, 0, 0, 6], sizes = [4, 4, 4, 3], strides = [1, 1, 1, 1]} : vector<6x6x4x128xf32> to vector<4x4x4x3xf32>
    %44 = arith.addf %40, %43 : vector<4x4x4x3xf32>
    %45 = vector.extract_strided_slice %42 {offsets = [0, 1, 0, 15], sizes = [4, 4, 4, 3], strides = [1, 1, 1, 1]} : vector<6x6x4x128xf32> to vector<4x4x4x3xf32>
    %46 = arith.addf %44, %45 : vector<4x4x4x3xf32>
    %47 = vector.extract_strided_slice %42 {offsets = [0, 2, 0, 24], sizes = [4, 4, 4, 3], strides = [1, 1, 1, 1]} : vector<6x6x4x128xf32> to vector<4x4x4x3xf32>
    %48 = arith.addf %46, %47 : vector<4x4x4x3xf32>
    %49 = vector.extract_strided_slice %42 {offsets = [1, 0, 0, 33], sizes = [4, 4, 4, 3], strides = [1, 1, 1, 1]} : vector<6x6x4x128xf32> to vector<4x4x4x3xf32>
    %50 = arith.addf %48, %49 : vector<4x4x4x3xf32>
    %51 = vector.extract_strided_slice %42 {offsets = [1, 1, 0, 42], sizes = [4, 4, 4, 3], strides = [1, 1, 1, 1]} : vector<6x6x4x128xf32> to vector<4x4x4x3xf32>
    %52 = arith.addf %50, %51 : vector<4x4x4x3xf32>
    %53 = vector.extract_strided_slice %42 {offsets = [1, 2, 0, 51], sizes = [4, 4, 4, 3], strides = [1, 1, 1, 1]} : vector<6x6x4x128xf32> to vector<4x4x4x3xf32>
    %54 = arith.addf %52, %53 : vector<4x4x4x3xf32>
    %55 = vector.extract_strided_slice %42 {offsets = [2, 0, 0, 60], sizes = [4, 4, 4, 3], strides = [1, 1, 1, 1]} : vector<6x6x4x128xf32> to vector<4x4x4x3xf32>
    %56 = arith.addf %54, %55 : vector<4x4x4x3xf32>
    %57 = vector.extract_strided_slice %42 {offsets = [2, 1, 0, 69], sizes = [4, 4, 4, 3], strides = [1, 1, 1, 1]} : vector<6x6x4x128xf32> to vector<4x4x4x3xf32>
    %58 = arith.addf %56, %57 : vector<4x4x4x3xf32>
    %59 = vector.extract_strided_slice %42 {offsets = [2, 2, 0, 78], sizes = [4, 4, 4, 3], strides = [1, 1, 1, 1]} : vector<6x6x4x128xf32> to vector<4x4x4x3xf32>
    %60 = arith.addf %58, %59 : vector<4x4x4x3xf32>
    %c0_12 = arith.constant 0 : index
    %c0_13 = arith.constant 0 : index
    %61 = vector.load %arg2[%c0_12, %c0_13] : memref<1x3xf32, #tpu.memory_space<vmem>>, vector<1x3xf32>
    %62 = vector.shape_cast %61 : vector<1x3xf32> to vector<1x1x1x3xf32>
    %63 = vector.broadcast %62 : vector<1x1x1x3xf32> to vector<4x4x4x3xf32>
    %64 = arith.addf %60, %63 : vector<4x4x4x3xf32>
    %c0_14 = arith.constant 0 : index
    %c0_15 = arith.constant 0 : index
    %c0_16 = arith.constant 0 : index
    %c0_17 = arith.constant 0 : index
    %c0_18 = arith.constant 0 : index
    %65 = vector.load %arg3[%c0_14, %c0_15, %c0_16, %c0_17, %c0_18] : memref<1x4x4x4x3xf32, #tpu.memory_space<vmem>>, vector<1x4x4x4x3xf32>
    %66 = vector.shape_cast %65 : vector<1x4x4x4x3xf32> to vector<4x4x4x3xf32>
    %67 = vector.shape_cast %64 : vector<4x4x4x3xf32> to vector<1x4x4x4x3xf32>
    tpu.vector_store %arg3[%c0_14, %c0_15, %c0_16, %c0_17, %c0_18], %67 {strides = array<i32>} : memref<1x4x4x4x3xf32, #tpu.memory_space<vmem>>, vector<1x4x4x4x3xf32>,
    return
  }
  func.func @transform_0(%arg0: i32) -> (i32, i32, i32, i32, i32) {
    %c0_i32 = arith.constant 0 : i32
    %c0_i32_0 = arith.constant 0 : i32
    %c0_i32_1 = arith.constant 0 : i32
    %c0_i32_2 = arith.constant 0 : i32
    %c0_i32_3 = arith.constant 0 : i32
    return %arg0, %c0_i32, %c0_i32_0, %c0_i32_1, %c0_i32_2 : i32, i32, i32, i32, i32
  }
  func.func @transform_1(%arg0: i32) -> (i32, i32) {
    %c0_i32 = arith.constant 0 : i32
    %c0_i32_0 = arith.constant 0 : i32
    %c0_i32_1 = arith.constant 0 : i32
    return %c0_i32, %c0_i32_0 : i32, i32
  }
  func.func @transform_2(%arg0: i32) -> (i32, i32, i32, i32, i32) {
    %c0_i32 = arith.constant 0 : i32
    %c0_i32_0 = arith.constant 0 : i32
    %c0_i32_1 = arith.constant 0 : i32
    %c0_i32_2 = arith.constant 0 : i32
    %c0_i32_3 = arith.constant 0 : i32
    return %arg0, %c0_i32, %c0_i32_0, %c0_i32_1, %c0_i32_2 : i32, i32, i32, i32, i32
  }
}

</mosaic_0001>

<llo_original>
// kernel: forward_pallas.11
$region0: #{forward_pallas.11}
  #allocation0 [shape = 'u32[]', space=smem, size = 0x4, offset = 0x4, fixed_abs, tag = 'smem constant byte address 0x4 - core index']
  #allocation1 [shape = 'u32[144,128]{1,0:T(1,128)}', space=vmem, size = 0x12000, scoped, tag = 'internal scratch']
  %s0 = inlined_call_operand.hbm [shape: f32[128,8], index: 0, kind: input, shape index: {}]
  %s1 = inlined_call_operand.vmem [shape: bf16[8,16], index: 1, kind: input, shape index: {}]
  %s2 = inlined_call_operand.vmem [shape: f32[128,16], index: 2, kind: output, shape index: {}]
  %s3 = sld [smem:[#allocation0]]
  $region22: #{forward_pallas.11} parent=0
    _
  %s5 = ssub.s32 1, %s3
  %s6 = scalar_select 0, %s5, %s3
  $region1: #{forward_pallas.11} parent=0
    #allocation2 [shape = 'u8[65536]{0}', space=vmem, size = 0x10000, scoped, tag = 'input window, operand 0, single buffered']
    #allocation3 [shape = 's32[1]{0}', space=sflag, size = 0x4, scoped, tag = 'scoped memory for forward_pallas.11']
    %7 = vsyncpa [#allocation3], 0
    // Predicated region
    $region2: #{forward_pallas.11} parent=1 // pred_check
      _
    $region3: #{forward_pallas.11} parent=1 // pred_check_branch
      %9 = sbr.rel (0) target = $region5
    $region4: #{forward_pallas.11} parent=1 // pred_region
      %s11 = ssub.s32 2048, 2048
      %12 = vsyncadd [#allocation3], %s11
      %s13 = sshll.u32 [#allocation2], 4
      %s14 = int_to_ptr.vmem [resolvable:$true] %s13
      %19 = dma.hbm_to_vmem [thread:$0]  %s0, 2048, %s14, [#allocation3], 128, 128, 8
    $region5: #{forward_pallas.11} parent=1 // pred_fallthru
      _
    // Predicated region
    $region6: #{forward_pallas.11} parent=1 // pred_check
      _
    $region7: #{forward_pallas.11} parent=1 // pred_check_branch
      %21 = sbr.rel (0) target = $region9
    $region8: #{forward_pallas.11} parent=1 // pred_region
      _
    $region9: #{forward_pallas.11} parent=1 // pred_fallthru
      _
    // Predicated region
    $region10: #{forward_pallas.11} parent=1 // pred_check
      _
    $region11: #{forward_pallas.11} parent=1 // pred_check_branch
      %23 = sbr.rel (0) target = $region13
    $region12: #{forward_pallas.11} parent=1 // pred_region
      %24 = dma.done [#allocation3], 2048
    $region13: #{forward_pallas.11} parent=1 // pred_fallthru
      _
    %v26 = vld [vmem:[#allocation2] sm:$0xff]
    %v27 = vld [vmem:[#allocation2 + $0x8] sm:$0xff]
    %v28 = vld [vmem:[#allocation2 + $0x10] sm:$0xff]
    %v29 = vld [vmem:[#allocation2 + $0x18] sm:$0xff]
    %v30 = vld [vmem:[#allocation2 + $0x20] sm:$0xff]
    %v31 = vld [vmem:[#allocation2 + $0x28] sm:$0xff]
    %v32 = vld [vmem:[#allocation2 + $0x30] sm:$0xff]
    %v33 = vld [vmem:[#allocation2 + $0x38] sm:$0xff]
    %v34 = vld [vmem:[#allocation2 + $0x40] sm:$0xff]
    %v35 = vld [vmem:[#allocation2 + $0x48] sm:$0xff]
    %v36 = vld [vmem:[#allocation2 + $0x50] sm:$0xff]
    %v37 = vld [vmem:[#allocation2 + $0x58] sm:$0xff]
    %v38 = vld [vmem:[#allocation2 + $0x60] sm:$0xff]
    %v39 = vld [vmem:[#allocation2 + $0x68] sm:$0xff]
    %v40 = vld [vmem:[#allocation2 + $0x70] sm:$0xff]
    %v41 = vld [vmem:[#allocation2 + $0x78] sm:$0xff]
    %v42 = vpack.c.bf16 %v27, %v26
    %v43 = vpack.c.bf16 %v29, %v28
    %v44 = vpack.c.bf16 %v31, %v30
    %v45 = vpack.c.bf16 %v33, %v32
    %v46 = vpack.c.bf16 %v35, %v34
    %v47 = vpack.c.bf16 %v37, %v36
    %v48 = vpack.c.bf16 %v39, %v38
    %v49 = vpack.c.bf16 %v41, %v40
    %v50 = vld [vmem:[%s1] sm:$0xf]
    %vm51 = vcmask 64512
    %v53 = vsel %vm51, %v42, 0
    %v56 = vsel %vm51, %v43, 0
    %v59 = vsel %vm51, %v44, 0
    %v62 = vsel %vm51, %v45, 0
    %v65 = vsel %vm51, %v46, 0
    %v68 = vsel %vm51, %v47, 0
    %v71 = vsel %vm51, %v48, 0
    %v74 = vsel %vm51, %v49, 0
    %vm76 = vcmask 1043456
    %v78 = vsel %vm76, %v50, 0
    %80 = vmatprep.subr.bf16.mxu0 0
    %81 = vmatpush1.bf16.msra.mxu0 0
    %82 = vmatprep.subr.bf16.mxu0 0
    %83 = vmatpush1.bf16.msra.mxu0 0
    %84 = vmatprep.subr.bf16.mxu0 0
    %85 = vmatpush1.bf16.msra.mxu0 0
    %86 = vmatprep.subr.bf16.mxu0 0
    %87 = vmatpush1.bf16.msra.mxu0 0
    %88 = vmatprep.subr.bf16.mxu0 0
    %89 = vmatpush1.bf16.msra.mxu0 0
    %90 = vmatprep.subr.bf16.mxu0 0
    %91 = vmatpush1.bf16.msra.mxu0 0
    %92 = vmatprep.subr.bf16.mxu0 0
    %93 = vmatpush1.bf16.msra.mxu0 0
    %94 = vmatprep.subr.bf16.mxu0 0
    %95 = vmatpush1.bf16.msra.mxu0 %v78
    %96 = vmatprep.subr.bf16.mxu0 0
    %97 = vmatpush2.bf16.msra.mxu0 0
    %98 = vmatprep.subr.bf16.mxu0 0
    %99 = vmatpush2.bf16.msra.mxu0 0
    %100 = vmatprep.subr.bf16.mxu0 0
    %101 = vmatpush2.bf16.msra.mxu0 0
    %102 = vmatprep.subr.bf16.mxu0 0
    %103 = vmatpush2.bf16.msra.mxu0 0
    %104 = vmatprep.subr.bf16.mxu0 0
    %105 = vmatpush2.bf16.msra.mxu0 0
    %106 = vmatprep.subr.bf16.mxu0 0
    %107 = vmatpush2.bf16.msra.mxu0 0
    %108 = vmatprep.subr.bf16.mxu0 0
    %109 = vmatpush2.bf16.msra.mxu0 0
    %110 = vmatprep.subr.bf16.mxu0 0
    %111 = vmatpush2.bf16.msra.mxu0 0
    %112 = vmatprep.mubr.bf16.mxu0 0
    %113 = vmatmul.mubr.bf16.gmra.mxu0 %v53
    %v114 = vpop.f32.mrf.mxu0
    %v115 = vadd.f32 0.0, %v114
    %v116 = vpop.f32.mrf.mxu0
    %v117 = vpop.f32.mrf.mxu0
    %v118 = vadd.f32 0.0, %v117
    %v119 = vpop.f32.mrf.mxu0
    %120 = vmatprep.mubr.bf16.mxu0 0
    %121 = vmatmul.mubr.bf16.gmra.mxu0 %v56
    %v122 = vpop.f32.mrf.mxu0
    %v123 = vadd.f32 0.0, %v122
    %v124 = vpop.f32.mrf.mxu0
    %v125 = vpop.f32.mrf.mxu0
    %v126 = vadd.f32 0.0, %v125
    %v127 = vpop.f32.mrf.mxu0
    %128 = vmatprep.mubr.bf16.mxu0 0
    %129 = vmatmul.mubr.bf16.gmra.mxu0 %v59
    %v130 = vpop.f32.mrf.mxu0
    %v131 = vadd.f32 0.0, %v130
    %v132 = vpop.f32.mrf.mxu0
    %v133 = vpop.f32.mrf.mxu0
    %v134 = vadd.f32 0.0, %v133
    %v135 = vpop.f32.mrf.mxu0
    %136 = vmatprep.mubr.bf16.mxu0 0
    %137 = vmatmul.mubr.bf16.gmra.mxu0 %v62
    %v138 = vpop.f32.mrf.mxu0
    %v139 = vadd.f32 0.0, %v138
    %v140 = vpop.f32.mrf.mxu0
    %v141 = vpop.f32.mrf.mxu0
    %v142 = vadd.f32 0.0, %v141
    %v143 = vpop.f32.mrf.mxu0
    %144 = vmatprep.mubr.bf16.mxu0 0
    %145 = vmatmul.mubr.bf16.gmra.mxu0 %v65
    %v146 = vpop.f32.mrf.mxu0
    %v147 = vadd.f32 0.0, %v146
    %v148 = vpop.f32.mrf.mxu0
    %v149 = vpop.f32.mrf.mxu0
    %v150 = vadd.f32 0.0, %v149
    %v151 = vpop.f32.mrf.mxu0
    %152 = vmatprep.mubr.bf16.mxu0 0
    %153 = vmatmul.mubr.bf16.gmra.mxu0 %v68
    %v154 = vpop.f32.mrf.mxu0
    %v155 = vadd.f32 0.0, %v154
    %v156 = vpop.f32.mrf.mxu0
    %v157 = vpop.f32.mrf.mxu0
    %v158 = vadd.f32 0.0, %v157
    %v159 = vpop.f32.mrf.mxu0
    %160 = vmatprep.mubr.bf16.mxu0 0
    %161 = vmatmul.mubr.bf16.gmra.mxu0 %v71
    %v162 = vpop.f32.mrf.mxu0
    %v163 = vadd.f32 0.0, %v162
    %v164 = vpop.f32.mrf.mxu0
    %v165 = vpop.f32.mrf.mxu0
    %v166 = vadd.f32 0.0, %v165
    %v167 = vpop.f32.mrf.mxu0
    %168 = vmatprep.mubr.bf16.mxu0 0
    %169 = vmatmul.mubr.bf16.gmra.mxu0 %v74
    %v170 = vpop.f32.mrf.mxu0
    %v171 = vadd.f32 0.0, %v170
    %v172 = vpop.f32.mrf.mxu0
    %v173 = vpop.f32.mrf.mxu0
    %v174 = vadd.f32 0.0, %v173
    %v175 = vpop.f32.mrf.mxu0
    %176 = vdwg.mxu0
    %vm177 = vcmask 130048
    %178 = vst.msk [vmem:[%s2] sm:$0xff] %vm177, %v115
    %179 = vst.msk [vmem:[%s2 + $0x8] sm:$0xff] %vm177, %v118
    %180 = vst.msk [vmem:[%s2 + $0x10] sm:$0xff] %vm177, %v123
    %181 = vst.msk [vmem:[%s2 + $0x18] sm:$0xff] %vm177, %v126
    %182 = vst.msk [vmem:[%s2 + $0x20] sm:$0xff] %vm177, %v131
    %183 = vst.msk [vmem:[%s2 + $0x28] sm:$0xff] %vm177, %v134
    %184 = vst.msk [vmem:[%s2 + $0x30] sm:$0xff] %vm177, %v139
    %185 = vst.msk [vmem:[%s2 + $0x38] sm:$0xff] %vm177, %v142
    %186 = vst.msk [vmem:[%s2 + $0x40] sm:$0xff] %vm177, %v147
    %187 = vst.msk [vmem:[%s2 + $0x48] sm:$0xff] %vm177, %v150
    %188 = vst.msk [vmem:[%s2 + $0x50] sm:$0xff] %vm177, %v155
    %189 = vst.msk [vmem:[%s2 + $0x58] sm:$0xff] %vm177, %v158
    %190 = vst.msk [vmem:[%s2 + $0x60] sm:$0xff] %vm177, %v163
    %191 = vst.msk [vmem:[%s2 + $0x68] sm:$0xff] %vm177, %v166
    %192 = vst.msk [vmem:[%s2 + $0x70] sm:$0xff] %vm177, %v171
    %193 = vst.msk [vmem:[%s2 + $0x78] sm:$0xff] %vm177, %v174
    // Predicated region
    $region14: #{forward_pallas.11} parent=1 // pred_check
      _
    $region15: #{forward_pallas.11} parent=1 // pred_check_branch
      %195 = sbr.rel (0) target = $region17
    $region16: #{forward_pallas.11} parent=1 // pred_region
      _
    $region17: #{forward_pallas.11} parent=1 // pred_fallthru
      _
    // Predicated region
    $region18: #{forward_pallas.11} parent=1 // pred_check
      _
    $region19: #{forward_pallas.11} parent=1 // pred_check_branch
      %197 = sbr.rel (0) target = $region21
    $region20: #{forward_pallas.11} parent=1 // pred_region
      _
    $region21: #{forward_pallas.11} parent=1 // pred_fallthru
      _
    %198 = vsyncpa [#allocation3], 1

// kernel: forward_pallas.12
$region0: #{forward_pallas.12}
  #allocation0 [shape = 'u32[]', space=smem, size = 0x4, offset = 0x4, fixed_abs, tag = 'smem constant byte address 0x4 - core index']
  #allocation1 [shape = 'u32[144,128]{1,0:T(1,128)}', space=vmem, size = 0x12000, scoped, tag = 'internal scratch']
  %s0 = inlined_call_operand.vmem [shape: f32[128,8], index: 0, kind: input, shape index: {}]
  %s1 = inlined_call_operand.vmem [shape: bf16[8,16], index: 1, kind: input, shape index: {}]
  %s2 = inlined_call_operand.vmem [shape: f32[128,16], index: 2, kind: output, shape index: {}]
  %s3 = sld [smem:[#allocation0]]
  $region18: #{forward_pallas.12} parent=0
    _
  %s5 = ssub.s32 1, %s3
  %s6 = scalar_select 0, %s5, %s3
  // Predicated region
  $region2: #{forward_pallas.12} parent=0 // pred_check
    _
  $region3: #{forward_pallas.12} parent=0 // pred_check_branch
    %8 = sbr.rel (0) target = $region5
  $region4: #{forward_pallas.12} parent=0 // pred_region
    _
  $region5: #{forward_pallas.12} parent=0 // pred_fallthru
    _
  // Predicated region
  $region6: #{forward_pallas.12} parent=0 // pred_check
    _
  $region7: #{forward_pallas.12} parent=0 // pred_check_branch
    %10 = sbr.rel (0) target = $region9
  $region8: #{forward_pallas.12} parent=0 // pred_region
    _
  $region9: #{forward_pallas.12} parent=0 // pred_fallthru
    _
  %v12 = vld [vmem:[%s0] sm:$0xff]
  %v13 = vld [vmem:[%s0 + $0x8] sm:$0xff]
  %v14 = vld [vmem:[%s0 + $0x10] sm:$0xff]
  %v15 = vld [vmem:[%s0 + $0x18] sm:$0xff]
  %v16 = vld [vmem:[%s0 + $0x20] sm:$0xff]
  %v17 = vld [vmem:[%s0 + $0x28] sm:$0xff]
  %v18 = vld [vmem:[%s0 + $0x30] sm:$0xff]
  %v19 = vld [vmem:[%s0 + $0x38] sm:$0xff]
  %v20 = vld [vmem:[%s0 + $0x40] sm:$0xff]
  %v21 = vld [vmem:[%s0 + $0x48] sm:$0xff]
  %v22 = vld [vmem:[%s0 + $0x50] sm:$0xff]
  %v23 = vld [vmem:[%s0 + $0x58] sm:$0xff]
  %v24 = vld [vmem:[%s0 + $0x60] sm:$0xff]
  %v25 = vld [vmem:[%s0 + $0x68] sm:$0xff]
  %v26 = vld [vmem:[%s0 + $0x70] sm:$0xff]
  %v27 = vld [vmem:[%s0 + $0x78] sm:$0xff]
  %v28 = vpack.c.bf16 %v13, %v12
  %v29 = vpack.c.bf16 %v15, %v14
  %v30 = vpack.c.bf16 %v17, %v16
  %v31 = vpack.c.bf16 %v19, %v18
  %v32 = vpack.c.bf16 %v21, %v20
  %v33 = vpack.c.bf16 %v23, %v22
  %v34 = vpack.c.bf16 %v25, %v24
  %v35 = vpack.c.bf16 %v27, %v26
  %v36 = vld [vmem:[%s1] sm:$0xf]
  %vm37 = vcmask 64512
  %v39 = vsel %vm37, %v28, 0
  %v42 = vsel %vm37, %v29, 0
  %v45 = vsel %vm37, %v30, 0
  %v48 = vsel %vm37, %v31, 0
  %v51 = vsel %vm37, %v32, 0
  %v54 = vsel %vm37, %v33, 0
  %v57 = vsel %vm37, %v34, 0
  %v60 = vsel %vm37, %v35, 0
  %vm62 = vcmask 1043456
  %v64 = vsel %vm62, %v36, 0
  %66 = vmatprep.subr.bf16.mxu0 0
  %67 = vmatpush1.bf16.msra.mxu0 0
  %68 = vmatprep.subr.bf16.mxu0 0
  %69 = vmatpush1.bf16.msra.mxu0 0
  %70 = vmatprep.subr.bf16.mxu0 0
  %71 = vmatpush1.bf16.msra.mxu0 0
  %72 = vmatprep.subr.bf16.mxu0 0
  %73 = vmatpush1.bf16.msra.mxu0 0
  %74 = vmatprep.subr.bf16.mxu0 0
  %75 = vmatpush1.bf16.msra.mxu0 0
  %76 = vmatprep.subr.bf16.mxu0 0
  %77 = vmatpush1.bf16.msra.mxu0 0
  %78 = vmatprep.subr.bf16.mxu0 0
  %79 = vmatpush1.bf16.msra.mxu0 0
  %80 = vmatprep.subr.bf16.mxu0 0
  %81 = vmatpush1.bf16.msra.mxu0 %v64
  %82 = vmatprep.subr.bf16.mxu0 0
  %83 = vmatpush2.bf16.msra.mxu0 0
  %84 = vmatprep.subr.bf16.mxu0 0
  %85 = vmatpush2.bf16.msra.mxu0 0
  %86 = vmatprep.subr.bf16.mxu0 0
  %87 = vmatpush2.bf16.msra.mxu0 0
  %88 = vmatprep.subr.bf16.mxu0 0
  %89 = vmatpush2.bf16.msra.mxu0 0
  %90 = vmatprep.subr.bf16.mxu0 0
  %91 = vmatpush2.bf16.msra.mxu0 0
  %92 = vmatprep.subr.bf16.mxu0 0
  %93 = vmatpush2.bf16.msra.mxu0 0
  %94 = vmatprep.subr.bf16.mxu0 0
  %95 = vmatpush2.bf16.msra.mxu0 0
  %96 = vmatprep.subr.bf16.mxu0 0
  %97 = vmatpush2.bf16.msra.mxu0 0
  %98 = vmatprep.mubr.bf16.mxu0 0
  %99 = vmatmul.mubr.bf16.gmra.mxu0 %v39
  %v100 = vpop.f32.mrf.mxu0
  %v101 = vadd.f32 0.0, %v100
  %v102 = vpop.f32.mrf.mxu0
  %v103 = vpop.f32.mrf.mxu0
  %v104 = vadd.f32 0.0, %v103
  %v105 = vpop.f32.mrf.mxu0
  %106 = vmatprep.mubr.bf16.mxu0 0
  %107 = vmatmul.mubr.bf16.gmra.mxu0 %v42
  %v108 = vpop.f32.mrf.mxu0
  %v109 = vadd.f32 0.0, %v108
  %v110 = vpop.f32.mrf.mxu0
  %v111 = vpop.f32.mrf.mxu0
  %v112 = vadd.f32 0.0, %v111
  %v113 = vpop.f32.mrf.mxu0
  %114 = vmatprep.mubr.bf16.mxu0 0
  %115 = vmatmul.mubr.bf16.gmra.mxu0 %v45
  %v116 = vpop.f32.mrf.mxu0
  %v117 = vadd.f32 0.0, %v116
  %v118 = vpop.f32.mrf.mxu0
  %v119 = vpop.f32.mrf.mxu0
  %v120 = vadd.f32 0.0, %v119
  %v121 = vpop.f32.mrf.mxu0
  %122 = vmatprep.mubr.bf16.mxu0 0
  %123 = vmatmul.mubr.bf16.gmra.mxu0 %v48
  %v124 = vpop.f32.mrf.mxu0
  %v125 = vadd.f32 0.0, %v124
  %v126 = vpop.f32.mrf.mxu0
  %v127 = vpop.f32.mrf.mxu0
  %v128 = vadd.f32 0.0, %v127
  %v129 = vpop.f32.mrf.mxu0
  %130 = vmatprep.mubr.bf16.mxu0 0
  %131 = vmatmul.mubr.bf16.gmra.mxu0 %v51
  %v132 = vpop.f32.mrf.mxu0
  %v133 = vadd.f32 0.0, %v132
  %v134 = vpop.f32.mrf.mxu0
  %v135 = vpop.f32.mrf.mxu0
  %v136 = vadd.f32 0.0, %v135
  %v137 = vpop.f32.mrf.mxu0
  %138 = vmatprep.mubr.bf16.mxu0 0
  %139 = vmatmul.mubr.bf16.gmra.mxu0 %v54
  %v140 = vpop.f32.mrf.mxu0
  %v141 = vadd.f32 0.0, %v140
  %v142 = vpop.f32.mrf.mxu0
  %v143 = vpop.f32.mrf.mxu0
  %v144 = vadd.f32 0.0, %v143
  %v145 = vpop.f32.mrf.mxu0
  %146 = vmatprep.mubr.bf16.mxu0 0
  %147 = vmatmul.mubr.bf16.gmra.mxu0 %v57
  %v148 = vpop.f32.mrf.mxu0
  %v149 = vadd.f32 0.0, %v148
  %v150 = vpop.f32.mrf.mxu0
  %v151 = vpop.f32.mrf.mxu0
  %v152 = vadd.f32 0.0, %v151
  %v153 = vpop.f32.mrf.mxu0
  %154 = vmatprep.mubr.bf16.mxu0 0
  %155 = vmatmul.mubr.bf16.gmra.mxu0 %v60
  %v156 = vpop.f32.mrf.mxu0
  %v157 = vadd.f32 0.0, %v156
  %v158 = vpop.f32.mrf.mxu0
  %v159 = vpop.f32.mrf.mxu0
  %v160 = vadd.f32 0.0, %v159
  %v161 = vpop.f32.mrf.mxu0
  %162 = vdwg.mxu0
  %vm163 = vcmask 130048
  %164 = vst.msk [vmem:[%s2] sm:$0xff] %vm163, %v101
  %165 = vst.msk [vmem:[%s2 + $0x8] sm:$0xff] %vm163, %v104
  %166 = vst.msk [vmem:[%s2 + $0x10] sm:$0xff] %vm163, %v109
  %167 = vst.msk [vmem:[%s2 + $0x18] sm:$0xff] %vm163, %v112
  %168 = vst.msk [vmem:[%s2 + $0x20] sm:$0xff] %vm163, %v117
  %169 = vst.msk [vmem:[%s2 + $0x28] sm:$0xff] %vm163, %v120
  %170 = vst.msk [vmem:[%s2 + $0x30] sm:$0xff] %vm163, %v125
  %171 = vst.msk [vmem:[%s2 + $0x38] sm:$0xff] %vm163, %v128
  %172 = vst.msk [vmem:[%s2 + $0x40] sm:$0xff] %vm163, %v133
  %173 = vst.msk [vmem:[%s2 + $0x48] sm:$0xff] %vm163, %v136
  %174 = vst.msk [vmem:[%s2 + $0x50] sm:$0xff] %vm163, %v141
  %175 = vst.msk [vmem:[%s2 + $0x58] sm:$0xff] %vm163, %v144
  %176 = vst.msk [vmem:[%s2 + $0x60] sm:$0xff] %vm163, %v149
  %177 = vst.msk [vmem:[%s2 + $0x68] sm:$0xff] %vm163, %v152
  %178 = vst.msk [vmem:[%s2 + $0x70] sm:$0xff] %vm163, %v157
  %179 = vst.msk [vmem:[%s2 + $0x78] sm:$0xff] %vm163, %v160
  // Predicated region
  $region10: #{forward_pallas.12} parent=0 // pred_check
    _
  $region11: #{forward_pallas.12} parent=0 // pred_check_branch
    %181 = sbr.rel (0) target = $region13
  $region12: #{forward_pallas.12} parent=0 // pred_region
    _
  $region13: #{forward_pallas.12} parent=0 // pred_fallthru
    _
  // Predicated region
  $region14: #{forward_pallas.12} parent=0 // pred_check
    _
  $region15: #{forward_pallas.12} parent=0 // pred_check_branch
    %183 = sbr.rel (0) target = $region17
  $region16: #{forward_pallas.12} parent=0 // pred_region
    _
  $region17: #{forward_pallas.12} parent=0 // pred_fallthru
    _

// kernel: forward_pallas.16
$region0: #{forward_pallas.16}
  #allocation0 [shape = 'u32[]', space=smem, size = 0x4, offset = 0x4, fixed_abs, tag = 'smem constant byte address 0x4 - core index']
  #allocation1 [shape = 'u32[144,128]{1,0:T(1,128)}', space=vmem, size = 0x12000, scoped, tag = 'internal scratch']
  %s0 = inlined_call_operand.vmem [shape: f32[128,16], index: 0, kind: input, shape index: {}]
  %s1 = inlined_call_operand.vmem [shape: bf16[16,128], index: 1, kind: input, shape index: {}]
  %s2 = inlined_call_operand.vmem [shape: f32[128,128], index: 2, kind: output, shape index: {}]
  %s3 = sld [smem:[#allocation0]]
  $region18: #{forward_pallas.16} parent=0
    _
  %s5 = ssub.s32 1, %s3
  %s6 = scalar_select 0, %s5, %s3
  // Predicated region
  $region2: #{forward_pallas.16} parent=0 // pred_check
    _
  $region3: #{forward_pallas.16} parent=0 // pred_check_branch
    %8 = sbr.rel (0) target = $region5
  $region4: #{forward_pallas.16} parent=0 // pred_region
    _
  $region5: #{forward_pallas.16} parent=0 // pred_fallthru
    _
  // Predicated region
  $region6: #{forward_pallas.16} parent=0 // pred_check
    _
  $region7: #{forward_pallas.16} parent=0 // pred_check_branch
    %10 = sbr.rel (0) target = $region9
  $region8: #{forward_pallas.16} parent=0 // pred_region
    _
  $region9: #{forward_pallas.16} parent=0 // pred_fallthru
    _
  %v12 = vld [vmem:[%s0] sm:$0xff]
  %v13 = vld [vmem:[%s0 + $0x8] sm:$0xff]
  %v14 = vld [vmem:[%s0 + $0x10] sm:$0xff]
  %v15 = vld [vmem:[%s0 + $0x18] sm:$0xff]
  %v16 = vld [vmem:[%s0 + $0x20] sm:$0xff]
  %v17 = vld [vmem:[%s0 + $0x28] sm:$0xff]
  %v18 = vld [vmem:[%s0 + $0x30] sm:$0xff]
  %v19 = vld [vmem:[%s0 + $0x38] sm:$0xff]
  %v20 = vld [vmem:[%s0 + $0x40] sm:$0xff]
  %v21 = vld [vmem:[%s0 + $0x48] sm:$0xff]
  %v22 = vld [vmem:[%s0 + $0x50] sm:$0xff]
  %v23 = vld [vmem:[%s0 + $0x58] sm:$0xff]
  %v24 = vld [vmem:[%s0 + $0x60] sm:$0xff]
  %v25 = vld [vmem:[%s0 + $0x68] sm:$0xff]
  %v26 = vld [vmem:[%s0 + $0x70] sm:$0xff]
  %v27 = vld [vmem:[%s0 + $0x78] sm:$0xff]
  %v28 = vpack.c.bf16 %v13, %v12
  %v29 = vpack.c.bf16 %v15, %v14
  %v30 = vpack.c.bf16 %v17, %v16
  %v31 = vpack.c.bf16 %v19, %v18
  %v32 = vpack.c.bf16 %v21, %v20
  %v33 = vpack.c.bf16 %v23, %v22
  %v34 = vpack.c.bf16 %v25, %v24
  %v35 = vpack.c.bf16 %v27, %v26
  %v36 = vld [vmem:[%s1] sm:$0xf]
  %v37 = vld [vmem:[%s1 + $0x4] sm:$0xf]
  %v40 = vunpack.c.l.b16 %v36
  %v41 = vunpack.c.l.b16 %v37
  %v42 = vpack.c.b16 %v41, %v40
  %vm44 = vcmask 130048
  %v46 = vsel %vm44, %v28, 0
  %v49 = vsel %vm44, %v29, 0
  %v52 = vsel %vm44, %v30, 0
  %v55 = vsel %vm44, %v31, 0
  %v58 = vsel %vm44, %v32, 0
  %v61 = vsel %vm44, %v33, 0
  %v64 = vsel %vm44, %v34, 0
  %v67 = vsel %vm44, %v35, 0
  %69 = vmatprep.subr.bf16.mxu0 0
  %70 = vmatpush1.bf16.msra.mxu0 0
  %71 = vmatprep.subr.bf16.mxu0 0
  %72 = vmatpush1.bf16.msra.mxu0 0
  %73 = vmatprep.subr.bf16.mxu0 0
  %74 = vmatpush1.bf16.msra.mxu0 0
  %75 = vmatprep.subr.bf16.mxu0 0
  %76 = vmatpush1.bf16.msra.mxu0 0
  %77 = vmatprep.subr.bf16.mxu0 0
  %78 = vmatpush1.bf16.msra.mxu0 0
  %79 = vmatprep.subr.bf16.mxu0 0
  %80 = vmatpush1.bf16.msra.mxu0 0
  %81 = vmatprep.subr.bf16.mxu0 0
  %82 = vmatpush1.bf16.msra.mxu0 0
  %83 = vmatprep.subr.bf16.mxu0 0
  %84 = vmatpush1.bf16.msra.mxu0 %v42
  %85 = vmatprep.subr.bf16.mxu0 0
  %86 = vmatpush2.bf16.msra.mxu0 0
  %87 = vmatprep.subr.bf16.mxu0 0
  %88 = vmatpush2.bf16.msra.mxu0 0
  %89 = vmatprep.subr.bf16.mxu0 0
  %90 = vmatpush2.bf16.msra.mxu0 0
  %91 = vmatprep.subr.bf16.mxu0 0
  %92 = vmatpush2.bf16.msra.mxu0 0
  %93 = vmatprep.subr.bf16.mxu0 0
  %94 = vmatpush2.bf16.msra.mxu0 0
  %95 = vmatprep.subr.bf16.mxu0 0
  %96 = vmatpush2.bf16.msra.mxu0 0
  %97 = vmatprep.subr.bf16.mxu0 0
  %98 = vmatpush2.bf16.msra.mxu0 0
  %99 = vmatprep.subr.bf16.mxu0 0
  %100 = vmatpush2.bf16.msra.mxu0 0
  %101 = vmatprep.mubr.bf16.mxu0 0
  %102 = vmatmul.mubr.bf16.gmra.mxu0 %v46
  %v103 = vpop.f32.mrf.mxu0
  %v104 = vadd.f32 0.0, %v103
  %v105 = vpop.f32.mrf.mxu0
  %v106 = vpop.f32.mrf.mxu0
  %v107 = vadd.f32 0.0, %v106
  %v108 = vpop.f32.mrf.mxu0
  %109 = vmatprep.mubr.bf16.mxu0 0
  %110 = vmatmul.mubr.bf16.gmra.mxu0 %v49
  %v111 = vpop.f32.mrf.mxu0
  %v112 = vadd.f32 0.0, %v111
  %v113 = vpop.f32.mrf.mxu0
  %v114 = vpop.f32.mrf.mxu0
  %v115 = vadd.f32 0.0, %v114
  %v116 = vpop.f32.mrf.mxu0
  %117 = vmatprep.mubr.bf16.mxu0 0
  %118 = vmatmul.mubr.bf16.gmra.mxu0 %v52
  %v119 = vpop.f32.mrf.mxu0
  %v120 = vadd.f32 0.0, %v119
  %v121 = vpop.f32.mrf.mxu0
  %v122 = vpop.f32.mrf.mxu0
  %v123 = vadd.f32 0.0, %v122
  %v124 = vpop.f32.mrf.mxu0
  %125 = vmatprep.mubr.bf16.mxu0 0
  %126 = vmatmul.mubr.bf16.gmra.mxu0 %v55
  %v127 = vpop.f32.mrf.mxu0
  %v128 = vadd.f32 0.0, %v127
  %v129 = vpop.f32.mrf.mxu0
  %v130 = vpop.f32.mrf.mxu0
  %v131 = vadd.f32 0.0, %v130
  %v132 = vpop.f32.mrf.mxu0
  %133 = vmatprep.mubr.bf16.mxu0 0
  %134 = vmatmul.mubr.bf16.gmra.mxu0 %v58
  %v135 = vpop.f32.mrf.mxu0
  %v136 = vadd.f32 0.0, %v135
  %v137 = vpop.f32.mrf.mxu0
  %v138 = vpop.f32.mrf.mxu0
  %v139 = vadd.f32 0.0, %v138
  %v140 = vpop.f32.mrf.mxu0
  %141 = vmatprep.mubr.bf16.mxu0 0
  %142 = vmatmul.mubr.bf16.gmra.mxu0 %v61
  %v143 = vpop.f32.mrf.mxu0
  %v144 = vadd.f32 0.0, %v143
  %v145 = vpop.f32.mrf.mxu0
  %v146 = vpop.f32.mrf.mxu0
  %v147 = vadd.f32 0.0, %v146
  %v148 = vpop.f32.mrf.mxu0
  %149 = vmatprep.mubr.bf16.mxu0 0
  %150 = vmatmul.mubr.bf16.gmra.mxu0 %v64
  %v151 = vpop.f32.mrf.mxu0
  %v152 = vadd.f32 0.0, %v151
  %v153 = vpop.f32.mrf.mxu0
  %v154 = vpop.f32.mrf.mxu0
  %v155 = vadd.f32 0.0, %v154
  %v156 = vpop.f32.mrf.mxu0
  %157 = vmatprep.mubr.bf16.mxu0 0
  %158 = vmatmul.mubr.bf16.gmra.mxu0 %v67
  %v159 = vpop.f32.mrf.mxu0
  %v160 = vadd.f32 0.0, %v159
  %v161 = vpop.f32.mrf.mxu0
  %v162 = vpop.f32.mrf.mxu0
  %v163 = vadd.f32 0.0, %v162
  %v164 = vpop.f32.mrf.mxu0
  %165 = vdwg.mxu0
  %166 = vst [vmem:[%s2] sm:$0xff] %v104
  %167 = vst [vmem:[%s2 + $0x8] sm:$0xff] %v107
  %168 = vst [vmem:[%s2 + $0x10] sm:$0xff] %v112
  %169 = vst [vmem:[%s2 + $0x18] sm:$0xff] %v115
  %170 = vst [vmem:[%s2 + $0x20] sm:$0xff] %v120
  %171 = vst [vmem:[%s2 + $0x28] sm:$0xff] %v123
  %172 = vst [vmem:[%s2 + $0x30] sm:$0xff] %v128
  %173 = vst [vmem:[%s2 + $0x38] sm:$0xff] %v131
  %174 = vst [vmem:[%s2 + $0x40] sm:$0xff] %v136
  %175 = vst [vmem:[%s2 + $0x48] sm:$0xff] %v139
  %176 = vst [vmem:[%s2 + $0x50] sm:$0xff] %v144
  %177 = vst [vmem:[%s2 + $0x58] sm:$0xff] %v147
  %178 = vst [vmem:[%s2 + $0x60] sm:$0xff] %v152
  %179 = vst [vmem:[%s2 + $0x68] sm:$0xff] %v155
  %180 = vst [vmem:[%s2 + $0x70] sm:$0xff] %v160
  %181 = vst [vmem:[%s2 + $0x78] sm:$0xff] %v163
  // Predicated region
  $region10: #{forward_pallas.16} parent=0 // pred_check
    _
  $region11: #{forward_pallas.16} parent=0 // pred_check_branch
    %183 = sbr.rel (0) target = $region13
  $region12: #{forward_pallas.16} parent=0 // pred_region
    _
  $region13: #{forward_pallas.16} parent=0 // pred_fallthru
    _
  // Predicated region
  $region14: #{forward_pallas.16} parent=0 // pred_check
    _
  $region15: #{forward_pallas.16} parent=0 // pred_check_branch
    %185 = sbr.rel (0) target = $region17
  $region16: #{forward_pallas.16} parent=0 // pred_region
    _
  $region17: #{forward_pallas.16} parent=0 // pred_fallthru
    _

// kernel: forward_pallas.13
$region0: #{forward_pallas.13}
  #allocation0 [shape = 'u32[]', space=smem, size = 0x4, offset = 0x4, fixed_abs, tag = 'smem constant byte address 0x4 - core index']
  #allocation1 [shape = 'u32[144,128]{1,0:T(1,128)}', space=vmem, size = 0x12000, scoped, tag = 'internal scratch']
  %s0 = inlined_call_operand.vmem [shape: f32[2,6,6,6,16], index: 0, kind: input, shape index: {}]
  %s1 = inlined_call_operand.vmem [shape: f32[27,1,16], index: 1, kind: input, shape index: {}]
  %s2 = inlined_call_operand.vmem [shape: f32[1,16], index: 2, kind: input, shape index: {}]
  %s3 = inlined_call_operand.vmem [shape: f32[2,4,4,4,16], index: 3, kind: output, shape index: {}]
  %s4 = sld [smem:[#allocation0]]
  $region45: #{forward_pallas.13} parent=0
    _
  %s6 = ssub.s32 1, %s4
  %s7 = scalar_select 0, %s6, %s4
  loop: start=0, step=1, limit=4
  $region2: #{forward_pallas.13} parent=0 // loop_pre_header
    _
  $region3: #{forward_pallas.13} parent=0 // loop_header
    %s9 = sphi 0, %s13
    %p10 = scmp.ge.s32.totalorder %s9, 4
    %s19 = sphi 0, %s21
    %s22 = sphi 0, %s19
    %s23 = sphi 0, %s22
    %s39 = sphi 0, %s23
    %s43 = sphi 0, %s43
    %s45 = sphi 0, %s43
    %s46 = sphi 0, %s45
    %s60 = sphi 0, %s46
    %s64 = sphi 0, %s64
    %s66 = sphi 0, %s64
    %s67 = sphi 0, %s66
    %s81 = sphi 0, %s67
    %s87 = sphi 0, %s89
    %s90 = sphi 0, %s87
    %s91 = sphi 0, %s90
    %s107 = sphi 0, %s91
  $region4: #{forward_pallas.13} parent=0 // loop_header_branch
    %12 = sbr.rel (%p10) target = $region8
  $region5: #{forward_pallas.13} parent=0 // loop_body
    %s14 = ssub.s32 %s9, 1
    %s15 = ssub.s32 %s9, 2
    %s16 = sadd.s32 %s9, 1
    %s17 = ssub.s32 %s9, %s16
    %p18 = scmp.eq.s32.totalorder %s17, 0
    %s20 = sadd.s32 %s19, 1
    %s21 = scalar_select %p18, %s19, %s20
    %p24 = pneg %p18
    %p25 = scmp.eq.s32.totalorder %s9, 1
    %p26 = por %p24, %p25
    %p27 = scmp.ne.s32.totalorder %s19, %s22
    %p28 = scmp.eq.s32.totalorder %s9, 0
    %p29 = por %p27, %p28
    %p30 = scmp.ne.s32.totalorder %s19, %s22
    %p31 = scmp.eq.s32.totalorder %s14, 1
    %p32 = por %p30, %p31
    %p33 = scmp.ne.s32.totalorder %s22, %s23
    %p34 = scmp.eq.s32.totalorder %s14, 0
    %p35 = por %p33, %p34
    %p36 = scmp.ne.s32.totalorder %s22, %s23
    %p37 = scmp.eq.s32.totalorder %s15, 1
    %p38 = por %p36, %p37
    %p40 = scmp.ne.s32.totalorder %s23, %s39
    %p41 = scmp.eq.s32.totalorder %s15, 0
    %p42 = por %p40, %p41
    %s44 = sadd.s32 %s43, 1
    %p47 = scmp.eq.s32.totalorder %s9, 1
    %p48 = scmp.ne.s32.totalorder %s43, %s45
    %p49 = scmp.eq.s32.totalorder %s9, 0
    %p50 = por %p48, %p49
    %p51 = scmp.ne.s32.totalorder %s43, %s45
    %p52 = scmp.eq.s32.totalorder %s14, 1
    %p53 = por %p51, %p52
    %p54 = scmp.ne.s32.totalorder %s45, %s46
    %p55 = scmp.eq.s32.totalorder %s14, 0
    %p56 = por %p54, %p55
    %p57 = scmp.ne.s32.totalorder %s45, %s46
    %p58 = scmp.eq.s32.totalorder %s15, 1
    %p59 = por %p57, %p58
    %p61 = scmp.ne.s32.totalorder %s46, %s60
    %p62 = scmp.eq.s32.totalorder %s15, 0
    %p63 = por %p61, %p62
    %s65 = sadd.s32 %s64, 1
    %p68 = scmp.eq.s32.totalorder %s9, 1
    %p69 = scmp.ne.s32.totalorder %s64, %s66
    %p70 = scmp.eq.s32.totalorder %s9, 0
    %p71 = por %p69, %p70
    %p72 = scmp.ne.s32.totalorder %s64, %s66
    %p73 = scmp.eq.s32.totalorder %s14, 1
    %p74 = por %p72, %p73
    %p75 = scmp.ne.s32.totalorder %s66, %s67
    %p76 = scmp.eq.s32.totalorder %s14, 0
    %p77 = por %p75, %p76
    %p78 = scmp.ne.s32.totalorder %s66, %s67
    %p79 = scmp.eq.s32.totalorder %s15, 1
    %p80 = por %p78, %p79
    %p82 = scmp.ne.s32.totalorder %s67, %s81
    %p83 = scmp.eq.s32.totalorder %s15, 0
    %p84 = por %p82, %p83
    %s85 = ssub.s32 %s9, %s16
    %p86 = scmp.eq.s32.totalorder %s85, 0
    %s88 = sadd.s32 %s87, 1
    %s89 = scalar_select %p86, %s87, %s88
    %p92 = pneg %p86
    %p93 = scmp.eq.s32.totalorder %s9, 1
    %p94 = por %p92, %p93
    %p95 = scmp.ne.s32.totalorder %s87, %s90
    %p96 = scmp.eq.s32.totalorder %s9, 0
    %p97 = por %p95, %p96
    %p98 = scmp.ne.s32.totalorder %s87, %s90
    %p99 = scmp.eq.s32.totalorder %s14, 1
    %p100 = por %p98, %p99
    %p101 = scmp.ne.s32.totalorder %s90, %s91
    %p102 = scmp.eq.s32.totalorder %s14, 0
    %p103 = por %p101, %p102
    %p104 = scmp.ne.s32.totalorder %s90, %s91
    %p105 = scmp.eq.s32.totalorder %s15, 1
    %p106 = por %p104, %p105
    %p108 = scmp.ne.s32.totalorder %s91, %s107
    %p109 = scmp.eq.s32.totalorder %s15, 0
    %p110 = por %p108, %p109
    %p111 = scmp.le.s32.totalorder 1, %s9
    %p112 = scmp.lt.s32.totalorder %s9, 3
    %p113 = pnand %p111, %p112
    %p114 = pneg %p113
    // Predicated region
    $region9: #{forward_pallas.13} parent=5 // pred_check
      _
    $region10: #{forward_pallas.13} parent=5 // pred_check_branch
      %116 = sbr.rel (%p113) target = $region12
    $region11: #{forward_pallas.13} parent=5 // pred_region
      %s117 = ssub.s32 %s9, 1
      // Predicated region
      $region13: #{forward_pallas.13} parent=11 // pred_check
        %p118 = pneg %p56
      $region14: #{forward_pallas.13} parent=11 // pred_check_branch
        %120 = sbr.rel (%p118) target = $region16
      $region15: #{forward_pallas.13} parent=11 // pred_region
        _
      $region16: #{forward_pallas.13} parent=11 // pred_fallthru
        _
      // Predicated region
      $region17: #{forward_pallas.13} parent=11 // pred_check
        %p121 = pneg %p77
      $region18: #{forward_pallas.13} parent=11 // pred_check_branch
        %123 = sbr.rel (%p121) target = $region20
      $region19: #{forward_pallas.13} parent=11 // pred_region
        _
      $region20: #{forward_pallas.13} parent=11 // pred_fallthru
        _
    $region12: #{forward_pallas.13} parent=5 // pred_fallthru
      _
    %p124 = scmp.lt.s32.totalorder %s9, 2
    // Predicated region
    $region21: #{forward_pallas.13} parent=5 // pred_check
      %p125 = pneg %p124
    $region22: #{forward_pallas.13} parent=5 // pred_check_branch
      %127 = sbr.rel (%p125) target = $region24
    $region23: #{forward_pallas.13} parent=5 // pred_region
      // Predicated region
      $region25: #{forward_pallas.13} parent=23 // pred_check
        %p128 = pneg %p29
      $region26: #{forward_pallas.13} parent=23 // pred_check_branch
        %130 = sbr.rel (%p128) target = $region28
      $region27: #{forward_pallas.13} parent=23 // pred_region
        %p131 = scmp.lt.s32.totalorder %s9, 1
        %s132 = scalar_select %p131, %s9, 1
        %s133 = smul.addr %s132, 36
        %s134 = smul.addr %s133, 8
        %s135 = scalar_lea.vmem %s0, %s134
      $region28: #{forward_pallas.13} parent=23 // pred_fallthru
        _
    $region24: #{forward_pallas.13} parent=5 // pred_fallthru
      _
    %p136 = scmp.le.s32.totalorder 1, %s9
    %p137 = scmp.lt.s32.totalorder %s9, 3
    %p138 = pnand %p136, %p137
    %p139 = pneg %p138
    // Predicated region
    $region29: #{forward_pallas.13} parent=5 // pred_check
      _
    $region30: #{forward_pallas.13} parent=5 // pred_check_branch
      %141 = sbr.rel (%p138) target = $region32
    $region31: #{forward_pallas.13} parent=5 // pred_region
      %s142 = ssub.s32 %s9, 1
      %p143 = scmp.lt.s32.totalorder %s14, 1
      %s144 = scalar_select %p143, %s14, 1
      %s145 = smul.addr %s144, 36
      %s146 = smul.addr %s145, 8
      %s147 = scalar_lea.vmem %s0, %s146
      %p148 = pneg %p35
      %p149 = pneg %p32
      %p150 = pneg %p56
      %p151 = pneg %p53
      %p152 = pneg %p77
      %p153 = pneg %p74
      %p154 = pneg %p103
      %p155 = pneg %p100
      %p156 = scmp.lt.s32.totalorder %s14, 1
      %s157 = scalar_select %p156, %s14, 1
      %s158 = smul.addr %s157, 16
      %s159 = smul.addr %s158, 4
      %s160 = scalar_lea.vmem %s3, %s159
      %p161 = scmp.lt.s32.totalorder %s14, 1
      %s162 = scalar_select %p161, %s14, 1
      %s163 = smul.addr %s162, 36
      %s164 = smul.addr %s163, 8
      %s165 = scalar_lea.vmem %s0, %s164
      %p166 = scmp.lt.s32.totalorder %s14, 1
      %s167 = scalar_select %p166, %s14, 1
      %s168 = smul.addr %s167, 16
      %s169 = smul.addr %s168, 4
      %s170 = scalar_lea.vmem %s3, %s169
      %v171 = vld [vmem:[%s165] sm:$0xf]
      %v172 = vld [vmem:[%s165 + $0x8] sm:$0xf]
      %v173 = vld [vmem:[%s165 + $0x10] sm:$0xf]
      %v174 = vld [vmem:[%s165 + $0x18] sm:$0xf]
      %v175 = vld [vmem:[%s165 + $0x20] sm:$0xf]
      %v176 = vld [vmem:[%s165 + $0x28] sm:$0xf]
      %v177 = vld [vmem:[%s165 + $0x30] sm:$0xf]
      %v178 = vld [vmem:[%s165 + $0x38] sm:$0xf]
      %v179 = vld [vmem:[%s165 + $0x40] sm:$0xf]
      %v180 = vld [vmem:[%s165 + $0x48] sm:$0xf]
      %v181 = vld [vmem:[%s165 + $0x50] sm:$0xf]
      %v182 = vld [vmem:[%s165 + $0x58] sm:$0xf]
      %v183 = vld [vmem:[%s165 + $0x60] sm:$0xf]
      %v184 = vld [vmem:[%s165 + $0x68] sm:$0xf]
      %v185 = vld [vmem:[%s165 + $0x70] sm:$0xf]
      %v186 = vld [vmem:[%s165 + $0x78] sm:$0xf]
      %v187 = vld [vmem:[%s165 + $0x80] sm:$0xf]
      %v188 = vld [vmem:[%s165 + $0x88] sm:$0xf]
      %v189 = vld [vmem:[%s165 + $0x90] sm:$0xf]
      %v190 = vld [vmem:[%s165 + $0x98] sm:$0xf]
      %v191 = vld [vmem:[%s165 + $0xa0] sm:$0xf]
      %v192 = vld [vmem:[%s165 + $0xa8] sm:$0xf]
      %v193 = vld [vmem:[%s165 + $0xb0] sm:$0xf]
      %v194 = vld [vmem:[%s165 + $0xb8] sm:$0xf]
      %v195 = vld [vmem:[%s165 + $0xc0] sm:$0xf]
      %v196 = vld [vmem:[%s165 + $0xc8] sm:$0xf]
      %v197 = vld [vmem:[%s165 + $0xd0] sm:$0xf]
      %v198 = vld [vmem:[%s165 + $0xd8] sm:$0xf]
      %v199 = vld [vmem:[%s165 + $0xe0] sm:$0xf]
      %v200 = vld [vmem:[%s165 + $0xe8] sm:$0xf]
      %v201 = vld [vmem:[%s165 + $0xf0] sm:$0xf]
      %v202 = vld [vmem:[%s165 + $0xf8] sm:$0xf]
      %v203 = vld [vmem:[%s165 + $0x100] sm:$0xf]
      %v204 = vld [vmem:[%s165 + $0x108] sm:$0xf]
      %v205 = vld [vmem:[%s165 + $0x110] sm:$0xf]
      %v206 = vld [vmem:[%s165 + $0x118] sm:$0xf]
      %v207 = vld [vmem:[%s1] sm:$0x1]
      %v209 = vlaneseq
      %v210 = vshrl.u32 %v209, 7
      %v211 = vsub.s32 0, %v210
      %v212 = vrot.slane %v207, %v211
      %v214 = vmul.f32 %v171, %v212
      %v215 = vmul.f32 %v172, %v212
      %v216 = vmul.f32 %v173, %v212
      %v217 = vmul.f32 %v174, %v212
      %v218 = vmul.f32 %v177, %v212
      %v219 = vmul.f32 %v178, %v212
      %v220 = vmul.f32 %v179, %v212
      %v221 = vmul.f32 %v180, %v212
      %v222 = vmul.f32 %v183, %v212
      %v223 = vmul.f32 %v184, %v212
      %v224 = vmul.f32 %v185, %v212
      %v225 = vmul.f32 %v186, %v212
      %v226 = vmul.f32 %v189, %v212
      %v227 = vmul.f32 %v190, %v212
      %v228 = vmul.f32 %v191, %v212
      %v229 = vmul.f32 %v192, %v212
      %v230 = vadd.f32 %v214, 0.0
      %v231 = vadd.f32 %v215, 0.0
      %v232 = vadd.f32 %v216, 0.0
      %v233 = vadd.f32 %v217, 0.0
      %v234 = vadd.f32 %v218, 0.0
      %v235 = vadd.f32 %v219, 0.0
      %v236 = vadd.f32 %v220, 0.0
      %v237 = vadd.f32 %v221, 0.0
      %v238 = vadd.f32 %v222, 0.0
      %v239 = vadd.f32 %v223, 0.0
      %v240 = vadd.f32 %v224, 0.0
      %v241 = vadd.f32 %v225, 0.0
      %v242 = vadd.f32 %v226, 0.0
      %v243 = vadd.f32 %v227, 0.0
      %v244 = vadd.f32 %v228, 0.0
      %v245 = vadd.f32 %v229, 0.0
      %s246 = scalar_lea.vmem %s1, 3
      %v247 = vld [vmem:[%s246] sm:$0x1]
      %v249 = vlaneseq
      %v250 = vshrl.u32 %v249, 7
      %v251 = vsub.s32 0, %v250
      %v252 = vrot.slane %v247, %v251
      %v254 = vmul.f32 %v172, %v252
      %v255 = vmul.f32 %v173, %v252
      %v256 = vmul.f32 %v174, %v252
      %v257 = vmul.f32 %v175, %v252
      %v258 = vmul.f32 %v178, %v252
      %v259 = vmul.f32 %v179, %v252
      %v260 = vmul.f32 %v180, %v252
      %v261 = vmul.f32 %v181, %v252
      %v262 = vmul.f32 %v184, %v252
      %v263 = vmul.f32 %v185, %v252
      %v264 = vmul.f32 %v186, %v252
      %v265 = vmul.f32 %v187, %v252
      %v266 = vmul.f32 %v190, %v252
      %v267 = vmul.f32 %v191, %v252
      %v268 = vmul.f32 %v192, %v252
      %v269 = vmul.f32 %v193, %v252
      %v270 = vadd.f32 %v230, %v254
      %v271 = vadd.f32 %v231, %v255
      %v272 = vadd.f32 %v232, %v256
      %v273 = vadd.f32 %v233, %v257
      %v274 = vadd.f32 %v234, %v258
      %v275 = vadd.f32 %v235, %v259
      %v276 = vadd.f32 %v236, %v260
      %v277 = vadd.f32 %v237, %v261
      %v278 = vadd.f32 %v238, %v262
      %v279 = vadd.f32 %v239, %v263
      %v280 = vadd.f32 %v240, %v264
      %v281 = vadd.f32 %v241, %v265
      %v282 = vadd.f32 %v242, %v266
      %v283 = vadd.f32 %v243, %v267
      %v284 = vadd.f32 %v244, %v268
      %v285 = vadd.f32 %v245, %v269
      %s286 = scalar_lea.vmem %s1, 6
      %v287 = vld [vmem:[%s286] sm:$0x1]
      %v289 = vlaneseq
      %v290 = vshrl.u32 %v289, 7
      %v291 = vsub.s32 0, %v290
      %v292 = vrot.slane %v287, %v291
      %v294 = vmul.f32 %v173, %v292
      %v295 = vmul.f32 %v174, %v292
      %v296 = vmul.f32 %v175, %v292
      %v297 = vmul.f32 %v176, %v292
      %v298 = vmul.f32 %v179, %v292
      %v299 = vmul.f32 %v180, %v292
      %v300 = vmul.f32 %v181, %v292
      %v301 = vmul.f32 %v182, %v292
      %v302 = vmul.f32 %v185, %v292
      %v303 = vmul.f32 %v186, %v292
      %v304 = vmul.f32 %v187, %v292
      %v305 = vmul.f32 %v188, %v292
      %v306 = vmul.f32 %v191, %v292
      %v307 = vmul.f32 %v192, %v292
      %v308 = vmul.f32 %v193, %v292
      %v309 = vmul.f32 %v194, %v292
      %v310 = vadd.f32 %v270, %v294
      %v311 = vadd.f32 %v271, %v295
      %v312 = vadd.f32 %v272, %v296
      %v313 = vadd.f32 %v273, %v297
      %v314 = vadd.f32 %v274, %v298
      %v315 = vadd.f32 %v275, %v299
      %v316 = vadd.f32 %v276, %v300
      %v317 = vadd.f32 %v277, %v301
      %v318 = vadd.f32 %v278, %v302
      %v319 = vadd.f32 %v279, %v303
      %v320 = vadd.f32 %v280, %v304
      %v321 = vadd.f32 %v281, %v305
      %v322 = vadd.f32 %v282, %v306
      %v323 = vadd.f32 %v283, %v307
      %v324 = vadd.f32 %v284, %v308
      %v325 = vadd.f32 %v285, %v309
      %s326 = scalar_lea.vmem %s1, 9
      %v327 = vld [vmem:[%s326] sm:$0x1]
      %v329 = vlaneseq
      %v330 = vshrl.u32 %v329, 7
      %v331 = vsub.s32 0, %v330
      %v332 = vrot.slane %v327, %v331
      %v334 = vmul.f32 %v177, %v332
      %v335 = vmul.f32 %v178, %v332
      %v336 = vmul.f32 %v179, %v332
      %v337 = vmul.f32 %v180, %v332
      %v338 = vmul.f32 %v183, %v332
      %v339 = vmul.f32 %v184, %v332
      %v340 = vmul.f32 %v185, %v332
      %v341 = vmul.f32 %v186, %v332
      %v342 = vmul.f32 %v189, %v332
      %v343 = vmul.f32 %v190, %v332
      %v344 = vmul.f32 %v191, %v332
      %v345 = vmul.f32 %v192, %v332
      %v346 = vmul.f32 %v195, %v332
      %v347 = vmul.f32 %v196, %v332
      %v348 = vmul.f32 %v197, %v332
      %v349 = vmul.f32 %v198, %v332
      %v350 = vadd.f32 %v310, %v334
      %v351 = vadd.f32 %v311, %v335
      %v352 = vadd.f32 %v312, %v336
      %v353 = vadd.f32 %v313, %v337
      %v354 = vadd.f32 %v314, %v338
      %v355 = vadd.f32 %v315, %v339
      %v356 = vadd.f32 %v316, %v340
      %v357 = vadd.f32 %v317, %v341
      %v358 = vadd.f32 %v318, %v342
      %v359 = vadd.f32 %v319, %v343
      %v360 = vadd.f32 %v320, %v344
      %v361 = vadd.f32 %v321, %v345
      %v362 = vadd.f32 %v322, %v346
      %v363 = vadd.f32 %v323, %v347
      %v364 = vadd.f32 %v324, %v348
      %v365 = vadd.f32 %v325, %v349
      %s366 = scalar_lea.vmem %s1, 12
      %v367 = vld [vmem:[%s366] sm:$0x1]
      %v369 = vlaneseq
      %v370 = vshrl.u32 %v369, 7
      %v371 = vsub.s32 0, %v370
      %v372 = vrot.slane %v367, %v371
      %v374 = vmul.f32 %v178, %v372
      %v375 = vmul.f32 %v179, %v372
      %v376 = vmul.f32 %v180, %v372
      %v377 = vmul.f32 %v181, %v372
      %v378 = vmul.f32 %v184, %v372
      %v379 = vmul.f32 %v185, %v372
      %v380 = vmul.f32 %v186, %v372
      %v381 = vmul.f32 %v187, %v372
      %v382 = vmul.f32 %v190, %v372
      %v383 = vmul.f32 %v191, %v372
      %v384 = vmul.f32 %v192, %v372
      %v385 = vmul.f32 %v193, %v372
      %v386 = vmul.f32 %v196, %v372
      %v387 = vmul.f32 %v197, %v372
      %v388 = vmul.f32 %v198, %v372
      %v389 = vmul.f32 %v199, %v372
      %v390 = vadd.f32 %v350, %v374
      %v391 = vadd.f32 %v351, %v375
      %v392 = vadd.f32 %v352, %v376
      %v393 = vadd.f32 %v353, %v377
      %v394 = vadd.f32 %v354, %v378
      %v395 = vadd.f32 %v355, %v379
      %v396 = vadd.f32 %v356, %v380
      %v397 = vadd.f32 %v357, %v381
      %v398 = vadd.f32 %v358, %v382
      %v399 = vadd.f32 %v359, %v383
      %v400 = vadd.f32 %v360, %v384
      %v401 = vadd.f32 %v361, %v385
      %v402 = vadd.f32 %v362, %v386
      %v403 = vadd.f32 %v363, %v387
      %v404 = vadd.f32 %v364, %v388
      %v405 = vadd.f32 %v365, %v389
      %s406 = scalar_lea.vmem %s1, 15
      %v407 = vld [vmem:[%s406] sm:$0x1]
      %v409 = vlaneseq
      %v410 = vshrl.u32 %v409, 7
      %v411 = vsub.s32 0, %v410
      %v412 = vrot.slane %v407, %v411
      %v414 = vmul.f32 %v179, %v412
      %v415 = vmul.f32 %v180, %v412
      %v416 = vmul.f32 %v181, %v412
      %v417 = vmul.f32 %v182, %v412
      %v418 = vmul.f32 %v185, %v412
      %v419 = vmul.f32 %v186, %v412
      %v420 = vmul.f32 %v187, %v412
      %v421 = vmul.f32 %v188, %v412
      %v422 = vmul.f32 %v191, %v412
      %v423 = vmul.f32 %v192, %v412
      %v424 = vmul.f32 %v193, %v412
      %v425 = vmul.f32 %v194, %v412
      %v426 = vmul.f32 %v197, %v412
      %v427 = vmul.f32 %v198, %v412
      %v428 = vmul.f32 %v199, %v412
      %v429 = vmul.f32 %v200, %v412
      %v430 = vadd.f32 %v390, %v414
      %v431 = vadd.f32 %v391, %v415
      %v432 = vadd.f32 %v392, %v416
      %v433 = vadd.f32 %v393, %v417
      %v434 = vadd.f32 %v394, %v418
      %v435 = vadd.f32 %v395, %v419
      %v436 = vadd.f32 %v396, %v420
      %v437 = vadd.f32 %v397, %v421
      %v438 = vadd.f32 %v398, %v422
      %v439 = vadd.f32 %v399, %v423
      %v440 = vadd.f32 %v400, %v424
      %v441 = vadd.f32 %v401, %v425
      %v442 = vadd.f32 %v402, %v426
      %v443 = vadd.f32 %v403, %v427
      %v444 = vadd.f32 %v404, %v428
      %v445 = vadd.f32 %v405, %v429
      %s446 = scalar_lea.vmem %s1, 18
      %v447 = vld [vmem:[%s446] sm:$0x1]
      %v449 = vlaneseq
      %v450 = vshrl.u32 %v449, 7
      %v451 = vsub.s32 0, %v450
      %v452 = vrot.slane %v447, %v451
      %v454 = vmul.f32 %v183, %v452
      %v455 = vmul.f32 %v184, %v452
      %v456 = vmul.f32 %v185, %v452
      %v457 = vmul.f32 %v186, %v452
      %v458 = vmul.f32 %v189, %v452
      %v459 = vmul.f32 %v190, %v452
      %v460 = vmul.f32 %v191, %v452
      %v461 = vmul.f32 %v192, %v452
      %v462 = vmul.f32 %v195, %v452
      %v463 = vmul.f32 %v196, %v452
      %v464 = vmul.f32 %v197, %v452
      %v465 = vmul.f32 %v198, %v452
      %v466 = vmul.f32 %v201, %v452
      %v467 = vmul.f32 %v202, %v452
      %v468 = vmul.f32 %v203, %v452
      %v469 = vmul.f32 %v204, %v452
      %v470 = vadd.f32 %v430, %v454
      %v471 = vadd.f32 %v431, %v455
      %v472 = vadd.f32 %v432, %v456
      %v473 = vadd.f32 %v433, %v457
      %v474 = vadd.f32 %v434, %v458
      %v475 = vadd.f32 %v435, %v459
      %v476 = vadd.f32 %v436, %v460
      %v477 = vadd.f32 %v437, %v461
      %v478 = vadd.f32 %v438, %v462
      %v479 = vadd.f32 %v439, %v463
      %v480 = vadd.f32 %v440, %v464
      %v481 = vadd.f32 %v441, %v465
      %v482 = vadd.f32 %v442, %v466
      %v483 = vadd.f32 %v443, %v467
      %v484 = vadd.f32 %v444, %v468
      %v485 = vadd.f32 %v445, %v469
      %s486 = scalar_lea.vmem %s1, 21
      %v487 = vld [vmem:[%s486] sm:$0x1]
      %v489 = vlaneseq
      %v490 = vshrl.u32 %v489, 7
      %v491 = vsub.s32 0, %v490
      %v492 = vrot.slane %v487, %v491
      %v494 = vmul.f32 %v184, %v492
      %v495 = vmul.f32 %v185, %v492
      %v496 = vmul.f32 %v186, %v492
      %v497 = vmul.f32 %v187, %v492
      %v498 = vmul.f32 %v190, %v492
      %v499 = vmul.f32 %v191, %v492
      %v500 = vmul.f32 %v192, %v492
      %v501 = vmul.f32 %v193, %v492
      %v502 = vmul.f32 %v196, %v492
      %v503 = vmul.f32 %v197, %v492
      %v504 = vmul.f32 %v198, %v492
      %v505 = vmul.f32 %v199, %v492
      %v506 = vmul.f32 %v202, %v492
      %v507 = vmul.f32 %v203, %v492
      %v508 = vmul.f32 %v204, %v492
      %v509 = vmul.f32 %v205, %v492
      %v510 = vadd.f32 %v470, %v494
      %v511 = vadd.f32 %v471, %v495
      %v512 = vadd.f32 %v472, %v496
      %v513 = vadd.f32 %v473, %v497
      %v514 = vadd.f32 %v474, %v498
      %v515 = vadd.f32 %v475, %v499
      %v516 = vadd.f32 %v476, %v500
      %v517 = vadd.f32 %v477, %v501
      %v518 = vadd.f32 %v478, %v502
      %v519 = vadd.f32 %v479, %v503
      %v520 = vadd.f32 %v480, %v504
      %v521 = vadd.f32 %v481, %v505
      %v522 = vadd.f32 %v482, %v506
      %v523 = vadd.f32 %v483, %v507
      %v524 = vadd.f32 %v484, %v508
      %v525 = vadd.f32 %v485, %v509
      %s526 = scalar_lea.vmem %s1, 24
      %v527 = vld [vmem:[%s526] sm:$0x1]
      %v529 = vlaneseq
      %v530 = vshrl.u32 %v529, 7
      %v531 = vsub.s32 0, %v530
      %v532 = vrot.slane %v527, %v531
      %v534 = vmul.f32 %v185, %v532
      %v535 = vmul.f32 %v186, %v532
      %v536 = vmul.f32 %v187, %v532
      %v537 = vmul.f32 %v188, %v532
      %v538 = vmul.f32 %v191, %v532
      %v539 = vmul.f32 %v192, %v532
      %v540 = vmul.f32 %v193, %v532
      %v541 = vmul.f32 %v194, %v532
      %v542 = vmul.f32 %v197, %v532
      %v543 = vmul.f32 %v198, %v532
      %v544 = vmul.f32 %v199, %v532
      %v545 = vmul.f32 %v200, %v532
      %v546 = vmul.f32 %v203, %v532
      %v547 = vmul.f32 %v204, %v532
      %v548 = vmul.f32 %v205, %v532
      %v549 = vmul.f32 %v206, %v532
      %v550 = vadd.f32 %v510, %v534
      %v551 = vadd.f32 %v511, %v535
      %v552 = vadd.f32 %v512, %v536
      %v553 = vadd.f32 %v513, %v537
      %v554 = vadd.f32 %v514, %v538
      %v555 = vadd.f32 %v515, %v539
      %v556 = vadd.f32 %v516, %v540
      %v557 = vadd.f32 %v517, %v541
      %v558 = vadd.f32 %v518, %v542
      %v559 = vadd.f32 %v519, %v543
      %v560 = vadd.f32 %v520, %v544
      %v561 = vadd.f32 %v521, %v545
      %v562 = vadd.f32 %v522, %v546
      %v563 = vadd.f32 %v523, %v547
      %v564 = vadd.f32 %v524, %v548
      %v565 = vadd.f32 %v525, %v549
      %v566 = vld [vmem:[%s165 + $0x1] sm:$0xf]
      %v567 = vld [vmem:[%s165 + $0x9] sm:$0xf]
      %v568 = vld [vmem:[%s165 + $0x11] sm:$0xf]
      %v569 = vld [vmem:[%s165 + $0x19] sm:$0xf]
      %v570 = vld [vmem:[%s165 + $0x21] sm:$0xf]
      %v571 = vld [vmem:[%s165 + $0x29] sm:$0xf]
      %v572 = vld [vmem:[%s165 + $0x31] sm:$0xf]
      %v573 = vld [vmem:[%s165 + $0x39] sm:$0xf]
      %v574 = vld [vmem:[%s165 + $0x41] sm:$0xf]
      %v575 = vld [vmem:[%s165 + $0x49] sm:$0xf]
      %v576 = vld [vmem:[%s165 + $0x51] sm:$0xf]
      %v577 = vld [vmem:[%s165 + $0x59] sm:$0xf]
      %v578 = vld [vmem:[%s165 + $0x61] sm:$0xf]
      %v579 = vld [vmem:[%s165 + $0x69] sm:$0xf]
      %v580 = vld [vmem:[%s165 + $0x71] sm:$0xf]
      %v581 = vld [vmem:[%s165 + $0x79] sm:$0xf]
      %v582 = vld [vmem:[%s165 + $0x81] sm:$0xf]
      %v583 = vld [vmem:[%s165 + $0x89] sm:$0xf]
      %v584 = vld [vmem:[%s165 + $0x91] sm:$0xf]
      %v585 = vld [vmem:[%s165 + $0x99] sm:$0xf]
      %v586 = vld [vmem:[%s165 + $0xa1] sm:$0xf]
      %v587 = vld [vmem:[%s165 + $0xa9] sm:$0xf]
      %v588 = vld [vmem:[%s165 + $0xb1] sm:$0xf]
      %v589 = vld [vmem:[%s165 + $0xb9] sm:$0xf]
      %v590 = vld [vmem:[%s165 + $0xc1] sm:$0xf]
      %v591 = vld [vmem:[%s165 + $0xc9] sm:$0xf]
      %v592 = vld [vmem:[%s165 + $0xd1] sm:$0xf]
      %v593 = vld [vmem:[%s165 + $0xd9] sm:$0xf]
      %v594 = vld [vmem:[%s165 + $0xe1] sm:$0xf]
      %v595 = vld [vmem:[%s165 + $0xe9] sm:$0xf]
      %v596 = vld [vmem:[%s165 + $0xf1] sm:$0xf]
      %v597 = vld [vmem:[%s165 + $0xf9] sm:$0xf]
      %v598 = vld [vmem:[%s165 + $0x101] sm:$0xf]
      %v599 = vld [vmem:[%s165 + $0x109] sm:$0xf]
      %v600 = vld [vmem:[%s165 + $0x111] sm:$0xf]
      %v601 = vld [vmem:[%s165 + $0x119] sm:$0xf]
      %s602 = scalar_lea.vmem %s1, 1
      %v603 = vld [vmem:[%s602] sm:$0x1]
      %v605 = vlaneseq
      %v606 = vshrl.u32 %v605, 7
      %v607 = vsub.s32 0, %v606
      %v608 = vrot.slane %v603, %v607
      %v610 = vmul.f32 %v566, %v608
      %v611 = vmul.f32 %v567, %v608
      %v612 = vmul.f32 %v568, %v608
      %v613 = vmul.f32 %v569, %v608
      %v614 = vmul.f32 %v572, %v608
      %v615 = vmul.f32 %v573, %v608
      %v616 = vmul.f32 %v574, %v608
      %v617 = vmul.f32 %v575, %v608
      %v618 = vmul.f32 %v578, %v608
      %v619 = vmul.f32 %v579, %v608
      %v620 = vmul.f32 %v580, %v608
      %v621 = vmul.f32 %v581, %v608
      %v622 = vmul.f32 %v584, %v608
      %v623 = vmul.f32 %v585, %v608
      %v624 = vmul.f32 %v586, %v608
      %v625 = vmul.f32 %v587, %v608
      %v626 = vadd.f32 %v550, %v610
      %v627 = vadd.f32 %v551, %v611
      %v628 = vadd.f32 %v552, %v612
      %v629 = vadd.f32 %v553, %v613
      %v630 = vadd.f32 %v554, %v614
      %v631 = vadd.f32 %v555, %v615
      %v632 = vadd.f32 %v556, %v616
      %v633 = vadd.f32 %v557, %v617
      %v634 = vadd.f32 %v558, %v618
      %v635 = vadd.f32 %v559, %v619
      %v636 = vadd.f32 %v560, %v620
      %v637 = vadd.f32 %v561, %v621
      %v638 = vadd.f32 %v562, %v622
      %v639 = vadd.f32 %v563, %v623
      %v640 = vadd.f32 %v564, %v624
      %v641 = vadd.f32 %v565, %v625
      %s642 = scalar_lea.vmem %s1, 4
      %v643 = vld [vmem:[%s642] sm:$0x1]
      %v645 = vlaneseq
      %v646 = vshrl.u32 %v645, 7
      %v647 = vsub.s32 0, %v646
      %v648 = vrot.slane %v643, %v647
      %v650 = vmul.f32 %v567, %v648
      %v651 = vmul.f32 %v568, %v648
      %v652 = vmul.f32 %v569, %v648
      %v653 = vmul.f32 %v570, %v648
      %v654 = vmul.f32 %v573, %v648
      %v655 = vmul.f32 %v574, %v648
      %v656 = vmul.f32 %v575, %v648
      %v657 = vmul.f32 %v576, %v648
      %v658 = vmul.f32 %v579, %v648
      %v659 = vmul.f32 %v580, %v648
      %v660 = vmul.f32 %v581, %v648
      %v661 = vmul.f32 %v582, %v648
      %v662 = vmul.f32 %v585, %v648
      %v663 = vmul.f32 %v586, %v648
      %v664 = vmul.f32 %v587, %v648
      %v665 = vmul.f32 %v588, %v648
      %v666 = vadd.f32 %v626, %v650
      %v667 = vadd.f32 %v627, %v651
      %v668 = vadd.f32 %v628, %v652
      %v669 = vadd.f32 %v629, %v653
      %v670 = vadd.f32 %v630, %v654
      %v671 = vadd.f32 %v631, %v655
      %v672 = vadd.f32 %v632, %v656
      %v673 = vadd.f32 %v633, %v657
      %v674 = vadd.f32 %v634, %v658
      %v675 = vadd.f32 %v635, %v659
      %v676 = vadd.f32 %v636, %v660
      %v677 = vadd.f32 %v637, %v661
      %v678 = vadd.f32 %v638, %v662
      %v679 = vadd.f32 %v639, %v663
      %v680 = vadd.f32 %v640, %v664
      %v681 = vadd.f32 %v641, %v665
      %s682 = scalar_lea.vmem %s1, 7
      %v683 = vld [vmem:[%s682] sm:$0x1]
      %v685 = vlaneseq
      %v686 = vshrl.u32 %v685, 7
      %v687 = vsub.s32 0, %v686
      %v688 = vrot.slane %v683, %v687
      %v690 = vmul.f32 %v568, %v688
      %v691 = vmul.f32 %v569, %v688
      %v692 = vmul.f32 %v570, %v688
      %v693 = vmul.f32 %v571, %v688
      %v694 = vmul.f32 %v574, %v688
      %v695 = vmul.f32 %v575, %v688
      %v696 = vmul.f32 %v576, %v688
      %v697 = vmul.f32 %v577, %v688
      %v698 = vmul.f32 %v580, %v688
      %v699 = vmul.f32 %v581, %v688
      %v700 = vmul.f32 %v582, %v688
      %v701 = vmul.f32 %v583, %v688
      %v702 = vmul.f32 %v586, %v688
      %v703 = vmul.f32 %v587, %v688
      %v704 = vmul.f32 %v588, %v688
      %v705 = vmul.f32 %v589, %v688
      %v706 = vadd.f32 %v666, %v690
      %v707 = vadd.f32 %v667, %v691
      %v708 = vadd.f32 %v668, %v692
      %v709 = vadd.f32 %v669, %v693
      %v710 = vadd.f32 %v670, %v694
      %v711 = vadd.f32 %v671, %v695
      %v712 = vadd.f32 %v672, %v696
      %v713 = vadd.f32 %v673, %v697
      %v714 = vadd.f32 %v674, %v698
      %v715 = vadd.f32 %v675, %v699
      %v716 = vadd.f32 %v676, %v700
      %v717 = vadd.f32 %v677, %v701
      %v718 = vadd.f32 %v678, %v702
      %v719 = vadd.f32 %v679, %v703
      %v720 = vadd.f32 %v680, %v704
      %v721 = vadd.f32 %v681, %v705
      %s722 = scalar_lea.vmem %s1, 10
      %v723 = vld [vmem:[%s722] sm:$0x1]
      %v725 = vlaneseq
      %v726 = vshrl.u32 %v725, 7
      %v727 = vsub.s32 0, %v726
      %v728 = vrot.slane %v723, %v727
      %v730 = vmul.f32 %v572, %v728
      %v731 = vmul.f32 %v573, %v728
      %v732 = vmul.f32 %v574, %v728
      %v733 = vmul.f32 %v575, %v728
      %v734 = vmul.f32 %v578, %v728
      %v735 = vmul.f32 %v579, %v728
      %v736 = vmul.f32 %v580, %v728
      %v737 = vmul.f32 %v581, %v728
      %v738 = vmul.f32 %v584, %v728
      %v739 = vmul.f32 %v585, %v728
      %v740 = vmul.f32 %v586, %v728
      %v741 = vmul.f32 %v587, %v728
      %v742 = vmul.f32 %v590, %v728
      %v743 = vmul.f32 %v591, %v728
      %v744 = vmul.f32 %v592, %v728
      %v745 = vmul.f32 %v593, %v728
      %v746 = vadd.f32 %v706, %v730
      %v747 = vadd.f32 %v707, %v731
      %v748 = vadd.f32 %v708, %v732
      %v749 = vadd.f32 %v709, %v733
      %v750 = vadd.f32 %v710, %v734
      %v751 = vadd.f32 %v711, %v735
      %v752 = vadd.f32 %v712, %v736
      %v753 = vadd.f32 %v713, %v737
      %v754 = vadd.f32 %v714, %v738
      %v755 = vadd.f32 %v715, %v739
      %v756 = vadd.f32 %v716, %v740
      %v757 = vadd.f32 %v717, %v741
      %v758 = vadd.f32 %v718, %v742
      %v759 = vadd.f32 %v719, %v743
      %v760 = vadd.f32 %v720, %v744
      %v761 = vadd.f32 %v721, %v745
      %s762 = scalar_lea.vmem %s1, 13
      %v763 = vld [vmem:[%s762] sm:$0x1]
      %v765 = vlaneseq
      %v766 = vshrl.u32 %v765, 7
      %v767 = vsub.s32 0, %v766
      %v768 = vrot.slane %v763, %v767
      %v770 = vmul.f32 %v573, %v768
      %v771 = vmul.f32 %v574, %v768
      %v772 = vmul.f32 %v575, %v768
      %v773 = vmul.f32 %v576, %v768
      %v774 = vmul.f32 %v579, %v768
      %v775 = vmul.f32 %v580, %v768
      %v776 = vmul.f32 %v581, %v768
      %v777 = vmul.f32 %v582, %v768
      %v778 = vmul.f32 %v585, %v768
      %v779 = vmul.f32 %v586, %v768
      %v780 = vmul.f32 %v587, %v768
      %v781 = vmul.f32 %v588, %v768
      %v782 = vmul.f32 %v591, %v768
      %v783 = vmul.f32 %v592, %v768
      %v784 = vmul.f32 %v593, %v768
      %v785 = vmul.f32 %v594, %v768
      %v786 = vadd.f32 %v746, %v770
      %v787 = vadd.f32 %v747, %v771
      %v788 = vadd.f32 %v748, %v772
      %v789 = vadd.f32 %v749, %v773
      %v790 = vadd.f32 %v750, %v774
      %v791 = vadd.f32 %v751, %v775
      %v792 = vadd.f32 %v752, %v776
      %v793 = vadd.f32 %v753, %v777
      %v794 = vadd.f32 %v754, %v778
      %v795 = vadd.f32 %v755, %v779
      %v796 = vadd.f32 %v756, %v780
      %v797 = vadd.f32 %v757, %v781
      %v798 = vadd.f32 %v758, %v782
      %v799 = vadd.f32 %v759, %v783
      %v800 = vadd.f32 %v760, %v784
      %v801 = vadd.f32 %v761, %v785
      %s802 = scalar_lea.vmem %s1, 16
      %v803 = vld [vmem:[%s802] sm:$0x1]
      %v805 = vlaneseq
      %v806 = vshrl.u32 %v805, 7
      %v807 = vsub.s32 0, %v806
      %v808 = vrot.slane %v803, %v807
      %v810 = vmul.f32 %v574, %v808
      %v811 = vmul.f32 %v575, %v808
      %v812 = vmul.f32 %v576, %v808
      %v813 = vmul.f32 %v577, %v808
      %v814 = vmul.f32 %v580, %v808
      %v815 = vmul.f32 %v581, %v808
      %v816 = vmul.f32 %v582, %v808
      %v817 = vmul.f32 %v583, %v808
      %v818 = vmul.f32 %v586, %v808
      %v819 = vmul.f32 %v587, %v808
      %v820 = vmul.f32 %v588, %v808
      %v821 = vmul.f32 %v589, %v808
      %v822 = vmul.f32 %v592, %v808
      %v823 = vmul.f32 %v593, %v808
      %v824 = vmul.f32 %v594, %v808
      %v825 = vmul.f32 %v595, %v808
      %v826 = vadd.f32 %v786, %v810
      %v827 = vadd.f32 %v787, %v811
      %v828 = vadd.f32 %v788, %v812
      %v829 = vadd.f32 %v789, %v813
      %v830 = vadd.f32 %v790, %v814
      %v831 = vadd.f32 %v791, %v815
      %v832 = vadd.f32 %v792, %v816
      %v833 = vadd.f32 %v793, %v817
      %v834 = vadd.f32 %v794, %v818
      %v835 = vadd.f32 %v795, %v819
      %v836 = vadd.f32 %v796, %v820
      %v837 = vadd.f32 %v797, %v821
      %v838 = vadd.f32 %v798, %v822
      %v839 = vadd.f32 %v799, %v823
      %v840 = vadd.f32 %v800, %v824
      %v841 = vadd.f32 %v801, %v825
      %s842 = scalar_lea.vmem %s1, 19
      %v843 = vld [vmem:[%s842] sm:$0x1]
      %v845 = vlaneseq
      %v846 = vshrl.u32 %v845, 7
      %v847 = vsub.s32 0, %v846
      %v848 = vrot.slane %v843, %v847
      %v850 = vmul.f32 %v578, %v848
      %v851 = vmul.f32 %v579, %v848
      %v852 = vmul.f32 %v580, %v848
      %v853 = vmul.f32 %v581, %v848
      %v854 = vmul.f32 %v584, %v848
      %v855 = vmul.f32 %v585, %v848
      %v856 = vmul.f32 %v586, %v848
      %v857 = vmul.f32 %v587, %v848
      %v858 = vmul.f32 %v590, %v848
      %v859 = vmul.f32 %v591, %v848
      %v860 = vmul.f32 %v592, %v848
      %v861 = vmul.f32 %v593, %v848
      %v862 = vmul.f32 %v596, %v848
      %v863 = vmul.f32 %v597, %v848
      %v864 = vmul.f32 %v598, %v848
      %v865 = vmul.f32 %v599, %v848
      %v866 = vadd.f32 %v826, %v850
      %v867 = vadd.f32 %v827, %v851
      %v868 = vadd.f32 %v828, %v852
      %v869 = vadd.f32 %v829, %v853
      %v870 = vadd.f32 %v830, %v854
      %v871 = vadd.f32 %v831, %v855
      %v872 = vadd.f32 %v832, %v856
      %v873 = vadd.f32 %v833, %v857
      %v874 = vadd.f32 %v834, %v858
      %v875 = vadd.f32 %v835, %v859
      %v876 = vadd.f32 %v836, %v860
      %v877 = vadd.f32 %v837, %v861
      %v878 = vadd.f32 %v838, %v862
      %v879 = vadd.f32 %v839, %v863
      %v880 = vadd.f32 %v840, %v864
      %v881 = vadd.f32 %v841, %v865
      %s882 = scalar_lea.vmem %s1, 22
      %v883 = vld [vmem:[%s882] sm:$0x1]
      %v885 = vlaneseq
      %v886 = vshrl.u32 %v885, 7
      %v887 = vsub.s32 0, %v886
      %v888 = vrot.slane %v883, %v887
      %v890 = vmul.f32 %v579, %v888
      %v891 = vmul.f32 %v580, %v888
      %v892 = vmul.f32 %v581, %v888
      %v893 = vmul.f32 %v582, %v888
      %v894 = vmul.f32 %v585, %v888
      %v895 = vmul.f32 %v586, %v888
      %v896 = vmul.f32 %v587, %v888
      %v897 = vmul.f32 %v588, %v888
      %v898 = vmul.f32 %v591, %v888
      %v899 = vmul.f32 %v592, %v888
      %v900 = vmul.f32 %v593, %v888
      %v901 = vmul.f32 %v594, %v888
      %v902 = vmul.f32 %v597, %v888
      %v903 = vmul.f32 %v598, %v888
      %v904 = vmul.f32 %v599, %v888
      %v905 = vmul.f32 %v600, %v888
      %v906 = vadd.f32 %v866, %v890
      %v907 = vadd.f32 %v867, %v891
      %v908 = vadd.f32 %v868, %v892
      %v909 = vadd.f32 %v869, %v893
      %v910 = vadd.f32 %v870, %v894
      %v911 = vadd.f32 %v871, %v895
      %v912 = vadd.f32 %v872, %v896
      %v913 = vadd.f32 %v873, %v897
      %v914 = vadd.f32 %v874, %v898
      %v915 = vadd.f32 %v875, %v899
      %v916 = vadd.f32 %v876, %v900
      %v917 = vadd.f32 %v877, %v901
      %v918 = vadd.f32 %v878, %v902
      %v919 = vadd.f32 %v879, %v903
      %v920 = vadd.f32 %v880, %v904
      %v921 = vadd.f32 %v881, %v905
      %s922 = scalar_lea.vmem %s1, 25
      %v923 = vld [vmem:[%s922] sm:$0x1]
      %v925 = vlaneseq
      %v926 = vshrl.u32 %v925, 7
      %v927 = vsub.s32 0, %v926
      %v928 = vrot.slane %v923, %v927
      %v930 = vmul.f32 %v580, %v928
      %v931 = vmul.f32 %v581, %v928
      %v932 = vmul.f32 %v582, %v928
      %v933 = vmul.f32 %v583, %v928
      %v934 = vmul.f32 %v586, %v928
      %v935 = vmul.f32 %v587, %v928
      %v936 = vmul.f32 %v588, %v928
      %v937 = vmul.f32 %v589, %v928
      %v938 = vmul.f32 %v592, %v928
      %v939 = vmul.f32 %v593, %v928
      %v940 = vmul.f32 %v594, %v928
      %v941 = vmul.f32 %v595, %v928
      %v942 = vmul.f32 %v598, %v928
      %v943 = vmul.f32 %v599, %v928
      %v944 = vmul.f32 %v600, %v928
      %v945 = vmul.f32 %v601, %v928
      %v946 = vadd.f32 %v906, %v930
      %v947 = vadd.f32 %v907, %v931
      %v948 = vadd.f32 %v908, %v932
      %v949 = vadd.f32 %v909, %v933
      %v950 = vadd.f32 %v910, %v934
      %v951 = vadd.f32 %v911, %v935
      %v952 = vadd.f32 %v912, %v936
      %v953 = vadd.f32 %v913, %v937
      %v954 = vadd.f32 %v914, %v938
      %v955 = vadd.f32 %v915, %v939
      %v956 = vadd.f32 %v916, %v940
      %v957 = vadd.f32 %v917, %v941
      %v958 = vadd.f32 %v918, %v942
      %v959 = vadd.f32 %v919, %v943
      %v960 = vadd.f32 %v920, %v944
      %v961 = vadd.f32 %v921, %v945
      %v962 = vld [vmem:[%s165 + $0x2] sm:$0xf]
      %v963 = vld [vmem:[%s165 + $0xa] sm:$0xf]
      %v964 = vld [vmem:[%s165 + $0x12] sm:$0xf]
      %v965 = vld [vmem:[%s165 + $0x1a] sm:$0xf]
      %v966 = vld [vmem:[%s165 + $0x22] sm:$0xf]
      %v967 = vld [vmem:[%s165 + $0x2a] sm:$0xf]
      %v968 = vld [vmem:[%s165 + $0x32] sm:$0xf]
      %v969 = vld [vmem:[%s165 + $0x3a] sm:$0xf]
      %v970 = vld [vmem:[%s165 + $0x42] sm:$0xf]
      %v971 = vld [vmem:[%s165 + $0x4a] sm:$0xf]
      %v972 = vld [vmem:[%s165 + $0x52] sm:$0xf]
      %v973 = vld [vmem:[%s165 + $0x5a] sm:$0xf]
      %v974 = vld [vmem:[%s165 + $0x62] sm:$0xf]
      %v975 = vld [vmem:[%s165 + $0x6a] sm:$0xf]
      %v976 = vld [vmem:[%s165 + $0x72] sm:$0xf]
      %v977 = vld [vmem:[%s165 + $0x7a] sm:$0xf]
      %v978 = vld [vmem:[%s165 + $0x82] sm:$0xf]
      %v979 = vld [vmem:[%s165 + $0x8a] sm:$0xf]
      %v980 = vld [vmem:[%s165 + $0x92] sm:$0xf]
      %v981 = vld [vmem:[%s165 + $0x9a] sm:$0xf]
      %v982 = vld [vmem:[%s165 + $0xa2] sm:$0xf]
      %v983 = vld [vmem:[%s165 + $0xaa] sm:$0xf]
      %v984 = vld [vmem:[%s165 + $0xb2] sm:$0xf]
      %v985 = vld [vmem:[%s165 + $0xba] sm:$0xf]
      %v986 = vld [vmem:[%s165 + $0xc2] sm:$0xf]
      %v987 = vld [vmem:[%s165 + $0xca] sm:$0xf]
      %v988 = vld [vmem:[%s165 + $0xd2] sm:$0xf]
      %v989 = vld [vmem:[%s165 + $0xda] sm:$0xf]
      %v990 = vld [vmem:[%s165 + $0xe2] sm:$0xf]
      %v991 = vld [vmem:[%s165 + $0xea] sm:$0xf]
      %v992 = vld [vmem:[%s165 + $0xf2] sm:$0xf]
      %v993 = vld [vmem:[%s165 + $0xfa] sm:$0xf]
      %v994 = vld [vmem:[%s165 + $0x102] sm:$0xf]
      %v995 = vld [vmem:[%s165 + $0x10a] sm:$0xf]
      %v996 = vld [vmem:[%s165 + $0x112] sm:$0xf]
      %v997 = vld [vmem:[%s165 + $0x11a] sm:$0xf]
      %s998 = scalar_lea.vmem %s1, 2
      %v999 = vld [vmem:[%s998] sm:$0x1]
      %v1001 = vlaneseq
      %v1002 = vshrl.u32 %v1001, 7
      %v1003 = vsub.s32 0, %v1002
      %v1004 = vrot.slane %v999, %v1003
      %v1006 = vmul.f32 %v962, %v1004
      %v1007 = vmul.f32 %v963, %v1004
      %v1008 = vmul.f32 %v964, %v1004
      %v1009 = vmul.f32 %v965, %v1004
      %v1010 = vmul.f32 %v968, %v1004
      %v1011 = vmul.f32 %v969, %v1004
      %v1012 = vmul.f32 %v970, %v1004
      %v1013 = vmul.f32 %v971, %v1004
      %v1014 = vmul.f32 %v974, %v1004
      %v1015 = vmul.f32 %v975, %v1004
      %v1016 = vmul.f32 %v976, %v1004
      %v1017 = vmul.f32 %v977, %v1004
      %v1018 = vmul.f32 %v980, %v1004
      %v1019 = vmul.f32 %v981, %v1004
      %v1020 = vmul.f32 %v982, %v1004
      %v1021 = vmul.f32 %v983, %v1004
      %v1022 = vadd.f32 %v946, %v1006
      %v1023 = vadd.f32 %v947, %v1007
      %v1024 = vadd.f32 %v948, %v1008
      %v1025 = vadd.f32 %v949, %v1009
      %v1026 = vadd.f32 %v950, %v1010
      %v1027 = vadd.f32 %v951, %v1011
      %v1028 = vadd.f32 %v952, %v1012
      %v1029 = vadd.f32 %v953, %v1013
      %v1030 = vadd.f32 %v954, %v1014
      %v1031 = vadd.f32 %v955, %v1015
      %v1032 = vadd.f32 %v956, %v1016
      %v1033 = vadd.f32 %v957, %v1017
      %v1034 = vadd.f32 %v958, %v1018
      %v1035 = vadd.f32 %v959, %v1019
      %v1036 = vadd.f32 %v960, %v1020
      %v1037 = vadd.f32 %v961, %v1021
      %s1038 = scalar_lea.vmem %s1, 5
      %v1039 = vld [vmem:[%s1038] sm:$0x1]
      %v1041 = vlaneseq
      %v1042 = vshrl.u32 %v1041, 7
      %v1043 = vsub.s32 0, %v1042
      %v1044 = vrot.slane %v1039, %v1043
      %v1046 = vmul.f32 %v963, %v1044
      %v1047 = vmul.f32 %v964, %v1044
      %v1048 = vmul.f32 %v965, %v1044
      %v1049 = vmul.f32 %v966, %v1044
      %v1050 = vmul.f32 %v969, %v1044
      %v1051 = vmul.f32 %v970, %v1044
      %v1052 = vmul.f32 %v971, %v1044
      %v1053 = vmul.f32 %v972, %v1044
      %v1054 = vmul.f32 %v975, %v1044
      %v1055 = vmul.f32 %v976, %v1044
      %v1056 = vmul.f32 %v977, %v1044
      %v1057 = vmul.f32 %v978, %v1044
      %v1058 = vmul.f32 %v981, %v1044
      %v1059 = vmul.f32 %v982, %v1044
      %v1060 = vmul.f32 %v983, %v1044
      %v1061 = vmul.f32 %v984, %v1044
      %v1062 = vadd.f32 %v1022, %v1046
      %v1063 = vadd.f32 %v1023, %v1047
      %v1064 = vadd.f32 %v1024, %v1048
      %v1065 = vadd.f32 %v1025, %v1049
      %v1066 = vadd.f32 %v1026, %v1050
      %v1067 = vadd.f32 %v1027, %v1051
      %v1068 = vadd.f32 %v1028, %v1052
      %v1069 = vadd.f32 %v1029, %v1053
      %v1070 = vadd.f32 %v1030, %v1054
      %v1071 = vadd.f32 %v1031, %v1055
      %v1072 = vadd.f32 %v1032, %v1056
      %v1073 = vadd.f32 %v1033, %v1057
      %v1074 = vadd.f32 %v1034, %v1058
      %v1075 = vadd.f32 %v1035, %v1059
      %v1076 = vadd.f32 %v1036, %v1060
      %v1077 = vadd.f32 %v1037, %v1061
      %s1078 = scalar_lea.vmem %s1, 8
      %v1079 = vld [vmem:[%s1078] sm:$0x1]
      %v1081 = vlaneseq
      %v1082 = vshrl.u32 %v1081, 7
      %v1083 = vsub.s32 0, %v1082
      %v1084 = vrot.slane %v1079, %v1083
      %v1086 = vmul.f32 %v964, %v1084
      %v1087 = vmul.f32 %v965, %v1084
      %v1088 = vmul.f32 %v966, %v1084
      %v1089 = vmul.f32 %v967, %v1084
      %v1090 = vmul.f32 %v970, %v1084
      %v1091 = vmul.f32 %v971, %v1084
      %v1092 = vmul.f32 %v972, %v1084
      %v1093 = vmul.f32 %v973, %v1084
      %v1094 = vmul.f32 %v976, %v1084
      %v1095 = vmul.f32 %v977, %v1084
      %v1096 = vmul.f32 %v978, %v1084
      %v1097 = vmul.f32 %v979, %v1084
      %v1098 = vmul.f32 %v982, %v1084
      %v1099 = vmul.f32 %v983, %v1084
      %v1100 = vmul.f32 %v984, %v1084
      %v1101 = vmul.f32 %v985, %v1084
      %v1102 = vadd.f32 %v1062, %v1086
      %v1103 = vadd.f32 %v1063, %v1087
      %v1104 = vadd.f32 %v1064, %v1088
      %v1105 = vadd.f32 %v1065, %v1089
      %v1106 = vadd.f32 %v1066, %v1090
      %v1107 = vadd.f32 %v1067, %v1091
      %v1108 = vadd.f32 %v1068, %v1092
      %v1109 = vadd.f32 %v1069, %v1093
      %v1110 = vadd.f32 %v1070, %v1094
      %v1111 = vadd.f32 %v1071, %v1095
      %v1112 = vadd.f32 %v1072, %v1096
      %v1113 = vadd.f32 %v1073, %v1097
      %v1114 = vadd.f32 %v1074, %v1098
      %v1115 = vadd.f32 %v1075, %v1099
      %v1116 = vadd.f32 %v1076, %v1100
      %v1117 = vadd.f32 %v1077, %v1101
      %s1118 = scalar_lea.vmem %s1, 11
      %v1119 = vld [vmem:[%s1118] sm:$0x1]
      %v1121 = vlaneseq
      %v1122 = vshrl.u32 %v1121, 7
      %v1123 = vsub.s32 0, %v1122
      %v1124 = vrot.slane %v1119, %v1123
      %v1126 = vmul.f32 %v968, %v1124
      %v1127 = vmul.f32 %v969, %v1124
      %v1128 = vmul.f32 %v970, %v1124
      %v1129 = vmul.f32 %v971, %v1124
      %v1130 = vmul.f32 %v974, %v1124
      %v1131 = vmul.f32 %v975, %v1124
      %v1132 = vmul.f32 %v976, %v1124
      %v1133 = vmul.f32 %v977, %v1124
      %v1134 = vmul.f32 %v980, %v1124
      %v1135 = vmul.f32 %v981, %v1124
      %v1136 = vmul.f32 %v982, %v1124
      %v1137 = vmul.f32 %v983, %v1124
      %v1138 = vmul.f32 %v986, %v1124
      %v1139 = vmul.f32 %v987, %v1124
      %v1140 = vmul.f32 %v988, %v1124
      %v1141 = vmul.f32 %v989, %v1124
      %v1142 = vadd.f32 %v1102, %v1126
      %v1143 = vadd.f32 %v1103, %v1127
      %v1144 = vadd.f32 %v1104, %v1128
      %v1145 = vadd.f32 %v1105, %v1129
      %v1146 = vadd.f32 %v1106, %v1130
      %v1147 = vadd.f32 %v1107, %v1131
      %v1148 = vadd.f32 %v1108, %v1132
      %v1149 = vadd.f32 %v1109, %v1133
      %v1150 = vadd.f32 %v1110, %v1134
      %v1151 = vadd.f32 %v1111, %v1135
      %v1152 = vadd.f32 %v1112, %v1136
      %v1153 = vadd.f32 %v1113, %v1137
      %v1154 = vadd.f32 %v1114, %v1138
      %v1155 = vadd.f32 %v1115, %v1139
      %v1156 = vadd.f32 %v1116, %v1140
      %v1157 = vadd.f32 %v1117, %v1141
      %s1158 = scalar_lea.vmem %s1, 14
      %v1159 = vld [vmem:[%s1158] sm:$0x1]
      %v1161 = vlaneseq
      %v1162 = vshrl.u32 %v1161, 7
      %v1163 = vsub.s32 0, %v1162
      %v1164 = vrot.slane %v1159, %v1163
      %v1166 = vmul.f32 %v969, %v1164
      %v1167 = vmul.f32 %v970, %v1164
      %v1168 = vmul.f32 %v971, %v1164
      %v1169 = vmul.f32 %v972, %v1164
      %v1170 = vmul.f32 %v975, %v1164
      %v1171 = vmul.f32 %v976, %v1164
      %v1172 = vmul.f32 %v977, %v1164
      %v1173 = vmul.f32 %v978, %v1164
      %v1174 = vmul.f32 %v981, %v1164
      %v1175 = vmul.f32 %v982, %v1164
      %v1176 = vmul.f32 %v983, %v1164
      %v1177 = vmul.f32 %v984, %v1164
      %v1178 = vmul.f32 %v987, %v1164
      %v1179 = vmul.f32 %v988, %v1164
      %v1180 = vmul.f32 %v989, %v1164
      %v1181 = vmul.f32 %v990, %v1164
      %v1182 = vadd.f32 %v1142, %v1166
      %v1183 = vadd.f32 %v1143, %v1167
      %v1184 = vadd.f32 %v1144, %v1168
      %v1185 = vadd.f32 %v1145, %v1169
      %v1186 = vadd.f32 %v1146, %v1170
      %v1187 = vadd.f32 %v1147, %v1171
      %v1188 = vadd.f32 %v1148, %v1172
      %v1189 = vadd.f32 %v1149, %v1173
      %v1190 = vadd.f32 %v1150, %v1174
      %v1191 = vadd.f32 %v1151, %v1175
      %v1192 = vadd.f32 %v1152, %v1176
      %v1193 = vadd.f32 %v1153, %v1177
      %v1194 = vadd.f32 %v1154, %v1178
      %v1195 = vadd.f32 %v1155, %v1179
      %v1196 = vadd.f32 %v1156, %v1180
      %v1197 = vadd.f32 %v1157, %v1181
      %s1198 = scalar_lea.vmem %s1, 17
      %v1199 = vld [vmem:[%s1198] sm:$0x1]
      %v1201 = vlaneseq
      %v1202 = vshrl.u32 %v1201, 7
      %v1203 = vsub.s32 0, %v1202
      %v1204 = vrot.slane %v1199, %v1203
      %v1206 = vmul.f32 %v970, %v1204
      %v1207 = vmul.f32 %v971, %v1204
      %v1208 = vmul.f32 %v972, %v1204
      %v1209 = vmul.f32 %v973, %v1204
      %v1210 = vmul.f32 %v976, %v1204
      %v1211 = vmul.f32 %v977, %v1204
      %v1212 = vmul.f32 %v978, %v1204
      %v1213 = vmul.f32 %v979, %v1204
      %v1214 = vmul.f32 %v982, %v1204
      %v1215 = vmul.f32 %v983, %v1204
      %v1216 = vmul.f32 %v984, %v1204
      %v1217 = vmul.f32 %v985, %v1204
      %v1218 = vmul.f32 %v988, %v1204
      %v1219 = vmul.f32 %v989, %v1204
      %v1220 = vmul.f32 %v990, %v1204
      %v1221 = vmul.f32 %v991, %v1204
      %v1222 = vadd.f32 %v1182, %v1206
      %v1223 = vadd.f32 %v1183, %v1207
      %v1224 = vadd.f32 %v1184, %v1208
      %v1225 = vadd.f32 %v1185, %v1209
      %v1226 = vadd.f32 %v1186, %v1210
      %v1227 = vadd.f32 %v1187, %v1211
      %v1228 = vadd.f32 %v1188, %v1212
      %v1229 = vadd.f32 %v1189, %v1213
      %v1230 = vadd.f32 %v1190, %v1214
      %v1231 = vadd.f32 %v1191, %v1215
      %v1232 = vadd.f32 %v1192, %v1216
      %v1233 = vadd.f32 %v1193, %v1217
      %v1234 = vadd.f32 %v1194, %v1218
      %v1235 = vadd.f32 %v1195, %v1219
      %v1236 = vadd.f32 %v1196, %v1220
      %v1237 = vadd.f32 %v1197, %v1221
      %s1238 = scalar_lea.vmem %s1, 20
      %v1239 = vld [vmem:[%s1238] sm:$0x1]
      %v1241 = vlaneseq
      %v1242 = vshrl.u32 %v1241, 7
      %v1243 = vsub.s32 0, %v1242
      %v1244 = vrot.slane %v1239, %v1243
      %v1246 = vmul.f32 %v974, %v1244
      %v1247 = vmul.f32 %v975, %v1244
      %v1248 = vmul.f32 %v976, %v1244
      %v1249 = vmul.f32 %v977, %v1244
      %v1250 = vmul.f32 %v980, %v1244
      %v1251 = vmul.f32 %v981, %v1244
      %v1252 = vmul.f32 %v982, %v1244
      %v1253 = vmul.f32 %v983, %v1244
      %v1254 = vmul.f32 %v986, %v1244
      %v1255 = vmul.f32 %v987, %v1244
      %v1256 = vmul.f32 %v988, %v1244
      %v1257 = vmul.f32 %v989, %v1244
      %v1258 = vmul.f32 %v992, %v1244
      %v1259 = vmul.f32 %v993, %v1244
      %v1260 = vmul.f32 %v994, %v1244
      %v1261 = vmul.f32 %v995, %v1244
      %v1262 = vadd.f32 %v1222, %v1246
      %v1263 = vadd.f32 %v1223, %v1247
      %v1264 = vadd.f32 %v1224, %v1248
      %v1265 = vadd.f32 %v1225, %v1249
      %v1266 = vadd.f32 %v1226, %v1250
      %v1267 = vadd.f32 %v1227, %v1251
      %v1268 = vadd.f32 %v1228, %v1252
      %v1269 = vadd.f32 %v1229, %v1253
      %v1270 = vadd.f32 %v1230, %v1254
      %v1271 = vadd.f32 %v1231, %v1255
      %v1272 = vadd.f32 %v1232, %v1256
      %v1273 = vadd.f32 %v1233, %v1257
      %v1274 = vadd.f32 %v1234, %v1258
      %v1275 = vadd.f32 %v1235, %v1259
      %v1276 = vadd.f32 %v1236, %v1260
      %v1277 = vadd.f32 %v1237, %v1261
      %s1278 = scalar_lea.vmem %s1, 23
      %v1279 = vld [vmem:[%s1278] sm:$0x1]
      %v1281 = vlaneseq
      %v1282 = vshrl.u32 %v1281, 7
      %v1283 = vsub.s32 0, %v1282
      %v1284 = vrot.slane %v1279, %v1283
      %v1286 = vmul.f32 %v975, %v1284
      %v1287 = vmul.f32 %v976, %v1284
      %v1288 = vmul.f32 %v977, %v1284
      %v1289 = vmul.f32 %v978, %v1284
      %v1290 = vmul.f32 %v981, %v1284
      %v1291 = vmul.f32 %v982, %v1284
      %v1292 = vmul.f32 %v983, %v1284
      %v1293 = vmul.f32 %v984, %v1284
      %v1294 = vmul.f32 %v987, %v1284
      %v1295 = vmul.f32 %v988, %v1284
      %v1296 = vmul.f32 %v989, %v1284
      %v1297 = vmul.f32 %v990, %v1284
      %v1298 = vmul.f32 %v993, %v1284
      %v1299 = vmul.f32 %v994, %v1284
      %v1300 = vmul.f32 %v995, %v1284
      %v1301 = vmul.f32 %v996, %v1284
      %v1302 = vadd.f32 %v1262, %v1286
      %v1303 = vadd.f32 %v1263, %v1287
      %v1304 = vadd.f32 %v1264, %v1288
      %v1305 = vadd.f32 %v1265, %v1289
      %v1306 = vadd.f32 %v1266, %v1290
      %v1307 = vadd.f32 %v1267, %v1291
      %v1308 = vadd.f32 %v1268, %v1292
      %v1309 = vadd.f32 %v1269, %v1293
      %v1310 = vadd.f32 %v1270, %v1294
      %v1311 = vadd.f32 %v1271, %v1295
      %v1312 = vadd.f32 %v1272, %v1296
      %v1313 = vadd.f32 %v1273, %v1297
      %v1314 = vadd.f32 %v1274, %v1298
      %v1315 = vadd.f32 %v1275, %v1299
      %v1316 = vadd.f32 %v1276, %v1300
      %v1317 = vadd.f32 %v1277, %v1301
      %s1318 = scalar_lea.vmem %s1, 26
      %v1319 = vld [vmem:[%s1318] sm:$0x1]
      %v1321 = vlaneseq
      %v1322 = vshrl.u32 %v1321, 7
      %v1323 = vsub.s32 0, %v1322
      %v1324 = vrot.slane %v1319, %v1323
      %v1326 = vmul.f32 %v976, %v1324
      %v1327 = vmul.f32 %v977, %v1324
      %v1328 = vmul.f32 %v978, %v1324
      %v1329 = vmul.f32 %v979, %v1324
      %v1330 = vmul.f32 %v982, %v1324
      %v1331 = vmul.f32 %v983, %v1324
      %v1332 = vmul.f32 %v984, %v1324
      %v1333 = vmul.f32 %v985, %v1324
      %v1334 = vmul.f32 %v988, %v1324
      %v1335 = vmul.f32 %v989, %v1324
      %v1336 = vmul.f32 %v990, %v1324
      %v1337 = vmul.f32 %v991, %v1324
      %v1338 = vmul.f32 %v994, %v1324
      %v1339 = vmul.f32 %v995, %v1324
      %v1340 = vmul.f32 %v996, %v1324
      %v1341 = vmul.f32 %v997, %v1324
      %v1342 = vadd.f32 %v1302, %v1326
      %v1343 = vadd.f32 %v1303, %v1327
      %v1344 = vadd.f32 %v1304, %v1328
      %v1345 = vadd.f32 %v1305, %v1329
      %v1346 = vadd.f32 %v1306, %v1330
      %v1347 = vadd.f32 %v1307, %v1331
      %v1348 = vadd.f32 %v1308, %v1332
      %v1349 = vadd.f32 %v1309, %v1333
      %v1350 = vadd.f32 %v1310, %v1334
      %v1351 = vadd.f32 %v1311, %v1335
      %v1352 = vadd.f32 %v1312, %v1336
      %v1353 = vadd.f32 %v1313, %v1337
      %v1354 = vadd.f32 %v1314, %v1338
      %v1355 = vadd.f32 %v1315, %v1339
      %v1356 = vadd.f32 %v1316, %v1340
      %v1357 = vadd.f32 %v1317, %v1341
      %v1358 = vld [vmem:[%s2] sm:$0x1]
      %v1360 = vlaneseq
      %v1361 = vshrl.u32 %v1360, 7
      %v1362 = vsub.s32 0, %v1361
      %v1363 = vrot.slane %v1358, %v1362
      %v1365 = vadd.f32 %v1342, %v1363
      %v1366 = vadd.f32 %v1343, %v1363
      %v1367 = vadd.f32 %v1344, %v1363
      %v1368 = vadd.f32 %v1345, %v1363
      %v1369 = vadd.f32 %v1346, %v1363
      %v1370 = vadd.f32 %v1347, %v1363
      %v1371 = vadd.f32 %v1348, %v1363
      %v1372 = vadd.f32 %v1349, %v1363
      %v1373 = vadd.f32 %v1350, %v1363
      %v1374 = vadd.f32 %v1351, %v1363
      %v1375 = vadd.f32 %v1352, %v1363
      %v1376 = vadd.f32 %v1353, %v1363
      %v1377 = vadd.f32 %v1354, %v1363
      %v1378 = vadd.f32 %v1355, %v1363
      %v1379 = vadd.f32 %v1356, %v1363
      %v1380 = vadd.f32 %v1357, %v1363
      %v1381 = vxor.u32 %v1365, 2147483648
      %v1382 = vxor.u32 %v1366, 2147483648
      %v1383 = vxor.u32 %v1367, 2147483648
      %v1384 = vxor.u32 %v1368, 2147483648
      %v1385 = vxor.u32 %v1369, 2147483648
      %v1386 = vxor.u32 %v1370, 2147483648
      %v1387 = vxor.u32 %v1371, 2147483648
      %v1388 = vxor.u32 %v1372, 2147483648
      %v1389 = vxor.u32 %v1373, 2147483648
      %v1390 = vxor.u32 %v1374, 2147483648
      %v1391 = vxor.u32 %v1375, 2147483648
      %v1392 = vxor.u32 %v1376, 2147483648
      %v1393 = vxor.u32 %v1377, 2147483648
      %v1394 = vxor.u32 %v1378, 2147483648
      %v1395 = vxor.u32 %v1379, 2147483648
      %v1396 = vxor.u32 %v1380, 2147483648
      %v1397 = vmul.f32 %v1381, 1.442695
      %v1398 = vpow.pop %v1397
      %v1399 = vmul.f32 %v1382, 1.442695
      %v1400 = vpow.pop %v1399
      %v1401 = vmul.f32 %v1383, 1.442695
      %v1402 = vpow.pop %v1401
      %v1403 = vmul.f32 %v1384, 1.442695
      %v1404 = vpow.pop %v1403
      %v1405 = vmul.f32 %v1385, 1.442695
      %v1406 = vpow.pop %v1405
      %v1407 = vmul.f32 %v1386, 1.442695
      %v1408 = vpow.pop %v1407
      %v1409 = vmul.f32 %v1387, 1.442695
      %v1410 = vpow.pop %v1409
      %v1411 = vmul.f32 %v1388, 1.442695
      %v1412 = vpow.pop %v1411
      %v1413 = vmul.f32 %v1389, 1.442695
      %v1414 = vpow.pop %v1413
      %v1415 = vmul.f32 %v1390, 1.442695
      %v1416 = vpow.pop %v1415
      %v1417 = vmul.f32 %v1391, 1.442695
      %v1418 = vpow.pop %v1417
      %v1419 = vmul.f32 %v1392, 1.442695
      %v1420 = vpow.pop %v1419
      %v1421 = vmul.f32 %v1393, 1.442695
      %v1422 = vpow.pop %v1421
      %v1423 = vmul.f32 %v1394, 1.442695
      %v1424 = vpow.pop %v1423
      %v1425 = vmul.f32 %v1395, 1.442695
      %v1426 = vpow.pop %v1425
      %v1427 = vmul.f32 %v1396, 1.442695
      %v1428 = vpow.pop %v1427
      %v1429 = vadd.f32 %v1398, 1.0
      %v1430 = vadd.f32 %v1400, 1.0
      %v1431 = vadd.f32 %v1402, 1.0
      %v1432 = vadd.f32 %v1404, 1.0
      %v1433 = vadd.f32 %v1406, 1.0
      %v1434 = vadd.f32 %v1408, 1.0
      %v1435 = vadd.f32 %v1410, 1.0
      %v1436 = vadd.f32 %v1412, 1.0
      %v1437 = vadd.f32 %v1414, 1.0
      %v1438 = vadd.f32 %v1416, 1.0
      %v1439 = vadd.f32 %v1418, 1.0
      %v1440 = vadd.f32 %v1420, 1.0
      %v1441 = vadd.f32 %v1422, 1.0
      %v1442 = vadd.f32 %v1424, 1.0
      %v1443 = vadd.f32 %v1426, 1.0
      %v1444 = vadd.f32 %v1428, 1.0
      %v1445 = vrcp.pop %v1429
      %v1446 = vmul.f32 1.0, %v1445
      %v1447 = vrcp.pop %v1430
      %v1448 = vmul.f32 1.0, %v1447
      %v1449 = vrcp.pop %v1431
      %v1450 = vmul.f32 1.0, %v1449
      %v1451 = vrcp.pop %v1432
      %v1452 = vmul.f32 1.0, %v1451
      %v1453 = vrcp.pop %v1433
      %v1454 = vmul.f32 1.0, %v1453
      %v1455 = vrcp.pop %v1434
      %v1456 = vmul.f32 1.0, %v1455
      %v1457 = vrcp.pop %v1435
      %v1458 = vmul.f32 1.0, %v1457
      %v1459 = vrcp.pop %v1436
      %v1460 = vmul.f32 1.0, %v1459
      %v1461 = vrcp.pop %v1437
      %v1462 = vmul.f32 1.0, %v1461
      %v1463 = vrcp.pop %v1438
      %v1464 = vmul.f32 1.0, %v1463
      %v1465 = vrcp.pop %v1439
      %v1466 = vmul.f32 1.0, %v1465
      %v1467 = vrcp.pop %v1440
      %v1468 = vmul.f32 1.0, %v1467
      %v1469 = vrcp.pop %v1441
      %v1470 = vmul.f32 1.0, %v1469
      %v1471 = vrcp.pop %v1442
      %v1472 = vmul.f32 1.0, %v1471
      %v1473 = vrcp.pop %v1443
      %v1474 = vmul.f32 1.0, %v1473
      %v1475 = vrcp.pop %v1444
      %v1476 = vmul.f32 1.0, %v1475
      %v1477 = vmul.f32 %v1365, %v1446
      %v1478 = vmul.f32 %v1366, %v1448
      %v1479 = vmul.f32 %v1367, %v1450
      %v1480 = vmul.f32 %v1368, %v1452
      %v1481 = vmul.f32 %v1369, %v1454
      %v1482 = vmul.f32 %v1370, %v1456
      %v1483 = vmul.f32 %v1371, %v1458
      %v1484 = vmul.f32 %v1372, %v1460
      %v1485 = vmul.f32 %v1373, %v1462
      %v1486 = vmul.f32 %v1374, %v1464
      %v1487 = vmul.f32 %v1375, %v1466
      %v1488 = vmul.f32 %v1376, %v1468
      %v1489 = vmul.f32 %v1377, %v1470
      %v1490 = vmul.f32 %v1378, %v1472
      %v1491 = vmul.f32 %v1379, %v1474
      %v1492 = vmul.f32 %v1380, %v1476
      %vm1493 = vcmask 125952
      %1494 = vst.msk [vmem:[%s170] sm:$0xf] %vm1493, %v1477
      %1495 = vst.msk [vmem:[%s170 + $0x4] sm:$0xf] %vm1493, %v1478
      %1496 = vst.msk [vmem:[%s170 + $0x8] sm:$0xf] %vm1493, %v1479
      %1497 = vst.msk [vmem:[%s170 + $0xc] sm:$0xf] %vm1493, %v1480
      %1498 = vst.msk [vmem:[%s170 + $0x10] sm:$0xf] %vm1493, %v1481
      %1499 = vst.msk [vmem:[%s170 + $0x14] sm:$0xf] %vm1493, %v1482
      %1500 = vst.msk [vmem:[%s170 + $0x18] sm:$0xf] %vm1493, %v1483
      %1501 = vst.msk [vmem:[%s170 + $0x1c] sm:$0xf] %vm1493, %v1484
      %1502 = vst.msk [vmem:[%s170 + $0x20] sm:$0xf] %vm1493, %v1485
      %1503 = vst.msk [vmem:[%s170 + $0x24] sm:$0xf] %vm1493, %v1486
      %1504 = vst.msk [vmem:[%s170 + $0x28] sm:$0xf] %vm1493, %v1487
      %1505 = vst.msk [vmem:[%s170 + $0x2c] sm:$0xf] %vm1493, %v1488
      %1506 = vst.msk [vmem:[%s170 + $0x30] sm:$0xf] %vm1493, %v1489
      %1507 = vst.msk [vmem:[%s170 + $0x34] sm:$0xf] %vm1493, %v1490
      %1508 = vst.msk [vmem:[%s170 + $0x38] sm:$0xf] %vm1493, %v1491
      %1509 = vst.msk [vmem:[%s170 + $0x3c] sm:$0xf] %vm1493, %v1492
      %p1510 = scmp.lt.s32.totalorder %s14, 1
      %s1511 = scalar_select %p1510, %s14, 1
      %s1512 = smul.addr %s1511, 16
      %s1513 = smul.addr %s1512, 4
      %s1514 = scalar_lea.vmem %s3, %s1513
      // Predicated region
      $region33: #{forward_pallas.13} parent=31 // pred_check
        %p1515 = pneg %p100
      $region34: #{forward_pallas.13} parent=31 // pred_check_branch
        %1517 = sbr.rel (%p1515) target = $region36
      $region35: #{forward_pallas.13} parent=31 // pred_region
        _
      $region36: #{forward_pallas.13} parent=31 // pred_fallthru
        _
    $region32: #{forward_pallas.13} parent=5 // pred_fallthru
      _
    %p1518 = scmp.le.s32.totalorder 2, %s9
    // Predicated region
    $region37: #{forward_pallas.13} parent=5 // pred_check
      %p1519 = pneg %p1518
    $region38: #{forward_pallas.13} parent=5 // pred_check_branch
      %1521 = sbr.rel (%p1519) target = $region40
    $region39: #{forward_pallas.13} parent=5 // pred_region
      %s1522 = ssub.s32 %s9, 2
      // Predicated region
      $region41: #{forward_pallas.13} parent=39 // pred_check
        %p1523 = pneg %p106
      $region42: #{forward_pallas.13} parent=39 // pred_check_branch
        %1525 = sbr.rel (%p1523) target = $region44
      $region43: #{forward_pallas.13} parent=39 // pred_region
        %p1526 = scmp.lt.s32.totalorder %s15, 1
        %s1527 = scalar_select %p1526, %s15, 1
        %s1528 = smul.addr %s1527, 16
        %s1529 = smul.addr %s1528, 4
        %s1530 = scalar_lea.vmem %s3, %s1529
      $region44: #{forward_pallas.13} parent=39 // pred_fallthru
        _
    $region40: #{forward_pallas.13} parent=5 // pred_fallthru
      _
  $region6: #{forward_pallas.13} parent=0 // loop_footer
    %s13 = sadd.s32 1, %s9
  $region7: #{forward_pallas.13} parent=0 // loop_footer_branch
    %8 = sbr.rel target = $region3
  $region8: #{forward_pallas.13} parent=0 // loop_exit
    _

// kernel: forward_pallas.17
$region0: #{forward_pallas.17}
  #allocation0 [shape = 'u32[]', space=smem, size = 0x4, offset = 0x4, fixed_abs, tag = 'smem constant byte address 0x4 - core index']
  #allocation1 [shape = 'u32[144,128]{1,0:T(1,128)}', space=vmem, size = 0x12000, scoped, tag = 'internal scratch']
  #allocation2 [shape = 'f32[4,16]{1,0:T(4,128)}', space=vmem, size = 0x800, scoped, tag = 'scratch operand']
  #allocation3 [shape = 'f32[64,16]{1,0:T(8,128)}', space=vmem, size = 0x8000, scoped, tag = 'scratch operand']
  #allocation4 [shape = 'f32[64,16]{1,0:T(8,128)}', space=vmem, size = 0x8000, scoped, tag = 'scratch operand']
  %s0 = inlined_call_operand.vmem [shape: f32[2,64,16], index: 0, kind: input, shape index: {}]
  %s1 = inlined_call_operand.vmem [shape: f32[2,64,16], index: 1, kind: input, shape index: {}]
  %s2 = inlined_call_operand.vmem [shape: f32[2,64,4,1], index: 2, kind: input, shape index: {}]
  %s3 = inlined_call_operand.vmem [shape: f32[2,64,4,1], index: 3, kind: input, shape index: {}]
  %s4 = inlined_call_operand.vmem [shape: f32[4,16], index: 4, kind: input, shape index: {}]
  %s5 = inlined_call_operand.vmem [shape: f32[1,16], index: 5, kind: input, shape index: {}]
  %s6 = inlined_call_operand.vmem [shape: f32[1,16], index: 6, kind: input, shape index: {}]
  %s7 = inlined_call_operand.vmem [shape: f32[2,64,16], index: 7, kind: output, shape index: {}]
  %s8 = sld [smem:[#allocation0]]
  $region72: #{forward_pallas.17} parent=0
    _
  %s10 = ssub.s32 1, %s8
  %s11 = scalar_select 0, %s10, %s8
  loop: start=0, step=1, limit=4
  $region2: #{forward_pallas.17} parent=0 // loop_pre_header
    _
  $region3: #{forward_pallas.17} parent=0 // loop_header
    %s13 = sphi 0, %s17
    %p14 = scmp.ge.s32.totalorder %s13, 4
    %s20 = sphi 0, %s32
    %s21 = sphi 0, %s28
    %s22 = sphi 0, %s20
    %s23 = sphi 0, %s21
    %s24 = sphi 0, %s22
    %s25 = sphi 0, %s23
    %s37 = sphi 0, %s39
    %s40 = sphi 0, %s37
    %s41 = sphi 0, %s40
    %s57 = sphi 0, %s41
    %s65 = sphi 0, %s67
    %s68 = sphi 0, %s65
    %s69 = sphi 0, %s68
    %s85 = sphi 0, %s69
    %s93 = sphi 0, %s95
    %s96 = sphi 0, %s93
    %s97 = sphi 0, %s96
    %s113 = sphi 0, %s97
    %s121 = sphi 0, %s123
    %s124 = sphi 0, %s121
    %s125 = sphi 0, %s124
    %s141 = sphi 0, %s125
    %s145 = sphi 0, %s145
    %s147 = sphi 0, %s145
    %s148 = sphi 0, %s147
    %s162 = sphi 0, %s148
    %s166 = sphi 0, %s166
    %s168 = sphi 0, %s166
    %s169 = sphi 0, %s168
    %s183 = sphi 0, %s169
    %s187 = sphi 0, %s187
    %s189 = sphi 0, %s187
    %s190 = sphi 0, %s189
    %s204 = sphi 0, %s190
    %s212 = sphi 0, %s214
    %s215 = sphi 0, %s212
    %s216 = sphi 0, %s215
    %s232 = sphi 0, %s216
  $region4: #{forward_pallas.17} parent=0 // loop_header_branch
    %16 = sbr.rel (%p14) target = $region8
  $region5: #{forward_pallas.17} parent=0 // loop_body
    %s18 = ssub.s32 %s13, 1
    %s19 = ssub.s32 %s13, 2
    %s26 = sadd.s32 1, %s21
    %p27 = scmp.ge.s32.totalorder %s26, 1
    %s28 = scalar_select %p27, 0, %s26
    %s29 = sadd.s32 1, %s20
    %s30 = scalar_select %p27, %s29, %s20
    %p31 = scmp.ge.s32.totalorder %s30, 2
    %s32 = scalar_select %p31, 0, %s30
    %s33 = ssub.s32 %s20, %s32
    %s34 = ssub.s32 %s21, %s28
    %s35 = sor.u32 %s33, %s34
    %p36 = scmp.eq.s32.totalorder %s35, 0
    %s38 = sadd.s32 %s37, 1
    %s39 = scalar_select %p36, %s37, %s38
    %p42 = pneg %p36
    %p43 = scmp.eq.s32.totalorder %s13, 1
    %p44 = por %p42, %p43
    %p45 = scmp.ne.s32.totalorder %s37, %s40
    %p46 = scmp.eq.s32.totalorder %s13, 0
    %p47 = por %p45, %p46
    %p48 = scmp.ne.s32.totalorder %s37, %s40
    %p49 = scmp.eq.s32.totalorder %s18, 1
    %p50 = por %p48, %p49
    %p51 = scmp.ne.s32.totalorder %s40, %s41
    %p52 = scmp.eq.s32.totalorder %s18, 0
    %p53 = por %p51, %p52
    %p54 = scmp.ne.s32.totalorder %s40, %s41
    %p55 = scmp.eq.s32.totalorder %s19, 1
    %p56 = por %p54, %p55
    %p58 = scmp.ne.s32.totalorder %s41, %s57
    %p59 = scmp.eq.s32.totalorder %s19, 0
    %p60 = por %p58, %p59
    %s61 = ssub.s32 %s20, %s32
    %s62 = ssub.s32 %s21, %s28
    %s63 = sor.u32 %s61, %s62
    %p64 = scmp.eq.s32.totalorder %s63, 0
    %s66 = sadd.s32 %s65, 1
    %s67 = scalar_select %p64, %s65, %s66
    %p70 = pneg %p64
    %p71 = scmp.eq.s32.totalorder %s13, 1
    %p72 = por %p70, %p71
    %p73 = scmp.ne.s32.totalorder %s65, %s68
    %p74 = scmp.eq.s32.totalorder %s13, 0
    %p75 = por %p73, %p74
    %p76 = scmp.ne.s32.totalorder %s65, %s68
    %p77 = scmp.eq.s32.totalorder %s18, 1
    %p78 = por %p76, %p77
    %p79 = scmp.ne.s32.totalorder %s68, %s69
    %p80 = scmp.eq.s32.totalorder %s18, 0
    %p81 = por %p79, %p80
    %p82 = scmp.ne.s32.totalorder %s68, %s69
    %p83 = scmp.eq.s32.totalorder %s19, 1
    %p84 = por %p82, %p83
    %p86 = scmp.ne.s32.totalorder %s69, %s85
    %p87 = scmp.eq.s32.totalorder %s19, 0
    %p88 = por %p86, %p87
    %s89 = ssub.s32 %s20, %s32
    %s90 = ssub.s32 %s21, %s28
    %s91 = sor.u32 %s89, %s90
    %p92 = scmp.eq.s32.totalorder %s91, 0
    %s94 = sadd.s32 %s93, 1
    %s95 = scalar_select %p92, %s93, %s94
    %p98 = pneg %p92
    %p99 = scmp.eq.s32.totalorder %s13, 1
    %p100 = por %p98, %p99
    %p101 = scmp.ne.s32.totalorder %s93, %s96
    %p102 = scmp.eq.s32.totalorder %s13, 0
    %p103 = por %p101, %p102
    %p104 = scmp.ne.s32.totalorder %s93, %s96
    %p105 = scmp.eq.s32.totalorder %s18, 1
    %p106 = por %p104, %p105
    %p107 = scmp.ne.s32.totalorder %s96, %s97
    %p108 = scmp.eq.s32.totalorder %s18, 0
    %p109 = por %p107, %p108
    %p110 = scmp.ne.s32.totalorder %s96, %s97
    %p111 = scmp.eq.s32.totalorder %s19, 1
    %p112 = por %p110, %p111
    %p114 = scmp.ne.s32.totalorder %s97, %s113
    %p115 = scmp.eq.s32.totalorder %s19, 0
    %p116 = por %p114, %p115
    %s117 = ssub.s32 %s20, %s32
    %s118 = ssub.s32 %s21, %s28
    %s119 = sor.u32 %s117, %s118
    %p120 = scmp.eq.s32.totalorder %s119, 0
    %s122 = sadd.s32 %s121, 1
    %s123 = scalar_select %p120, %s121, %s122
    %p126 = pneg %p120
    %p127 = scmp.eq.s32.totalorder %s13, 1
    %p128 = por %p126, %p127
    %p129 = scmp.ne.s32.totalorder %s121, %s124
    %p130 = scmp.eq.s32.totalorder %s13, 0
    %p131 = por %p129, %p130
    %p132 = scmp.ne.s32.totalorder %s121, %s124
    %p133 = scmp.eq.s32.totalorder %s18, 1
    %p134 = por %p132, %p133
    %p135 = scmp.ne.s32.totalorder %s124, %s125
    %p136 = scmp.eq.s32.totalorder %s18, 0
    %p137 = por %p135, %p136
    %p138 = scmp.ne.s32.totalorder %s124, %s125
    %p139 = scmp.eq.s32.totalorder %s19, 1
    %p140 = por %p138, %p139
    %p142 = scmp.ne.s32.totalorder %s125, %s141
    %p143 = scmp.eq.s32.totalorder %s19, 0
    %p144 = por %p142, %p143
    %s146 = sadd.s32 %s145, 1
    %p149 = scmp.eq.s32.totalorder %s13, 1
    %p150 = scmp.ne.s32.totalorder %s145, %s147
    %p151 = scmp.eq.s32.totalorder %s13, 0
    %p152 = por %p150, %p151
    %p153 = scmp.ne.s32.totalorder %s145, %s147
    %p154 = scmp.eq.s32.totalorder %s18, 1
    %p155 = por %p153, %p154
    %p156 = scmp.ne.s32.totalorder %s147, %s148
    %p157 = scmp.eq.s32.totalorder %s18, 0
    %p158 = por %p156, %p157
    %p159 = scmp.ne.s32.totalorder %s147, %s148
    %p160 = scmp.eq.s32.totalorder %s19, 1
    %p161 = por %p159, %p160
    %p163 = scmp.ne.s32.totalorder %s148, %s162
    %p164 = scmp.eq.s32.totalorder %s19, 0
    %p165 = por %p163, %p164
    %s167 = sadd.s32 %s166, 1
    %p170 = scmp.eq.s32.totalorder %s13, 1
    %p171 = scmp.ne.s32.totalorder %s166, %s168
    %p172 = scmp.eq.s32.totalorder %s13, 0
    %p173 = por %p171, %p172
    %p174 = scmp.ne.s32.totalorder %s166, %s168
    %p175 = scmp.eq.s32.totalorder %s18, 1
    %p176 = por %p174, %p175
    %p177 = scmp.ne.s32.totalorder %s168, %s169
    %p178 = scmp.eq.s32.totalorder %s18, 0
    %p179 = por %p177, %p178
    %p180 = scmp.ne.s32.totalorder %s168, %s169
    %p181 = scmp.eq.s32.totalorder %s19, 1
    %p182 = por %p180, %p181
    %p184 = scmp.ne.s32.totalorder %s169, %s183
    %p185 = scmp.eq.s32.totalorder %s19, 0
    %p186 = por %p184, %p185
    %s188 = sadd.s32 %s187, 1
    %p191 = scmp.eq.s32.totalorder %s13, 1
    %p192 = scmp.ne.s32.totalorder %s187, %s189
    %p193 = scmp.eq.s32.totalorder %s13, 0
    %p194 = por %p192, %p193
    %p195 = scmp.ne.s32.totalorder %s187, %s189
    %p196 = scmp.eq.s32.totalorder %s18, 1
    %p197 = por %p195, %p196
    %p198 = scmp.ne.s32.totalorder %s189, %s190
    %p199 = scmp.eq.s32.totalorder %s18, 0
    %p200 = por %p198, %p199
    %p201 = scmp.ne.s32.totalorder %s189, %s190
    %p202 = scmp.eq.s32.totalorder %s19, 1
    %p203 = por %p201, %p202
    %p205 = scmp.ne.s32.totalorder %s190, %s204
    %p206 = scmp.eq.s32.totalorder %s19, 0
    %p207 = por %p205, %p206
    %s208 = ssub.s32 %s20, %s32
    %s209 = ssub.s32 %s21, %s28
    %s210 = sor.u32 %s208, %s209
    %p211 = scmp.eq.s32.totalorder %s210, 0
    %s213 = sadd.s32 %s212, 1
    %s214 = scalar_select %p211, %s212, %s213
    %p217 = pneg %p211
    %p218 = scmp.eq.s32.totalorder %s13, 1
    %p219 = por %p217, %p218
    %p220 = scmp.ne.s32.totalorder %s212, %s215
    %p221 = scmp.eq.s32.totalorder %s13, 0
    %p222 = por %p220, %p221
    %p223 = scmp.ne.s32.totalorder %s212, %s215
    %p224 = scmp.eq.s32.totalorder %s18, 1
    %p225 = por %p223, %p224
    %p226 = scmp.ne.s32.totalorder %s215, %s216
    %p227 = scmp.eq.s32.totalorder %s18, 0
    %p228 = por %p226, %p227
    %p229 = scmp.ne.s32.totalorder %s215, %s216
    %p230 = scmp.eq.s32.totalorder %s19, 1
    %p231 = por %p229, %p230
    %p233 = scmp.ne.s32.totalorder %s216, %s232
    %p234 = scmp.eq.s32.totalorder %s19, 0
    %p235 = por %p233, %p234
    %p236 = scmp.le.s32.totalorder 1, %s13
    %p237 = scmp.lt.s32.totalorder %s13, 3
    %p238 = pnand %p236, %p237
    %p239 = pneg %p238
    // Predicated region
    $region9: #{forward_pallas.17} parent=5 // pred_check
      _
    $region10: #{forward_pallas.17} parent=5 // pred_check_branch
      %241 = sbr.rel (%p238) target = $region12
    $region11: #{forward_pallas.17} parent=5 // pred_region
      %s242 = ssub.s32 %s13, 1
      // Predicated region
      $region13: #{forward_pallas.17} parent=11 // pred_check
        %p243 = pneg %p158
      $region14: #{forward_pallas.17} parent=11 // pred_check_branch
        %245 = sbr.rel (%p243) target = $region16
      $region15: #{forward_pallas.17} parent=11 // pred_region
        _
      $region16: #{forward_pallas.17} parent=11 // pred_fallthru
        _
      // Predicated region
      $region17: #{forward_pallas.17} parent=11 // pred_check
        %p246 = pneg %p179
      $region18: #{forward_pallas.17} parent=11 // pred_check_branch
        %248 = sbr.rel (%p246) target = $region20
      $region19: #{forward_pallas.17} parent=11 // pred_region
        _
      $region20: #{forward_pallas.17} parent=11 // pred_fallthru
        _
      // Predicated region
      $region21: #{forward_pallas.17} parent=11 // pred_check
        %p249 = pneg %p200
      $region22: #{forward_pallas.17} parent=11 // pred_check_branch
        %251 = sbr.rel (%p249) target = $region24
      $region23: #{forward_pallas.17} parent=11 // pred_region
        _
      $region24: #{forward_pallas.17} parent=11 // pred_fallthru
        _
    $region12: #{forward_pallas.17} parent=5 // pred_fallthru
      _
    %p252 = scmp.lt.s32.totalorder %s13, 2
    // Predicated region
    $region25: #{forward_pallas.17} parent=5 // pred_check
      %p253 = pneg %p252
    $region26: #{forward_pallas.17} parent=5 // pred_check_branch
      %255 = sbr.rel (%p253) target = $region28
    $region27: #{forward_pallas.17} parent=5 // pred_region
      // Predicated region
      $region29: #{forward_pallas.17} parent=27 // pred_check
        %p256 = pneg %p47
      $region30: #{forward_pallas.17} parent=27 // pred_check_branch
        %258 = sbr.rel (%p256) target = $region32
      $region31: #{forward_pallas.17} parent=27 // pred_region
        %s259 = smul.u32 8, %s21
        %p260 = scmp.lt.s32.totalorder %s20, 1
        %s261 = scalar_select %p260, %s20, 1
        %p262 = scmp.lt.s32.totalorder %s259, 7
        %s263 = scalar_select %p262, %s259, 7
        %s264 = smul.addr %s261, 8
        %s265 = sadd.s32 %s263, %s264
        %s266 = smul.addr %s265, 8
        %s267 = scalar_lea.vmem %s0, %s266
        %s268 = smul.u32 8, %s21
      $region32: #{forward_pallas.17} parent=27 // pred_fallthru
        _
      // Predicated region
      $region33: #{forward_pallas.17} parent=27 // pred_check
        %p269 = pneg %p75
      $region34: #{forward_pallas.17} parent=27 // pred_check_branch
        %271 = sbr.rel (%p269) target = $region36
      $region35: #{forward_pallas.17} parent=27 // pred_region
        %s272 = smul.u32 8, %s21
        %p273 = scmp.lt.s32.totalorder %s20, 1
        %s274 = scalar_select %p273, %s20, 1
        %p275 = scmp.lt.s32.totalorder %s272, 7
        %s276 = scalar_select %p275, %s272, 7
        %s277 = smul.addr %s274, 8
        %s278 = sadd.s32 %s276, %s277
        %s279 = smul.addr %s278, 8
        %s280 = scalar_lea.vmem %s1, %s279
        %s281 = smul.u32 8, %s21
      $region36: #{forward_pallas.17} parent=27 // pred_fallthru
        _
      // Predicated region
      $region37: #{forward_pallas.17} parent=27 // pred_check
        %p282 = pneg %p103
      $region38: #{forward_pallas.17} parent=27 // pred_check_branch
        %284 = sbr.rel (%p282) target = $region40
      $region39: #{forward_pallas.17} parent=27 // pred_region
        %s285 = smul.u32 64, %s21
        %p286 = scmp.lt.s32.totalorder %s20, 1
        %s287 = scalar_select %p286, %s20, 1
        %p288 = scmp.lt.s32.totalorder %s285, 63
        %s289 = scalar_select %p288, %s285, 63
        %s290 = smul.addr %s287, 64
        %s291 = sadd.s32 %s289, %s290
        %s292 = smul.addr %s291, 4
        %s293 = scalar_lea.vmem %s2, %s292
        %s294 = smul.u32 64, %s21
      $region40: #{forward_pallas.17} parent=27 // pred_fallthru
        _
      // Predicated region
      $region41: #{forward_pallas.17} parent=27 // pred_check
        %p295 = pneg %p131
      $region42: #{forward_pallas.17} parent=27 // pred_check_branch
        %297 = sbr.rel (%p295) target = $region44
      $region43: #{forward_pallas.17} parent=27 // pred_region
        %s298 = smul.u32 64, %s21
        %p299 = scmp.lt.s32.totalorder %s20, 1
        %s300 = scalar_select %p299, %s20, 1
        %p301 = scmp.lt.s32.totalorder %s298, 63
        %s302 = scalar_select %p301, %s298, 63
        %s303 = smul.addr %s300, 64
        %s304 = sadd.s32 %s302, %s303
        %s305 = smul.addr %s304, 4
        %s306 = scalar_lea.vmem %s3, %s305
        %s307 = smul.u32 64, %s21
      $region44: #{forward_pallas.17} parent=27 // pred_fallthru
        _
    $region28: #{forward_pallas.17} parent=5 // pred_fallthru
      _
    %p308 = scmp.le.s32.totalorder 1, %s13
    %p309 = scmp.lt.s32.totalorder %s13, 3
    %p310 = pnand %p308, %p309
    %p311 = pneg %p310
    // Predicated region
    $region45: #{forward_pallas.17} parent=5 // pred_check
      _
    $region46: #{forward_pallas.17} parent=5 // pred_check_branch
      %313 = sbr.rel (%p310) target = $region48
    $region47: #{forward_pallas.17} parent=5 // pred_region
      %s314 = ssub.s32 %s13, 1
      %s315 = smul.u32 8, %s23
      %p316 = scmp.lt.s32.totalorder %s22, 1
      %s317 = scalar_select %p316, %s22, 1
      %p318 = scmp.lt.s32.totalorder %s315, 7
      %s319 = scalar_select %p318, %s315, 7
      %s320 = smul.addr %s317, 8
      %s321 = sadd.s32 %s319, %s320
      %s322 = smul.addr %s321, 8
      %s323 = scalar_lea.vmem %s0, %s322
      %p324 = pneg %p53
      %p325 = pneg %p50
      %s326 = smul.u32 8, %s23
      %p327 = scmp.lt.s32.totalorder %s22, 1
      %s328 = scalar_select %p327, %s22, 1
      %p329 = scmp.lt.s32.totalorder %s326, 7
      %s330 = scalar_select %p329, %s326, 7
      %s331 = smul.addr %s328, 8
      %s332 = sadd.s32 %s330, %s331
      %s333 = smul.addr %s332, 8
      %s334 = scalar_lea.vmem %s1, %s333
      %p335 = pneg %p81
      %p336 = pneg %p78
      %s337 = smul.u32 64, %s23
      %p338 = scmp.lt.s32.totalorder %s22, 1
      %s339 = scalar_select %p338, %s22, 1
      %p340 = scmp.lt.s32.totalorder %s337, 63
      %s341 = scalar_select %p340, %s337, 63
      %s342 = smul.addr %s339, 64
      %s343 = sadd.s32 %s341, %s342
      %s344 = smul.addr %s343, 4
      %s345 = scalar_lea.vmem %s2, %s344
      %p346 = pneg %p109
      %p347 = pneg %p106
      %s348 = smul.u32 64, %s23
      %p349 = scmp.lt.s32.totalorder %s22, 1
      %s350 = scalar_select %p349, %s22, 1
      %p351 = scmp.lt.s32.totalorder %s348, 63
      %s352 = scalar_select %p351, %s348, 63
      %s353 = smul.addr %s350, 64
      %s354 = sadd.s32 %s352, %s353
      %s355 = smul.addr %s354, 4
      %s356 = scalar_lea.vmem %s3, %s355
      %p357 = pneg %p137
      %p358 = pneg %p134
      %p359 = pneg %p158
      %p360 = pneg %p155
      %p361 = pneg %p179
      %p362 = pneg %p176
      %p363 = pneg %p200
      %p364 = pneg %p197
      %p365 = pneg %p228
      %p366 = pneg %p225
      %s367 = smul.u32 8, %s23
      %p368 = scmp.lt.s32.totalorder %s22, 1
      %s369 = scalar_select %p368, %s22, 1
      %p370 = scmp.lt.s32.totalorder %s367, 7
      %s371 = scalar_select %p370, %s367, 7
      %s372 = smul.addr %s369, 8
      %s373 = sadd.s32 %s371, %s372
      %s374 = smul.addr %s373, 8
      %s375 = scalar_lea.vmem %s7, %s374
      %s376 = smul.u32 8, %s23
      %p377 = scmp.lt.s32.totalorder %s22, 1
      %s378 = scalar_select %p377, %s22, 1
      %p379 = scmp.lt.s32.totalorder %s376, 7
      %s380 = scalar_select %p379, %s376, 7
      %s381 = smul.addr %s378, 8
      %s382 = sadd.s32 %s380, %s381
      %s383 = smul.addr %s382, 8
      %s384 = scalar_lea.vmem %s0, %s383
      %s385 = smul.u32 8, %s23
      %s386 = smul.u32 8, %s23
      %p387 = scmp.lt.s32.totalorder %s22, 1
      %s388 = scalar_select %p387, %s22, 1
      %p389 = scmp.lt.s32.totalorder %s386, 7
      %s390 = scalar_select %p389, %s386, 7
      %s391 = smul.addr %s388, 8
      %s392 = sadd.s32 %s390, %s391
      %s393 = smul.addr %s392, 8
      %s394 = scalar_lea.vmem %s1, %s393
      %s395 = smul.u32 8, %s23
      %s396 = smul.u32 64, %s23
      %p397 = scmp.lt.s32.totalorder %s22, 1
      %s398 = scalar_select %p397, %s22, 1
      %p399 = scmp.lt.s32.totalorder %s396, 63
      %s400 = scalar_select %p399, %s396, 63
      %s401 = smul.addr %s398, 64
      %s402 = sadd.s32 %s400, %s401
      %s403 = smul.addr %s402, 4
      %s404 = scalar_lea.vmem %s2, %s403
      %s405 = smul.u32 64, %s23
      %s406 = smul.u32 64, %s23
      %p407 = scmp.lt.s32.totalorder %s22, 1
      %s408 = scalar_select %p407, %s22, 1
      %p409 = scmp.lt.s32.totalorder %s406, 63
      %s410 = scalar_select %p409, %s406, 63
      %s411 = smul.addr %s408, 64
      %s412 = sadd.s32 %s410, %s411
      %s413 = smul.addr %s412, 4
      %s414 = scalar_lea.vmem %s3, %s413
      %s415 = smul.u32 64, %s23
      %s416 = smul.u32 8, %s23
      %p417 = scmp.lt.s32.totalorder %s22, 1
      %s418 = scalar_select %p417, %s22, 1
      %p419 = scmp.lt.s32.totalorder %s416, 7
      %s420 = scalar_select %p419, %s416, 7
      %s421 = smul.addr %s418, 8
      %s422 = sadd.s32 %s420, %s421
      %s423 = smul.addr %s422, 8
      %s424 = scalar_lea.vmem %s7, %s423
      %s425 = smul.u32 8, %s23
      %p426 = scmp.eq.s32.totalorder %s23, 0
      // Predicated region
      $region49: #{forward_pallas.17} parent=47 // pred_check
        %p427 = pneg %p426
      $region50: #{forward_pallas.17} parent=47 // pred_check_branch
        %429 = sbr.rel (%p427) target = $region52
      $region51: #{forward_pallas.17} parent=47 // pred_region
        %vm430 = vcmask 125952
        %431 = vst.msk [vmem:[#allocation2] sm:$0xf] %vm430, 0.0
      $region52: #{forward_pallas.17} parent=47 // pred_fallthru
        _
      %v432 = vld [vmem:[%s394] sm:$0xff]
      %v433 = vld [vmem:[%s394 + $0x8] sm:$0xff]
      %v434 = vld [vmem:[%s394 + $0x10] sm:$0xff]
      %v435 = vld [vmem:[%s394 + $0x18] sm:$0xff]
      %v436 = vld [vmem:[%s394 + $0x20] sm:$0xff]
      %v437 = vld [vmem:[%s394 + $0x28] sm:$0xff]
      %v438 = vld [vmem:[%s394 + $0x30] sm:$0xff]
      %v439 = vld [vmem:[%s394 + $0x38] sm:$0xff]
      %v440 = vld [vmem:[%s6] sm:$0x1]
      %v442 = vlaneseq
      %v443 = vshrl.u32 %v442, 7
      %v444 = vsub.s32 0, %v443
      %v445 = vrot.slane %v440, %v444
      %v447 = vadd.f32 %v432, %v445
      %v448 = vadd.f32 %v433, %v445
      %v449 = vadd.f32 %v434, %v445
      %v450 = vadd.f32 %v435, %v445
      %v451 = vadd.f32 %v436, %v445
      %v452 = vadd.f32 %v437, %v445
      %v453 = vadd.f32 %v438, %v445
      %v454 = vadd.f32 %v439, %v445
      %v455 = vmax.f32 %v447, 0.0
      %v456 = vmax.f32 %v448, 0.0
      %v457 = vmax.f32 %v449, 0.0
      %v458 = vmax.f32 %v450, 0.0
      %v459 = vmax.f32 %v451, 0.0
      %v460 = vmax.f32 %v452, 0.0
      %v461 = vmax.f32 %v453, 0.0
      %v462 = vmax.f32 %v454, 0.0
      %vm463 = vcmp.ne.f32.partialorder %v447, %v447
      %vm464 = vcmp.ne.f32.partialorder %v448, %v448
      %vm465 = vcmp.ne.f32.partialorder %v449, %v449
      %vm466 = vcmp.ne.f32.partialorder %v450, %v450
      %vm467 = vcmp.ne.f32.partialorder %v451, %v451
      %vm468 = vcmp.ne.f32.partialorder %v452, %v452
      %vm469 = vcmp.ne.f32.partialorder %v453, %v453
      %vm470 = vcmp.ne.f32.partialorder %v454, %v454
      %v471 = vadd.f32 %v447, 0.0
      %v472 = vadd.f32 %v448, 0.0
      %v473 = vadd.f32 %v449, 0.0
      %v474 = vadd.f32 %v450, 0.0
      %v475 = vadd.f32 %v451, 0.0
      %v476 = vadd.f32 %v452, 0.0
      %v477 = vadd.f32 %v453, 0.0
      %v478 = vadd.f32 %v454, 0.0
      %v479 = vand.u32 2147483647, %v447
      %v480 = vand.u32 2147483647, %v448
      %v481 = vand.u32 2147483647, %v449
      %v482 = vand.u32 2147483647, %v450
      %v483 = vand.u32 2147483647, %v451
      %v484 = vand.u32 2147483647, %v452
      %v485 = vand.u32 2147483647, %v453
      %v486 = vand.u32 2147483647, %v454
      %v487 = vsub.f32 0.0, %v479
      %v488 = vsub.f32 0.0, %v480
      %v489 = vsub.f32 0.0, %v481
      %v490 = vsub.f32 0.0, %v482
      %v491 = vsub.f32 0.0, %v483
      %v492 = vsub.f32 0.0, %v484
      %v493 = vsub.f32 0.0, %v485
      %v494 = vsub.f32 0.0, %v486
      %v495 = vmul.f32 %v487, 1.442695
      %v496 = vpow.pop %v495
      %v497 = vmul.f32 %v488, 1.442695
      %v498 = vpow.pop %v497
      %v499 = vmul.f32 %v489, 1.442695
      %v500 = vpow.pop %v499
      %v501 = vmul.f32 %v490, 1.442695
      %v502 = vpow.pop %v501
      %v503 = vmul.f32 %v491, 1.442695
      %v504 = vpow.pop %v503
      %v505 = vmul.f32 %v492, 1.442695
      %v506 = vpow.pop %v505
      %v507 = vmul.f32 %v493, 1.442695
      %v508 = vpow.pop %v507
      %v509 = vmul.f32 %v494, 1.442695
      %v510 = vpow.pop %v509
      %v511 = vadd.f32 %v496, 1.0
      %v512 = vlog2.pop %v511
      %v513 = vmul.f32 %v512, 0.6931472
      %v514 = vmul.f32 -0.5, %v496
      %v515 = vadd.f32 %v514, 1.0
      %v516 = vmul.f32 %v515, %v496
      %v517 = vand.u32 2147483647, %v496
      %vm518 = vcmp.lt.f32.partialorder %v517, 0.0004427343
      %v519 = vsel %vm518, %v516, %v513
      %v520 = vadd.f32 %v498, 1.0
      %v521 = vlog2.pop %v520
      %v522 = vmul.f32 %v521, 0.6931472
      %v523 = vmul.f32 -0.5, %v498
      %v524 = vadd.f32 %v523, 1.0
      %v525 = vmul.f32 %v524, %v498
      %v526 = vand.u32 2147483647, %v498
      %vm527 = vcmp.lt.f32.partialorder %v526, 0.0004427343
      %v528 = vsel %vm527, %v525, %v522
      %v529 = vadd.f32 %v500, 1.0
      %v530 = vlog2.pop %v529
      %v531 = vmul.f32 %v530, 0.6931472
      %v532 = vmul.f32 -0.5, %v500
      %v533 = vadd.f32 %v532, 1.0
      %v534 = vmul.f32 %v533, %v500
      %v535 = vand.u32 2147483647, %v500
      %vm536 = vcmp.lt.f32.partialorder %v535, 0.0004427343
      %v537 = vsel %vm536, %v534, %v531
      %v538 = vadd.f32 %v502, 1.0
      %v539 = vlog2.pop %v538
      %v540 = vmul.f32 %v539, 0.6931472
      %v541 = vmul.f32 -0.5, %v502
      %v542 = vadd.f32 %v541, 1.0
      %v543 = vmul.f32 %v542, %v502
      %v544 = vand.u32 2147483647, %v502
      %vm545 = vcmp.lt.f32.partialorder %v544, 0.0004427343
      %v546 = vsel %vm545, %v543, %v540
      %v547 = vadd.f32 %v504, 1.0
      %v548 = vlog2.pop %v547
      %v549 = vmul.f32 %v548, 0.6931472
      %v550 = vmul.f32 -0.5, %v504
      %v551 = vadd.f32 %v550, 1.0
      %v552 = vmul.f32 %v551, %v504
      %v553 = vand.u32 2147483647, %v504
      %vm554 = vcmp.lt.f32.partialorder %v553, 0.0004427343
      %v555 = vsel %vm554, %v552, %v549
      %v556 = vadd.f32 %v506, 1.0
      %v557 = vlog2.pop %v556
      %v558 = vmul.f32 %v557, 0.6931472
      %v559 = vmul.f32 -0.5, %v506
      %v560 = vadd.f32 %v559, 1.0
      %v561 = vmul.f32 %v560, %v506
      %v562 = vand.u32 2147483647, %v506
      %vm563 = vcmp.lt.f32.partialorder %v562, 0.0004427343
      %v564 = vsel %vm563, %v561, %v558
      %v565 = vadd.f32 %v508, 1.0
      %v566 = vlog2.pop %v565
      %v567 = vmul.f32 %v566, 0.6931472
      %v568 = vmul.f32 -0.5, %v508
      %v569 = vadd.f32 %v568, 1.0
      %v570 = vmul.f32 %v569, %v508
      %v571 = vand.u32 2147483647, %v508
      %vm572 = vcmp.lt.f32.partialorder %v571, 0.0004427343
      %v573 = vsel %vm572, %v570, %v567
      %v574 = vadd.f32 %v510, 1.0
      %v575 = vlog2.pop %v574
      %v576 = vmul.f32 %v575, 0.6931472
      %v577 = vmul.f32 -0.5, %v510
      %v578 = vadd.f32 %v577, 1.0
      %v579 = vmul.f32 %v578, %v510
      %v580 = vand.u32 2147483647, %v510
      %vm581 = vcmp.lt.f32.partialorder %v580, 0.0004427343
      %v582 = vsel %vm581, %v579, %v576
      %v583 = vadd.f32 %v455, %v519
      %v584 = vadd.f32 %v456, %v528
      %v585 = vadd.f32 %v457, %v537
      %v586 = vadd.f32 %v458, %v546
      %v587 = vadd.f32 %v459, %v555
      %v588 = vadd.f32 %v460, %v564
      %v589 = vadd.f32 %v461, %v573
      %v590 = vadd.f32 %v462, %v582
      %v591 = vsel %vm463, %v471, %v583
      %v592 = vsel %vm464, %v472, %v584
      %v593 = vsel %vm465, %v473, %v585
      %v594 = vsel %vm466, %v474, %v586
      %v595 = vsel %vm467, %v475, %v587
      %v596 = vsel %vm468, %v476, %v588
      %v597 = vsel %vm469, %v477, %v589
      %v598 = vsel %vm470, %v478, %v590
      %vm599 = vcmask 130048
      %600 = vst.msk [vmem:[#allocation3] sm:$0xff] %vm599, %v591
      %601 = vst.msk [vmem:[#allocation3 + $0x8] sm:$0xff] %vm599, %v592
      %602 = vst.msk [vmem:[#allocation3 + $0x10] sm:$0xff] %vm599, %v593
      %603 = vst.msk [vmem:[#allocation3 + $0x18] sm:$0xff] %vm599, %v594
      %604 = vst.msk [vmem:[#allocation3 + $0x20] sm:$0xff] %vm599, %v595
      %605 = vst.msk [vmem:[#allocation3 + $0x28] sm:$0xff] %vm599, %v596
      %606 = vst.msk [vmem:[#allocation3 + $0x30] sm:$0xff] %vm599, %v597
      %607 = vst.msk [vmem:[#allocation3 + $0x38] sm:$0xff] %vm599, %v598
      %v608 = vld [vmem:[%s384] sm:$0xff]
      %v609 = vld [vmem:[%s384 + $0x8] sm:$0xff]
      %v610 = vld [vmem:[%s384 + $0x10] sm:$0xff]
      %v611 = vld [vmem:[%s384 + $0x18] sm:$0xff]
      %v612 = vld [vmem:[%s384 + $0x20] sm:$0xff]
      %v613 = vld [vmem:[%s384 + $0x28] sm:$0xff]
      %v614 = vld [vmem:[%s384 + $0x30] sm:$0xff]
      %v615 = vld [vmem:[%s384 + $0x38] sm:$0xff]
      %v616 = vmul.f32 %v591, %v608
      %v617 = vmul.f32 %v592, %v609
      %v618 = vmul.f32 %v593, %v610
      %v619 = vmul.f32 %v594, %v611
      %v620 = vmul.f32 %v595, %v612
      %v621 = vmul.f32 %v596, %v613
      %v622 = vmul.f32 %v597, %v614
      %v623 = vmul.f32 %v598, %v615
      %624 = vst.msk [vmem:[#allocation4] sm:$0xff] %vm599, %v616
      %625 = vst.msk [vmem:[#allocation4 + $0x8] sm:$0xff] %vm599, %v617
      %626 = vst.msk [vmem:[#allocation4 + $0x10] sm:$0xff] %vm599, %v618
      %627 = vst.msk [vmem:[#allocation4 + $0x18] sm:$0xff] %vm599, %v619
      %628 = vst.msk [vmem:[#allocation4 + $0x20] sm:$0xff] %vm599, %v620
      %629 = vst.msk [vmem:[#allocation4 + $0x28] sm:$0xff] %vm599, %v621
      %630 = vst.msk [vmem:[#allocation4 + $0x30] sm:$0xff] %vm599, %v622
      %631 = vst.msk [vmem:[#allocation4 + $0x38] sm:$0xff] %vm599, %v623
      %v632 = vld [vmem:[%s4] sm:$0xf]
      %v633 = vld [vmem:[%s5] sm:$0x1]
      %v634 = vld [vmem:[#allocation2] sm:$0xf]
      loop: start=0, step=1, limit=8
      $region53: #{forward_pallas.17} parent=47 // loop_pre_header
        _
      $region54: #{forward_pallas.17} parent=47 // loop_header
        %s636 = sphi 0, %s640
        %p637 = scmp.ge.s32.totalorder %s636, 8
        %v641 = vphi %v634, %v963
      $region55: #{forward_pallas.17} parent=47 // loop_header_branch
        %639 = sbr.rel (%p637) target = $region59
      $region56: #{forward_pallas.17} parent=47 // loop_body
        %s642 = smul.u32 %s636, 8
        %s643 = scalar_lea.vmem [#allocation3], %s642
        %v644 = vld [vmem:[%s643] sm:$0x1]
        %v645 = vlaneseq
        %v646 = vshrl.u32 %v645, 7
        %v647 = vsub.s32 0, %v646
        %v648 = vrot.slane %v644, %v647
        %v649 = vmul.f32 %v648, %v632
        %v650 = vmul.f32 %v649, 1.442695
        %v651 = vpow.pop %v650
        %s652 = smul.u32 %s642, 4
        %s653 = scalar_lea.vmem %s404, %s652
        %v654 = vld [vmem:[%s653] sm:$0xf]
        %s655 = scalar_lea.vmem [#allocation4], %s642
        %v656 = vld [vmem:[%s655] sm:$0x1]
        %658 = vset.pattern.permute.xlu0 0
        %659 = vperm.xlu0 %658, %v654
        %v660 = vpop.permute.xlu0 %659
        %v662 = vlaneseq
        %v663 = vshrl.u32 %v662, 7
        %v664 = vsub.s32 0, %v663
        %v665 = vrot.slane %v656, %v664
        %v666 = vmul.f32 %v660, %v665
        %v667 = vmul.f32 %v651, %v641
        %v668 = vadd.f32 %v667, %v666
        %s669 = scalar_lea.vmem %s414, %s652
        %v670 = vld [vmem:[%s669] sm:$0xf]
        %672 = vset.pattern.permute.xlu0 0
        %673 = vperm.xlu0 %672, %v670
        %v674 = vpop.permute.xlu0 %673
        %v676 = vmul.f32 %v674, %v668
        %vm677 = vcmask 125952
        %v678 = vsel %vm677, %v676, 0.0
        %v679 = vrot.slane %v678, 4
        %v680 = vadd.f32 %v678, %v679
        %v681 = vrot.slane %v680, 2
        %v682 = vadd.f32 %v680, %v681
        %v683 = vrot.slane %v682, 1
        %v684 = vadd.f32 %v682, %v683
        %s685 = sadd.s32 %s642, 1
        %s686 = scalar_lea.vmem [#allocation3], %s685
        %v687 = vld [vmem:[%s686] sm:$0x1]
        %v688 = vlaneseq
        %v689 = vshrl.u32 %v688, 7
        %v690 = vsub.s32 0, %v689
        %v691 = vrot.slane %v687, %v690
        %v692 = vmul.f32 %v691, %v632
        %v693 = vmul.f32 %v692, 1.442695
        %v694 = vpow.pop %v693
        %s695 = smul.u32 %s685, 4
        %s696 = scalar_lea.vmem %s404, %s695
        %v697 = vld [vmem:[%s696] sm:$0xf]
        %s698 = scalar_lea.vmem [#allocation4], %s685
        %v699 = vld [vmem:[%s698] sm:$0x1]
        %701 = vset.pattern.permute.xlu0 0
        %702 = vperm.xlu0 %701, %v697
        %v703 = vpop.permute.xlu0 %702
        %v705 = vlaneseq
        %v706 = vshrl.u32 %v705, 7
        %v707 = vsub.s32 0, %v706
        %v708 = vrot.slane %v699, %v707
        %v709 = vmul.f32 %v703, %v708
        %v710 = vmul.f32 %v694, %v668
        %v711 = vadd.f32 %v710, %v709
        %s712 = scalar_lea.vmem %s414, %s695
        %v713 = vld [vmem:[%s712] sm:$0xf]
        %715 = vset.pattern.permute.xlu0 0
        %716 = vperm.xlu0 %715, %v713
        %v717 = vpop.permute.xlu0 %716
        %v719 = vmul.f32 %v717, %v711
        %v720 = vsel %vm677, %v719, 0.0
        %v721 = vrot.slane %v720, 4
        %v722 = vadd.f32 %v720, %v721
        %v723 = vrot.slane %v722, 2
        %v724 = vadd.f32 %v722, %v723
        %v725 = vrot.slane %v724, 1
        %v726 = vadd.f32 %v724, %v725
        %s727 = sadd.s32 %s642, 2
        %s728 = scalar_lea.vmem [#allocation3], %s727
        %v729 = vld [vmem:[%s728] sm:$0x1]
        %v730 = vlaneseq
        %v731 = vshrl.u32 %v730, 7
        %v732 = vsub.s32 0, %v731
        %v733 = vrot.slane %v729, %v732
        %v734 = vmul.f32 %v733, %v632
        %v735 = vmul.f32 %v734, 1.442695
        %v736 = vpow.pop %v735
        %s737 = smul.u32 %s727, 4
        %s738 = scalar_lea.vmem %s404, %s737
        %v739 = vld [vmem:[%s738] sm:$0xf]
        %s740 = scalar_lea.vmem [#allocation4], %s727
        %v741 = vld [vmem:[%s740] sm:$0x1]
        %743 = vset.pattern.permute.xlu0 0
        %744 = vperm.xlu0 %743, %v739
        %v745 = vpop.permute.xlu0 %744
        %v747 = vlaneseq
        %v748 = vshrl.u32 %v747, 7
        %v749 = vsub.s32 0, %v748
        %v750 = vrot.slane %v741, %v749
        %v751 = vmul.f32 %v745, %v750
        %v752 = vmul.f32 %v736, %v711
        %v753 = vadd.f32 %v752, %v751
        %s754 = scalar_lea.vmem %s414, %s737
        %v755 = vld [vmem:[%s754] sm:$0xf]
        %757 = vset.pattern.permute.xlu0 0
        %758 = vperm.xlu0 %757, %v755
        %v759 = vpop.permute.xlu0 %758
        %v761 = vmul.f32 %v759, %v753
        %v762 = vsel %vm677, %v761, 0.0
        %v763 = vrot.slane %v762, 4
        %v764 = vadd.f32 %v762, %v763
        %v765 = vrot.slane %v764, 2
        %v766 = vadd.f32 %v764, %v765
        %v767 = vrot.slane %v766, 1
        %v768 = vadd.f32 %v766, %v767
        %s769 = sadd.s32 %s642, 3
        %s770 = scalar_lea.vmem [#allocation3], %s769
        %v771 = vld [vmem:[%s770] sm:$0x1]
        %v772 = vlaneseq
        %v773 = vshrl.u32 %v772, 7
        %v774 = vsub.s32 0, %v773
        %v775 = vrot.slane %v771, %v774
        %v776 = vmul.f32 %v775, %v632
        %v777 = vmul.f32 %v776, 1.442695
        %v778 = vpow.pop %v777
        %s779 = smul.u32 %s769, 4
        %s780 = scalar_lea.vmem %s404, %s779
        %v781 = vld [vmem:[%s780] sm:$0xf]
        %s782 = scalar_lea.vmem [#allocation4], %s769
        %v783 = vld [vmem:[%s782] sm:$0x1]
        %785 = vset.pattern.permute.xlu0 0
        %786 = vperm.xlu0 %785, %v781
        %v787 = vpop.permute.xlu0 %786
        %v789 = vlaneseq
        %v790 = vshrl.u32 %v789, 7
        %v791 = vsub.s32 0, %v790
        %v792 = vrot.slane %v783, %v791
        %v793 = vmul.f32 %v787, %v792
        %v794 = vmul.f32 %v778, %v753
        %v795 = vadd.f32 %v794, %v793
        %s796 = scalar_lea.vmem %s414, %s779
        %v797 = vld [vmem:[%s796] sm:$0xf]
        %799 = vset.pattern.permute.xlu0 0
        %800 = vperm.xlu0 %799, %v797
        %v801 = vpop.permute.xlu0 %800
        %v803 = vmul.f32 %v801, %v795
        %v804 = vsel %vm677, %v803, 0.0
        %v805 = vrot.slane %v804, 4
        %v806 = vadd.f32 %v804, %v805
        %v807 = vrot.slane %v806, 2
        %v808 = vadd.f32 %v806, %v807
        %v809 = vrot.slane %v808, 1
        %v810 = vadd.f32 %v808, %v809
        %s811 = sadd.s32 %s642, 4
        %s812 = scalar_lea.vmem [#allocation3], %s811
        %v813 = vld [vmem:[%s812] sm:$0x1]
        %v814 = vlaneseq
        %v815 = vshrl.u32 %v814, 7
        %v816 = vsub.s32 0, %v815
        %v817 = vrot.slane %v813, %v816
        %v818 = vmul.f32 %v817, %v632
        %v819 = vmul.f32 %v818, 1.442695
        %v820 = vpow.pop %v819
        %s821 = smul.u32 %s811, 4
        %s822 = scalar_lea.vmem %s404, %s821
        %v823 = vld [vmem:[%s822] sm:$0xf]
        %s824 = scalar_lea.vmem [#allocation4], %s811
        %v825 = vld [vmem:[%s824] sm:$0x1]
        %827 = vset.pattern.permute.xlu0 0
        %828 = vperm.xlu0 %827, %v823
        %v829 = vpop.permute.xlu0 %828
        %v831 = vlaneseq
        %v832 = vshrl.u32 %v831, 7
        %v833 = vsub.s32 0, %v832
        %v834 = vrot.slane %v825, %v833
        %v835 = vmul.f32 %v829, %v834
        %v836 = vmul.f32 %v820, %v795
        %v837 = vadd.f32 %v836, %v835
        %s838 = scalar_lea.vmem %s414, %s821
        %v839 = vld [vmem:[%s838] sm:$0xf]
        %841 = vset.pattern.permute.xlu0 0
        %842 = vperm.xlu0 %841, %v839
        %v843 = vpop.permute.xlu0 %842
        %v845 = vmul.f32 %v843, %v837
        %v846 = vsel %vm677, %v845, 0.0
        %v847 = vrot.slane %v846, 4
        %v848 = vadd.f32 %v846, %v847
        %v849 = vrot.slane %v848, 2
        %v850 = vadd.f32 %v848, %v849
        %v851 = vrot.slane %v850, 1
        %v852 = vadd.f32 %v850, %v851
        %s853 = sadd.s32 %s642, 5
        %s854 = scalar_lea.vmem [#allocation3], %s853
        %v855 = vld [vmem:[%s854] sm:$0x1]
        %v856 = vlaneseq
        %v857 = vshrl.u32 %v856, 7
        %v858 = vsub.s32 0, %v857
        %v859 = vrot.slane %v855, %v858
        %v860 = vmul.f32 %v859, %v632
        %v861 = vmul.f32 %v860, 1.442695
        %v862 = vpow.pop %v861
        %s863 = smul.u32 %s853, 4
        %s864 = scalar_lea.vmem %s404, %s863
        %v865 = vld [vmem:[%s864] sm:$0xf]
        %s866 = scalar_lea.vmem [#allocation4], %s853
        %v867 = vld [vmem:[%s866] sm:$0x1]
        %869 = vset.pattern.permute.xlu0 0
        %870 = vperm.xlu0 %869, %v865
        %v871 = vpop.permute.xlu0 %870
        %v873 = vlaneseq
        %v874 = vshrl.u32 %v873, 7
        %v875 = vsub.s32 0, %v874
        %v876 = vrot.slane %v867, %v875
        %v877 = vmul.f32 %v871, %v876
        %v878 = vmul.f32 %v862, %v837
        %v879 = vadd.f32 %v878, %v877
        %s880 = scalar_lea.vmem %s414, %s863
        %v881 = vld [vmem:[%s880] sm:$0xf]
        %883 = vset.pattern.permute.xlu0 0
        %884 = vperm.xlu0 %883, %v881
        %v885 = vpop.permute.xlu0 %884
        %v887 = vmul.f32 %v885, %v879
        %v888 = vsel %vm677, %v887, 0.0
        %v889 = vrot.slane %v888, 4
        %v890 = vadd.f32 %v888, %v889
        %v891 = vrot.slane %v890, 2
        %v892 = vadd.f32 %v890, %v891
        %v893 = vrot.slane %v892, 1
        %v894 = vadd.f32 %v892, %v893
        %s895 = sadd.s32 %s642, 6
        %s896 = scalar_lea.vmem [#allocation3], %s895
        %v897 = vld [vmem:[%s896] sm:$0x1]
        %v898 = vlaneseq
        %v899 = vshrl.u32 %v898, 7
        %v900 = vsub.s32 0, %v899
        %v901 = vrot.slane %v897, %v900
        %v902 = vmul.f32 %v901, %v632
        %v903 = vmul.f32 %v902, 1.442695
        %v904 = vpow.pop %v903
        %s905 = smul.u32 %s895, 4
        %s906 = scalar_lea.vmem %s404, %s905
        %v907 = vld [vmem:[%s906] sm:$0xf]
        %s908 = scalar_lea.vmem [#allocation4], %s895
        %v909 = vld [vmem:[%s908] sm:$0x1]
        %911 = vset.pattern.permute.xlu0 0
        %912 = vperm.xlu0 %911, %v907
        %v913 = vpop.permute.xlu0 %912
        %v915 = vlaneseq
        %v916 = vshrl.u32 %v915, 7
        %v917 = vsub.s32 0, %v916
        %v918 = vrot.slane %v909, %v917
        %v919 = vmul.f32 %v913, %v918
        %v920 = vmul.f32 %v904, %v879
        %v921 = vadd.f32 %v920, %v919
        %s922 = scalar_lea.vmem %s414, %s905
        %v923 = vld [vmem:[%s922] sm:$0xf]
        %925 = vset.pattern.permute.xlu0 0
        %926 = vperm.xlu0 %925, %v923
        %v927 = vpop.permute.xlu0 %926
        %v929 = vmul.f32 %v927, %v921
        %v930 = vsel %vm677, %v929, 0.0
        %v931 = vrot.slane %v930, 4
        %v932 = vadd.f32 %v930, %v931
        %v933 = vrot.slane %v932, 2
        %v934 = vadd.f32 %v932, %v933
        %v935 = vrot.slane %v934, 1
        %v936 = vadd.f32 %v934, %v935
        %s937 = sadd.s32 %s642, 7
        %s938 = scalar_lea.vmem [#allocation3], %s937
        %v939 = vld [vmem:[%s938] sm:$0x1]
        %v940 = vlaneseq
        %v941 = vshrl.u32 %v940, 7
        %v942 = vsub.s32 0, %v941
        %v943 = vrot.slane %v939, %v942
        %v944 = vmul.f32 %v943, %v632
        %v945 = vmul.f32 %v944, 1.442695
        %v946 = vpow.pop %v945
        %s947 = smul.u32 %s937, 4
        %s948 = scalar_lea.vmem %s404, %s947
        %v949 = vld [vmem:[%s948] sm:$0xf]
        %s950 = scalar_lea.vmem [#allocation4], %s937
        %v951 = vld [vmem:[%s950] sm:$0x1]
        %953 = vset.pattern.permute.xlu0 0
        %954 = vperm.xlu0 %953, %v949
        %v955 = vpop.permute.xlu0 %954
        %v957 = vlaneseq
        %v958 = vshrl.u32 %v957, 7
        %v959 = vsub.s32 0, %v958
        %v960 = vrot.slane %v951, %v959
        %v961 = vmul.f32 %v955, %v960
        %v962 = vmul.f32 %v946, %v921
        %v963 = vadd.f32 %v962, %v961
        %s964 = scalar_lea.vmem %s414, %s947
        %v965 = vld [vmem:[%s964] sm:$0xf]
        %967 = vset.pattern.permute.xlu0 0
        %968 = vperm.xlu0 %967, %v965
        %v969 = vpop.permute.xlu0 %968
        %v971 = vmul.f32 %v969, %v963
        %v972 = vsel %vm677, %v971, 0.0
        %v973 = vrot.slane %v972, 4
        %v974 = vadd.f32 %v972, %v973
        %v975 = vrot.slane %v974, 2
        %v976 = vadd.f32 %v974, %v975
        %v977 = vrot.slane %v976, 1
        %v978 = vadd.f32 %v976, %v977
        %vm979 = vcmask 1040384
        %v980 = vsel %vm979, %v684, %v726
        %vm981 = vcmask 1041408
        %v982 = vsel %vm981, %v980, %v768
        %vm983 = vcmask 1042432
        %v984 = vsel %vm983, %v982, %v810
        %vm985 = vcmask 1043456
        %v986 = vsel %vm985, %v984, %v852
        %vm987 = vcmask 1044480
        %v988 = vsel %vm987, %v986, %v894
        %vm989 = vcmask 1045504
        %v990 = vsel %vm989, %v988, %v936
        %vm991 = vcmask 1046528
        %v992 = vsel %vm991, %v990, %v978
        %s993 = scalar_lea.vmem %s384, %s642
        %v994 = vld [vmem:[%s993] sm:$0xff]
        %v996 = vlaneseq
        %v997 = vshrl.u32 %v996, 7
        %v998 = vsub.s32 0, %v997
        %v999 = vrot.slane %v633, %v998
        %v1001 = vmul.f32 %v994, %v999
        %v1002 = vadd.f32 %v992, %v1001
        %s1003 = scalar_lea.vmem %s424, %s642
        %1004 = vst.msk [vmem:[%s1003] sm:$0xff] %vm599, %v1002
      $region57: #{forward_pallas.17} parent=47 // loop_footer
        %s640 = sadd.s32 1, %s636
      $region58: #{forward_pallas.17} parent=47 // loop_footer_branch
        %635 = sbr.rel target = $region54
      $region59: #{forward_pallas.17} parent=47 // loop_exit
        _
      %vm1005 = vcmask 125952
      %1006 = vst.msk [vmem:[#allocation2] sm:$0xf] %vm1005, %v641
      %s1007 = smul.u32 8, %s23
      %p1008 = scmp.lt.s32.totalorder %s22, 1
      %s1009 = scalar_select %p1008, %s22, 1
      %p1010 = scmp.lt.s32.totalorder %s1007, 7
      %s1011 = scalar_select %p1010, %s1007, 7
      %s1012 = smul.addr %s1009, 8
      %s1013 = sadd.s32 %s1011, %s1012
      %s1014 = smul.addr %s1013, 8
      %s1015 = scalar_lea.vmem %s7, %s1014
      // Predicated region
      $region60: #{forward_pallas.17} parent=47 // pred_check
        %p1016 = pneg %p225
      $region61: #{forward_pallas.17} parent=47 // pred_check_branch
        %1018 = sbr.rel (%p1016) target = $region63
      $region62: #{forward_pallas.17} parent=47 // pred_region
        %s1019 = smul.u32 8, %s23
      $region63: #{forward_pallas.17} parent=47 // pred_fallthru
        _
    $region48: #{forward_pallas.17} parent=5 // pred_fallthru
      _
    %p1020 = scmp.le.s32.totalorder 2, %s13
    // Predicated region
    $region64: #{forward_pallas.17} parent=5 // pred_check
      %p1021 = pneg %p1020
    $region65: #{forward_pallas.17} parent=5 // pred_check_branch
      %1023 = sbr.rel (%p1021) target = $region67
    $region66: #{forward_pallas.17} parent=5 // pred_region
      %s1024 = ssub.s32 %s13, 2
      // Predicated region
      $region68: #{forward_pallas.17} parent=66 // pred_check
        %p1025 = pneg %p231
      $region69: #{forward_pallas.17} parent=66 // pred_check_branch
        %1027 = sbr.rel (%p1025) target = $region71
      $region70: #{forward_pallas.17} parent=66 // pred_region
        %s1028 = smul.u32 8, %s25
        %p1029 = scmp.lt.s32.totalorder %s24, 1
        %s1030 = scalar_select %p1029, %s24, 1
        %p1031 = scmp.lt.s32.totalorder %s1028, 7
        %s1032 = scalar_select %p1031, %s1028, 7
        %s1033 = smul.addr %s1030, 8
        %s1034 = sadd.s32 %s1032, %s1033
        %s1035 = smul.addr %s1034, 8
        %s1036 = scalar_lea.vmem %s7, %s1035
      $region71: #{forward_pallas.17} parent=66 // pred_fallthru
        _
    $region67: #{forward_pallas.17} parent=5 // pred_fallthru
      _
  $region6: #{forward_pallas.17} parent=0 // loop_footer
    %s17 = sadd.s32 1, %s13
  $region7: #{forward_pallas.17} parent=0 // loop_footer_branch
    %12 = sbr.rel target = $region3
  $region8: #{forward_pallas.17} parent=0 // loop_exit
    _

// kernel: forward_pallas.19
$region0: #{forward_pallas.19}
  #allocation0 [shape = 'u32[]', space=smem, size = 0x4, offset = 0x4, fixed_abs, tag = 'smem constant byte address 0x4 - core index']
  #allocation1 [shape = 'u32[144,128]{1,0:T(1,128)}', space=vmem, size = 0x12000, scoped, tag = 'internal scratch']
  %s0 = inlined_call_operand.vmem [shape: f32[128,16], index: 0, kind: input, shape index: {}]
  %s1 = inlined_call_operand.vmem [shape: f32[128,16], index: 1, kind: input, shape index: {}]
  %s2 = inlined_call_operand.vmem [shape: f32[1,16], index: 2, kind: input, shape index: {}]
  %s3 = inlined_call_operand.vmem [shape: f32[1,16], index: 3, kind: input, shape index: {}]
  %s4 = inlined_call_operand.vmem [shape: f32[1,16], index: 4, kind: input, shape index: {}]
  %s5 = inlined_call_operand.vmem [shape: f32[1,16], index: 5, kind: input, shape index: {}]
  %s6 = inlined_call_operand.vmem [shape: bf16[16,16], index: 6, kind: input, shape index: {}]
  %s7 = inlined_call_operand.vmem [shape: bf16[16,16], index: 7, kind: input, shape index: {}]
  %s8 = inlined_call_operand.vmem [shape: f32[1,16], index: 8, kind: input, shape index: {}]
  %s9 = inlined_call_operand.vmem [shape: f32[128,16], index: 9, kind: output, shape index: {}]
  %s10 = sld [smem:[#allocation0]]
  $region46: #{forward_pallas.19} parent=0
    _
  %s12 = ssub.s32 1, %s10
  %s13 = scalar_select 0, %s12, %s10
  // Predicated region
  $region2: #{forward_pallas.19} parent=0 // pred_check
    _
  $region3: #{forward_pallas.19} parent=0 // pred_check_branch
    %15 = sbr.rel (0) target = $region5
  $region4: #{forward_pallas.19} parent=0 // pred_region
    _
  $region5: #{forward_pallas.19} parent=0 // pred_fallthru
    _
  // Predicated region
  $region6: #{forward_pallas.19} parent=0 // pred_check
    _
  $region7: #{forward_pallas.19} parent=0 // pred_check_branch
    %17 = sbr.rel (0) target = $region9
  $region8: #{forward_pallas.19} parent=0 // pred_region
    _
  $region9: #{forward_pallas.19} parent=0 // pred_fallthru
    _
  // Predicated region
  $region10: #{forward_pallas.19} parent=0 // pred_check
    _
  $region11: #{forward_pallas.19} parent=0 // pred_check_branch
    %19 = sbr.rel (0) target = $region13
  $region12: #{forward_pallas.19} parent=0 // pred_region
    _
  $region13: #{forward_pallas.19} parent=0 // pred_fallthru
    _
  // Predicated region
  $region14: #{forward_pallas.19} parent=0 // pred_check
    _
  $region15: #{forward_pallas.19} parent=0 // pred_check_branch
    %21 = sbr.rel (0) target = $region17
  $region16: #{forward_pallas.19} parent=0 // pred_region
    _
  $region17: #{forward_pallas.19} parent=0 // pred_fallthru
    _
  // Predicated region
  $region18: #{forward_pallas.19} parent=0 // pred_check
    _
  $region19: #{forward_pallas.19} parent=0 // pred_check_branch
    %23 = sbr.rel (0) target = $region21
  $region20: #{forward_pallas.19} parent=0 // pred_region
    _
  $region21: #{forward_pallas.19} parent=0 // pred_fallthru
    _
  // Predicated region
  $region22: #{forward_pallas.19} parent=0 // pred_check
    _
  $region23: #{forward_pallas.19} parent=0 // pred_check_branch
    %25 = sbr.rel (0) target = $region25
  $region24: #{forward_pallas.19} parent=0 // pred_region
    _
  $region25: #{forward_pallas.19} parent=0 // pred_fallthru
    _
  // Predicated region
  $region26: #{forward_pallas.19} parent=0 // pred_check
    _
  $region27: #{forward_pallas.19} parent=0 // pred_check_branch
    %27 = sbr.rel (0) target = $region29
  $region28: #{forward_pallas.19} parent=0 // pred_region
    _
  $region29: #{forward_pallas.19} parent=0 // pred_fallthru
    _
  // Predicated region
  $region30: #{forward_pallas.19} parent=0 // pred_check
    _
  $region31: #{forward_pallas.19} parent=0 // pred_check_branch
    %29 = sbr.rel (0) target = $region33
  $region32: #{forward_pallas.19} parent=0 // pred_region
    _
  $region33: #{forward_pallas.19} parent=0 // pred_fallthru
    _
  // Predicated region
  $region34: #{forward_pallas.19} parent=0 // pred_check
    _
  $region35: #{forward_pallas.19} parent=0 // pred_check_branch
    %31 = sbr.rel (0) target = $region37
  $region36: #{forward_pallas.19} parent=0 // pred_region
    _
  $region37: #{forward_pallas.19} parent=0 // pred_fallthru
    _
  %v33 = vld [vmem:[%s0] sm:$0xff]
  %v34 = vld [vmem:[%s0 + $0x8] sm:$0xff]
  %v35 = vld [vmem:[%s0 + $0x10] sm:$0xff]
  %v36 = vld [vmem:[%s0 + $0x18] sm:$0xff]
  %v37 = vld [vmem:[%s0 + $0x20] sm:$0xff]
  %v38 = vld [vmem:[%s0 + $0x28] sm:$0xff]
  %v39 = vld [vmem:[%s0 + $0x30] sm:$0xff]
  %v40 = vld [vmem:[%s0 + $0x38] sm:$0xff]
  %v41 = vld [vmem:[%s0 + $0x40] sm:$0xff]
  %v42 = vld [vmem:[%s0 + $0x48] sm:$0xff]
  %v43 = vld [vmem:[%s0 + $0x50] sm:$0xff]
  %v44 = vld [vmem:[%s0 + $0x58] sm:$0xff]
  %v45 = vld [vmem:[%s0 + $0x60] sm:$0xff]
  %v46 = vld [vmem:[%s0 + $0x68] sm:$0xff]
  %v47 = vld [vmem:[%s0 + $0x70] sm:$0xff]
  %v48 = vld [vmem:[%s0 + $0x78] sm:$0xff]
  %v49 = vld [vmem:[%s2] sm:$0x1]
  %v50 = vld [vmem:[%s3] sm:$0x1]
  %vm51 = vcmask 130048
  %v52 = vsel %vm51, %v33, 0.0
  %53 = vadd.xlane.f32.xlu0 %v52
  %v54 = vpop.xlane.xlu0 %53
  %v55 = vsel %vm51, %v34, 0.0
  %56 = vadd.xlane.f32.xlu0 %v55
  %v57 = vpop.xlane.xlu0 %56
  %v58 = vsel %vm51, %v35, 0.0
  %59 = vadd.xlane.f32.xlu0 %v58
  %v60 = vpop.xlane.xlu0 %59
  %v61 = vsel %vm51, %v36, 0.0
  %62 = vadd.xlane.f32.xlu0 %v61
  %v63 = vpop.xlane.xlu0 %62
  %v64 = vsel %vm51, %v37, 0.0
  %65 = vadd.xlane.f32.xlu0 %v64
  %v66 = vpop.xlane.xlu0 %65
  %v67 = vsel %vm51, %v38, 0.0
  %68 = vadd.xlane.f32.xlu0 %v67
  %v69 = vpop.xlane.xlu0 %68
  %v70 = vsel %vm51, %v39, 0.0
  %71 = vadd.xlane.f32.xlu0 %v70
  %v72 = vpop.xlane.xlu0 %71
  %v73 = vsel %vm51, %v40, 0.0
  %74 = vadd.xlane.f32.xlu0 %v73
  %v75 = vpop.xlane.xlu0 %74
  %v76 = vsel %vm51, %v41, 0.0
  %77 = vadd.xlane.f32.xlu0 %v76
  %v78 = vpop.xlane.xlu0 %77
  %v79 = vsel %vm51, %v42, 0.0
  %80 = vadd.xlane.f32.xlu0 %v79
  %v81 = vpop.xlane.xlu0 %80
  %v82 = vsel %vm51, %v43, 0.0
  %83 = vadd.xlane.f32.xlu0 %v82
  %v84 = vpop.xlane.xlu0 %83
  %v85 = vsel %vm51, %v44, 0.0
  %86 = vadd.xlane.f32.xlu0 %v85
  %v87 = vpop.xlane.xlu0 %86
  %v88 = vsel %vm51, %v45, 0.0
  %89 = vadd.xlane.f32.xlu0 %v88
  %v90 = vpop.xlane.xlu0 %89
  %v91 = vsel %vm51, %v46, 0.0
  %92 = vadd.xlane.f32.xlu0 %v91
  %v93 = vpop.xlane.xlu0 %92
  %v94 = vsel %vm51, %v47, 0.0
  %95 = vadd.xlane.f32.xlu0 %v94
  %v96 = vpop.xlane.xlu0 %95
  %v97 = vsel %vm51, %v48, 0.0
  %98 = vadd.xlane.f32.xlu0 %v97
  %v99 = vpop.xlane.xlu0 %98
  %v100 = vrcp.pop 16.0
  %v101 = vmul.f32 %v54, %v100
  %v102 = vmul.f32 %v57, %v100
  %v103 = vmul.f32 %v60, %v100
  %v104 = vmul.f32 %v63, %v100
  %v105 = vmul.f32 %v66, %v100
  %v106 = vmul.f32 %v69, %v100
  %v107 = vmul.f32 %v72, %v100
  %v108 = vmul.f32 %v75, %v100
  %v109 = vmul.f32 %v78, %v100
  %v110 = vmul.f32 %v81, %v100
  %v111 = vmul.f32 %v84, %v100
  %v112 = vmul.f32 %v87, %v100
  %v113 = vmul.f32 %v90, %v100
  %v114 = vmul.f32 %v93, %v100
  %v115 = vmul.f32 %v96, %v100
  %v116 = vmul.f32 %v99, %v100
  %v117 = vsub.f32 %v33, %v101
  %v118 = vsub.f32 %v34, %v102
  %v119 = vsub.f32 %v35, %v103
  %v120 = vsub.f32 %v36, %v104
  %v121 = vsub.f32 %v37, %v105
  %v122 = vsub.f32 %v38, %v106
  %v123 = vsub.f32 %v39, %v107
  %v124 = vsub.f32 %v40, %v108
  %v125 = vsub.f32 %v41, %v109
  %v126 = vsub.f32 %v42, %v110
  %v127 = vsub.f32 %v43, %v111
  %v128 = vsub.f32 %v44, %v112
  %v129 = vsub.f32 %v45, %v113
  %v130 = vsub.f32 %v46, %v114
  %v131 = vsub.f32 %v47, %v115
  %v132 = vsub.f32 %v48, %v116
  %v133 = vmul.f32 %v117, %v117
  %v134 = vmul.f32 %v118, %v118
  %v135 = vmul.f32 %v119, %v119
  %v136 = vmul.f32 %v120, %v120
  %v137 = vmul.f32 %v121, %v121
  %v138 = vmul.f32 %v122, %v122
  %v139 = vmul.f32 %v123, %v123
  %v140 = vmul.f32 %v124, %v124
  %v141 = vmul.f32 %v125, %v125
  %v142 = vmul.f32 %v126, %v126
  %v143 = vmul.f32 %v127, %v127
  %v144 = vmul.f32 %v128, %v128
  %v145 = vmul.f32 %v129, %v129
  %v146 = vmul.f32 %v130, %v130
  %v147 = vmul.f32 %v131, %v131
  %v148 = vmul.f32 %v132, %v132
  %v149 = vsel %vm51, %v133, 0.0
  %150 = vadd.xlane.f32.xlu0 %v149
  %v151 = vpop.xlane.xlu0 %150
  %v152 = vsel %vm51, %v134, 0.0
  %153 = vadd.xlane.f32.xlu0 %v152
  %v154 = vpop.xlane.xlu0 %153
  %v155 = vsel %vm51, %v135, 0.0
  %156 = vadd.xlane.f32.xlu0 %v155
  %v157 = vpop.xlane.xlu0 %156
  %v158 = vsel %vm51, %v136, 0.0
  %159 = vadd.xlane.f32.xlu0 %v158
  %v160 = vpop.xlane.xlu0 %159
  %v161 = vsel %vm51, %v137, 0.0
  %162 = vadd.xlane.f32.xlu0 %v161
  %v163 = vpop.xlane.xlu0 %162
  %v164 = vsel %vm51, %v138, 0.0
  %165 = vadd.xlane.f32.xlu0 %v164
  %v166 = vpop.xlane.xlu0 %165
  %v167 = vsel %vm51, %v139, 0.0
  %168 = vadd.xlane.f32.xlu0 %v167
  %v169 = vpop.xlane.xlu0 %168
  %v170 = vsel %vm51, %v140, 0.0
  %171 = vadd.xlane.f32.xlu0 %v170
  %v172 = vpop.xlane.xlu0 %171
  %v173 = vsel %vm51, %v141, 0.0
  %174 = vadd.xlane.f32.xlu0 %v173
  %v175 = vpop.xlane.xlu0 %174
  %v176 = vsel %vm51, %v142, 0.0
  %177 = vadd.xlane.f32.xlu0 %v176
  %v178 = vpop.xlane.xlu0 %177
  %v179 = vsel %vm51, %v143, 0.0
  %180 = vadd.xlane.f32.xlu0 %v179
  %v181 = vpop.xlane.xlu0 %180
  %v182 = vsel %vm51, %v144, 0.0
  %183 = vadd.xlane.f32.xlu0 %v182
  %v184 = vpop.xlane.xlu0 %183
  %v185 = vsel %vm51, %v145, 0.0
  %186 = vadd.xlane.f32.xlu0 %v185
  %v187 = vpop.xlane.xlu0 %186
  %v188 = vsel %vm51, %v146, 0.0
  %189 = vadd.xlane.f32.xlu0 %v188
  %v190 = vpop.xlane.xlu0 %189
  %v191 = vsel %vm51, %v147, 0.0
  %192 = vadd.xlane.f32.xlu0 %v191
  %v193 = vpop.xlane.xlu0 %192
  %v194 = vsel %vm51, %v148, 0.0
  %195 = vadd.xlane.f32.xlu0 %v194
  %v196 = vpop.xlane.xlu0 %195
  %v197 = vmul.f32 %v151, %v100
  %v198 = vmul.f32 %v154, %v100
  %v199 = vmul.f32 %v157, %v100
  %v200 = vmul.f32 %v160, %v100
  %v201 = vmul.f32 %v163, %v100
  %v202 = vmul.f32 %v166, %v100
  %v203 = vmul.f32 %v169, %v100
  %v204 = vmul.f32 %v172, %v100
  %v205 = vmul.f32 %v175, %v100
  %v206 = vmul.f32 %v178, %v100
  %v207 = vmul.f32 %v181, %v100
  %v208 = vmul.f32 %v184, %v100
  %v209 = vmul.f32 %v187, %v100
  %v210 = vmul.f32 %v190, %v100
  %v211 = vmul.f32 %v193, %v100
  %v212 = vmul.f32 %v196, %v100
  %v213 = vadd.f32 %v197, 1e-05
  %v214 = vadd.f32 %v198, 1e-05
  %v215 = vadd.f32 %v199, 1e-05
  %v216 = vadd.f32 %v200, 1e-05
  %v217 = vadd.f32 %v201, 1e-05
  %v218 = vadd.f32 %v202, 1e-05
  %v219 = vadd.f32 %v203, 1e-05
  %v220 = vadd.f32 %v204, 1e-05
  %v221 = vadd.f32 %v205, 1e-05
  %v222 = vadd.f32 %v206, 1e-05
  %v223 = vadd.f32 %v207, 1e-05
  %v224 = vadd.f32 %v208, 1e-05
  %v225 = vadd.f32 %v209, 1e-05
  %v226 = vadd.f32 %v210, 1e-05
  %v227 = vadd.f32 %v211, 1e-05
  %v228 = vadd.f32 %v212, 1e-05
  %v229 = vrsqrt.pop %v213
  %v230 = vrsqrt.pop %v214
  %v231 = vrsqrt.pop %v215
  %v232 = vrsqrt.pop %v216
  %v233 = vrsqrt.pop %v217
  %v234 = vrsqrt.pop %v218
  %v235 = vrsqrt.pop %v219
  %v236 = vrsqrt.pop %v220
  %v237 = vrsqrt.pop %v221
  %v238 = vrsqrt.pop %v222
  %v239 = vrsqrt.pop %v223
  %v240 = vrsqrt.pop %v224
  %v241 = vrsqrt.pop %v225
  %v242 = vrsqrt.pop %v226
  %v243 = vrsqrt.pop %v227
  %v244 = vrsqrt.pop %v228
  %v245 = vmul.f32 %v117, %v229
  %v246 = vmul.f32 %v118, %v230
  %v247 = vmul.f32 %v119, %v231
  %v248 = vmul.f32 %v120, %v232
  %v249 = vmul.f32 %v121, %v233
  %v250 = vmul.f32 %v122, %v234
  %v251 = vmul.f32 %v123, %v235
  %v252 = vmul.f32 %v124, %v236
  %v253 = vmul.f32 %v125, %v237
  %v254 = vmul.f32 %v126, %v238
  %v255 = vmul.f32 %v127, %v239
  %v256 = vmul.f32 %v128, %v240
  %v257 = vmul.f32 %v129, %v241
  %v258 = vmul.f32 %v130, %v242
  %v259 = vmul.f32 %v131, %v243
  %v260 = vmul.f32 %v132, %v244
  %v262 = vlaneseq
  %v263 = vshrl.u32 %v262, 7
  %v264 = vsub.s32 0, %v263
  %v265 = vrot.slane %v49, %v264
  %v267 = vmul.f32 %v245, %v265
  %v268 = vmul.f32 %v246, %v265
  %v269 = vmul.f32 %v247, %v265
  %v270 = vmul.f32 %v248, %v265
  %v271 = vmul.f32 %v249, %v265
  %v272 = vmul.f32 %v250, %v265
  %v273 = vmul.f32 %v251, %v265
  %v274 = vmul.f32 %v252, %v265
  %v275 = vmul.f32 %v253, %v265
  %v276 = vmul.f32 %v254, %v265
  %v277 = vmul.f32 %v255, %v265
  %v278 = vmul.f32 %v256, %v265
  %v279 = vmul.f32 %v257, %v265
  %v280 = vmul.f32 %v258, %v265
  %v281 = vmul.f32 %v259, %v265
  %v282 = vmul.f32 %v260, %v265
  %v284 = vlaneseq
  %v285 = vshrl.u32 %v284, 7
  %v286 = vsub.s32 0, %v285
  %v287 = vrot.slane %v50, %v286
  %v289 = vadd.f32 %v267, %v287
  %v290 = vadd.f32 %v268, %v287
  %v291 = vadd.f32 %v269, %v287
  %v292 = vadd.f32 %v270, %v287
  %v293 = vadd.f32 %v271, %v287
  %v294 = vadd.f32 %v272, %v287
  %v295 = vadd.f32 %v273, %v287
  %v296 = vadd.f32 %v274, %v287
  %v297 = vadd.f32 %v275, %v287
  %v298 = vadd.f32 %v276, %v287
  %v299 = vadd.f32 %v277, %v287
  %v300 = vadd.f32 %v278, %v287
  %v301 = vadd.f32 %v279, %v287
  %v302 = vadd.f32 %v280, %v287
  %v303 = vadd.f32 %v281, %v287
  %v304 = vadd.f32 %v282, %v287
  %v305 = vpack.c.bf16 %v290, %v289
  %v306 = vpack.c.bf16 %v292, %v291
  %v307 = vpack.c.bf16 %v294, %v293
  %v308 = vpack.c.bf16 %v296, %v295
  %v309 = vpack.c.bf16 %v298, %v297
  %v310 = vpack.c.bf16 %v300, %v299
  %v311 = vpack.c.bf16 %v302, %v301
  %v312 = vpack.c.bf16 %v304, %v303
  %v313 = vld [vmem:[%s1] sm:$0xff]
  %v314 = vld [vmem:[%s1 + $0x8] sm:$0xff]
  %v315 = vld [vmem:[%s1 + $0x10] sm:$0xff]
  %v316 = vld [vmem:[%s1 + $0x18] sm:$0xff]
  %v317 = vld [vmem:[%s1 + $0x20] sm:$0xff]
  %v318 = vld [vmem:[%s1 + $0x28] sm:$0xff]
  %v319 = vld [vmem:[%s1 + $0x30] sm:$0xff]
  %v320 = vld [vmem:[%s1 + $0x38] sm:$0xff]
  %v321 = vld [vmem:[%s1 + $0x40] sm:$0xff]
  %v322 = vld [vmem:[%s1 + $0x48] sm:$0xff]
  %v323 = vld [vmem:[%s1 + $0x50] sm:$0xff]
  %v324 = vld [vmem:[%s1 + $0x58] sm:$0xff]
  %v325 = vld [vmem:[%s1 + $0x60] sm:$0xff]
  %v326 = vld [vmem:[%s1 + $0x68] sm:$0xff]
  %v327 = vld [vmem:[%s1 + $0x70] sm:$0xff]
  %v328 = vld [vmem:[%s1 + $0x78] sm:$0xff]
  %v329 = vld [vmem:[%s4] sm:$0x1]
  %v330 = vld [vmem:[%s5] sm:$0x1]
  %v331 = vsel %vm51, %v313, 0.0
  %332 = vadd.xlane.f32.xlu0 %v331
  %v333 = vpop.xlane.xlu0 %332
  %v334 = vsel %vm51, %v314, 0.0
  %335 = vadd.xlane.f32.xlu0 %v334
  %v336 = vpop.xlane.xlu0 %335
  %v337 = vsel %vm51, %v315, 0.0
  %338 = vadd.xlane.f32.xlu0 %v337
  %v339 = vpop.xlane.xlu0 %338
  %v340 = vsel %vm51, %v316, 0.0
  %341 = vadd.xlane.f32.xlu0 %v340
  %v342 = vpop.xlane.xlu0 %341
  %v343 = vsel %vm51, %v317, 0.0
  %344 = vadd.xlane.f32.xlu0 %v343
  %v345 = vpop.xlane.xlu0 %344
  %v346 = vsel %vm51, %v318, 0.0
  %347 = vadd.xlane.f32.xlu0 %v346
  %v348 = vpop.xlane.xlu0 %347
  %v349 = vsel %vm51, %v319, 0.0
  %350 = vadd.xlane.f32.xlu0 %v349
  %v351 = vpop.xlane.xlu0 %350
  %v352 = vsel %vm51, %v320, 0.0
  %353 = vadd.xlane.f32.xlu0 %v352
  %v354 = vpop.xlane.xlu0 %353
  %v355 = vsel %vm51, %v321, 0.0
  %356 = vadd.xlane.f32.xlu0 %v355
  %v357 = vpop.xlane.xlu0 %356
  %v358 = vsel %vm51, %v322, 0.0
  %359 = vadd.xlane.f32.xlu0 %v358
  %v360 = vpop.xlane.xlu0 %359
  %v361 = vsel %vm51, %v323, 0.0
  %362 = vadd.xlane.f32.xlu0 %v361
  %v363 = vpop.xlane.xlu0 %362
  %v364 = vsel %vm51, %v324, 0.0
  %365 = vadd.xlane.f32.xlu0 %v364
  %v366 = vpop.xlane.xlu0 %365
  %v367 = vsel %vm51, %v325, 0.0
  %368 = vadd.xlane.f32.xlu0 %v367
  %v369 = vpop.xlane.xlu0 %368
  %v370 = vsel %vm51, %v326, 0.0
  %371 = vadd.xlane.f32.xlu0 %v370
  %v372 = vpop.xlane.xlu0 %371
  %v373 = vsel %vm51, %v327, 0.0
  %374 = vadd.xlane.f32.xlu0 %v373
  %v375 = vpop.xlane.xlu0 %374
  %v376 = vsel %vm51, %v328, 0.0
  %377 = vadd.xlane.f32.xlu0 %v376
  %v378 = vpop.xlane.xlu0 %377
  %v379 = vmul.f32 %v333, %v100
  %v380 = vmul.f32 %v336, %v100
  %v381 = vmul.f32 %v339, %v100
  %v382 = vmul.f32 %v342, %v100
  %v383 = vmul.f32 %v345, %v100
  %v384 = vmul.f32 %v348, %v100
  %v385 = vmul.f32 %v351, %v100
  %v386 = vmul.f32 %v354, %v100
  %v387 = vmul.f32 %v357, %v100
  %v388 = vmul.f32 %v360, %v100
  %v389 = vmul.f32 %v363, %v100
  %v390 = vmul.f32 %v366, %v100
  %v391 = vmul.f32 %v369, %v100
  %v392 = vmul.f32 %v372, %v100
  %v393 = vmul.f32 %v375, %v100
  %v394 = vmul.f32 %v378, %v100
  %v395 = vsub.f32 %v313, %v379
  %v396 = vsub.f32 %v314, %v380
  %v397 = vsub.f32 %v315, %v381
  %v398 = vsub.f32 %v316, %v382
  %v399 = vsub.f32 %v317, %v383
  %v400 = vsub.f32 %v318, %v384
  %v401 = vsub.f32 %v319, %v385
  %v402 = vsub.f32 %v320, %v386
  %v403 = vsub.f32 %v321, %v387
  %v404 = vsub.f32 %v322, %v388
  %v405 = vsub.f32 %v323, %v389
  %v406 = vsub.f32 %v324, %v390
  %v407 = vsub.f32 %v325, %v391
  %v408 = vsub.f32 %v326, %v392
  %v409 = vsub.f32 %v327, %v393
  %v410 = vsub.f32 %v328, %v394
  %v411 = vmul.f32 %v395, %v395
  %v412 = vmul.f32 %v396, %v396
  %v413 = vmul.f32 %v397, %v397
  %v414 = vmul.f32 %v398, %v398
  %v415 = vmul.f32 %v399, %v399
  %v416 = vmul.f32 %v400, %v400
  %v417 = vmul.f32 %v401, %v401
  %v418 = vmul.f32 %v402, %v402
  %v419 = vmul.f32 %v403, %v403
  %v420 = vmul.f32 %v404, %v404
  %v421 = vmul.f32 %v405, %v405
  %v422 = vmul.f32 %v406, %v406
  %v423 = vmul.f32 %v407, %v407
  %v424 = vmul.f32 %v408, %v408
  %v425 = vmul.f32 %v409, %v409
  %v426 = vmul.f32 %v410, %v410
  %v427 = vsel %vm51, %v411, 0.0
  %428 = vadd.xlane.f32.xlu0 %v427
  %v429 = vpop.xlane.xlu0 %428
  %v430 = vsel %vm51, %v412, 0.0
  %431 = vadd.xlane.f32.xlu0 %v430
  %v432 = vpop.xlane.xlu0 %431
  %v433 = vsel %vm51, %v413, 0.0
  %434 = vadd.xlane.f32.xlu0 %v433
  %v435 = vpop.xlane.xlu0 %434
  %v436 = vsel %vm51, %v414, 0.0
  %437 = vadd.xlane.f32.xlu0 %v436
  %v438 = vpop.xlane.xlu0 %437
  %v439 = vsel %vm51, %v415, 0.0
  %440 = vadd.xlane.f32.xlu0 %v439
  %v441 = vpop.xlane.xlu0 %440
  %v442 = vsel %vm51, %v416, 0.0
  %443 = vadd.xlane.f32.xlu0 %v442
  %v444 = vpop.xlane.xlu0 %443
  %v445 = vsel %vm51, %v417, 0.0
  %446 = vadd.xlane.f32.xlu0 %v445
  %v447 = vpop.xlane.xlu0 %446
  %v448 = vsel %vm51, %v418, 0.0
  %449 = vadd.xlane.f32.xlu0 %v448
  %v450 = vpop.xlane.xlu0 %449
  %v451 = vsel %vm51, %v419, 0.0
  %452 = vadd.xlane.f32.xlu0 %v451
  %v453 = vpop.xlane.xlu0 %452
  %v454 = vsel %vm51, %v420, 0.0
  %455 = vadd.xlane.f32.xlu0 %v454
  %v456 = vpop.xlane.xlu0 %455
  %v457 = vsel %vm51, %v421, 0.0
  %458 = vadd.xlane.f32.xlu0 %v457
  %v459 = vpop.xlane.xlu0 %458
  %v460 = vsel %vm51, %v422, 0.0
  %461 = vadd.xlane.f32.xlu0 %v460
  %v462 = vpop.xlane.xlu0 %461
  %v463 = vsel %vm51, %v423, 0.0
  %464 = vadd.xlane.f32.xlu0 %v463
  %v465 = vpop.xlane.xlu0 %464
  %v466 = vsel %vm51, %v424, 0.0
  %467 = vadd.xlane.f32.xlu0 %v466
  %v468 = vpop.xlane.xlu0 %467
  %v469 = vsel %vm51, %v425, 0.0
  %470 = vadd.xlane.f32.xlu0 %v469
  %v471 = vpop.xlane.xlu0 %470
  %v472 = vsel %vm51, %v426, 0.0
  %473 = vadd.xlane.f32.xlu0 %v472
  %v474 = vpop.xlane.xlu0 %473
  %v475 = vmul.f32 %v429, %v100
  %v476 = vmul.f32 %v432, %v100
  %v477 = vmul.f32 %v435, %v100
  %v478 = vmul.f32 %v438, %v100
  %v479 = vmul.f32 %v441, %v100
  %v480 = vmul.f32 %v444, %v100
  %v481 = vmul.f32 %v447, %v100
  %v482 = vmul.f32 %v450, %v100
  %v483 = vmul.f32 %v453, %v100
  %v484 = vmul.f32 %v456, %v100
  %v485 = vmul.f32 %v459, %v100
  %v486 = vmul.f32 %v462, %v100
  %v487 = vmul.f32 %v465, %v100
  %v488 = vmul.f32 %v468, %v100
  %v489 = vmul.f32 %v471, %v100
  %v490 = vmul.f32 %v474, %v100
  %v491 = vadd.f32 %v475, 1e-05
  %v492 = vadd.f32 %v476, 1e-05
  %v493 = vadd.f32 %v477, 1e-05
  %v494 = vadd.f32 %v478, 1e-05
  %v495 = vadd.f32 %v479, 1e-05
  %v496 = vadd.f32 %v480, 1e-05
  %v497 = vadd.f32 %v481, 1e-05
  %v498 = vadd.f32 %v482, 1e-05
  %v499 = vadd.f32 %v483, 1e-05
  %v500 = vadd.f32 %v484, 1e-05
  %v501 = vadd.f32 %v485, 1e-05
  %v502 = vadd.f32 %v486, 1e-05
  %v503 = vadd.f32 %v487, 1e-05
  %v504 = vadd.f32 %v488, 1e-05
  %v505 = vadd.f32 %v489, 1e-05
  %v506 = vadd.f32 %v490, 1e-05
  %v507 = vrsqrt.pop %v491
  %v508 = vrsqrt.pop %v492
  %v509 = vrsqrt.pop %v493
  %v510 = vrsqrt.pop %v494
  %v511 = vrsqrt.pop %v495
  %v512 = vrsqrt.pop %v496
  %v513 = vrsqrt.pop %v497
  %v514 = vrsqrt.pop %v498
  %v515 = vrsqrt.pop %v499
  %v516 = vrsqrt.pop %v500
  %v517 = vrsqrt.pop %v501
  %v518 = vrsqrt.pop %v502
  %v519 = vrsqrt.pop %v503
  %v520 = vrsqrt.pop %v504
  %v521 = vrsqrt.pop %v505
  %v522 = vrsqrt.pop %v506
  %v523 = vmul.f32 %v395, %v507
  %v524 = vmul.f32 %v396, %v508
  %v525 = vmul.f32 %v397, %v509
  %v526 = vmul.f32 %v398, %v510
  %v527 = vmul.f32 %v399, %v511
  %v528 = vmul.f32 %v400, %v512
  %v529 = vmul.f32 %v401, %v513
  %v530 = vmul.f32 %v402, %v514
  %v531 = vmul.f32 %v403, %v515
  %v532 = vmul.f32 %v404, %v516
  %v533 = vmul.f32 %v405, %v517
  %v534 = vmul.f32 %v406, %v518
  %v535 = vmul.f32 %v407, %v519
  %v536 = vmul.f32 %v408, %v520
  %v537 = vmul.f32 %v409, %v521
  %v538 = vmul.f32 %v410, %v522
  %v540 = vlaneseq
  %v541 = vshrl.u32 %v540, 7
  %v542 = vsub.s32 0, %v541
  %v543 = vrot.slane %v329, %v542
  %v545 = vmul.f32 %v523, %v543
  %v546 = vmul.f32 %v524, %v543
  %v547 = vmul.f32 %v525, %v543
  %v548 = vmul.f32 %v526, %v543
  %v549 = vmul.f32 %v527, %v543
  %v550 = vmul.f32 %v528, %v543
  %v551 = vmul.f32 %v529, %v543
  %v552 = vmul.f32 %v530, %v543
  %v553 = vmul.f32 %v531, %v543
  %v554 = vmul.f32 %v532, %v543
  %v555 = vmul.f32 %v533, %v543
  %v556 = vmul.f32 %v534, %v543
  %v557 = vmul.f32 %v535, %v543
  %v558 = vmul.f32 %v536, %v543
  %v559 = vmul.f32 %v537, %v543
  %v560 = vmul.f32 %v538, %v543
  %v562 = vlaneseq
  %v563 = vshrl.u32 %v562, 7
  %v564 = vsub.s32 0, %v563
  %v565 = vrot.slane %v330, %v564
  %v567 = vadd.f32 %v545, %v565
  %v568 = vadd.f32 %v546, %v565
  %v569 = vadd.f32 %v547, %v565
  %v570 = vadd.f32 %v548, %v565
  %v571 = vadd.f32 %v549, %v565
  %v572 = vadd.f32 %v550, %v565
  %v573 = vadd.f32 %v551, %v565
  %v574 = vadd.f32 %v552, %v565
  %v575 = vadd.f32 %v553, %v565
  %v576 = vadd.f32 %v554, %v565
  %v577 = vadd.f32 %v555, %v565
  %v578 = vadd.f32 %v556, %v565
  %v579 = vadd.f32 %v557, %v565
  %v580 = vadd.f32 %v558, %v565
  %v581 = vadd.f32 %v559, %v565
  %v582 = vadd.f32 %v560, %v565
  %v583 = vpack.c.bf16 %v568, %v567
  %v584 = vpack.c.bf16 %v570, %v569
  %v585 = vpack.c.bf16 %v572, %v571
  %v586 = vpack.c.bf16 %v574, %v573
  %v587 = vpack.c.bf16 %v576, %v575
  %v588 = vpack.c.bf16 %v578, %v577
  %v589 = vpack.c.bf16 %v580, %v579
  %v590 = vpack.c.bf16 %v582, %v581
  %v591 = vld [vmem:[%s6] sm:$0xf]
  %v592 = vld [vmem:[%s6 + $0x4] sm:$0xf]
  %v593 = vld [vmem:[%s7] sm:$0xf]
  %v594 = vld [vmem:[%s7 + $0x4] sm:$0xf]
  %v597 = vunpack.c.l.b16 %v593
  %v598 = vunpack.c.l.b16 %v594
  %v599 = vpack.c.b16 %v598, %v597
  %v602 = vsel %vm51, %v583, 0
  %v605 = vsel %vm51, %v584, 0
  %v608 = vsel %vm51, %v585, 0
  %v611 = vsel %vm51, %v586, 0
  %v614 = vsel %vm51, %v587, 0
  %v617 = vsel %vm51, %v588, 0
  %v620 = vsel %vm51, %v589, 0
  %v623 = vsel %vm51, %v590, 0
  %625 = vmatprep.subr.bf16.mxu0 0
  %626 = vmatpush1.bf16.msra.mxu0 0
  %627 = vmatprep.subr.bf16.mxu0 0
  %628 = vmatpush1.bf16.msra.mxu0 0
  %629 = vmatprep.subr.bf16.mxu0 0
  %630 = vmatpush1.bf16.msra.mxu0 0
  %631 = vmatprep.subr.bf16.mxu0 0
  %632 = vmatpush1.bf16.msra.mxu0 0
  %633 = vmatprep.subr.bf16.mxu0 0
  %634 = vmatpush1.bf16.msra.mxu0 0
  %635 = vmatprep.subr.bf16.mxu0 0
  %636 = vmatpush1.bf16.msra.mxu0 0
  %637 = vmatprep.subr.bf16.mxu0 0
  %638 = vmatpush1.bf16.msra.mxu0 0
  %639 = vmatprep.subr.bf16.mxu0 0
  %640 = vmatpush1.bf16.msra.mxu0 %v599
  %641 = vmatprep.subr.bf16.mxu0 0
  %642 = vmatpush2.bf16.msra.mxu0 0
  %643 = vmatprep.subr.bf16.mxu0 0
  %644 = vmatpush2.bf16.msra.mxu0 0
  %645 = vmatprep.subr.bf16.mxu0 0
  %646 = vmatpush2.bf16.msra.mxu0 0
  %647 = vmatprep.subr.bf16.mxu0 0
  %648 = vmatpush2.bf16.msra.mxu0 0
  %649 = vmatprep.subr.bf16.mxu0 0
  %650 = vmatpush2.bf16.msra.mxu0 0
  %651 = vmatprep.subr.bf16.mxu0 0
  %652 = vmatpush2.bf16.msra.mxu0 0
  %653 = vmatprep.subr.bf16.mxu0 0
  %654 = vmatpush2.bf16.msra.mxu0 0
  %655 = vmatprep.subr.bf16.mxu0 0
  %656 = vmatpush2.bf16.msra.mxu0 0
  %657 = vmatprep.mubr.bf16.mxu0 0
  %658 = vmatmul.mubr.bf16.gmra.mxu0 %v602
  %v659 = vpop.f32.mrf.mxu0
  %v660 = vadd.f32 0.0, %v659
  %v661 = vpop.f32.mrf.mxu0
  %v662 = vpop.f32.mrf.mxu0
  %v663 = vadd.f32 0.0, %v662
  %v664 = vpop.f32.mrf.mxu0
  %665 = vmatprep.mubr.bf16.mxu0 0
  %666 = vmatmul.mubr.bf16.gmra.mxu0 %v605
  %v667 = vpop.f32.mrf.mxu0
  %v668 = vadd.f32 0.0, %v667
  %v669 = vpop.f32.mrf.mxu0
  %v670 = vpop.f32.mrf.mxu0
  %v671 = vadd.f32 0.0, %v670
  %v672 = vpop.f32.mrf.mxu0
  %673 = vmatprep.mubr.bf16.mxu0 0
  %674 = vmatmul.mubr.bf16.gmra.mxu0 %v608
  %v675 = vpop.f32.mrf.mxu0
  %v676 = vadd.f32 0.0, %v675
  %v677 = vpop.f32.mrf.mxu0
  %v678 = vpop.f32.mrf.mxu0
  %v679 = vadd.f32 0.0, %v678
  %v680 = vpop.f32.mrf.mxu0
  %681 = vmatprep.mubr.bf16.mxu0 0
  %682 = vmatmul.mubr.bf16.gmra.mxu0 %v611
  %v683 = vpop.f32.mrf.mxu0
  %v684 = vadd.f32 0.0, %v683
  %v685 = vpop.f32.mrf.mxu0
  %v686 = vpop.f32.mrf.mxu0
  %v687 = vadd.f32 0.0, %v686
  %v688 = vpop.f32.mrf.mxu0
  %689 = vmatprep.mubr.bf16.mxu0 0
  %690 = vmatmul.mubr.bf16.gmra.mxu0 %v614
  %v691 = vpop.f32.mrf.mxu0
  %v692 = vadd.f32 0.0, %v691
  %v693 = vpop.f32.mrf.mxu0
  %v694 = vpop.f32.mrf.mxu0
  %v695 = vadd.f32 0.0, %v694
  %v696 = vpop.f32.mrf.mxu0
  %697 = vmatprep.mubr.bf16.mxu0 0
  %698 = vmatmul.mubr.bf16.gmra.mxu0 %v617
  %v699 = vpop.f32.mrf.mxu0
  %v700 = vadd.f32 0.0, %v699
  %v701 = vpop.f32.mrf.mxu0
  %v702 = vpop.f32.mrf.mxu0
  %v703 = vadd.f32 0.0, %v702
  %v704 = vpop.f32.mrf.mxu0
  %705 = vmatprep.mubr.bf16.mxu0 0
  %706 = vmatmul.mubr.bf16.gmra.mxu0 %v620
  %v707 = vpop.f32.mrf.mxu0
  %v708 = vadd.f32 0.0, %v707
  %v709 = vpop.f32.mrf.mxu0
  %v710 = vpop.f32.mrf.mxu0
  %v711 = vadd.f32 0.0, %v710
  %v712 = vpop.f32.mrf.mxu0
  %713 = vmatprep.mubr.bf16.mxu0 0
  %714 = vmatmul.mubr.bf16.gmra.mxu0 %v623
  %v715 = vpop.f32.mrf.mxu0
  %v716 = vadd.f32 0.0, %v715
  %v717 = vpop.f32.mrf.mxu0
  %v718 = vpop.f32.mrf.mxu0
  %v719 = vadd.f32 0.0, %v718
  %v720 = vpop.f32.mrf.mxu0
  %721 = vdwg.mxu0
  %v724 = vunpack.c.l.b16 %v591
  %v725 = vunpack.c.l.b16 %v592
  %v726 = vpack.c.b16 %v725, %v724
  %v729 = vsel %vm51, %v305, 0
  %v732 = vsel %vm51, %v306, 0
  %v735 = vsel %vm51, %v307, 0
  %v738 = vsel %vm51, %v308, 0
  %v741 = vsel %vm51, %v309, 0
  %v744 = vsel %vm51, %v310, 0
  %v747 = vsel %vm51, %v311, 0
  %v750 = vsel %vm51, %v312, 0
  %752 = vmatprep.subr.bf16.mxu0 0
  %753 = vmatpush1.bf16.msra.mxu0 0
  %754 = vmatprep.subr.bf16.mxu0 0
  %755 = vmatpush1.bf16.msra.mxu0 0
  %756 = vmatprep.subr.bf16.mxu0 0
  %757 = vmatpush1.bf16.msra.mxu0 0
  %758 = vmatprep.subr.bf16.mxu0 0
  %759 = vmatpush1.bf16.msra.mxu0 0
  %760 = vmatprep.subr.bf16.mxu0 0
  %761 = vmatpush1.bf16.msra.mxu0 0
  %762 = vmatprep.subr.bf16.mxu0 0
  %763 = vmatpush1.bf16.msra.mxu0 0
  %764 = vmatprep.subr.bf16.mxu0 0
  %765 = vmatpush1.bf16.msra.mxu0 0
  %766 = vmatprep.subr.bf16.mxu0 0
  %767 = vmatpush1.bf16.msra.mxu0 %v726
  %768 = vmatprep.subr.bf16.mxu0 0
  %769 = vmatpush2.bf16.msra.mxu0 0
  %770 = vmatprep.subr.bf16.mxu0 0
  %771 = vmatpush2.bf16.msra.mxu0 0
  %772 = vmatprep.subr.bf16.mxu0 0
  %773 = vmatpush2.bf16.msra.mxu0 0
  %774 = vmatprep.subr.bf16.mxu0 0
  %775 = vmatpush2.bf16.msra.mxu0 0
  %776 = vmatprep.subr.bf16.mxu0 0
  %777 = vmatpush2.bf16.msra.mxu0 0
  %778 = vmatprep.subr.bf16.mxu0 0
  %779 = vmatpush2.bf16.msra.mxu0 0
  %780 = vmatprep.subr.bf16.mxu0 0
  %781 = vmatpush2.bf16.msra.mxu0 0
  %782 = vmatprep.subr.bf16.mxu0 0
  %783 = vmatpush2.bf16.msra.mxu0 0
  %784 = vmatprep.mubr.bf16.mxu0 0
  %785 = vmatmul.mubr.bf16.gmra.mxu0 %v729
  %v786 = vpop.f32.mrf.mxu0
  %v787 = vadd.f32 %v660, %v786
  %v788 = vpop.f32.mrf.mxu0
  %v789 = vpop.f32.mrf.mxu0
  %v790 = vadd.f32 %v663, %v789
  %v791 = vpop.f32.mrf.mxu0
  %792 = vmatprep.mubr.bf16.mxu0 0
  %793 = vmatmul.mubr.bf16.gmra.mxu0 %v732
  %v794 = vpop.f32.mrf.mxu0
  %v795 = vadd.f32 %v668, %v794
  %v796 = vpop.f32.mrf.mxu0
  %v797 = vpop.f32.mrf.mxu0
  %v798 = vadd.f32 %v671, %v797
  %v799 = vpop.f32.mrf.mxu0
  %800 = vmatprep.mubr.bf16.mxu0 0
  %801 = vmatmul.mubr.bf16.gmra.mxu0 %v735
  %v802 = vpop.f32.mrf.mxu0
  %v803 = vadd.f32 %v676, %v802
  %v804 = vpop.f32.mrf.mxu0
  %v805 = vpop.f32.mrf.mxu0
  %v806 = vadd.f32 %v679, %v805
  %v807 = vpop.f32.mrf.mxu0
  %808 = vmatprep.mubr.bf16.mxu0 0
  %809 = vmatmul.mubr.bf16.gmra.mxu0 %v738
  %v810 = vpop.f32.mrf.mxu0
  %v811 = vadd.f32 %v684, %v810
  %v812 = vpop.f32.mrf.mxu0
  %v813 = vpop.f32.mrf.mxu0
  %v814 = vadd.f32 %v687, %v813
  %v815 = vpop.f32.mrf.mxu0
  %816 = vmatprep.mubr.bf16.mxu0 0
  %817 = vmatmul.mubr.bf16.gmra.mxu0 %v741
  %v818 = vpop.f32.mrf.mxu0
  %v819 = vadd.f32 %v692, %v818
  %v820 = vpop.f32.mrf.mxu0
  %v821 = vpop.f32.mrf.mxu0
  %v822 = vadd.f32 %v695, %v821
  %v823 = vpop.f32.mrf.mxu0
  %824 = vmatprep.mubr.bf16.mxu0 0
  %825 = vmatmul.mubr.bf16.gmra.mxu0 %v744
  %v826 = vpop.f32.mrf.mxu0
  %v827 = vadd.f32 %v700, %v826
  %v828 = vpop.f32.mrf.mxu0
  %v829 = vpop.f32.mrf.mxu0
  %v830 = vadd.f32 %v703, %v829
  %v831 = vpop.f32.mrf.mxu0
  %832 = vmatprep.mubr.bf16.mxu0 0
  %833 = vmatmul.mubr.bf16.gmra.mxu0 %v747
  %v834 = vpop.f32.mrf.mxu0
  %v835 = vadd.f32 %v708, %v834
  %v836 = vpop.f32.mrf.mxu0
  %v837 = vpop.f32.mrf.mxu0
  %v838 = vadd.f32 %v711, %v837
  %v839 = vpop.f32.mrf.mxu0
  %840 = vmatprep.mubr.bf16.mxu0 0
  %841 = vmatmul.mubr.bf16.gmra.mxu0 %v750
  %v842 = vpop.f32.mrf.mxu0
  %v843 = vadd.f32 %v716, %v842
  %v844 = vpop.f32.mrf.mxu0
  %v845 = vpop.f32.mrf.mxu0
  %v846 = vadd.f32 %v719, %v845
  %v847 = vpop.f32.mrf.mxu0
  %848 = vdwg.mxu0
  %v849 = vld [vmem:[%s8] sm:$0x1]
  %v851 = vlaneseq
  %v852 = vshrl.u32 %v851, 7
  %v853 = vsub.s32 0, %v852
  %v854 = vrot.slane %v849, %v853
  %v856 = vadd.f32 %v787, %v854
  %v857 = vadd.f32 %v790, %v854
  %v858 = vadd.f32 %v795, %v854
  %v859 = vadd.f32 %v798, %v854
  %v860 = vadd.f32 %v803, %v854
  %v861 = vadd.f32 %v806, %v854
  %v862 = vadd.f32 %v811, %v854
  %v863 = vadd.f32 %v814, %v854
  %v864 = vadd.f32 %v819, %v854
  %v865 = vadd.f32 %v822, %v854
  %v866 = vadd.f32 %v827, %v854
  %v867 = vadd.f32 %v830, %v854
  %v868 = vadd.f32 %v835, %v854
  %v869 = vadd.f32 %v838, %v854
  %v870 = vadd.f32 %v843, %v854
  %v871 = vadd.f32 %v846, %v854
  %872 = vst.msk [vmem:[%s9] sm:$0xff] %vm51, %v856
  %873 = vst.msk [vmem:[%s9 + $0x8] sm:$0xff] %vm51, %v857
  %874 = vst.msk [vmem:[%s9 + $0x10] sm:$0xff] %vm51, %v858
  %875 = vst.msk [vmem:[%s9 + $0x18] sm:$0xff] %vm51, %v859
  %876 = vst.msk [vmem:[%s9 + $0x20] sm:$0xff] %vm51, %v860
  %877 = vst.msk [vmem:[%s9 + $0x28] sm:$0xff] %vm51, %v861
  %878 = vst.msk [vmem:[%s9 + $0x30] sm:$0xff] %vm51, %v862
  %879 = vst.msk [vmem:[%s9 + $0x38] sm:$0xff] %vm51, %v863
  %880 = vst.msk [vmem:[%s9 + $0x40] sm:$0xff] %vm51, %v864
  %881 = vst.msk [vmem:[%s9 + $0x48] sm:$0xff] %vm51, %v865
  %882 = vst.msk [vmem:[%s9 + $0x50] sm:$0xff] %vm51, %v866
  %883 = vst.msk [vmem:[%s9 + $0x58] sm:$0xff] %vm51, %v867
  %884 = vst.msk [vmem:[%s9 + $0x60] sm:$0xff] %vm51, %v868
  %885 = vst.msk [vmem:[%s9 + $0x68] sm:$0xff] %vm51, %v869
  %886 = vst.msk [vmem:[%s9 + $0x70] sm:$0xff] %vm51, %v870
  %887 = vst.msk [vmem:[%s9 + $0x78] sm:$0xff] %vm51, %v871
  // Predicated region
  $region38: #{forward_pallas.19} parent=0 // pred_check
    _
  $region39: #{forward_pallas.19} parent=0 // pred_check_branch
    %889 = sbr.rel (0) target = $region41
  $region40: #{forward_pallas.19} parent=0 // pred_region
    _
  $region41: #{forward_pallas.19} parent=0 // pred_fallthru
    _
  // Predicated region
  $region42: #{forward_pallas.19} parent=0 // pred_check
    _
  $region43: #{forward_pallas.19} parent=0 // pred_check_branch
    %891 = sbr.rel (0) target = $region45
  $region44: #{forward_pallas.19} parent=0 // pred_region
    _
  $region45: #{forward_pallas.19} parent=0 // pred_fallthru
    _

// kernel: forward_pallas.21
$region0: #{forward_pallas.21}
  #allocation0 [shape = 'u32[]', space=smem, size = 0x4, offset = 0x4, fixed_abs, tag = 'smem constant byte address 0x4 - core index']
  #allocation1 [shape = 'u32[144,128]{1,0:T(1,128)}', space=vmem, size = 0x12000, scoped, tag = 'internal scratch']
  %s0 = inlined_call_operand.vmem [shape: f32[2,6,6,6,128], index: 0, kind: input, shape index: {}]
  %s1 = inlined_call_operand.vmem [shape: f32[1,3], index: 1, kind: input, shape index: {}]
  %s2 = inlined_call_operand.vmem [shape: f32[2,4,4,4,3], index: 2, kind: output, shape index: {}]
  %s3 = sld [smem:[#allocation0]]
  $region41: #{forward_pallas.21} parent=0
    _
  %s5 = ssub.s32 1, %s3
  %s6 = scalar_select 0, %s5, %s3
  loop: start=0, step=1, limit=4
  $region2: #{forward_pallas.21} parent=0 // loop_pre_header
    _
  $region3: #{forward_pallas.21} parent=0 // loop_header
    %s8 = sphi 0, %s12
    %p9 = scmp.ge.s32.totalorder %s8, 4
    %s18 = sphi 0, %s20
    %s21 = sphi 0, %s18
    %s22 = sphi 0, %s21
    %s38 = sphi 0, %s22
    %s42 = sphi 0, %s42
    %s44 = sphi 0, %s42
    %s45 = sphi 0, %s44
    %s59 = sphi 0, %s45
    %s65 = sphi 0, %s67
    %s68 = sphi 0, %s65
    %s69 = sphi 0, %s68
    %s85 = sphi 0, %s69
  $region4: #{forward_pallas.21} parent=0 // loop_header_branch
    %11 = sbr.rel (%p9) target = $region8
  $region5: #{forward_pallas.21} parent=0 // loop_body
    %s13 = ssub.s32 %s8, 1
    %s14 = ssub.s32 %s8, 2
    %s15 = sadd.s32 %s8, 1
    %s16 = ssub.s32 %s8, %s15
    %p17 = scmp.eq.s32.totalorder %s16, 0
    %s19 = sadd.s32 %s18, 1
    %s20 = scalar_select %p17, %s18, %s19
    %p23 = pneg %p17
    %p24 = scmp.eq.s32.totalorder %s8, 1
    %p25 = por %p23, %p24
    %p26 = scmp.ne.s32.totalorder %s18, %s21
    %p27 = scmp.eq.s32.totalorder %s8, 0
    %p28 = por %p26, %p27
    %p29 = scmp.ne.s32.totalorder %s18, %s21
    %p30 = scmp.eq.s32.totalorder %s13, 1
    %p31 = por %p29, %p30
    %p32 = scmp.ne.s32.totalorder %s21, %s22
    %p33 = scmp.eq.s32.totalorder %s13, 0
    %p34 = por %p32, %p33
    %p35 = scmp.ne.s32.totalorder %s21, %s22
    %p36 = scmp.eq.s32.totalorder %s14, 1
    %p37 = por %p35, %p36
    %p39 = scmp.ne.s32.totalorder %s22, %s38
    %p40 = scmp.eq.s32.totalorder %s14, 0
    %p41 = por %p39, %p40
    %s43 = sadd.s32 %s42, 1
    %p46 = scmp.eq.s32.totalorder %s8, 1
    %p47 = scmp.ne.s32.totalorder %s42, %s44
    %p48 = scmp.eq.s32.totalorder %s8, 0
    %p49 = por %p47, %p48
    %p50 = scmp.ne.s32.totalorder %s42, %s44
    %p51 = scmp.eq.s32.totalorder %s13, 1
    %p52 = por %p50, %p51
    %p53 = scmp.ne.s32.totalorder %s44, %s45
    %p54 = scmp.eq.s32.totalorder %s13, 0
    %p55 = por %p53, %p54
    %p56 = scmp.ne.s32.totalorder %s44, %s45
    %p57 = scmp.eq.s32.totalorder %s14, 1
    %p58 = por %p56, %p57
    %p60 = scmp.ne.s32.totalorder %s45, %s59
    %p61 = scmp.eq.s32.totalorder %s14, 0
    %p62 = por %p60, %p61
    %s63 = ssub.s32 %s8, %s15
    %p64 = scmp.eq.s32.totalorder %s63, 0
    %s66 = sadd.s32 %s65, 1
    %s67 = scalar_select %p64, %s65, %s66
    %p70 = pneg %p64
    %p71 = scmp.eq.s32.totalorder %s8, 1
    %p72 = por %p70, %p71
    %p73 = scmp.ne.s32.totalorder %s65, %s68
    %p74 = scmp.eq.s32.totalorder %s8, 0
    %p75 = por %p73, %p74
    %p76 = scmp.ne.s32.totalorder %s65, %s68
    %p77 = scmp.eq.s32.totalorder %s13, 1
    %p78 = por %p76, %p77
    %p79 = scmp.ne.s32.totalorder %s68, %s69
    %p80 = scmp.eq.s32.totalorder %s13, 0
    %p81 = por %p79, %p80
    %p82 = scmp.ne.s32.totalorder %s68, %s69
    %p83 = scmp.eq.s32.totalorder %s14, 1
    %p84 = por %p82, %p83
    %p86 = scmp.ne.s32.totalorder %s69, %s85
    %p87 = scmp.eq.s32.totalorder %s14, 0
    %p88 = por %p86, %p87
    %p89 = scmp.le.s32.totalorder 1, %s8
    %p90 = scmp.lt.s32.totalorder %s8, 3
    %p91 = pnand %p89, %p90
    %p92 = pneg %p91
    // Predicated region
    $region9: #{forward_pallas.21} parent=5 // pred_check
      _
    $region10: #{forward_pallas.21} parent=5 // pred_check_branch
      %94 = sbr.rel (%p91) target = $region12
    $region11: #{forward_pallas.21} parent=5 // pred_region
      %s95 = ssub.s32 %s8, 1
      // Predicated region
      $region13: #{forward_pallas.21} parent=11 // pred_check
        %p96 = pneg %p55
      $region14: #{forward_pallas.21} parent=11 // pred_check_branch
        %98 = sbr.rel (%p96) target = $region16
      $region15: #{forward_pallas.21} parent=11 // pred_region
        _
      $region16: #{forward_pallas.21} parent=11 // pred_fallthru
        _
    $region12: #{forward_pallas.21} parent=5 // pred_fallthru
      _
    %p99 = scmp.lt.s32.totalorder %s8, 2
    // Predicated region
    $region17: #{forward_pallas.21} parent=5 // pred_check
      %p100 = pneg %p99
    $region18: #{forward_pallas.21} parent=5 // pred_check_branch
      %102 = sbr.rel (%p100) target = $region20
    $region19: #{forward_pallas.21} parent=5 // pred_region
      // Predicated region
      $region21: #{forward_pallas.21} parent=19 // pred_check
        %p103 = pneg %p28
      $region22: #{forward_pallas.21} parent=19 // pred_check_branch
        %105 = sbr.rel (%p103) target = $region24
      $region23: #{forward_pallas.21} parent=19 // pred_region
        %p106 = scmp.lt.s32.totalorder %s8, 1
        %s107 = scalar_select %p106, %s8, 1
        %s108 = smul.addr %s107, 36
        %s109 = smul.addr %s108, 8
        %s110 = scalar_lea.vmem %s0, %s109
      $region24: #{forward_pallas.21} parent=19 // pred_fallthru
        _
    $region20: #{forward_pallas.21} parent=5 // pred_fallthru
      _
    %p111 = scmp.le.s32.totalorder 1, %s8
    %p112 = scmp.lt.s32.totalorder %s8, 3
    %p113 = pnand %p111, %p112
    %p114 = pneg %p113
    // Predicated region
    $region25: #{forward_pallas.21} parent=5 // pred_check
      _
    $region26: #{forward_pallas.21} parent=5 // pred_check_branch
      %116 = sbr.rel (%p113) target = $region28
    $region27: #{forward_pallas.21} parent=5 // pred_region
      %s117 = ssub.s32 %s8, 1
      %p118 = scmp.lt.s32.totalorder %s13, 1
      %s119 = scalar_select %p118, %s13, 1
      %s120 = smul.addr %s119, 36
      %s121 = smul.addr %s120, 8
      %s122 = scalar_lea.vmem %s0, %s121
      %p123 = pneg %p34
      %p124 = pneg %p31
      %p125 = pneg %p55
      %p126 = pneg %p52
      %p127 = pneg %p81
      %p128 = pneg %p78
      %p129 = scmp.lt.s32.totalorder %s13, 1
      %s130 = scalar_select %p129, %s13, 1
      %s131 = smul.addr %s130, 16
      %s132 = smul.addr %s131, 4
      %s133 = scalar_lea.vmem %s2, %s132
      %p134 = scmp.lt.s32.totalorder %s13, 1
      %s135 = scalar_select %p134, %s13, 1
      %s136 = smul.addr %s135, 36
      %s137 = smul.addr %s136, 8
      %s138 = scalar_lea.vmem %s0, %s137
      %p139 = scmp.lt.s32.totalorder %s13, 1
      %s140 = scalar_select %p139, %s13, 1
      %s141 = smul.addr %s140, 16
      %s142 = smul.addr %s141, 4
      %s143 = scalar_lea.vmem %s2, %s142
      %v144 = vld [vmem:[%s138] sm:$0xf]
      %v145 = vld [vmem:[%s138 + $0x8] sm:$0xf]
      %v146 = vld [vmem:[%s138 + $0x10] sm:$0xf]
      %v147 = vld [vmem:[%s138 + $0x18] sm:$0xf]
      %v148 = vld [vmem:[%s138 + $0x20] sm:$0xf]
      %v149 = vld [vmem:[%s138 + $0x28] sm:$0xf]
      %v150 = vld [vmem:[%s138 + $0x30] sm:$0xf]
      %v151 = vld [vmem:[%s138 + $0x38] sm:$0xf]
      %v152 = vld [vmem:[%s138 + $0x40] sm:$0xf]
      %v153 = vld [vmem:[%s138 + $0x48] sm:$0xf]
      %v154 = vld [vmem:[%s138 + $0x50] sm:$0xf]
      %v155 = vld [vmem:[%s138 + $0x58] sm:$0xf]
      %v156 = vld [vmem:[%s138 + $0x60] sm:$0xf]
      %v157 = vld [vmem:[%s138 + $0x68] sm:$0xf]
      %v158 = vld [vmem:[%s138 + $0x70] sm:$0xf]
      %v159 = vld [vmem:[%s138 + $0x78] sm:$0xf]
      %v160 = vld [vmem:[%s138 + $0x80] sm:$0xf]
      %v161 = vld [vmem:[%s138 + $0x88] sm:$0xf]
      %v162 = vld [vmem:[%s138 + $0x90] sm:$0xf]
      %v163 = vld [vmem:[%s138 + $0x98] sm:$0xf]
      %v164 = vld [vmem:[%s138 + $0xa0] sm:$0xf]
      %v165 = vld [vmem:[%s138 + $0xa8] sm:$0xf]
      %v166 = vld [vmem:[%s138 + $0xb0] sm:$0xf]
      %v167 = vld [vmem:[%s138 + $0xb8] sm:$0xf]
      %v168 = vld [vmem:[%s138 + $0xc0] sm:$0xf]
      %v169 = vld [vmem:[%s138 + $0xc8] sm:$0xf]
      %v170 = vld [vmem:[%s138 + $0xd0] sm:$0xf]
      %v171 = vld [vmem:[%s138 + $0xd8] sm:$0xf]
      %v172 = vld [vmem:[%s138 + $0xe0] sm:$0xf]
      %v173 = vld [vmem:[%s138 + $0xe8] sm:$0xf]
      %v174 = vld [vmem:[%s138 + $0xf0] sm:$0xf]
      %v175 = vld [vmem:[%s138 + $0xf8] sm:$0xf]
      %v176 = vld [vmem:[%s138 + $0x100] sm:$0xf]
      %v177 = vld [vmem:[%s138 + $0x108] sm:$0xf]
      %v178 = vld [vmem:[%s138 + $0x110] sm:$0xf]
      %v179 = vld [vmem:[%s138 + $0x118] sm:$0xf]
      %v180 = vadd.f32 %v144, 0.0
      %v181 = vadd.f32 %v145, 0.0
      %v182 = vadd.f32 %v146, 0.0
      %v183 = vadd.f32 %v147, 0.0
      %v184 = vadd.f32 %v150, 0.0
      %v185 = vadd.f32 %v151, 0.0
      %v186 = vadd.f32 %v152, 0.0
      %v187 = vadd.f32 %v153, 0.0
      %v188 = vadd.f32 %v156, 0.0
      %v189 = vadd.f32 %v157, 0.0
      %v190 = vadd.f32 %v158, 0.0
      %v191 = vadd.f32 %v159, 0.0
      %v192 = vadd.f32 %v162, 0.0
      %v193 = vadd.f32 %v163, 0.0
      %v194 = vadd.f32 %v164, 0.0
      %v195 = vadd.f32 %v165, 0.0
      %212 = vrot.lane.b32.xlu0 %v145, 119
      %v213 = vpop.permute.xlu0 %212
      %214 = vrot.lane.b32.xlu0 %v146, 119
      %v215 = vpop.permute.xlu0 %214
      %216 = vrot.lane.b32.xlu0 %v147, 119
      %v217 = vpop.permute.xlu0 %216
      %218 = vrot.lane.b32.xlu0 %v148, 119
      %v219 = vpop.permute.xlu0 %218
      %220 = vrot.lane.b32.xlu0 %v151, 119
      %v221 = vpop.permute.xlu0 %220
      %222 = vrot.lane.b32.xlu0 %v152, 119
      %v223 = vpop.permute.xlu0 %222
      %224 = vrot.lane.b32.xlu0 %v153, 119
      %v225 = vpop.permute.xlu0 %224
      %226 = vrot.lane.b32.xlu0 %v154, 119
      %v227 = vpop.permute.xlu0 %226
      %228 = vrot.lane.b32.xlu0 %v157, 119
      %v229 = vpop.permute.xlu0 %228
      %230 = vrot.lane.b32.xlu0 %v158, 119
      %v231 = vpop.permute.xlu0 %230
      %232 = vrot.lane.b32.xlu0 %v159, 119
      %v233 = vpop.permute.xlu0 %232
      %234 = vrot.lane.b32.xlu0 %v160, 119
      %v235 = vpop.permute.xlu0 %234
      %236 = vrot.lane.b32.xlu0 %v163, 119
      %v237 = vpop.permute.xlu0 %236
      %238 = vrot.lane.b32.xlu0 %v164, 119
      %v239 = vpop.permute.xlu0 %238
      %240 = vrot.lane.b32.xlu0 %v165, 119
      %v241 = vpop.permute.xlu0 %240
      %242 = vrot.lane.b32.xlu0 %v166, 119
      %v243 = vpop.permute.xlu0 %242
      %v260 = vadd.f32 %v180, %v213
      %v261 = vadd.f32 %v181, %v215
      %v262 = vadd.f32 %v182, %v217
      %v263 = vadd.f32 %v183, %v219
      %v264 = vadd.f32 %v184, %v221
      %v265 = vadd.f32 %v185, %v223
      %v266 = vadd.f32 %v186, %v225
      %v267 = vadd.f32 %v187, %v227
      %v268 = vadd.f32 %v188, %v229
      %v269 = vadd.f32 %v189, %v231
      %v270 = vadd.f32 %v190, %v233
      %v271 = vadd.f32 %v191, %v235
      %v272 = vadd.f32 %v192, %v237
      %v273 = vadd.f32 %v193, %v239
      %v274 = vadd.f32 %v194, %v241
      %v275 = vadd.f32 %v195, %v243
      %280 = vrot.lane.b32.xlu0 %v146, 110
      %v281 = vpop.permute.xlu0 %280
      %282 = vrot.lane.b32.xlu0 %v147, 110
      %v283 = vpop.permute.xlu0 %282
      %284 = vrot.lane.b32.xlu0 %v148, 110
      %v285 = vpop.permute.xlu0 %284
      %286 = vrot.lane.b32.xlu0 %v149, 110
      %v287 = vpop.permute.xlu0 %286
      %288 = vrot.lane.b32.xlu0 %v152, 110
      %v289 = vpop.permute.xlu0 %288
      %290 = vrot.lane.b32.xlu0 %v153, 110
      %v291 = vpop.permute.xlu0 %290
      %292 = vrot.lane.b32.xlu0 %v154, 110
      %v293 = vpop.permute.xlu0 %292
      %294 = vrot.lane.b32.xlu0 %v155, 110
      %v295 = vpop.permute.xlu0 %294
      %296 = vrot.lane.b32.xlu0 %v158, 110
      %v297 = vpop.permute.xlu0 %296
      %298 = vrot.lane.b32.xlu0 %v159, 110
      %v299 = vpop.permute.xlu0 %298
      %300 = vrot.lane.b32.xlu0 %v160, 110
      %v301 = vpop.permute.xlu0 %300
      %302 = vrot.lane.b32.xlu0 %v161, 110
      %v303 = vpop.permute.xlu0 %302
      %304 = vrot.lane.b32.xlu0 %v164, 110
      %v305 = vpop.permute.xlu0 %304
      %306 = vrot.lane.b32.xlu0 %v165, 110
      %v307 = vpop.permute.xlu0 %306
      %308 = vrot.lane.b32.xlu0 %v166, 110
      %v309 = vpop.permute.xlu0 %308
      %310 = vrot.lane.b32.xlu0 %v167, 110
      %v311 = vpop.permute.xlu0 %310
      %v328 = vadd.f32 %v260, %v281
      %v329 = vadd.f32 %v261, %v283
      %v330 = vadd.f32 %v262, %v285
      %v331 = vadd.f32 %v263, %v287
      %v332 = vadd.f32 %v264, %v289
      %v333 = vadd.f32 %v265, %v291
      %v334 = vadd.f32 %v266, %v293
      %v335 = vadd.f32 %v267, %v295
      %v336 = vadd.f32 %v268, %v297
      %v337 = vadd.f32 %v269, %v299
      %v338 = vadd.f32 %v270, %v301
      %v339 = vadd.f32 %v271, %v303
      %v340 = vadd.f32 %v272, %v305
      %v341 = vadd.f32 %v273, %v307
      %v342 = vadd.f32 %v274, %v309
      %v343 = vadd.f32 %v275, %v311
      %351 = vrot.lane.b32.xlu0 %v150, 101
      %v352 = vpop.permute.xlu0 %351
      %353 = vrot.lane.b32.xlu0 %v151, 101
      %v354 = vpop.permute.xlu0 %353
      %355 = vrot.lane.b32.xlu0 %v152, 101
      %v356 = vpop.permute.xlu0 %355
      %357 = vrot.lane.b32.xlu0 %v153, 101
      %v358 = vpop.permute.xlu0 %357
      %359 = vrot.lane.b32.xlu0 %v156, 101
      %v360 = vpop.permute.xlu0 %359
      %361 = vrot.lane.b32.xlu0 %v157, 101
      %v362 = vpop.permute.xlu0 %361
      %363 = vrot.lane.b32.xlu0 %v158, 101
      %v364 = vpop.permute.xlu0 %363
      %365 = vrot.lane.b32.xlu0 %v159, 101
      %v366 = vpop.permute.xlu0 %365
      %367 = vrot.lane.b32.xlu0 %v162, 101
      %v368 = vpop.permute.xlu0 %367
      %369 = vrot.lane.b32.xlu0 %v163, 101
      %v370 = vpop.permute.xlu0 %369
      %371 = vrot.lane.b32.xlu0 %v164, 101
      %v372 = vpop.permute.xlu0 %371
      %373 = vrot.lane.b32.xlu0 %v165, 101
      %v374 = vpop.permute.xlu0 %373
      %375 = vrot.lane.b32.xlu0 %v168, 101
      %v376 = vpop.permute.xlu0 %375
      %377 = vrot.lane.b32.xlu0 %v169, 101
      %v378 = vpop.permute.xlu0 %377
      %379 = vrot.lane.b32.xlu0 %v170, 101
      %v380 = vpop.permute.xlu0 %379
      %381 = vrot.lane.b32.xlu0 %v171, 101
      %v382 = vpop.permute.xlu0 %381
      %v399 = vadd.f32 %v328, %v352
      %v400 = vadd.f32 %v329, %v354
      %v401 = vadd.f32 %v330, %v356
      %v402 = vadd.f32 %v331, %v358
      %v403 = vadd.f32 %v332, %v360
      %v404 = vadd.f32 %v333, %v362
      %v405 = vadd.f32 %v334, %v364
      %v406 = vadd.f32 %v335, %v366
      %v407 = vadd.f32 %v336, %v368
      %v408 = vadd.f32 %v337, %v370
      %v409 = vadd.f32 %v338, %v372
      %v410 = vadd.f32 %v339, %v374
      %v411 = vadd.f32 %v340, %v376
      %v412 = vadd.f32 %v341, %v378
      %v413 = vadd.f32 %v342, %v380
      %v414 = vadd.f32 %v343, %v382
      %416 = vrot.lane.b32.xlu0 %v151, 92
      %v417 = vpop.permute.xlu0 %416
      %418 = vrot.lane.b32.xlu0 %v152, 92
      %v419 = vpop.permute.xlu0 %418
      %420 = vrot.lane.b32.xlu0 %v153, 92
      %v421 = vpop.permute.xlu0 %420
      %422 = vrot.lane.b32.xlu0 %v154, 92
      %v423 = vpop.permute.xlu0 %422
      %424 = vrot.lane.b32.xlu0 %v157, 92
      %v425 = vpop.permute.xlu0 %424
      %426 = vrot.lane.b32.xlu0 %v158, 92
      %v427 = vpop.permute.xlu0 %426
      %428 = vrot.lane.b32.xlu0 %v159, 92
      %v429 = vpop.permute.xlu0 %428
      %430 = vrot.lane.b32.xlu0 %v160, 92
      %v431 = vpop.permute.xlu0 %430
      %432 = vrot.lane.b32.xlu0 %v163, 92
      %v433 = vpop.permute.xlu0 %432
      %434 = vrot.lane.b32.xlu0 %v164, 92
      %v435 = vpop.permute.xlu0 %434
      %436 = vrot.lane.b32.xlu0 %v165, 92
      %v437 = vpop.permute.xlu0 %436
      %438 = vrot.lane.b32.xlu0 %v166, 92
      %v439 = vpop.permute.xlu0 %438
      %440 = vrot.lane.b32.xlu0 %v169, 92
      %v441 = vpop.permute.xlu0 %440
      %442 = vrot.lane.b32.xlu0 %v170, 92
      %v443 = vpop.permute.xlu0 %442
      %444 = vrot.lane.b32.xlu0 %v171, 92
      %v445 = vpop.permute.xlu0 %444
      %446 = vrot.lane.b32.xlu0 %v172, 92
      %v447 = vpop.permute.xlu0 %446
      %v464 = vadd.f32 %v399, %v417
      %v465 = vadd.f32 %v400, %v419
      %v466 = vadd.f32 %v401, %v421
      %v467 = vadd.f32 %v402, %v423
      %v468 = vadd.f32 %v403, %v425
      %v469 = vadd.f32 %v404, %v427
      %v470 = vadd.f32 %v405, %v429
      %v471 = vadd.f32 %v406, %v431
      %v472 = vadd.f32 %v407, %v433
      %v473 = vadd.f32 %v408, %v435
      %v474 = vadd.f32 %v409, %v437
      %v475 = vadd.f32 %v410, %v439
      %v476 = vadd.f32 %v411, %v441
      %v477 = vadd.f32 %v412, %v443
      %v478 = vadd.f32 %v413, %v445
      %v479 = vadd.f32 %v414, %v447
      %481 = vrot.lane.b32.xlu0 %v152, 83
      %v482 = vpop.permute.xlu0 %481
      %483 = vrot.lane.b32.xlu0 %v153, 83
      %v484 = vpop.permute.xlu0 %483
      %485 = vrot.lane.b32.xlu0 %v154, 83
      %v486 = vpop.permute.xlu0 %485
      %487 = vrot.lane.b32.xlu0 %v155, 83
      %v488 = vpop.permute.xlu0 %487
      %489 = vrot.lane.b32.xlu0 %v158, 83
      %v490 = vpop.permute.xlu0 %489
      %491 = vrot.lane.b32.xlu0 %v159, 83
      %v492 = vpop.permute.xlu0 %491
      %493 = vrot.lane.b32.xlu0 %v160, 83
      %v494 = vpop.permute.xlu0 %493
      %495 = vrot.lane.b32.xlu0 %v161, 83
      %v496 = vpop.permute.xlu0 %495
      %497 = vrot.lane.b32.xlu0 %v164, 83
      %v498 = vpop.permute.xlu0 %497
      %499 = vrot.lane.b32.xlu0 %v165, 83
      %v500 = vpop.permute.xlu0 %499
      %501 = vrot.lane.b32.xlu0 %v166, 83
      %v502 = vpop.permute.xlu0 %501
      %503 = vrot.lane.b32.xlu0 %v167, 83
      %v504 = vpop.permute.xlu0 %503
      %505 = vrot.lane.b32.xlu0 %v170, 83
      %v506 = vpop.permute.xlu0 %505
      %507 = vrot.lane.b32.xlu0 %v171, 83
      %v508 = vpop.permute.xlu0 %507
      %509 = vrot.lane.b32.xlu0 %v172, 83
      %v510 = vpop.permute.xlu0 %509
      %511 = vrot.lane.b32.xlu0 %v173, 83
      %v512 = vpop.permute.xlu0 %511
      %v529 = vadd.f32 %v464, %v482
      %v530 = vadd.f32 %v465, %v484
      %v531 = vadd.f32 %v466, %v486
      %v532 = vadd.f32 %v467, %v488
      %v533 = vadd.f32 %v468, %v490
      %v534 = vadd.f32 %v469, %v492
      %v535 = vadd.f32 %v470, %v494
      %v536 = vadd.f32 %v471, %v496
      %v537 = vadd.f32 %v472, %v498
      %v538 = vadd.f32 %v473, %v500
      %v539 = vadd.f32 %v474, %v502
      %v540 = vadd.f32 %v475, %v504
      %v541 = vadd.f32 %v476, %v506
      %v542 = vadd.f32 %v477, %v508
      %v543 = vadd.f32 %v478, %v510
      %v544 = vadd.f32 %v479, %v512
      %549 = vrot.lane.b32.xlu0 %v156, 74
      %v550 = vpop.permute.xlu0 %549
      %551 = vrot.lane.b32.xlu0 %v157, 74
      %v552 = vpop.permute.xlu0 %551
      %553 = vrot.lane.b32.xlu0 %v158, 74
      %v554 = vpop.permute.xlu0 %553
      %555 = vrot.lane.b32.xlu0 %v159, 74
      %v556 = vpop.permute.xlu0 %555
      %557 = vrot.lane.b32.xlu0 %v162, 74
      %v558 = vpop.permute.xlu0 %557
      %559 = vrot.lane.b32.xlu0 %v163, 74
      %v560 = vpop.permute.xlu0 %559
      %561 = vrot.lane.b32.xlu0 %v164, 74
      %v562 = vpop.permute.xlu0 %561
      %563 = vrot.lane.b32.xlu0 %v165, 74
      %v564 = vpop.permute.xlu0 %563
      %565 = vrot.lane.b32.xlu0 %v168, 74
      %v566 = vpop.permute.xlu0 %565
      %567 = vrot.lane.b32.xlu0 %v169, 74
      %v568 = vpop.permute.xlu0 %567
      %569 = vrot.lane.b32.xlu0 %v170, 74
      %v570 = vpop.permute.xlu0 %569
      %571 = vrot.lane.b32.xlu0 %v171, 74
      %v572 = vpop.permute.xlu0 %571
      %573 = vrot.lane.b32.xlu0 %v174, 74
      %v574 = vpop.permute.xlu0 %573
      %575 = vrot.lane.b32.xlu0 %v175, 74
      %v576 = vpop.permute.xlu0 %575
      %577 = vrot.lane.b32.xlu0 %v176, 74
      %v578 = vpop.permute.xlu0 %577
      %579 = vrot.lane.b32.xlu0 %v177, 74
      %v580 = vpop.permute.xlu0 %579
      %v597 = vadd.f32 %v529, %v550
      %v598 = vadd.f32 %v530, %v552
      %v599 = vadd.f32 %v531, %v554
      %v600 = vadd.f32 %v532, %v556
      %v601 = vadd.f32 %v533, %v558
      %v602 = vadd.f32 %v534, %v560
      %v603 = vadd.f32 %v535, %v562
      %v604 = vadd.f32 %v536, %v564
      %v605 = vadd.f32 %v537, %v566
      %v606 = vadd.f32 %v538, %v568
      %v607 = vadd.f32 %v539, %v570
      %v608 = vadd.f32 %v540, %v572
      %v609 = vadd.f32 %v541, %v574
      %v610 = vadd.f32 %v542, %v576
      %v611 = vadd.f32 %v543, %v578
      %v612 = vadd.f32 %v544, %v580
      %614 = vrot.lane.b32.xlu0 %v157, 65
      %v615 = vpop.permute.xlu0 %614
      %616 = vrot.lane.b32.xlu0 %v158, 65
      %v617 = vpop.permute.xlu0 %616
      %618 = vrot.lane.b32.xlu0 %v159, 65
      %v619 = vpop.permute.xlu0 %618
      %620 = vrot.lane.b32.xlu0 %v160, 65
      %v621 = vpop.permute.xlu0 %620
      %622 = vrot.lane.b32.xlu0 %v163, 65
      %v623 = vpop.permute.xlu0 %622
      %624 = vrot.lane.b32.xlu0 %v164, 65
      %v625 = vpop.permute.xlu0 %624
      %626 = vrot.lane.b32.xlu0 %v165, 65
      %v627 = vpop.permute.xlu0 %626
      %628 = vrot.lane.b32.xlu0 %v166, 65
      %v629 = vpop.permute.xlu0 %628
      %630 = vrot.lane.b32.xlu0 %v169, 65
      %v631 = vpop.permute.xlu0 %630
      %632 = vrot.lane.b32.xlu0 %v170, 65
      %v633 = vpop.permute.xlu0 %632
      %634 = vrot.lane.b32.xlu0 %v171, 65
      %v635 = vpop.permute.xlu0 %634
      %636 = vrot.lane.b32.xlu0 %v172, 65
      %v637 = vpop.permute.xlu0 %636
      %638 = vrot.lane.b32.xlu0 %v175, 65
      %v639 = vpop.permute.xlu0 %638
      %640 = vrot.lane.b32.xlu0 %v176, 65
      %v641 = vpop.permute.xlu0 %640
      %642 = vrot.lane.b32.xlu0 %v177, 65
      %v643 = vpop.permute.xlu0 %642
      %644 = vrot.lane.b32.xlu0 %v178, 65
      %v645 = vpop.permute.xlu0 %644
      %v662 = vadd.f32 %v597, %v615
      %v663 = vadd.f32 %v598, %v617
      %v664 = vadd.f32 %v599, %v619
      %v665 = vadd.f32 %v600, %v621
      %v666 = vadd.f32 %v601, %v623
      %v667 = vadd.f32 %v602, %v625
      %v668 = vadd.f32 %v603, %v627
      %v669 = vadd.f32 %v604, %v629
      %v670 = vadd.f32 %v605, %v631
      %v671 = vadd.f32 %v606, %v633
      %v672 = vadd.f32 %v607, %v635
      %v673 = vadd.f32 %v608, %v637
      %v674 = vadd.f32 %v609, %v639
      %v675 = vadd.f32 %v610, %v641
      %v676 = vadd.f32 %v611, %v643
      %v677 = vadd.f32 %v612, %v645
      %679 = vrot.lane.b32.xlu0 %v158, 56
      %v680 = vpop.permute.xlu0 %679
      %681 = vrot.lane.b32.xlu0 %v159, 56
      %v682 = vpop.permute.xlu0 %681
      %683 = vrot.lane.b32.xlu0 %v160, 56
      %v684 = vpop.permute.xlu0 %683
      %685 = vrot.lane.b32.xlu0 %v161, 56
      %v686 = vpop.permute.xlu0 %685
      %687 = vrot.lane.b32.xlu0 %v164, 56
      %v688 = vpop.permute.xlu0 %687
      %689 = vrot.lane.b32.xlu0 %v165, 56
      %v690 = vpop.permute.xlu0 %689
      %691 = vrot.lane.b32.xlu0 %v166, 56
      %v692 = vpop.permute.xlu0 %691
      %693 = vrot.lane.b32.xlu0 %v167, 56
      %v694 = vpop.permute.xlu0 %693
      %695 = vrot.lane.b32.xlu0 %v170, 56
      %v696 = vpop.permute.xlu0 %695
      %697 = vrot.lane.b32.xlu0 %v171, 56
      %v698 = vpop.permute.xlu0 %697
      %699 = vrot.lane.b32.xlu0 %v172, 56
      %v700 = vpop.permute.xlu0 %699
      %701 = vrot.lane.b32.xlu0 %v173, 56
      %v702 = vpop.permute.xlu0 %701
      %703 = vrot.lane.b32.xlu0 %v176, 56
      %v704 = vpop.permute.xlu0 %703
      %705 = vrot.lane.b32.xlu0 %v177, 56
      %v706 = vpop.permute.xlu0 %705
      %707 = vrot.lane.b32.xlu0 %v178, 56
      %v708 = vpop.permute.xlu0 %707
      %709 = vrot.lane.b32.xlu0 %v179, 56
      %v710 = vpop.permute.xlu0 %709
      %v727 = vadd.f32 %v662, %v680
      %v728 = vadd.f32 %v663, %v682
      %v729 = vadd.f32 %v664, %v684
      %v730 = vadd.f32 %v665, %v686
      %v731 = vadd.f32 %v666, %v688
      %v732 = vadd.f32 %v667, %v690
      %v733 = vadd.f32 %v668, %v692
      %v734 = vadd.f32 %v669, %v694
      %v735 = vadd.f32 %v670, %v696
      %v736 = vadd.f32 %v671, %v698
      %v737 = vadd.f32 %v672, %v700
      %v738 = vadd.f32 %v673, %v702
      %v739 = vadd.f32 %v674, %v704
      %v740 = vadd.f32 %v675, %v706
      %v741 = vadd.f32 %v676, %v708
      %v742 = vadd.f32 %v677, %v710
      %v743 = vld [vmem:[%s138 + $0x1] sm:$0xf]
      %v744 = vld [vmem:[%s138 + $0x9] sm:$0xf]
      %v745 = vld [vmem:[%s138 + $0x11] sm:$0xf]
      %v746 = vld [vmem:[%s138 + $0x19] sm:$0xf]
      %v747 = vld [vmem:[%s138 + $0x21] sm:$0xf]
      %v748 = vld [vmem:[%s138 + $0x29] sm:$0xf]
      %v749 = vld [vmem:[%s138 + $0x31] sm:$0xf]
      %v750 = vld [vmem:[%s138 + $0x39] sm:$0xf]
      %v751 = vld [vmem:[%s138 + $0x41] sm:$0xf]
      %v752 = vld [vmem:[%s138 + $0x49] sm:$0xf]
      %v753 = vld [vmem:[%s138 + $0x51] sm:$0xf]
      %v754 = vld [vmem:[%s138 + $0x59] sm:$0xf]
      %v755 = vld [vmem:[%s138 + $0x61] sm:$0xf]
      %v756 = vld [vmem:[%s138 + $0x69] sm:$0xf]
      %v757 = vld [vmem:[%s138 + $0x71] sm:$0xf]
      %v758 = vld [vmem:[%s138 + $0x79] sm:$0xf]
      %v759 = vld [vmem:[%s138 + $0x81] sm:$0xf]
      %v760 = vld [vmem:[%s138 + $0x89] sm:$0xf]
      %v761 = vld [vmem:[%s138 + $0x91] sm:$0xf]
      %v762 = vld [vmem:[%s138 + $0x99] sm:$0xf]
      %v763 = vld [vmem:[%s138 + $0xa1] sm:$0xf]
      %v764 = vld [vmem:[%s138 + $0xa9] sm:$0xf]
      %v765 = vld [vmem:[%s138 + $0xb1] sm:$0xf]
      %v766 = vld [vmem:[%s138 + $0xb9] sm:$0xf]
      %v767 = vld [vmem:[%s138 + $0xc1] sm:$0xf]
      %v768 = vld [vmem:[%s138 + $0xc9] sm:$0xf]
      %v769 = vld [vmem:[%s138 + $0xd1] sm:$0xf]
      %v770 = vld [vmem:[%s138 + $0xd9] sm:$0xf]
      %v771 = vld [vmem:[%s138 + $0xe1] sm:$0xf]
      %v772 = vld [vmem:[%s138 + $0xe9] sm:$0xf]
      %v773 = vld [vmem:[%s138 + $0xf1] sm:$0xf]
      %v774 = vld [vmem:[%s138 + $0xf9] sm:$0xf]
      %v775 = vld [vmem:[%s138 + $0x101] sm:$0xf]
      %v776 = vld [vmem:[%s138 + $0x109] sm:$0xf]
      %v777 = vld [vmem:[%s138 + $0x111] sm:$0xf]
      %v778 = vld [vmem:[%s138 + $0x119] sm:$0xf]
      %795 = vrot.lane.b32.xlu0 %v743, 125
      %v796 = vpop.permute.xlu0 %795
      %797 = vrot.lane.b32.xlu0 %v744, 125
      %v798 = vpop.permute.xlu0 %797
      %799 = vrot.lane.b32.xlu0 %v745, 125
      %v800 = vpop.permute.xlu0 %799
      %801 = vrot.lane.b32.xlu0 %v746, 125
      %v802 = vpop.permute.xlu0 %801
      %803 = vrot.lane.b32.xlu0 %v749, 125
      %v804 = vpop.permute.xlu0 %803
      %805 = vrot.lane.b32.xlu0 %v750, 125
      %v806 = vpop.permute.xlu0 %805
      %807 = vrot.lane.b32.xlu0 %v751, 125
      %v808 = vpop.permute.xlu0 %807
      %809 = vrot.lane.b32.xlu0 %v752, 125
      %v810 = vpop.permute.xlu0 %809
      %811 = vrot.lane.b32.xlu0 %v755, 125
      %v812 = vpop.permute.xlu0 %811
      %813 = vrot.lane.b32.xlu0 %v756, 125
      %v814 = vpop.permute.xlu0 %813
      %815 = vrot.lane.b32.xlu0 %v757, 125
      %v816 = vpop.permute.xlu0 %815
      %817 = vrot.lane.b32.xlu0 %v758, 125
      %v818 = vpop.permute.xlu0 %817
      %819 = vrot.lane.b32.xlu0 %v761, 125
      %v820 = vpop.permute.xlu0 %819
      %821 = vrot.lane.b32.xlu0 %v762, 125
      %v822 = vpop.permute.xlu0 %821
      %823 = vrot.lane.b32.xlu0 %v763, 125
      %v824 = vpop.permute.xlu0 %823
      %825 = vrot.lane.b32.xlu0 %v764, 125
      %v826 = vpop.permute.xlu0 %825
      %v843 = vadd.f32 %v727, %v796
      %v844 = vadd.f32 %v728, %v798
      %v845 = vadd.f32 %v729, %v800
      %v846 = vadd.f32 %v730, %v802
      %v847 = vadd.f32 %v731, %v804
      %v848 = vadd.f32 %v732, %v806
      %v849 = vadd.f32 %v733, %v808
      %v850 = vadd.f32 %v734, %v810
      %v851 = vadd.f32 %v735, %v812
      %v852 = vadd.f32 %v736, %v814
      %v853 = vadd.f32 %v737, %v816
      %v854 = vadd.f32 %v738, %v818
      %v855 = vadd.f32 %v739, %v820
      %v856 = vadd.f32 %v740, %v822
      %v857 = vadd.f32 %v741, %v824
      %v858 = vadd.f32 %v742, %v826
      %863 = vrot.lane.b32.xlu0 %v744, 116
      %v864 = vpop.permute.xlu0 %863
      %865 = vrot.lane.b32.xlu0 %v745, 116
      %v866 = vpop.permute.xlu0 %865
      %867 = vrot.lane.b32.xlu0 %v746, 116
      %v868 = vpop.permute.xlu0 %867
      %869 = vrot.lane.b32.xlu0 %v747, 116
      %v870 = vpop.permute.xlu0 %869
      %871 = vrot.lane.b32.xlu0 %v750, 116
      %v872 = vpop.permute.xlu0 %871
      %873 = vrot.lane.b32.xlu0 %v751, 116
      %v874 = vpop.permute.xlu0 %873
      %875 = vrot.lane.b32.xlu0 %v752, 116
      %v876 = vpop.permute.xlu0 %875
      %877 = vrot.lane.b32.xlu0 %v753, 116
      %v878 = vpop.permute.xlu0 %877
      %879 = vrot.lane.b32.xlu0 %v756, 116
      %v880 = vpop.permute.xlu0 %879
      %881 = vrot.lane.b32.xlu0 %v757, 116
      %v882 = vpop.permute.xlu0 %881
      %883 = vrot.lane.b32.xlu0 %v758, 116
      %v884 = vpop.permute.xlu0 %883
      %885 = vrot.lane.b32.xlu0 %v759, 116
      %v886 = vpop.permute.xlu0 %885
      %887 = vrot.lane.b32.xlu0 %v762, 116
      %v888 = vpop.permute.xlu0 %887
      %889 = vrot.lane.b32.xlu0 %v763, 116
      %v890 = vpop.permute.xlu0 %889
      %891 = vrot.lane.b32.xlu0 %v764, 116
      %v892 = vpop.permute.xlu0 %891
      %893 = vrot.lane.b32.xlu0 %v765, 116
      %v894 = vpop.permute.xlu0 %893
      %v911 = vadd.f32 %v843, %v864
      %v912 = vadd.f32 %v844, %v866
      %v913 = vadd.f32 %v845, %v868
      %v914 = vadd.f32 %v846, %v870
      %v915 = vadd.f32 %v847, %v872
      %v916 = vadd.f32 %v848, %v874
      %v917 = vadd.f32 %v849, %v876
      %v918 = vadd.f32 %v850, %v878
      %v919 = vadd.f32 %v851, %v880
      %v920 = vadd.f32 %v852, %v882
      %v921 = vadd.f32 %v853, %v884
      %v922 = vadd.f32 %v854, %v886
      %v923 = vadd.f32 %v855, %v888
      %v924 = vadd.f32 %v856, %v890
      %v925 = vadd.f32 %v857, %v892
      %v926 = vadd.f32 %v858, %v894
      %931 = vrot.lane.b32.xlu0 %v745, 107
      %v932 = vpop.permute.xlu0 %931
      %933 = vrot.lane.b32.xlu0 %v746, 107
      %v934 = vpop.permute.xlu0 %933
      %935 = vrot.lane.b32.xlu0 %v747, 107
      %v936 = vpop.permute.xlu0 %935
      %937 = vrot.lane.b32.xlu0 %v748, 107
      %v938 = vpop.permute.xlu0 %937
      %939 = vrot.lane.b32.xlu0 %v751, 107
      %v940 = vpop.permute.xlu0 %939
      %941 = vrot.lane.b32.xlu0 %v752, 107
      %v942 = vpop.permute.xlu0 %941
      %943 = vrot.lane.b32.xlu0 %v753, 107
      %v944 = vpop.permute.xlu0 %943
      %945 = vrot.lane.b32.xlu0 %v754, 107
      %v946 = vpop.permute.xlu0 %945
      %947 = vrot.lane.b32.xlu0 %v757, 107
      %v948 = vpop.permute.xlu0 %947
      %949 = vrot.lane.b32.xlu0 %v758, 107
      %v950 = vpop.permute.xlu0 %949
      %951 = vrot.lane.b32.xlu0 %v759, 107
      %v952 = vpop.permute.xlu0 %951
      %953 = vrot.lane.b32.xlu0 %v760, 107
      %v954 = vpop.permute.xlu0 %953
      %955 = vrot.lane.b32.xlu0 %v763, 107
      %v956 = vpop.permute.xlu0 %955
      %957 = vrot.lane.b32.xlu0 %v764, 107
      %v958 = vpop.permute.xlu0 %957
      %959 = vrot.lane.b32.xlu0 %v765, 107
      %v960 = vpop.permute.xlu0 %959
      %961 = vrot.lane.b32.xlu0 %v766, 107
      %v962 = vpop.permute.xlu0 %961
      %v979 = vadd.f32 %v911, %v932
      %v980 = vadd.f32 %v912, %v934
      %v981 = vadd.f32 %v913, %v936
      %v982 = vadd.f32 %v914, %v938
      %v983 = vadd.f32 %v915, %v940
      %v984 = vadd.f32 %v916, %v942
      %v985 = vadd.f32 %v917, %v944
      %v986 = vadd.f32 %v918, %v946
      %v987 = vadd.f32 %v919, %v948
      %v988 = vadd.f32 %v920, %v950
      %v989 = vadd.f32 %v921, %v952
      %v990 = vadd.f32 %v922, %v954
      %v991 = vadd.f32 %v923, %v956
      %v992 = vadd.f32 %v924, %v958
      %v993 = vadd.f32 %v925, %v960
      %v994 = vadd.f32 %v926, %v962
      %999 = vrot.lane.b32.xlu0 %v749, 98
      %v1000 = vpop.permute.xlu0 %999
      %1001 = vrot.lane.b32.xlu0 %v750, 98
      %v1002 = vpop.permute.xlu0 %1001
      %1003 = vrot.lane.b32.xlu0 %v751, 98
      %v1004 = vpop.permute.xlu0 %1003
      %1005 = vrot.lane.b32.xlu0 %v752, 98
      %v1006 = vpop.permute.xlu0 %1005
      %1007 = vrot.lane.b32.xlu0 %v755, 98
      %v1008 = vpop.permute.xlu0 %1007
      %1009 = vrot.lane.b32.xlu0 %v756, 98
      %v1010 = vpop.permute.xlu0 %1009
      %1011 = vrot.lane.b32.xlu0 %v757, 98
      %v1012 = vpop.permute.xlu0 %1011
      %1013 = vrot.lane.b32.xlu0 %v758, 98
      %v1014 = vpop.permute.xlu0 %1013
      %1015 = vrot.lane.b32.xlu0 %v761, 98
      %v1016 = vpop.permute.xlu0 %1015
      %1017 = vrot.lane.b32.xlu0 %v762, 98
      %v1018 = vpop.permute.xlu0 %1017
      %1019 = vrot.lane.b32.xlu0 %v763, 98
      %v1020 = vpop.permute.xlu0 %1019
      %1021 = vrot.lane.b32.xlu0 %v764, 98
      %v1022 = vpop.permute.xlu0 %1021
      %1023 = vrot.lane.b32.xlu0 %v767, 98
      %v1024 = vpop.permute.xlu0 %1023
      %1025 = vrot.lane.b32.xlu0 %v768, 98
      %v1026 = vpop.permute.xlu0 %1025
      %1027 = vrot.lane.b32.xlu0 %v769, 98
      %v1028 = vpop.permute.xlu0 %1027
      %1029 = vrot.lane.b32.xlu0 %v770, 98
      %v1030 = vpop.permute.xlu0 %1029
      %v1047 = vadd.f32 %v979, %v1000
      %v1048 = vadd.f32 %v980, %v1002
      %v1049 = vadd.f32 %v981, %v1004
      %v1050 = vadd.f32 %v982, %v1006
      %v1051 = vadd.f32 %v983, %v1008
      %v1052 = vadd.f32 %v984, %v1010
      %v1053 = vadd.f32 %v985, %v1012
      %v1054 = vadd.f32 %v986, %v1014
      %v1055 = vadd.f32 %v987, %v1016
      %v1056 = vadd.f32 %v988, %v1018
      %v1057 = vadd.f32 %v989, %v1020
      %v1058 = vadd.f32 %v990, %v1022
      %v1059 = vadd.f32 %v991, %v1024
      %v1060 = vadd.f32 %v992, %v1026
      %v1061 = vadd.f32 %v993, %v1028
      %v1062 = vadd.f32 %v994, %v1030
      %1064 = vrot.lane.b32.xlu0 %v750, 89
      %v1065 = vpop.permute.xlu0 %1064
      %1066 = vrot.lane.b32.xlu0 %v751, 89
      %v1067 = vpop.permute.xlu0 %1066
      %1068 = vrot.lane.b32.xlu0 %v752, 89
      %v1069 = vpop.permute.xlu0 %1068
      %1070 = vrot.lane.b32.xlu0 %v753, 89
      %v1071 = vpop.permute.xlu0 %1070
      %1072 = vrot.lane.b32.xlu0 %v756, 89
      %v1073 = vpop.permute.xlu0 %1072
      %1074 = vrot.lane.b32.xlu0 %v757, 89
      %v1075 = vpop.permute.xlu0 %1074
      %1076 = vrot.lane.b32.xlu0 %v758, 89
      %v1077 = vpop.permute.xlu0 %1076
      %1078 = vrot.lane.b32.xlu0 %v759, 89
      %v1079 = vpop.permute.xlu0 %1078
      %1080 = vrot.lane.b32.xlu0 %v762, 89
      %v1081 = vpop.permute.xlu0 %1080
      %1082 = vrot.lane.b32.xlu0 %v763, 89
      %v1083 = vpop.permute.xlu0 %1082
      %1084 = vrot.lane.b32.xlu0 %v764, 89
      %v1085 = vpop.permute.xlu0 %1084
      %1086 = vrot.lane.b32.xlu0 %v765, 89
      %v1087 = vpop.permute.xlu0 %1086
      %1088 = vrot.lane.b32.xlu0 %v768, 89
      %v1089 = vpop.permute.xlu0 %1088
      %1090 = vrot.lane.b32.xlu0 %v769, 89
      %v1091 = vpop.permute.xlu0 %1090
      %1092 = vrot.lane.b32.xlu0 %v770, 89
      %v1093 = vpop.permute.xlu0 %1092
      %1094 = vrot.lane.b32.xlu0 %v771, 89
      %v1095 = vpop.permute.xlu0 %1094
      %v1112 = vadd.f32 %v1047, %v1065
      %v1113 = vadd.f32 %v1048, %v1067
      %v1114 = vadd.f32 %v1049, %v1069
      %v1115 = vadd.f32 %v1050, %v1071
      %v1116 = vadd.f32 %v1051, %v1073
      %v1117 = vadd.f32 %v1052, %v1075
      %v1118 = vadd.f32 %v1053, %v1077
      %v1119 = vadd.f32 %v1054, %v1079
      %v1120 = vadd.f32 %v1055, %v1081
      %v1121 = vadd.f32 %v1056, %v1083
      %v1122 = vadd.f32 %v1057, %v1085
      %v1123 = vadd.f32 %v1058, %v1087
      %v1124 = vadd.f32 %v1059, %v1089
      %v1125 = vadd.f32 %v1060, %v1091
      %v1126 = vadd.f32 %v1061, %v1093
      %v1127 = vadd.f32 %v1062, %v1095
      %1129 = vrot.lane.b32.xlu0 %v751, 80
      %v1130 = vpop.permute.xlu0 %1129
      %1131 = vrot.lane.b32.xlu0 %v752, 80
      %v1132 = vpop.permute.xlu0 %1131
      %1133 = vrot.lane.b32.xlu0 %v753, 80
      %v1134 = vpop.permute.xlu0 %1133
      %1135 = vrot.lane.b32.xlu0 %v754, 80
      %v1136 = vpop.permute.xlu0 %1135
      %1137 = vrot.lane.b32.xlu0 %v757, 80
      %v1138 = vpop.permute.xlu0 %1137
      %1139 = vrot.lane.b32.xlu0 %v758, 80
      %v1140 = vpop.permute.xlu0 %1139
      %1141 = vrot.lane.b32.xlu0 %v759, 80
      %v1142 = vpop.permute.xlu0 %1141
      %1143 = vrot.lane.b32.xlu0 %v760, 80
      %v1144 = vpop.permute.xlu0 %1143
      %1145 = vrot.lane.b32.xlu0 %v763, 80
      %v1146 = vpop.permute.xlu0 %1145
      %1147 = vrot.lane.b32.xlu0 %v764, 80
      %v1148 = vpop.permute.xlu0 %1147
      %1149 = vrot.lane.b32.xlu0 %v765, 80
      %v1150 = vpop.permute.xlu0 %1149
      %1151 = vrot.lane.b32.xlu0 %v766, 80
      %v1152 = vpop.permute.xlu0 %1151
      %1153 = vrot.lane.b32.xlu0 %v769, 80
      %v1154 = vpop.permute.xlu0 %1153
      %1155 = vrot.lane.b32.xlu0 %v770, 80
      %v1156 = vpop.permute.xlu0 %1155
      %1157 = vrot.lane.b32.xlu0 %v771, 80
      %v1158 = vpop.permute.xlu0 %1157
      %1159 = vrot.lane.b32.xlu0 %v772, 80
      %v1160 = vpop.permute.xlu0 %1159
      %v1177 = vadd.f32 %v1112, %v1130
      %v1178 = vadd.f32 %v1113, %v1132
      %v1179 = vadd.f32 %v1114, %v1134
      %v1180 = vadd.f32 %v1115, %v1136
      %v1181 = vadd.f32 %v1116, %v1138
      %v1182 = vadd.f32 %v1117, %v1140
      %v1183 = vadd.f32 %v1118, %v1142
      %v1184 = vadd.f32 %v1119, %v1144
      %v1185 = vadd.f32 %v1120, %v1146
      %v1186 = vadd.f32 %v1121, %v1148
      %v1187 = vadd.f32 %v1122, %v1150
      %v1188 = vadd.f32 %v1123, %v1152
      %v1189 = vadd.f32 %v1124, %v1154
      %v1190 = vadd.f32 %v1125, %v1156
      %v1191 = vadd.f32 %v1126, %v1158
      %v1192 = vadd.f32 %v1127, %v1160
      %1197 = vrot.lane.b32.xlu0 %v755, 71
      %v1198 = vpop.permute.xlu0 %1197
      %1199 = vrot.lane.b32.xlu0 %v756, 71
      %v1200 = vpop.permute.xlu0 %1199
      %1201 = vrot.lane.b32.xlu0 %v757, 71
      %v1202 = vpop.permute.xlu0 %1201
      %1203 = vrot.lane.b32.xlu0 %v758, 71
      %v1204 = vpop.permute.xlu0 %1203
      %1205 = vrot.lane.b32.xlu0 %v761, 71
      %v1206 = vpop.permute.xlu0 %1205
      %1207 = vrot.lane.b32.xlu0 %v762, 71
      %v1208 = vpop.permute.xlu0 %1207
      %1209 = vrot.lane.b32.xlu0 %v763, 71
      %v1210 = vpop.permute.xlu0 %1209
      %1211 = vrot.lane.b32.xlu0 %v764, 71
      %v1212 = vpop.permute.xlu0 %1211
      %1213 = vrot.lane.b32.xlu0 %v767, 71
      %v1214 = vpop.permute.xlu0 %1213
      %1215 = vrot.lane.b32.xlu0 %v768, 71
      %v1216 = vpop.permute.xlu0 %1215
      %1217 = vrot.lane.b32.xlu0 %v769, 71
      %v1218 = vpop.permute.xlu0 %1217
      %1219 = vrot.lane.b32.xlu0 %v770, 71
      %v1220 = vpop.permute.xlu0 %1219
      %1221 = vrot.lane.b32.xlu0 %v773, 71
      %v1222 = vpop.permute.xlu0 %1221
      %1223 = vrot.lane.b32.xlu0 %v774, 71
      %v1224 = vpop.permute.xlu0 %1223
      %1225 = vrot.lane.b32.xlu0 %v775, 71
      %v1226 = vpop.permute.xlu0 %1225
      %1227 = vrot.lane.b32.xlu0 %v776, 71
      %v1228 = vpop.permute.xlu0 %1227
      %v1245 = vadd.f32 %v1177, %v1198
      %v1246 = vadd.f32 %v1178, %v1200
      %v1247 = vadd.f32 %v1179, %v1202
      %v1248 = vadd.f32 %v1180, %v1204
      %v1249 = vadd.f32 %v1181, %v1206
      %v1250 = vadd.f32 %v1182, %v1208
      %v1251 = vadd.f32 %v1183, %v1210
      %v1252 = vadd.f32 %v1184, %v1212
      %v1253 = vadd.f32 %v1185, %v1214
      %v1254 = vadd.f32 %v1186, %v1216
      %v1255 = vadd.f32 %v1187, %v1218
      %v1256 = vadd.f32 %v1188, %v1220
      %v1257 = vadd.f32 %v1189, %v1222
      %v1258 = vadd.f32 %v1190, %v1224
      %v1259 = vadd.f32 %v1191, %v1226
      %v1260 = vadd.f32 %v1192, %v1228
      %1262 = vrot.lane.b32.xlu0 %v756, 62
      %v1263 = vpop.permute.xlu0 %1262
      %1264 = vrot.lane.b32.xlu0 %v757, 62
      %v1265 = vpop.permute.xlu0 %1264
      %1266 = vrot.lane.b32.xlu0 %v758, 62
      %v1267 = vpop.permute.xlu0 %1266
      %1268 = vrot.lane.b32.xlu0 %v759, 62
      %v1269 = vpop.permute.xlu0 %1268
      %1270 = vrot.lane.b32.xlu0 %v762, 62
      %v1271 = vpop.permute.xlu0 %1270
      %1272 = vrot.lane.b32.xlu0 %v763, 62
      %v1273 = vpop.permute.xlu0 %1272
      %1274 = vrot.lane.b32.xlu0 %v764, 62
      %v1275 = vpop.permute.xlu0 %1274
      %1276 = vrot.lane.b32.xlu0 %v765, 62
      %v1277 = vpop.permute.xlu0 %1276
      %1278 = vrot.lane.b32.xlu0 %v768, 62
      %v1279 = vpop.permute.xlu0 %1278
      %1280 = vrot.lane.b32.xlu0 %v769, 62
      %v1281 = vpop.permute.xlu0 %1280
      %1282 = vrot.lane.b32.xlu0 %v770, 62
      %v1283 = vpop.permute.xlu0 %1282
      %1284 = vrot.lane.b32.xlu0 %v771, 62
      %v1285 = vpop.permute.xlu0 %1284
      %1286 = vrot.lane.b32.xlu0 %v774, 62
      %v1287 = vpop.permute.xlu0 %1286
      %1288 = vrot.lane.b32.xlu0 %v775, 62
      %v1289 = vpop.permute.xlu0 %1288
      %1290 = vrot.lane.b32.xlu0 %v776, 62
      %v1291 = vpop.permute.xlu0 %1290
      %1292 = vrot.lane.b32.xlu0 %v777, 62
      %v1293 = vpop.permute.xlu0 %1292
      %v1310 = vadd.f32 %v1245, %v1263
      %v1311 = vadd.f32 %v1246, %v1265
      %v1312 = vadd.f32 %v1247, %v1267
      %v1313 = vadd.f32 %v1248, %v1269
      %v1314 = vadd.f32 %v1249, %v1271
      %v1315 = vadd.f32 %v1250, %v1273
      %v1316 = vadd.f32 %v1251, %v1275
      %v1317 = vadd.f32 %v1252, %v1277
      %v1318 = vadd.f32 %v1253, %v1279
      %v1319 = vadd.f32 %v1254, %v1281
      %v1320 = vadd.f32 %v1255, %v1283
      %v1321 = vadd.f32 %v1256, %v1285
      %v1322 = vadd.f32 %v1257, %v1287
      %v1323 = vadd.f32 %v1258, %v1289
      %v1324 = vadd.f32 %v1259, %v1291
      %v1325 = vadd.f32 %v1260, %v1293
      %1327 = vrot.lane.b32.xlu0 %v757, 53
      %v1328 = vpop.permute.xlu0 %1327
      %1329 = vrot.lane.b32.xlu0 %v758, 53
      %v1330 = vpop.permute.xlu0 %1329
      %1331 = vrot.lane.b32.xlu0 %v759, 53
      %v1332 = vpop.permute.xlu0 %1331
      %1333 = vrot.lane.b32.xlu0 %v760, 53
      %v1334 = vpop.permute.xlu0 %1333
      %1335 = vrot.lane.b32.xlu0 %v763, 53
      %v1336 = vpop.permute.xlu0 %1335
      %1337 = vrot.lane.b32.xlu0 %v764, 53
      %v1338 = vpop.permute.xlu0 %1337
      %1339 = vrot.lane.b32.xlu0 %v765, 53
      %v1340 = vpop.permute.xlu0 %1339
      %1341 = vrot.lane.b32.xlu0 %v766, 53
      %v1342 = vpop.permute.xlu0 %1341
      %1343 = vrot.lane.b32.xlu0 %v769, 53
      %v1344 = vpop.permute.xlu0 %1343
      %1345 = vrot.lane.b32.xlu0 %v770, 53
      %v1346 = vpop.permute.xlu0 %1345
      %1347 = vrot.lane.b32.xlu0 %v771, 53
      %v1348 = vpop.permute.xlu0 %1347
      %1349 = vrot.lane.b32.xlu0 %v772, 53
      %v1350 = vpop.permute.xlu0 %1349
      %1351 = vrot.lane.b32.xlu0 %v775, 53
      %v1352 = vpop.permute.xlu0 %1351
      %1353 = vrot.lane.b32.xlu0 %v776, 53
      %v1354 = vpop.permute.xlu0 %1353
      %1355 = vrot.lane.b32.xlu0 %v777, 53
      %v1356 = vpop.permute.xlu0 %1355
      %1357 = vrot.lane.b32.xlu0 %v778, 53
      %v1358 = vpop.permute.xlu0 %1357
      %v1375 = vadd.f32 %v1310, %v1328
      %v1376 = vadd.f32 %v1311, %v1330
      %v1377 = vadd.f32 %v1312, %v1332
      %v1378 = vadd.f32 %v1313, %v1334
      %v1379 = vadd.f32 %v1314, %v1336
      %v1380 = vadd.f32 %v1315, %v1338
      %v1381 = vadd.f32 %v1316, %v1340
      %v1382 = vadd.f32 %v1317, %v1342
      %v1383 = vadd.f32 %v1318, %v1344
      %v1384 = vadd.f32 %v1319, %v1346
      %v1385 = vadd.f32 %v1320, %v1348
      %v1386 = vadd.f32 %v1321, %v1350
      %v1387 = vadd.f32 %v1322, %v1352
      %v1388 = vadd.f32 %v1323, %v1354
      %v1389 = vadd.f32 %v1324, %v1356
      %v1390 = vadd.f32 %v1325, %v1358
      %v1391 = vld [vmem:[%s138 + $0x2] sm:$0xf]
      %v1392 = vld [vmem:[%s138 + $0xa] sm:$0xf]
      %v1393 = vld [vmem:[%s138 + $0x12] sm:$0xf]
      %v1394 = vld [vmem:[%s138 + $0x1a] sm:$0xf]
      %v1395 = vld [vmem:[%s138 + $0x22] sm:$0xf]
      %v1396 = vld [vmem:[%s138 + $0x2a] sm:$0xf]
      %v1397 = vld [vmem:[%s138 + $0x32] sm:$0xf]
      %v1398 = vld [vmem:[%s138 + $0x3a] sm:$0xf]
      %v1399 = vld [vmem:[%s138 + $0x42] sm:$0xf]
      %v1400 = vld [vmem:[%s138 + $0x4a] sm:$0xf]
      %v1401 = vld [vmem:[%s138 + $0x52] sm:$0xf]
      %v1402 = vld [vmem:[%s138 + $0x5a] sm:$0xf]
      %v1403 = vld [vmem:[%s138 + $0x62] sm:$0xf]
      %v1404 = vld [vmem:[%s138 + $0x6a] sm:$0xf]
      %v1405 = vld [vmem:[%s138 + $0x72] sm:$0xf]
      %v1406 = vld [vmem:[%s138 + $0x7a] sm:$0xf]
      %v1407 = vld [vmem:[%s138 + $0x82] sm:$0xf]
      %v1408 = vld [vmem:[%s138 + $0x8a] sm:$0xf]
      %v1409 = vld [vmem:[%s138 + $0x92] sm:$0xf]
      %v1410 = vld [vmem:[%s138 + $0x9a] sm:$0xf]
      %v1411 = vld [vmem:[%s138 + $0xa2] sm:$0xf]
      %v1412 = vld [vmem:[%s138 + $0xaa] sm:$0xf]
      %v1413 = vld [vmem:[%s138 + $0xb2] sm:$0xf]
      %v1414 = vld [vmem:[%s138 + $0xba] sm:$0xf]
      %v1415 = vld [vmem:[%s138 + $0xc2] sm:$0xf]
      %v1416 = vld [vmem:[%s138 + $0xca] sm:$0xf]
      %v1417 = vld [vmem:[%s138 + $0xd2] sm:$0xf]
      %v1418 = vld [vmem:[%s138 + $0xda] sm:$0xf]
      %v1419 = vld [vmem:[%s138 + $0xe2] sm:$0xf]
      %v1420 = vld [vmem:[%s138 + $0xea] sm:$0xf]
      %v1421 = vld [vmem:[%s138 + $0xf2] sm:$0xf]
      %v1422 = vld [vmem:[%s138 + $0xfa] sm:$0xf]
      %v1423 = vld [vmem:[%s138 + $0x102] sm:$0xf]
      %v1424 = vld [vmem:[%s138 + $0x10a] sm:$0xf]
      %v1425 = vld [vmem:[%s138 + $0x112] sm:$0xf]
      %v1426 = vld [vmem:[%s138 + $0x11a] sm:$0xf]
      %1443 = vrot.lane.b32.xlu0 %v1391, 122
      %v1444 = vpop.permute.xlu0 %1443
      %1445 = vrot.lane.b32.xlu0 %v1392, 122
      %v1446 = vpop.permute.xlu0 %1445
      %1447 = vrot.lane.b32.xlu0 %v1393, 122
      %v1448 = vpop.permute.xlu0 %1447
      %1449 = vrot.lane.b32.xlu0 %v1394, 122
      %v1450 = vpop.permute.xlu0 %1449
      %1451 = vrot.lane.b32.xlu0 %v1397, 122
      %v1452 = vpop.permute.xlu0 %1451
      %1453 = vrot.lane.b32.xlu0 %v1398, 122
      %v1454 = vpop.permute.xlu0 %1453
      %1455 = vrot.lane.b32.xlu0 %v1399, 122
      %v1456 = vpop.permute.xlu0 %1455
      %1457 = vrot.lane.b32.xlu0 %v1400, 122
      %v1458 = vpop.permute.xlu0 %1457
      %1459 = vrot.lane.b32.xlu0 %v1403, 122
      %v1460 = vpop.permute.xlu0 %1459
      %1461 = vrot.lane.b32.xlu0 %v1404, 122
      %v1462 = vpop.permute.xlu0 %1461
      %1463 = vrot.lane.b32.xlu0 %v1405, 122
      %v1464 = vpop.permute.xlu0 %1463
      %1465 = vrot.lane.b32.xlu0 %v1406, 122
      %v1466 = vpop.permute.xlu0 %1465
      %1467 = vrot.lane.b32.xlu0 %v1409, 122
      %v1468 = vpop.permute.xlu0 %1467
      %1469 = vrot.lane.b32.xlu0 %v1410, 122
      %v1470 = vpop.permute.xlu0 %1469
      %1471 = vrot.lane.b32.xlu0 %v1411, 122
      %v1472 = vpop.permute.xlu0 %1471
      %1473 = vrot.lane.b32.xlu0 %v1412, 122
      %v1474 = vpop.permute.xlu0 %1473
      %v1491 = vadd.f32 %v1375, %v1444
      %v1492 = vadd.f32 %v1376, %v1446
      %v1493 = vadd.f32 %v1377, %v1448
      %v1494 = vadd.f32 %v1378, %v1450
      %v1495 = vadd.f32 %v1379, %v1452
      %v1496 = vadd.f32 %v1380, %v1454
      %v1497 = vadd.f32 %v1381, %v1456
      %v1498 = vadd.f32 %v1382, %v1458
      %v1499 = vadd.f32 %v1383, %v1460
      %v1500 = vadd.f32 %v1384, %v1462
      %v1501 = vadd.f32 %v1385, %v1464
      %v1502 = vadd.f32 %v1386, %v1466
      %v1503 = vadd.f32 %v1387, %v1468
      %v1504 = vadd.f32 %v1388, %v1470
      %v1505 = vadd.f32 %v1389, %v1472
      %v1506 = vadd.f32 %v1390, %v1474
      %1511 = vrot.lane.b32.xlu0 %v1392, 113
      %v1512 = vpop.permute.xlu0 %1511
      %1513 = vrot.lane.b32.xlu0 %v1393, 113
      %v1514 = vpop.permute.xlu0 %1513
      %1515 = vrot.lane.b32.xlu0 %v1394, 113
      %v1516 = vpop.permute.xlu0 %1515
      %1517 = vrot.lane.b32.xlu0 %v1395, 113
      %v1518 = vpop.permute.xlu0 %1517
      %1519 = vrot.lane.b32.xlu0 %v1398, 113
      %v1520 = vpop.permute.xlu0 %1519
      %1521 = vrot.lane.b32.xlu0 %v1399, 113
      %v1522 = vpop.permute.xlu0 %1521
      %1523 = vrot.lane.b32.xlu0 %v1400, 113
      %v1524 = vpop.permute.xlu0 %1523
      %1525 = vrot.lane.b32.xlu0 %v1401, 113
      %v1526 = vpop.permute.xlu0 %1525
      %1527 = vrot.lane.b32.xlu0 %v1404, 113
      %v1528 = vpop.permute.xlu0 %1527
      %1529 = vrot.lane.b32.xlu0 %v1405, 113
      %v1530 = vpop.permute.xlu0 %1529
      %1531 = vrot.lane.b32.xlu0 %v1406, 113
      %v1532 = vpop.permute.xlu0 %1531
      %1533 = vrot.lane.b32.xlu0 %v1407, 113
      %v1534 = vpop.permute.xlu0 %1533
      %1535 = vrot.lane.b32.xlu0 %v1410, 113
      %v1536 = vpop.permute.xlu0 %1535
      %1537 = vrot.lane.b32.xlu0 %v1411, 113
      %v1538 = vpop.permute.xlu0 %1537
      %1539 = vrot.lane.b32.xlu0 %v1412, 113
      %v1540 = vpop.permute.xlu0 %1539
      %1541 = vrot.lane.b32.xlu0 %v1413, 113
      %v1542 = vpop.permute.xlu0 %1541
      %v1559 = vadd.f32 %v1491, %v1512
      %v1560 = vadd.f32 %v1492, %v1514
      %v1561 = vadd.f32 %v1493, %v1516
      %v1562 = vadd.f32 %v1494, %v1518
      %v1563 = vadd.f32 %v1495, %v1520
      %v1564 = vadd.f32 %v1496, %v1522
      %v1565 = vadd.f32 %v1497, %v1524
      %v1566 = vadd.f32 %v1498, %v1526
      %v1567 = vadd.f32 %v1499, %v1528
      %v1568 = vadd.f32 %v1500, %v1530
      %v1569 = vadd.f32 %v1501, %v1532
      %v1570 = vadd.f32 %v1502, %v1534
      %v1571 = vadd.f32 %v1503, %v1536
      %v1572 = vadd.f32 %v1504, %v1538
      %v1573 = vadd.f32 %v1505, %v1540
      %v1574 = vadd.f32 %v1506, %v1542
      %1579 = vrot.lane.b32.xlu0 %v1393, 104
      %v1580 = vpop.permute.xlu0 %1579
      %1581 = vrot.lane.b32.xlu0 %v1394, 104
      %v1582 = vpop.permute.xlu0 %1581
      %1583 = vrot.lane.b32.xlu0 %v1395, 104
      %v1584 = vpop.permute.xlu0 %1583
      %1585 = vrot.lane.b32.xlu0 %v1396, 104
      %v1586 = vpop.permute.xlu0 %1585
      %1587 = vrot.lane.b32.xlu0 %v1399, 104
      %v1588 = vpop.permute.xlu0 %1587
      %1589 = vrot.lane.b32.xlu0 %v1400, 104
      %v1590 = vpop.permute.xlu0 %1589
      %1591 = vrot.lane.b32.xlu0 %v1401, 104
      %v1592 = vpop.permute.xlu0 %1591
      %1593 = vrot.lane.b32.xlu0 %v1402, 104
      %v1594 = vpop.permute.xlu0 %1593
      %1595 = vrot.lane.b32.xlu0 %v1405, 104
      %v1596 = vpop.permute.xlu0 %1595
      %1597 = vrot.lane.b32.xlu0 %v1406, 104
      %v1598 = vpop.permute.xlu0 %1597
      %1599 = vrot.lane.b32.xlu0 %v1407, 104
      %v1600 = vpop.permute.xlu0 %1599
      %1601 = vrot.lane.b32.xlu0 %v1408, 104
      %v1602 = vpop.permute.xlu0 %1601
      %1603 = vrot.lane.b32.xlu0 %v1411, 104
      %v1604 = vpop.permute.xlu0 %1603
      %1605 = vrot.lane.b32.xlu0 %v1412, 104
      %v1606 = vpop.permute.xlu0 %1605
      %1607 = vrot.lane.b32.xlu0 %v1413, 104
      %v1608 = vpop.permute.xlu0 %1607
      %1609 = vrot.lane.b32.xlu0 %v1414, 104
      %v1610 = vpop.permute.xlu0 %1609
      %v1627 = vadd.f32 %v1559, %v1580
      %v1628 = vadd.f32 %v1560, %v1582
      %v1629 = vadd.f32 %v1561, %v1584
      %v1630 = vadd.f32 %v1562, %v1586
      %v1631 = vadd.f32 %v1563, %v1588
      %v1632 = vadd.f32 %v1564, %v1590
      %v1633 = vadd.f32 %v1565, %v1592
      %v1634 = vadd.f32 %v1566, %v1594
      %v1635 = vadd.f32 %v1567, %v1596
      %v1636 = vadd.f32 %v1568, %v1598
      %v1637 = vadd.f32 %v1569, %v1600
      %v1638 = vadd.f32 %v1570, %v1602
      %v1639 = vadd.f32 %v1571, %v1604
      %v1640 = vadd.f32 %v1572, %v1606
      %v1641 = vadd.f32 %v1573, %v1608
      %v1642 = vadd.f32 %v1574, %v1610
      %1647 = vrot.lane.b32.xlu0 %v1397, 95
      %v1648 = vpop.permute.xlu0 %1647
      %1649 = vrot.lane.b32.xlu0 %v1398, 95
      %v1650 = vpop.permute.xlu0 %1649
      %1651 = vrot.lane.b32.xlu0 %v1399, 95
      %v1652 = vpop.permute.xlu0 %1651
      %1653 = vrot.lane.b32.xlu0 %v1400, 95
      %v1654 = vpop.permute.xlu0 %1653
      %1655 = vrot.lane.b32.xlu0 %v1403, 95
      %v1656 = vpop.permute.xlu0 %1655
      %1657 = vrot.lane.b32.xlu0 %v1404, 95
      %v1658 = vpop.permute.xlu0 %1657
      %1659 = vrot.lane.b32.xlu0 %v1405, 95
      %v1660 = vpop.permute.xlu0 %1659
      %1661 = vrot.lane.b32.xlu0 %v1406, 95
      %v1662 = vpop.permute.xlu0 %1661
      %1663 = vrot.lane.b32.xlu0 %v1409, 95
      %v1664 = vpop.permute.xlu0 %1663
      %1665 = vrot.lane.b32.xlu0 %v1410, 95
      %v1666 = vpop.permute.xlu0 %1665
      %1667 = vrot.lane.b32.xlu0 %v1411, 95
      %v1668 = vpop.permute.xlu0 %1667
      %1669 = vrot.lane.b32.xlu0 %v1412, 95
      %v1670 = vpop.permute.xlu0 %1669
      %1671 = vrot.lane.b32.xlu0 %v1415, 95
      %v1672 = vpop.permute.xlu0 %1671
      %1673 = vrot.lane.b32.xlu0 %v1416, 95
      %v1674 = vpop.permute.xlu0 %1673
      %1675 = vrot.lane.b32.xlu0 %v1417, 95
      %v1676 = vpop.permute.xlu0 %1675
      %1677 = vrot.lane.b32.xlu0 %v1418, 95
      %v1678 = vpop.permute.xlu0 %1677
      %v1695 = vadd.f32 %v1627, %v1648
      %v1696 = vadd.f32 %v1628, %v1650
      %v1697 = vadd.f32 %v1629, %v1652
      %v1698 = vadd.f32 %v1630, %v1654
      %v1699 = vadd.f32 %v1631, %v1656
      %v1700 = vadd.f32 %v1632, %v1658
      %v1701 = vadd.f32 %v1633, %v1660
      %v1702 = vadd.f32 %v1634, %v1662
      %v1703 = vadd.f32 %v1635, %v1664
      %v1704 = vadd.f32 %v1636, %v1666
      %v1705 = vadd.f32 %v1637, %v1668
      %v1706 = vadd.f32 %v1638, %v1670
      %v1707 = vadd.f32 %v1639, %v1672
      %v1708 = vadd.f32 %v1640, %v1674
      %v1709 = vadd.f32 %v1641, %v1676
      %v1710 = vadd.f32 %v1642, %v1678
      %1712 = vrot.lane.b32.xlu0 %v1398, 86
      %v1713 = vpop.permute.xlu0 %1712
      %1714 = vrot.lane.b32.xlu0 %v1399, 86
      %v1715 = vpop.permute.xlu0 %1714
      %1716 = vrot.lane.b32.xlu0 %v1400, 86
      %v1717 = vpop.permute.xlu0 %1716
      %1718 = vrot.lane.b32.xlu0 %v1401, 86
      %v1719 = vpop.permute.xlu0 %1718
      %1720 = vrot.lane.b32.xlu0 %v1404, 86
      %v1721 = vpop.permute.xlu0 %1720
      %1722 = vrot.lane.b32.xlu0 %v1405, 86
      %v1723 = vpop.permute.xlu0 %1722
      %1724 = vrot.lane.b32.xlu0 %v1406, 86
      %v1725 = vpop.permute.xlu0 %1724
      %1726 = vrot.lane.b32.xlu0 %v1407, 86
      %v1727 = vpop.permute.xlu0 %1726
      %1728 = vrot.lane.b32.xlu0 %v1410, 86
      %v1729 = vpop.permute.xlu0 %1728
      %1730 = vrot.lane.b32.xlu0 %v1411, 86
      %v1731 = vpop.permute.xlu0 %1730
      %1732 = vrot.lane.b32.xlu0 %v1412, 86
      %v1733 = vpop.permute.xlu0 %1732
      %1734 = vrot.lane.b32.xlu0 %v1413, 86
      %v1735 = vpop.permute.xlu0 %1734
      %1736 = vrot.lane.b32.xlu0 %v1416, 86
      %v1737 = vpop.permute.xlu0 %1736
      %1738 = vrot.lane.b32.xlu0 %v1417, 86
      %v1739 = vpop.permute.xlu0 %1738
      %1740 = vrot.lane.b32.xlu0 %v1418, 86
      %v1741 = vpop.permute.xlu0 %1740
      %1742 = vrot.lane.b32.xlu0 %v1419, 86
      %v1743 = vpop.permute.xlu0 %1742
      %v1760 = vadd.f32 %v1695, %v1713
      %v1761 = vadd.f32 %v1696, %v1715
      %v1762 = vadd.f32 %v1697, %v1717
      %v1763 = vadd.f32 %v1698, %v1719
      %v1764 = vadd.f32 %v1699, %v1721
      %v1765 = vadd.f32 %v1700, %v1723
      %v1766 = vadd.f32 %v1701, %v1725
      %v1767 = vadd.f32 %v1702, %v1727
      %v1768 = vadd.f32 %v1703, %v1729
      %v1769 = vadd.f32 %v1704, %v1731
      %v1770 = vadd.f32 %v1705, %v1733
      %v1771 = vadd.f32 %v1706, %v1735
      %v1772 = vadd.f32 %v1707, %v1737
      %v1773 = vadd.f32 %v1708, %v1739
      %v1774 = vadd.f32 %v1709, %v1741
      %v1775 = vadd.f32 %v1710, %v1743
      %1777 = vrot.lane.b32.xlu0 %v1399, 77
      %v1778 = vpop.permute.xlu0 %1777
      %1779 = vrot.lane.b32.xlu0 %v1400, 77
      %v1780 = vpop.permute.xlu0 %1779
      %1781 = vrot.lane.b32.xlu0 %v1401, 77
      %v1782 = vpop.permute.xlu0 %1781
      %1783 = vrot.lane.b32.xlu0 %v1402, 77
      %v1784 = vpop.permute.xlu0 %1783
      %1785 = vrot.lane.b32.xlu0 %v1405, 77
      %v1786 = vpop.permute.xlu0 %1785
      %1787 = vrot.lane.b32.xlu0 %v1406, 77
      %v1788 = vpop.permute.xlu0 %1787
      %1789 = vrot.lane.b32.xlu0 %v1407, 77
      %v1790 = vpop.permute.xlu0 %1789
      %1791 = vrot.lane.b32.xlu0 %v1408, 77
      %v1792 = vpop.permute.xlu0 %1791
      %1793 = vrot.lane.b32.xlu0 %v1411, 77
      %v1794 = vpop.permute.xlu0 %1793
      %1795 = vrot.lane.b32.xlu0 %v1412, 77
      %v1796 = vpop.permute.xlu0 %1795
      %1797 = vrot.lane.b32.xlu0 %v1413, 77
      %v1798 = vpop.permute.xlu0 %1797
      %1799 = vrot.lane.b32.xlu0 %v1414, 77
      %v1800 = vpop.permute.xlu0 %1799
      %1801 = vrot.lane.b32.xlu0 %v1417, 77
      %v1802 = vpop.permute.xlu0 %1801
      %1803 = vrot.lane.b32.xlu0 %v1418, 77
      %v1804 = vpop.permute.xlu0 %1803
      %1805 = vrot.lane.b32.xlu0 %v1419, 77
      %v1806 = vpop.permute.xlu0 %1805
      %1807 = vrot.lane.b32.xlu0 %v1420, 77
      %v1808 = vpop.permute.xlu0 %1807
      %v1825 = vadd.f32 %v1760, %v1778
      %v1826 = vadd.f32 %v1761, %v1780
      %v1827 = vadd.f32 %v1762, %v1782
      %v1828 = vadd.f32 %v1763, %v1784
      %v1829 = vadd.f32 %v1764, %v1786
      %v1830 = vadd.f32 %v1765, %v1788
      %v1831 = vadd.f32 %v1766, %v1790
      %v1832 = vadd.f32 %v1767, %v1792
      %v1833 = vadd.f32 %v1768, %v1794
      %v1834 = vadd.f32 %v1769, %v1796
      %v1835 = vadd.f32 %v1770, %v1798
      %v1836 = vadd.f32 %v1771, %v1800
      %v1837 = vadd.f32 %v1772, %v1802
      %v1838 = vadd.f32 %v1773, %v1804
      %v1839 = vadd.f32 %v1774, %v1806
      %v1840 = vadd.f32 %v1775, %v1808
      %1845 = vrot.lane.b32.xlu0 %v1403, 68
      %v1846 = vpop.permute.xlu0 %1845
      %1847 = vrot.lane.b32.xlu0 %v1404, 68
      %v1848 = vpop.permute.xlu0 %1847
      %1849 = vrot.lane.b32.xlu0 %v1405, 68
      %v1850 = vpop.permute.xlu0 %1849
      %1851 = vrot.lane.b32.xlu0 %v1406, 68
      %v1852 = vpop.permute.xlu0 %1851
      %1853 = vrot.lane.b32.xlu0 %v1409, 68
      %v1854 = vpop.permute.xlu0 %1853
      %1855 = vrot.lane.b32.xlu0 %v1410, 68
      %v1856 = vpop.permute.xlu0 %1855
      %1857 = vrot.lane.b32.xlu0 %v1411, 68
      %v1858 = vpop.permute.xlu0 %1857
      %1859 = vrot.lane.b32.xlu0 %v1412, 68
      %v1860 = vpop.permute.xlu0 %1859
      %1861 = vrot.lane.b32.xlu0 %v1415, 68
      %v1862 = vpop.permute.xlu0 %1861
      %1863 = vrot.lane.b32.xlu0 %v1416, 68
      %v1864 = vpop.permute.xlu0 %1863
      %1865 = vrot.lane.b32.xlu0 %v1417, 68
      %v1866 = vpop.permute.xlu0 %1865
      %1867 = vrot.lane.b32.xlu0 %v1418, 68
      %v1868 = vpop.permute.xlu0 %1867
      %1869 = vrot.lane.b32.xlu0 %v1421, 68
      %v1870 = vpop.permute.xlu0 %1869
      %1871 = vrot.lane.b32.xlu0 %v1422, 68
      %v1872 = vpop.permute.xlu0 %1871
      %1873 = vrot.lane.b32.xlu0 %v1423, 68
      %v1874 = vpop.permute.xlu0 %1873
      %1875 = vrot.lane.b32.xlu0 %v1424, 68
      %v1876 = vpop.permute.xlu0 %1875
      %v1893 = vadd.f32 %v1825, %v1846
      %v1894 = vadd.f32 %v1826, %v1848
      %v1895 = vadd.f32 %v1827, %v1850
      %v1896 = vadd.f32 %v1828, %v1852
      %v1897 = vadd.f32 %v1829, %v1854
      %v1898 = vadd.f32 %v1830, %v1856
      %v1899 = vadd.f32 %v1831, %v1858
      %v1900 = vadd.f32 %v1832, %v1860
      %v1901 = vadd.f32 %v1833, %v1862
      %v1902 = vadd.f32 %v1834, %v1864
      %v1903 = vadd.f32 %v1835, %v1866
      %v1904 = vadd.f32 %v1836, %v1868
      %v1905 = vadd.f32 %v1837, %v1870
      %v1906 = vadd.f32 %v1838, %v1872
      %v1907 = vadd.f32 %v1839, %v1874
      %v1908 = vadd.f32 %v1840, %v1876
      %1910 = vrot.lane.b32.xlu0 %v1404, 59
      %v1911 = vpop.permute.xlu0 %1910
      %1912 = vrot.lane.b32.xlu0 %v1405, 59
      %v1913 = vpop.permute.xlu0 %1912
      %1914 = vrot.lane.b32.xlu0 %v1406, 59
      %v1915 = vpop.permute.xlu0 %1914
      %1916 = vrot.lane.b32.xlu0 %v1407, 59
      %v1917 = vpop.permute.xlu0 %1916
      %1918 = vrot.lane.b32.xlu0 %v1410, 59
      %v1919 = vpop.permute.xlu0 %1918
      %1920 = vrot.lane.b32.xlu0 %v1411, 59
      %v1921 = vpop.permute.xlu0 %1920
      %1922 = vrot.lane.b32.xlu0 %v1412, 59
      %v1923 = vpop.permute.xlu0 %1922
      %1924 = vrot.lane.b32.xlu0 %v1413, 59
      %v1925 = vpop.permute.xlu0 %1924
      %1926 = vrot.lane.b32.xlu0 %v1416, 59
      %v1927 = vpop.permute.xlu0 %1926
      %1928 = vrot.lane.b32.xlu0 %v1417, 59
      %v1929 = vpop.permute.xlu0 %1928
      %1930 = vrot.lane.b32.xlu0 %v1418, 59
      %v1931 = vpop.permute.xlu0 %1930
      %1932 = vrot.lane.b32.xlu0 %v1419, 59
      %v1933 = vpop.permute.xlu0 %1932
      %1934 = vrot.lane.b32.xlu0 %v1422, 59
      %v1935 = vpop.permute.xlu0 %1934
      %1936 = vrot.lane.b32.xlu0 %v1423, 59
      %v1937 = vpop.permute.xlu0 %1936
      %1938 = vrot.lane.b32.xlu0 %v1424, 59
      %v1939 = vpop.permute.xlu0 %1938
      %1940 = vrot.lane.b32.xlu0 %v1425, 59
      %v1941 = vpop.permute.xlu0 %1940
      %v1958 = vadd.f32 %v1893, %v1911
      %v1959 = vadd.f32 %v1894, %v1913
      %v1960 = vadd.f32 %v1895, %v1915
      %v1961 = vadd.f32 %v1896, %v1917
      %v1962 = vadd.f32 %v1897, %v1919
      %v1963 = vadd.f32 %v1898, %v1921
      %v1964 = vadd.f32 %v1899, %v1923
      %v1965 = vadd.f32 %v1900, %v1925
      %v1966 = vadd.f32 %v1901, %v1927
      %v1967 = vadd.f32 %v1902, %v1929
      %v1968 = vadd.f32 %v1903, %v1931
      %v1969 = vadd.f32 %v1904, %v1933
      %v1970 = vadd.f32 %v1905, %v1935
      %v1971 = vadd.f32 %v1906, %v1937
      %v1972 = vadd.f32 %v1907, %v1939
      %v1973 = vadd.f32 %v1908, %v1941
      %1975 = vrot.lane.b32.xlu0 %v1405, 50
      %v1976 = vpop.permute.xlu0 %1975
      %1977 = vrot.lane.b32.xlu0 %v1406, 50
      %v1978 = vpop.permute.xlu0 %1977
      %1979 = vrot.lane.b32.xlu0 %v1407, 50
      %v1980 = vpop.permute.xlu0 %1979
      %1981 = vrot.lane.b32.xlu0 %v1408, 50
      %v1982 = vpop.permute.xlu0 %1981
      %1983 = vrot.lane.b32.xlu0 %v1411, 50
      %v1984 = vpop.permute.xlu0 %1983
      %1985 = vrot.lane.b32.xlu0 %v1412, 50
      %v1986 = vpop.permute.xlu0 %1985
      %1987 = vrot.lane.b32.xlu0 %v1413, 50
      %v1988 = vpop.permute.xlu0 %1987
      %1989 = vrot.lane.b32.xlu0 %v1414, 50
      %v1990 = vpop.permute.xlu0 %1989
      %1991 = vrot.lane.b32.xlu0 %v1417, 50
      %v1992 = vpop.permute.xlu0 %1991
      %1993 = vrot.lane.b32.xlu0 %v1418, 50
      %v1994 = vpop.permute.xlu0 %1993
      %1995 = vrot.lane.b32.xlu0 %v1419, 50
      %v1996 = vpop.permute.xlu0 %1995
      %1997 = vrot.lane.b32.xlu0 %v1420, 50
      %v1998 = vpop.permute.xlu0 %1997
      %1999 = vrot.lane.b32.xlu0 %v1423, 50
      %v2000 = vpop.permute.xlu0 %1999
      %2001 = vrot.lane.b32.xlu0 %v1424, 50
      %v2002 = vpop.permute.xlu0 %2001
      %2003 = vrot.lane.b32.xlu0 %v1425, 50
      %v2004 = vpop.permute.xlu0 %2003
      %2005 = vrot.lane.b32.xlu0 %v1426, 50
      %v2006 = vpop.permute.xlu0 %2005
      %v2023 = vadd.f32 %v1958, %v1976
      %v2024 = vadd.f32 %v1959, %v1978
      %v2025 = vadd.f32 %v1960, %v1980
      %v2026 = vadd.f32 %v1961, %v1982
      %v2027 = vadd.f32 %v1962, %v1984
      %v2028 = vadd.f32 %v1963, %v1986
      %v2029 = vadd.f32 %v1964, %v1988
      %v2030 = vadd.f32 %v1965, %v1990
      %v2031 = vadd.f32 %v1966, %v1992
      %v2032 = vadd.f32 %v1967, %v1994
      %v2033 = vadd.f32 %v1968, %v1996
      %v2034 = vadd.f32 %v1969, %v1998
      %v2035 = vadd.f32 %v1970, %v2000
      %v2036 = vadd.f32 %v1971, %v2002
      %v2037 = vadd.f32 %v1972, %v2004
      %v2038 = vadd.f32 %v1973, %v2006
      %v2039 = vld [vmem:[%s1] sm:$0x1]
      %v2041 = vlaneseq
      %v2042 = vshrl.u32 %v2041, 7
      %v2043 = vsub.s32 0, %v2042
      %v2044 = vrot.slane %v2039, %v2043
      %v2046 = vadd.f32 %v2023, %v2044
      %v2047 = vadd.f32 %v2024, %v2044
      %v2048 = vadd.f32 %v2025, %v2044
      %v2049 = vadd.f32 %v2026, %v2044
      %v2050 = vadd.f32 %v2027, %v2044
      %v2051 = vadd.f32 %v2028, %v2044
      %v2052 = vadd.f32 %v2029, %v2044
      %v2053 = vadd.f32 %v2030, %v2044
      %v2054 = vadd.f32 %v2031, %v2044
      %v2055 = vadd.f32 %v2032, %v2044
      %v2056 = vadd.f32 %v2033, %v2044
      %v2057 = vadd.f32 %v2034, %v2044
      %v2058 = vadd.f32 %v2035, %v2044
      %v2059 = vadd.f32 %v2036, %v2044
      %v2060 = vadd.f32 %v2037, %v2044
      %v2061 = vadd.f32 %v2038, %v2044
      %vm2062 = vcmask 19456
      %2063 = vst.msk [vmem:[%s143] sm:$0xf] %vm2062, %v2046
      %2064 = vst.msk [vmem:[%s143 + $0x4] sm:$0xf] %vm2062, %v2047
      %2065 = vst.msk [vmem:[%s143 + $0x8] sm:$0xf] %vm2062, %v2048
      %2066 = vst.msk [vmem:[%s143 + $0xc] sm:$0xf] %vm2062, %v2049
      %2067 = vst.msk [vmem:[%s143 + $0x10] sm:$0xf] %vm2062, %v2050
      %2068 = vst.msk [vmem:[%s143 + $0x14] sm:$0xf] %vm2062, %v2051
      %2069 = vst.msk [vmem:[%s143 + $0x18] sm:$0xf] %vm2062, %v2052
      %2070 = vst.msk [vmem:[%s143 + $0x1c] sm:$0xf] %vm2062, %v2053
      %2071 = vst.msk [vmem:[%s143 + $0x20] sm:$0xf] %vm2062, %v2054
      %2072 = vst.msk [vmem:[%s143 + $0x24] sm:$0xf] %vm2062, %v2055
      %2073 = vst.msk [vmem:[%s143 + $0x28] sm:$0xf] %vm2062, %v2056
      %2074 = vst.msk [vmem:[%s143 + $0x2c] sm:$0xf] %vm2062, %v2057
      %2075 = vst.msk [vmem:[%s143 + $0x30] sm:$0xf] %vm2062, %v2058
      %2076 = vst.msk [vmem:[%s143 + $0x34] sm:$0xf] %vm2062, %v2059
      %2077 = vst.msk [vmem:[%s143 + $0x38] sm:$0xf] %vm2062, %v2060
      %2078 = vst.msk [vmem:[%s143 + $0x3c] sm:$0xf] %vm2062, %v2061
      %p2079 = scmp.lt.s32.totalorder %s13, 1
      %s2080 = scalar_select %p2079, %s13, 1
      %s2081 = smul.addr %s2080, 16
      %s2082 = smul.addr %s2081, 4
      %s2083 = scalar_lea.vmem %s2, %s2082
      // Predicated region
      $region29: #{forward_pallas.21} parent=27 // pred_check
        %p2084 = pneg %p78
      $region30: #{forward_pallas.21} parent=27 // pred_check_branch
        %2086 = sbr.rel (%p2084) target = $region32
      $region31: #{forward_pallas.21} parent=27 // pred_region
        _
      $region32: #{forward_pallas.21} parent=27 // pred_fallthru
        _
    $region28: #{forward_pallas.21} parent=5 // pred_fallthru
      _
    %p2087 = scmp.le.s32.totalorder 2, %s8
    // Predicated region
    $region33: #{forward_pallas.21} parent=5 // pred_check
      %p2088 = pneg %p2087
    $region34: #{forward_pallas.21} parent=5 // pred_check_branch
      %2090 = sbr.rel (%p2088) target = $region36
    $region35: #{forward_pallas.21} parent=5 // pred_region
      %s2091 = ssub.s32 %s8, 2
      // Predicated region
      $region37: #{forward_pallas.21} parent=35 // pred_check
        %p2092 = pneg %p84
      $region38: #{forward_pallas.21} parent=35 // pred_check_branch
        %2094 = sbr.rel (%p2092) target = $region40
      $region39: #{forward_pallas.21} parent=35 // pred_region
        %p2095 = scmp.lt.s32.totalorder %s14, 1
        %s2096 = scalar_select %p2095, %s14, 1
        %s2097 = smul.addr %s2096, 16
        %s2098 = smul.addr %s2097, 4
        %s2099 = scalar_lea.vmem %s2, %s2098
      $region40: #{forward_pallas.21} parent=35 // pred_fallthru
        _
    $region36: #{forward_pallas.21} parent=5 // pred_fallthru
      _
  $region6: #{forward_pallas.21} parent=0 // loop_footer
    %s12 = sadd.s32 1, %s8
  $region7: #{forward_pallas.21} parent=0 // loop_footer_branch
    %7 = sbr.rel target = $region3
  $region8: #{forward_pallas.21} parent=0 // loop_exit
    _

</llo_original>
